<compile_context>
chip_gen: v7x
topology: tpu7x:2x2x1
jax: 0.10.0
libtpu: 0.0.40
codegen_flags: <defaults>
</compile_context>

<pallas_src>
import functools

import jax
import jax.numpy as jnp
from jax.experimental import pallas as pl
from jax.experimental.pallas import tpu as pltpu


# -----------------------------------------------------------------------------
# Pallas kernel: LayerNorm + 2-layer GRU + temporal mean + MLP head + softmax
# -----------------------------------------------------------------------------
def _audio_gru_kernel(
    x_ref,         # (Bb, Tc, E)            f32   batch-first input chunk
    ln_w_ref,      # (1, 1, E)              f32
    ln_b_ref,      # (1, 1, E)              f32
    wih0_ref,      # (E, 3H)                bf16  layer-0 input->gates (transposed)
    b_gi0_ref,     # (1, 3H)                f32   [bih0_r+bhh0_r, bih0_z+bhh0_z, bih0_n]
    w_fused_ref,   # (H, 6H)                bf16  [wih1 | whh0]
    b_fused_ref,   # (1, 6H)                f32   [bih1_r+bhh1_r, bih1_z+bhh1_z, bih1_n, 0, 0, bhh0_n]
    whh1_ref,      # (H, 3H)                bf16  layer-1 hidden->gates
    bhh1n_ref,     # (1, H)                 f32   bhh1_n
    gh0_init_ref,  # (1, 3H)                f32   [0, 0, bhh0_n]  (gh0 for the very first step)
    fc1_w_ref,     # (H, H)                 bf16
    fc1_b_ref,     # (1, H)                 f32
    fc2_w_ref,     # (H, C)                 bf16
    fc2_b_ref,     # (1, C)                 f32
    out_ref,       # (Bb, C)                f32
    gi0_scr,       # (n_slabs, Bb, SS, 3H)  f32   scratch: hoisted layer-0 input gates
    h0_scr,        # (Bb, H)                f32   scratch: layer-0 hidden state
    h1_scr,        # (Bb, H)                f32   scratch: layer-1 hidden state
    gh0_scr,       # (Bb, 3H)               f32   scratch: layer-0 hidden gates for next step
    acc_scr,       # (Bb, H)                f32   scratch: running sum of layer-1 outputs
    *,
    inv_t,
):
    Bb, Tc, E = x_ref.shape
    n_slabs, _, SS, _ = gi0_scr.shape
    H = h0_scr.shape[1]
    t_idx = pl.program_id(1)

    # ---- init recurrent state at the first time-chunk of each batch block ----
    @pl.when(t_idx == 0)
    def _init():
        h0_scr[...] = jnp.zeros_like(h0_scr)
        h1_scr[...] = jnp.zeros_like(h1_scr)
        acc_scr[...] = jnp.zeros_like(acc_scr)
        gh0_scr[...] = jnp.broadcast_to(gh0_init_ref[...], gh0_scr.shape)

    # ---- Phase 1 (hoisted, per sub-slab): LayerNorm in f32, then one
    #      (Bb*SS, E) @ (E, 3H) bf16 matmul per slab for layer-0 input gates.
    #      Static slab loop -> only static slices of the input block; results
    #      land in VMEM scratch so Phase 2 can index slabs dynamically.
    ln_w = ln_w_ref[...]
    ln_b = ln_b_ref[...]
    wih0 = wih0_ref[...]
    b_gi0 = jnp.broadcast_to(b_gi0_ref[...], (Bb * SS, 3 * H))   # hoisted broadcast
    for s in range(n_slabs):
        xs = x_ref[:, s * SS:(s + 1) * SS, :]                    # (Bb, SS, E) f32
        mu = jnp.mean(xs, axis=-1, keepdims=True)
        var = jnp.mean(jnp.square(xs - mu), axis=-1, keepdims=True)
        xn = (xs - mu) * jax.lax.rsqrt(var + 1e-5) * ln_w + ln_b
        xn2 = xn.reshape(Bb * SS, E).astype(jnp.bfloat16)
        g = jnp.dot(xn2, wih0, preferred_element_type=jnp.float32) + b_gi0
        gi0_scr[s] = g.reshape(Bb, SS, 3 * H)

    # Hoist weight loads and bias broadcasts out of the serial recurrence
    # (JAX does not CSE broadcast_in_dim).
    w_fused = w_fused_ref[...]
    whh1 = whh1_ref[...]
    b_fused = jnp.broadcast_to(b_fused_ref[...], (Bb, 6 * H))
    bhh1n = jnp.broadcast_to(bhh1n_ref[...], (Bb, H))

    # ---- Phase 2: serial recurrence (PyTorch GRU gate order [r, z, n]).
    #      Outer fori over slabs (bounded code size), static inner loop of SS
    #      steps acts as the unroll factor.
    def slab_step(s, carry):
        h0, h1, gh0, acc = carry
        slab = gi0_scr[s]                                        # (Bb, SS, 3H)
        for k in range(SS):                                      # static unroll
            gi0_t = slab[:, k, :]                                # (Bb, 3H)

            # layer-0 cell; gh0 (incl. bhh0_n on its n-slice) was produced by
            # the previous step's fused matmul (or by gh0_init at step 0).
            r0 = jax.nn.sigmoid(gi0_t[:, :H] + gh0[:, :H])
            z0 = jax.nn.sigmoid(gi0_t[:, H:2 * H] + gh0[:, H:2 * H])
            n0 = jnp.tanh(gi0_t[:, 2 * H:] + r0 * gh0[:, 2 * H:])
            h0 = (1.0 - z0) * n0 + z0 * h0

            # layer-1 hidden projection: independent of the new h0 -> can
            # overlap with the fused matmul below.
            gh1 = jnp.dot(h1.astype(jnp.bfloat16), whh1,
                          preferred_element_type=jnp.float32)

            # Fused matmul: h0 @ [wih1 | whh0] gives layer-1's input gates for
            # this step AND layer-0's hidden gates for the next step in one
            # MXU issue (M = Bb).
            fused = jnp.dot(h0.astype(jnp.bfloat16), w_fused,
                            preferred_element_type=jnp.float32) + b_fused
            gi1 = fused[:, :3 * H]
            gh0 = fused[:, 3 * H:]

            # layer-1 cell
            r1 = jax.nn.sigmoid(gi1[:, :H] + gh1[:, :H])
            z1 = jax.nn.sigmoid(gi1[:, H:2 * H] + gh1[:, H:2 * H])
            n1 = jnp.tanh(gi1[:, 2 * H:] + r1 * (gh1[:, 2 * H:] + bhh1n))
            h1 = (1.0 - z1) * n1 + z1 * h1
            acc = acc + h1
        return h0, h1, gh0, acc

    carry0 = (h0_scr[...], h1_scr[...], gh0_scr[...], acc_scr[...])
    h0, h1, gh0, acc = jax.lax.fori_loop(0, n_slabs, slab_step, carry0)
    h0_scr[...] = h0
    h1_scr[...] = h1
    gh0_scr[...] = gh0
    acc_scr[...] = acc

    # ---- Phase 3: temporal mean + classifier head + exact softmax (last chunk)
    @pl.when(t_idx == pl.num_programs(1) - 1)
    def _final():
        pooled = (acc * inv_t).astype(jnp.bfloat16)              # mean over time
        z = (jnp.dot(pooled, fc1_w_ref[...], preferred_element_type=jnp.float32)
             + fc1_b_ref[...])
        z = jnp.maximum(z, 0.0).astype(jnp.bfloat16)
        logits = (jnp.dot(z, fc2_w_ref[...], preferred_element_type=jnp.float32)
                  + fc2_b_ref[...])
        m = jnp.max(logits, axis=-1, keepdims=True)
        e = jnp.exp(logits - m)
        out_ref[...] = (e / jnp.sum(e, axis=-1, keepdims=True)).astype(out_ref.dtype)


# -----------------------------------------------------------------------------
# Parameter preprocessing shared by the wrapper and the bit-matched reference.
# -----------------------------------------------------------------------------
def _prepare(params):
    H = params["whh0"].shape[0]
    E = params["wih0"].shape[0]

    def split3(v):
        return v[:H], v[H:2 * H], v[2 * H:]

    bih0_r, bih0_z, bih0_n = split3(params["bih0"])
    bhh0_r, bhh0_z, bhh0_n = split3(params["bhh0"])
    bih1_r, bih1_z, bih1_n = split3(params["bih1"])
    bhh1_r, bhh1_z, bhh1_n = split3(params["bhh1"])
    zeros_h = jnp.zeros((H,), jnp.float32)

    return dict(
        H=H,
        ln_w=params["ln_w"].reshape(1, 1, E).astype(jnp.float32),
        ln_b=params["ln_b"].reshape(1, 1, E).astype(jnp.float32),
        wih0=params["wih0"].astype(jnp.bfloat16),
        b_gi0=jnp.concatenate([bih0_r + bhh0_r, bih0_z + bhh0_z, bih0_n]).reshape(1, 3 * H),
        w_fused=jnp.concatenate([params["wih1"], params["whh0"]], axis=1).astype(jnp.bfloat16),
        b_fused=jnp.concatenate([bih1_r + bhh1_r, bih1_z + bhh1_z, bih1_n,
                                 zeros_h, zeros_h, bhh0_n]).reshape(1, 6 * H),
        whh1=params["whh1"].astype(jnp.bfloat16),
        bhh1_n=bhh1_n.reshape(1, H),
        gh0_init=jnp.concatenate([zeros_h, zeros_h, bhh0_n]).reshape(1, 3 * H),
        fc1_w=params["fc1_w"].astype(jnp.bfloat16),
        fc1_b=params["fc1_b"].reshape(1, H).astype(jnp.float32),
        fc2_w=params["fc2_w"].astype(jnp.bfloat16),
        fc2_b=params["fc2_b"].reshape(1, -1).astype(jnp.float32),
    )


def _largest_divisor_leq(n, cap):
    for d in range(min(n, cap), 0, -1):
        if n % d == 0:
            return d
    return 1


# -----------------------------------------------------------------------------
# Wrapper
# -----------------------------------------------------------------------------
@functools.partial(jax.jit, static_argnames=("time_block", "batch_block", "sub_steps"))
def audio_bilstm_net_forward(x, params, *, time_block=None, batch_block=None,
                             sub_steps=None):
    """x: (B, T, E) float32 (batch_first, like the PyTorch module)."""
    B, T, E = x.shape
    H = params["whh0"].shape[0]      # whh0 stored as (H, 3H)
    C = params["fc2_w"].shape[1]     # fc2_w stored as (H, C)

    # --- tile selection ------------------------------------------------------
    if batch_block is None:
        # Bb is the M dimension of every recurrence matmul -> as large as the
        # MXU wants (<=256), but keep >=2 batch blocks when B allows so the
        # "parallel" axis can shard across v7x's 2 TensorCores.
        Bb = _largest_divisor_leq(B, 256)
        if B // Bb < 2 and B % 2 == 0 and B // 2 >= 16:
            Bb = B // 2
    else:
        Bb = batch_block
    Tc = _largest_divisor_leq(T, 128) if time_block is None else time_block
    SS = _largest_divisor_leq(Tc, 8) if sub_steps is None else sub_steps
    assert B % Bb == 0, "batch_block must divide B"
    assert T % Tc == 0, "time_block must divide T"
    assert Tc % SS == 0, "sub_steps must divide time_block"
    n_slabs = Tc // SS

    prep = _prepare(params)
    x = x.astype(jnp.float32)   # no transpose / no extra HBM copy pass

    operands = (
        x,
        prep["ln_w"], prep["ln_b"],
        prep["wih0"], prep["b_gi0"],
        prep["w_fused"], prep["b_fused"],
        prep["whh1"], prep["bhh1_n"], prep["gh0_init"],
        prep["fc1_w"], prep["fc1_b"], prep["fc2_w"], prep["fc2_b"],
    )

    def _const_spec(arr):
        zeros = (0,) * arr.ndim
        return pl.BlockSpec(arr.shape, lambda b, t, _z=zeros: _z)

    in_specs = [pl.BlockSpec((Bb, Tc, E), lambda b, t: (b, t, 0))]
    in_specs += [_const_spec(op) for op in operands[1:]]
    out_specs = pl.BlockSpec((Bb, C), lambda b, t: (b, 0))

    grid = (B // Bb, T // Tc)   # batch blocks (parallel) x time chunks (serial)

    # VMEM limit: ~3/4 of the chip's VMEM (64 MiB/TC on v7x, 128 MiB v5e/v6e),
    # capped at 100 MiB; never below the conservative 32 MiB default.
    try:
        vmem_cap = int(pltpu.get_tpu_info().vmem_capacity_bytes)
    except Exception:
        vmem_cap = 128 * 1024 * 1024
    vmem_limit = max(32 * 1024 * 1024, min(100 * 1024 * 1024, (vmem_cap * 3) // 4))

    flops = 2 * B * T * (E * 3 * H + H * 9 * H) + 2 * B * (H * H + H * C)
    transcendentals = 6 * B * T * H + B * C
    bytes_accessed = (B * T * E * 4 + B * C * 4
                      + 2 * (E * 3 * H + H * 6 * H + H * 3 * H + H * H + H * C))

    kernel = functools.partial(_audio_gru_kernel, inv_t=float(1.0 / T))

    return pl.pallas_call(
        kernel,
        out_shape=jax.ShapeDtypeStruct((B, C), jnp.float32),
        grid=grid,
        in_specs=in_specs,
        out_specs=out_specs,
        scratch_shapes=[
            pltpu.VMEM((n_slabs, Bb, SS, 3 * H), jnp.float32),  # gi0 for the chunk
            pltpu.VMEM((Bb, H), jnp.float32),                   # h0
            pltpu.VMEM((Bb, H), jnp.float32),                   # h1
            pltpu.VMEM((Bb, 3 * H), jnp.float32),               # gh0 (next step)
            pltpu.VMEM((Bb, H), jnp.float32),                   # acc (sum of h1)
        ],
        compiler_params=pltpu.CompilerParams(
            dimension_semantics=("parallel", "arbitrary"),
            vmem_limit_bytes=int(vmem_limit),
        ),
        cost_estimate=pl.CostEstimate(
            flops=flops, transcendentals=transcendentals,
            bytes_accessed=bytes_accessed),
    )(*operands)


# -----------------------------------------------------------------------------
# Deterministic parameter init (shapes follow the PyTorch module __init__).
# -----------------------------------------------------------------------------
def init_params(key, embed_size, hidden_size, num_classes):
    keys = jax.random.split(key, 12)
    k_gru = 1.0 / jnp.sqrt(hidden_size)
    k_fc = 1.0 / jnp.sqrt(hidden_size)

    def u(k, shape, scale):
        return jax.random.uniform(k, shape, jnp.float32, -scale, scale)

    return {
        "ln_w": jnp.ones((embed_size,), jnp.float32),
        "ln_b": jnp.zeros((embed_size,), jnp.float32),
        # GRU layer 0 (PyTorch stores W_ih as (3H, E); we keep the transpose).
        "wih0": u(keys[0], (embed_size, 3 * hidden_size), k_gru),
        "whh0": u(keys[1], (hidden_size, 3 * hidden_size), k_gru),
        "bih0": u(keys[2], (3 * hidden_size,), k_gru),
        "bhh0": u(keys[3], (3 * hidden_size,), k_gru),
        # GRU layer 1
        "wih1": u(keys[4], (hidden_size, 3 * hidden_size), k_gru),
        "whh1": u(keys[5], (hidden_size, 3 * hidden_size), k_gru),
        "bih1": u(keys[6], (3 * hidden_size,), k_gru),
        "bhh1": u(keys[7], (3 * hidden_size,), k_gru),
        # Classifier head
        "fc1_w": u(keys[8], (hidden_size, hidden_size), k_fc),
        "fc1_b": u(keys[9], (hidden_size,), k_fc),
        "fc2_w": u(keys[10], (hidden_size, num_classes), k_fc),
        "fc2_b": u(keys[11], (num_classes,), k_fc),
    }


# -----------------------------------------------------------------------------
# Pure-JAX references.
#   reference_forward : full-f32 mirror of the PyTorch eval-mode forward.
#   matched_reference : same math as the kernel (bf16 matmul operands, f32 acc,
#                       fused weights / combined biases) for a tight check.
# -----------------------------------------------------------------------------
def reference_forward(x, params):
    H = params["whh0"].shape[0]
    mu = jnp.mean(x, axis=-1, keepdims=True)
    var = jnp.mean(jnp.square(x - mu), axis=-1, keepdims=True)
    xn = (x - mu) * jax.lax.rsqrt(var + 1e-5) * params["ln_w"] + params["ln_b"]

    def gru_layer(seq, wih, whh, bih, bhh):
        B = seq.shape[0]

        def cell(h, x_t):
            gi = x_t @ wih + bih
            gh = h @ whh + bhh
            r = jax.nn.sigmoid(gi[:, :H] + gh[:, :H])
            z = jax.nn.sigmoid(gi[:, H:2 * H] + gh[:, H:2 * H])
            n = jnp.tanh(gi[:, 2 * H:] + r * gh[:, 2 * H:])
            h_new = (1.0 - z) * n + z * h
            return h_new, h_new

        h0 = jnp.zeros((B, H), jnp.float32)
        _, ys = jax.lax.scan(cell, h0, jnp.transpose(seq, (1, 0, 2)))
        return jnp.transpose(ys, (1, 0, 2))

    y0 = gru_layer(xn, params["wih0"], params["whh0"], params["bih0"], params["bhh0"])
    y1 = gru_layer(y0, params["wih1"], params["whh1"], params["bih1"], params["bhh1"])
    pooled = jnp.mean(y1, axis=1)
    z1 = jnp.maximum(pooled @ params["fc1_w"] + params["fc1_b"], 0.0)
    logits = z1 @ params["fc2_w"] + params["fc2_b"]
    return jax.nn.softmax(logits, axis=1)


def matched_reference(x, params):
    p = _prepare(params)
    H = p["H"]
    B, T, E = x.shape

    mu = jnp.mean(x, axis=-1, keepdims=True)
    var = jnp.mean(jnp.square(x - mu), axis=-1, keepdims=True)
    xn = (x - mu) * jax.lax.rsqrt(var + 1e-5) * p["ln_w"] + p["ln_b"]
    gi0_all = (jnp.dot(xn.reshape(B * T, E).astype(jnp.bfloat16), p["wih0"],
                       preferred_element_type=jnp.float32).reshape(B, T, 3 * H)
               + p["b_gi0"])

    def cell(carry, gi0_t):
        h0, h1, gh0 = carry
        r0 = jax.nn.sigmoid(gi0_t[:, :H] + gh0[:, :H])
        z0 = jax.nn.sigmoid(gi0_t[:, H:2 * H] + gh0[:, H:2 * H])
        n0 = jnp.tanh(gi0_t[:, 2 * H:] + r0 * gh0[:, 2 * H:])
        h0n = (1.0 - z0) * n0 + z0 * h0
        gh1 = jnp.dot(h1.astype(jnp.bfloat16), p["whh1"],
                      preferred_element_type=jnp.float32)
        fused = jnp.dot(h0n.astype(jnp.bfloat16), p["w_fused"],
                        preferred_element_type=jnp.float32) + p["b_fused"]
        gi1, gh0n = fused[:, :3 * H], fused[:, 3 * H:]
        r1 = jax.nn.sigmoid(gi1[:, :H] + gh1[:, :H])
        z1 = jax.nn.sigmoid(gi1[:, H:2 * H] + gh1[:, H:2 * H])
        n1 = jnp.tanh(gi1[:, 2 * H:] + r1 * (gh1[:, 2 * H:] + p["bhh1_n"]))
        h1n = (1.0 - z1) * n1 + z1 * h1
        return (h0n, h1n, gh0n), h1n

    h0 = jnp.zeros((B, H), jnp.float32)
    h1 = jnp.zeros((B, H), jnp.float32)
    gh0 = jnp.broadcast_to(p["gh0_init"], (B, 3 * H))
    _, ys = jax.lax.scan(cell, (h0, h1, gh0), jnp.transpose(gi0_all, (1, 0, 2)))
    pooled = jnp.mean(ys, axis=0).astype(jnp.bfloat16)
    z = jnp.maximum(jnp.dot(pooled, p["fc1_w"], preferred_element_type=jnp.float32)
                    + p["fc1_b"], 0.0).astype(jnp.bfloat16)
    logits = jnp.dot(z, p["fc2_w"], preferred_element_type=jnp.float32) + p["fc2_b"]
    return jax.nn.softmax(logits, axis=1)


if __name__ == "__main__":
    # Small shapes consistent with the module's forward (B, T, embed_size).
    B, T, E, H, C = 16, 32, 128, 128, 2

    key = jax.random.PRNGKey(0)
    k_x, k_p = jax.random.split(key)
    x = jax.random.normal(k_x, (B, T, E), jnp.float32)
    params = init_params(k_p, embed_size=E, hidden_size=H, num_classes=C)

    # batch_block=8 -> 2 parallel batch blocks; time_block=16 -> 2 serial time
    # chunks carried in VMEM scratch; sub_steps=8 -> 2 slabs per chunk, so both
    # the slab fori_loop and the static inner unroll are exercised.
    out = audio_bilstm_net_forward(x, params, time_block=16, batch_block=8,
                                   sub_steps=8)
    out = jax.block_until_ready(out)

    assert out.shape == (B, C)
    assert bool(jnp.all(jnp.isfinite(out)))
    assert bool(jnp.allclose(jnp.sum(out, axis=1), 1.0, atol=1e-3))

    ref_matched = matched_reference(x, params)    # same bf16/fusion math
    ref_f32 = reference_forward(x, params)        # pure f32 PyTorch mirror
    assert bool(jnp.allclose(out, ref_matched, atol=5e-3, rtol=5e-3))
    assert bool(jnp.allclose(out, ref_f32, atol=2e-2, rtol=2e-2))

    print("KERNEL_OK")
</pallas_src>

<mosaic_0001>
module attributes {stable_mosaic.version = 11 : i64} {
  func.func @_audio_gru_kernel(%arg0: i32, %arg1: i32, %arg2: memref<8x16x128xf32, #tpu.memory_space<vmem>>, %arg3: memref<1x1x128xf32, #tpu.memory_space<vmem>>, %arg4: memref<1x1x128xf32, #tpu.memory_space<vmem>>, %arg5: memref<128x384xbf16, #tpu.memory_space<vmem>>, %arg6: memref<1x384xf32, #tpu.memory_space<vmem>>, %arg7: memref<128x768xbf16, #tpu.memory_space<vmem>>, %arg8: memref<1x768xf32, #tpu.memory_space<vmem>>, %arg9: memref<128x384xbf16, #tpu.memory_space<vmem>>, %arg10: memref<1x128xf32, #tpu.memory_space<vmem>>, %arg11: memref<1x384xf32, #tpu.memory_space<vmem>>, %arg12: memref<128x128xbf16, #tpu.memory_space<vmem>>, %arg13: memref<1x128xf32, #tpu.memory_space<vmem>>, %arg14: memref<128x2xbf16, #tpu.memory_space<vmem>>, %arg15: memref<1x2xf32, #tpu.memory_space<vmem>>, %arg16: memref<8x2xf32, #tpu.memory_space<vmem>>, %arg17: memref<2x8x8x384xf32, #tpu.memory_space<vmem>>, %arg18: memref<8x128xf32, #tpu.memory_space<vmem>>, %arg19: memref<8x128xf32, #tpu.memory_space<vmem>>, %arg20: memref<8x384xf32, #tpu.memory_space<vmem>>, %arg21: memref<8x128xf32, #tpu.memory_space<vmem>>) attributes {dimension_semantics = [#tpu.dimension_semantics<parallel>, #tpu.dimension_semantics<arbitrary>], iteration_bounds = array<i64: 2, 2>, scalar_prefetch = 0 : i64, scratch_operands = 5 : i64, tpu.core_type = #tpu.core_type<tc>, window_params = [{transform_indices = @transform_0, window_bounds = array<i64: 8, 16, 128>}, {pipeline_mode = #tpu.pipeline_mode<synchronous>, transform_indices = @transform_1, window_bounds = array<i64: 1, 1, 128>}, {pipeline_mode = #tpu.pipeline_mode<synchronous>, transform_indices = @transform_2, window_bounds = array<i64: 1, 1, 128>}, {pipeline_mode = #tpu.pipeline_mode<synchronous>, transform_indices = @transform_3, window_bounds = array<i64: 128, 384>}, {pipeline_mode = #tpu.pipeline_mode<synchronous>, transform_indices = @transform_4, window_bounds = array<i64: 1, 384>}, {pipeline_mode = #tpu.pipeline_mode<synchronous>, transform_indices = @transform_5, window_bounds = array<i64: 128, 768>}, {pipeline_mode = #tpu.pipeline_mode<synchronous>, transform_indices = @transform_6, window_bounds = array<i64: 1, 768>}, {pipeline_mode = #tpu.pipeline_mode<synchronous>, transform_indices = @transform_7, window_bounds = array<i64: 128, 384>}, {pipeline_mode = #tpu.pipeline_mode<synchronous>, transform_indices = @transform_8, window_bounds = array<i64: 1, 128>}, {pipeline_mode = #tpu.pipeline_mode<synchronous>, transform_indices = @transform_9, window_bounds = array<i64: 1, 384>}, {pipeline_mode = #tpu.pipeline_mode<synchronous>, transform_indices = @transform_10, window_bounds = array<i64: 128, 128>}, {pipeline_mode = #tpu.pipeline_mode<synchronous>, transform_indices = @transform_11, window_bounds = array<i64: 1, 128>}, {pipeline_mode = #tpu.pipeline_mode<synchronous>, transform_indices = @transform_12, window_bounds = array<i64: 128, 2>}, {pipeline_mode = #tpu.pipeline_mode<synchronous>, transform_indices = @transform_13, window_bounds = array<i64: 1, 2>}, {transform_indices = @transform_14, window_bounds = array<i64: 8, 2>}]} {
    %c0_i32 = arith.constant 0 : i32
    %0 = arith.cmpi eq, %arg1, %c0_i32 : i32
    %1 = arith.extui %0 : i1 to i32
    %c0_i32_0 = arith.constant 0 : i32
    %2 = arith.cmpi ne, %1, %c0_i32_0 : i32
    scf.if %2 {
      %cst_61 = arith.constant 0.000000e+00 : f32
      %92 = vector.broadcast %cst_61 : f32 to vector<8x128xf32>
      %c0_62 = arith.constant 0 : index
      %c0_63 = arith.constant 0 : index
      %93 = vector.load %arg18[%c0_62, %c0_63] : memref<8x128xf32, #tpu.memory_space<vmem>>, vector<8x128xf32>
      tpu.vector_store %arg18[%c0_62, %c0_63], %92 {strides = array<i32>} : memref<8x128xf32, #tpu.memory_space<vmem>>, vector<8x128xf32>,
      %cst_64 = arith.constant 0.000000e+00 : f32
      %94 = vector.broadcast %cst_64 : f32 to vector<8x128xf32>
      %c0_65 = arith.constant 0 : index
      %c0_66 = arith.constant 0 : index
      %95 = vector.load %arg19[%c0_65, %c0_66] : memref<8x128xf32, #tpu.memory_space<vmem>>, vector<8x128xf32>
      tpu.vector_store %arg19[%c0_65, %c0_66], %94 {strides = array<i32>} : memref<8x128xf32, #tpu.memory_space<vmem>>, vector<8x128xf32>,
      %cst_67 = arith.constant 0.000000e+00 : f32
      %96 = vector.broadcast %cst_67 : f32 to vector<8x128xf32>
      %c0_68 = arith.constant 0 : index
      %c0_69 = arith.constant 0 : index
      %97 = vector.load %arg21[%c0_68, %c0_69] : memref<8x128xf32, #tpu.memory_space<vmem>>, vector<8x128xf32>
      tpu.vector_store %arg21[%c0_68, %c0_69], %96 {strides = array<i32>} : memref<8x128xf32, #tpu.memory_space<vmem>>, vector<8x128xf32>,
      %c0_70 = arith.constant 0 : index
      %c0_71 = arith.constant 0 : index
      %98 = vector.load %arg11[%c0_70, %c0_71] : memref<1x384xf32, #tpu.memory_space<vmem>>, vector<1x384xf32>
      %99 = vector.shape_cast %98 : vector<1x384xf32> to vector<1x384xf32>
      %100 = vector.broadcast %99 : vector<1x384xf32> to vector<8x384xf32>
      %c0_72 = arith.constant 0 : index
      %c0_73 = arith.constant 0 : index
      %101 = vector.load %arg20[%c0_72, %c0_73] : memref<8x384xf32, #tpu.memory_space<vmem>>, vector<8x384xf32>
      tpu.vector_store %arg20[%c0_72, %c0_73], %100 {strides = array<i32>} : memref<8x384xf32, #tpu.memory_space<vmem>>, vector<8x384xf32>,
    } else {
    }
    %c0 = arith.constant 0 : index
    %c0_1 = arith.constant 0 : index
    %c0_2 = arith.constant 0 : index
    %3 = vector.load %arg3[%c0, %c0_1, %c0_2] : memref<1x1x128xf32, #tpu.memory_space<vmem>>, vector<1x1x128xf32>
    %c0_3 = arith.constant 0 : index
    %c0_4 = arith.constant 0 : index
    %c0_5 = arith.constant 0 : index
    %4 = vector.load %arg4[%c0_3, %c0_4, %c0_5] : memref<1x1x128xf32, #tpu.memory_space<vmem>>, vector<1x1x128xf32>
    %c0_6 = arith.constant 0 : index
    %c0_7 = arith.constant 0 : index
    %5 = vector.load %arg5[%c0_6, %c0_7] : memref<128x384xbf16, #tpu.memory_space<vmem>>, vector<128x384xbf16>
    %c0_8 = arith.constant 0 : index
    %c0_9 = arith.constant 0 : index
    %6 = vector.load %arg6[%c0_8, %c0_9] : memref<1x384xf32, #tpu.memory_space<vmem>>, vector<1x384xf32>
    %7 = vector.shape_cast %6 : vector<1x384xf32> to vector<1x384xf32>
    %8 = vector.broadcast %7 : vector<1x384xf32> to vector<64x384xf32>
    %c0_10 = arith.constant 0 : index
    %c0_11 = arith.constant 0 : index
    %c0_12 = arith.constant 0 : index
    %9 = vector.load %arg2[%c0_10, %c0_11, %c0_12] : memref<8x16x128xf32, #tpu.memory_space<vmem>>, vector<8x8x128xf32>
    %cst = arith.constant dense<0.000000e+00> : vector<8x8xf32>
    %10 = vector.multi_reduction <add>, %9, %cst [2] : vector<8x8x128xf32> to vector<8x8xf32>
    %11 = vector.shape_cast %10 : vector<8x8xf32> to vector<8x8x1xf32>
    %cst_13 = arith.constant 1.280000e+02 : f32
    %12 = vector.broadcast %cst_13 : f32 to vector<8x8x1xf32>
    %13 = arith.divf %11, %12 : vector<8x8x1xf32>
    %14 = vector.broadcast %13 : vector<8x8x1xf32> to vector<8x8x128xf32>
    %15 = arith.subf %9, %14 : vector<8x8x128xf32>
    %16 = arith.mulf %15, %15 : vector<8x8x128xf32>
    %cst_14 = arith.constant dense<0.000000e+00> : vector<8x8xf32>
    %17 = vector.multi_reduction <add>, %16, %cst_14 [2] : vector<8x8x128xf32> to vector<8x8xf32>
    %18 = vector.shape_cast %17 : vector<8x8xf32> to vector<8x8x1xf32>
    %cst_15 = arith.constant 1.280000e+02 : f32
    %19 = vector.broadcast %cst_15 : f32 to vector<8x8x1xf32>
    %20 = arith.divf %18, %19 : vector<8x8x1xf32>
    %21 = vector.broadcast %13 : vector<8x8x1xf32> to vector<8x8x128xf32>
    %22 = arith.subf %9, %21 : vector<8x8x128xf32>
    %cst_16 = arith.constant 9.99999974E-6 : f32
    %23 = vector.broadcast %cst_16 : f32 to vector<8x8x1xf32>
    %24 = arith.addf %20, %23 : vector<8x8x1xf32>
    %25 = math.rsqrt %24 : vector<8x8x1xf32>
    %26 = vector.broadcast %25 : vector<8x8x1xf32> to vector<8x8x128xf32>
    %27 = arith.mulf %22, %26 : vector<8x8x128xf32>
    %28 = vector.broadcast %3 : vector<1x1x128xf32> to vector<8x8x128xf32>
    %29 = arith.mulf %27, %28 : vector<8x8x128xf32>
    %30 = vector.broadcast %4 : vector<1x1x128xf32> to vector<8x8x128xf32>
    %31 = arith.addf %29, %30 : vector<8x8x128xf32>
    %32 = vector.shape_cast %31 : vector<8x8x128xf32> to vector<64x128xf32>
    %33 = arith.truncf %32 : vector<64x128xf32> to vector<64x128xbf16>
    %cst_17 = arith.constant dense<0.000000e+00> : vector<64x384xf32>
    %34 = tpu.matmul %33, %5, %cst_17 {dimension_numbers = #tpu.dot_dimension_numbers<[1], [0], [0], [1], [0, 0, 1, 1], [], []>} : vector<64x128xbf16>, vector<128x384xbf16>, vector<64x384xf32> -> vector<64x384xf32>
    %35 = arith.addf %34, %8 : vector<64x384xf32>
    %36 = vector.shape_cast %35 : vector<64x384xf32> to vector<8x8x384xf32>
    %c0_18 = arith.constant 0 : index
    %c0_19 = arith.constant 0 : index
    %c0_20 = arith.constant 0 : index
    %c0_21 = arith.constant 0 : index
    %37 = vector.load %arg17[%c0_18, %c0_19, %c0_20, %c0_21] : memref<2x8x8x384xf32, #tpu.memory_space<vmem>>, vector<1x8x8x384xf32>
    %38 = vector.shape_cast %37 : vector<1x8x8x384xf32> to vector<8x8x384xf32>
    %39 = vector.shape_cast %36 : vector<8x8x384xf32> to vector<1x8x8x384xf32>
    tpu.vector_store %arg17[%c0_18, %c0_19, %c0_20, %c0_21], %39 {strides = array<i32>} : memref<2x8x8x384xf32, #tpu.memory_space<vmem>>, vector<1x8x8x384xf32>,
    %c0_22 = arith.constant 0 : index
    %c8 = arith.constant 8 : index
    %c0_23 = arith.constant 0 : index
    %40 = vector.load %arg2[%c0_22, %c8, %c0_23] : memref<8x16x128xf32, #tpu.memory_space<vmem>>, vector<8x8x128xf32>
    %cst_24 = arith.constant dense<0.000000e+00> : vector<8x8xf32>
    %41 = vector.multi_reduction <add>, %40, %cst_24 [2] : vector<8x8x128xf32> to vector<8x8xf32>
    %42 = vector.shape_cast %41 : vector<8x8xf32> to vector<8x8x1xf32>
    %cst_25 = arith.constant 1.280000e+02 : f32
    %43 = vector.broadcast %cst_25 : f32 to vector<8x8x1xf32>
    %44 = arith.divf %42, %43 : vector<8x8x1xf32>
    %45 = vector.broadcast %44 : vector<8x8x1xf32> to vector<8x8x128xf32>
    %46 = arith.subf %40, %45 : vector<8x8x128xf32>
    %47 = arith.mulf %46, %46 : vector<8x8x128xf32>
    %cst_26 = arith.constant dense<0.000000e+00> : vector<8x8xf32>
    %48 = vector.multi_reduction <add>, %47, %cst_26 [2] : vector<8x8x128xf32> to vector<8x8xf32>
    %49 = vector.shape_cast %48 : vector<8x8xf32> to vector<8x8x1xf32>
    %cst_27 = arith.constant 1.280000e+02 : f32
    %50 = vector.broadcast %cst_27 : f32 to vector<8x8x1xf32>
    %51 = arith.divf %49, %50 : vector<8x8x1xf32>
    %52 = vector.broadcast %44 : vector<8x8x1xf32> to vector<8x8x128xf32>
    %53 = arith.subf %40, %52 : vector<8x8x128xf32>
    %cst_28 = arith.constant 9.99999974E-6 : f32
    %54 = vector.broadcast %cst_28 : f32 to vector<8x8x1xf32>
    %55 = arith.addf %51, %54 : vector<8x8x1xf32>
    %56 = math.rsqrt %55 : vector<8x8x1xf32>
    %57 = vector.broadcast %56 : vector<8x8x1xf32> to vector<8x8x128xf32>
    %58 = arith.mulf %53, %57 : vector<8x8x128xf32>
    %59 = vector.broadcast %3 : vector<1x1x128xf32> to vector<8x8x128xf32>
    %60 = arith.mulf %58, %59 : vector<8x8x128xf32>
    %61 = vector.broadcast %4 : vector<1x1x128xf32> to vector<8x8x128xf32>
    %62 = arith.addf %60, %61 : vector<8x8x128xf32>
    %63 = vector.shape_cast %62 : vector<8x8x128xf32> to vector<64x128xf32>
    %64 = arith.truncf %63 : vector<64x128xf32> to vector<64x128xbf16>
    %cst_29 = arith.constant dense<0.000000e+00> : vector<64x384xf32>
    %65 = tpu.matmul %64, %5, %cst_29 {dimension_numbers = #tpu.dot_dimension_numbers<[1], [0], [0], [1], [0, 0, 1, 1], [], []>} : vector<64x128xbf16>, vector<128x384xbf16>, vector<64x384xf32> -> vector<64x384xf32>
    %66 = arith.addf %65, %8 : vector<64x384xf32>
    %67 = vector.shape_cast %66 : vector<64x384xf32> to vector<8x8x384xf32>
    %c1 = arith.constant 1 : index
    %c0_30 = arith.constant 0 : index
    %c0_31 = arith.constant 0 : index
    %c0_32 = arith.constant 0 : index
    %68 = vector.load %arg17[%c1, %c0_30, %c0_31, %c0_32] : memref<2x8x8x384xf32, #tpu.memory_space<vmem>>, vector<1x8x8x384xf32>
    %69 = vector.shape_cast %68 : vector<1x8x8x384xf32> to vector<8x8x384xf32>
    %70 = vector.shape_cast %67 : vector<8x8x384xf32> to vector<1x8x8x384xf32>
    tpu.vector_store %arg17[%c1, %c0_30, %c0_31, %c0_32], %70 {strides = array<i32>} : memref<2x8x8x384xf32, #tpu.memory_space<vmem>>, vector<1x8x8x384xf32>,
    %c0_33 = arith.constant 0 : index
    %c0_34 = arith.constant 0 : index
    %71 = vector.load %arg7[%c0_33, %c0_34] : memref<128x768xbf16, #tpu.memory_space<vmem>>, vector<128x768xbf16>
    %c0_35 = arith.constant 0 : index
    %c0_36 = arith.constant 0 : index
    %72 = vector.load %arg9[%c0_35, %c0_36] : memref<128x384xbf16, #tpu.memory_space<vmem>>, vector<128x384xbf16>
    %c0_37 = arith.constant 0 : index
    %c0_38 = arith.constant 0 : index
    %73 = vector.load %arg8[%c0_37, %c0_38] : memref<1x768xf32, #tpu.memory_space<vmem>>, vector<1x768xf32>
    %74 = vector.shape_cast %73 : vector<1x768xf32> to vector<1x768xf32>
    %75 = vector.broadcast %74 : vector<1x768xf32> to vector<8x768xf32>
    %c0_39 = arith.constant 0 : index
    %c0_40 = arith.constant 0 : index
    %76 = vector.load %arg10[%c0_39, %c0_40] : memref<1x128xf32, #tpu.memory_space<vmem>>, vector<1x128xf32>
    %77 = vector.shape_cast %76 : vector<1x128xf32> to vector<1x128xf32>
    %78 = vector.broadcast %77 : vector<1x128xf32> to vector<8x128xf32>
    %c0_41 = arith.constant 0 : index
    %c0_42 = arith.constant 0 : index
    %79 = vector.load %arg18[%c0_41, %c0_42] : memref<8x128xf32, #tpu.memory_space<vmem>>, vector<8x128xf32>
    %c0_43 = arith.constant 0 : index
    %c0_44 = arith.constant 0 : index
    %80 = vector.load %arg19[%c0_43, %c0_44] : memref<8x128xf32, #tpu.memory_space<vmem>>, vector<8x128xf32>
    %c0_45 = arith.constant 0 : index
    %c0_46 = arith.constant 0 : index
    %81 = vector.load %arg20[%c0_45, %c0_46] : memref<8x384xf32, #tpu.memory_space<vmem>>, vector<8x384xf32>
    %c0_47 = arith.constant 0 : index
    %c0_48 = arith.constant 0 : index
    %82 = vector.load %arg21[%c0_47, %c0_48] : memref<8x128xf32, #tpu.memory_space<vmem>>, vector<8x128xf32>
    %c0_i32_49 = arith.constant 0 : i32
    %c2_i32 = arith.constant 2 : i32
    %83 = arith.addi %c0_i32_49, %c2_i32 : i32
    %c1_i32 = arith.constant 1 : i32
    %84:4 = scf.for %arg22 = %c0_i32_49 to %83 step %c1_i32 iter_args(%arg23 = %79, %arg24 = %80, %arg25 = %81, %arg26 = %82) -> (vector<8x128xf32>, vector<8x128xf32>, vector<8x384xf32>, vector<8x128xf32>)  : i32 {
      %92 = arith.index_cast %arg22 : i32 to index
      %c0_61 = arith.constant 0 : index
      %c0_62 = arith.constant 0 : index
      %c0_63 = arith.constant 0 : index
      %93 = vector.load %arg17[%92, %c0_61, %c0_62, %c0_63] : memref<2x8x8x384xf32, #tpu.memory_space<vmem>>, vector<1x8x8x384xf32>
      %94 = vector.shape_cast %93 : vector<1x8x8x384xf32> to vector<8x8x384xf32>
      %95 = vector.extract_strided_slice %94 {offsets = [0, 0, 0], sizes = [8, 1, 384], strides = [1, 1, 1]} : vector<8x8x384xf32> to vector<8x1x384xf32>
      %96 = vector.shape_cast %95 : vector<8x1x384xf32> to vector<8x384xf32>
      %97 = vector.extract_strided_slice %96 {offsets = [0, 0], sizes = [8, 128], strides = [1, 1]} : vector<8x384xf32> to vector<8x128xf32>
      %98 = vector.extract_strided_slice %arg25 {offsets = [0, 0], sizes = [8, 128], strides = [1, 1]} : vector<8x384xf32> to vector<8x128xf32>
      %99 = arith.addf %97, %98 : vector<8x128xf32>
      %100 = arith.negf %99 : vector<8x128xf32>
      %101 = math.exp %100 : vector<8x128xf32>
      %cst_64 = arith.constant 1.000000e+00 : f32
      %102 = vector.broadcast %cst_64 : f32 to vector<8x128xf32>
      %103 = arith.addf %102, %101 : vector<8x128xf32>
      %104 = arith.divf %102, %103 : vector<8x128xf32>
      %105 = vector.extract_strided_slice %96 {offsets = [0, 128], sizes = [8, 128], strides = [1, 1]} : vector<8x384xf32> to vector<8x128xf32>
      %106 = vector.extract_strided_slice %arg25 {offsets = [0, 128], sizes = [8, 128], strides = [1, 1]} : vector<8x384xf32> to vector<8x128xf32>
      %107 = arith.addf %105, %106 : vector<8x128xf32>
      %108 = arith.negf %107 : vector<8x128xf32>
      %109 = math.exp %108 : vector<8x128xf32>
      %cst_65 = arith.constant 1.000000e+00 : f32
      %110 = vector.broadcast %cst_65 : f32 to vector<8x128xf32>
      %111 = arith.addf %110, %109 : vector<8x128xf32>
      %112 = arith.divf %110, %111 : vector<8x128xf32>
      %113 = vector.extract_strided_slice %96 {offsets = [0, 256], sizes = [8, 128], strides = [1, 1]} : vector<8x384xf32> to vector<8x128xf32>
      %114 = vector.extract_strided_slice %arg25 {offsets = [0, 256], sizes = [8, 128], strides = [1, 1]} : vector<8x384xf32> to vector<8x128xf32>
      %115 = arith.mulf %104, %114 : vector<8x128xf32>
      %116 = arith.addf %113, %115 : vector<8x128xf32>
      %117 = math.tanh %116 : vector<8x128xf32>
      %cst_66 = arith.constant 1.000000e+00 : f32
      %118 = vector.broadcast %cst_66 : f32 to vector<8x128xf32>
      %119 = arith.subf %118, %112 : vector<8x128xf32>
      %120 = arith.mulf %119, %117 : vector<8x128xf32>
      %121 = arith.mulf %112, %arg23 : vector<8x128xf32>
      %122 = arith.addf %120, %121 : vector<8x128xf32>
      %123 = arith.truncf %arg24 : vector<8x128xf32> to vector<8x128xbf16>
      %cst_67 = arith.constant dense<0.000000e+00> : vector<8x384xf32>
      %124 = tpu.matmul %123, %72, %cst_67 {dimension_numbers = #tpu.dot_dimension_numbers<[1], [0], [0], [1], [0, 0, 1, 1], [], []>} : vector<8x128xbf16>, vector<128x384xbf16>, vector<8x384xf32> -> vector<8x384xf32>
      %125 = arith.truncf %122 : vector<8x128xf32> to vector<8x128xbf16>
      %cst_68 = arith.constant dense<0.000000e+00> : vector<8x768xf32>
      %126 = tpu.matmul %125, %71, %cst_68 {dimension_numbers = #tpu.dot_dimension_numbers<[1], [0], [0], [1], [0, 0, 1, 1], [], []>} : vector<8x128xbf16>, vector<128x768xbf16>, vector<8x768xf32> -> vector<8x768xf32>
      %127 = arith.addf %126, %75 : vector<8x768xf32>
      %128 = vector.extract_strided_slice %127 {offsets = [0, 0], sizes = [8, 384], strides = [1, 1]} : vector<8x768xf32> to vector<8x384xf32>
      %129 = vector.extract_strided_slice %127 {offsets = [0, 384], sizes = [8, 384], strides = [1, 1]} : vector<8x768xf32> to vector<8x384xf32>
      %130 = vector.extract_strided_slice %128 {offsets = [0, 0], sizes = [8, 128], strides = [1, 1]} : vector<8x384xf32> to vector<8x128xf32>
      %131 = vector.extract_strided_slice %124 {offsets = [0, 0], sizes = [8, 128], strides = [1, 1]} : vector<8x384xf32> to vector<8x128xf32>
      %132 = arith.addf %130, %131 : vector<8x128xf32>
      %133 = arith.negf %132 : vector<8x128xf32>
      %134 = math.exp %133 : vector<8x128xf32>
      %cst_69 = arith.constant 1.000000e+00 : f32
      %135 = vector.broadcast %cst_69 : f32 to vector<8x128xf32>
      %136 = arith.addf %135, %134 : vector<8x128xf32>
      %137 = arith.divf %135, %136 : vector<8x128xf32>
      %138 = vector.extract_strided_slice %128 {offsets = [0, 128], sizes = [8, 128], strides = [1, 1]} : vector<8x384xf32> to vector<8x128xf32>
      %139 = vector.extract_strided_slice %124 {offsets = [0, 128], sizes = [8, 128], strides = [1, 1]} : vector<8x384xf32> to vector<8x128xf32>
      %140 = arith.addf %138, %139 : vector<8x128xf32>
      %141 = arith.negf %140 : vector<8x128xf32>
      %142 = math.exp %141 : vector<8x128xf32>
      %cst_70 = arith.constant 1.000000e+00 : f32
      %143 = vector.broadcast %cst_70 : f32 to vector<8x128xf32>
      %144 = arith.addf %143, %142 : vector<8x128xf32>
      %145 = arith.divf %143, %144 : vector<8x128xf32>
      %146 = vector.extract_strided_slice %128 {offsets = [0, 256], sizes = [8, 128], strides = [1, 1]} : vector<8x384xf32> to vector<8x128xf32>
      %147 = vector.extract_strided_slice %124 {offsets = [0, 256], sizes = [8, 128], strides = [1, 1]} : vector<8x384xf32> to vector<8x128xf32>
      %148 = arith.addf %147, %78 : vector<8x128xf32>
      %149 = arith.mulf %137, %148 : vector<8x128xf32>
      %150 = arith.addf %146, %149 : vector<8x128xf32>
      %151 = math.tanh %150 : vector<8x128xf32>
      %cst_71 = arith.constant 1.000000e+00 : f32
      %152 = vector.broadcast %cst_71 : f32 to vector<8x128xf32>
      %153 = arith.subf %152, %145 : vector<8x128xf32>
      %154 = arith.mulf %153, %151 : vector<8x128xf32>
      %155 = arith.mulf %145, %arg24 : vector<8x128xf32>
      %156 = arith.addf %154, %155 : vector<8x128xf32>
      %157 = arith.addf %arg26, %156 : vector<8x128xf32>
      %158 = vector.extract_strided_slice %94 {offsets = [0, 1, 0], sizes = [8, 1, 384], strides = [1, 1, 1]} : vector<8x8x384xf32> to vector<8x1x384xf32>
      %159 = vector.shape_cast %158 : vector<8x1x384xf32> to vector<8x384xf32>
      %160 = vector.extract_strided_slice %159 {offsets = [0, 0], sizes = [8, 128], strides = [1, 1]} : vector<8x384xf32> to vector<8x128xf32>
      %161 = vector.extract_strided_slice %129 {offsets = [0, 0], sizes = [8, 128], strides = [1, 1]} : vector<8x384xf32> to vector<8x128xf32>
      %162 = arith.addf %160, %161 : vector<8x128xf32>
      %163 = arith.negf %162 : vector<8x128xf32>
      %164 = math.exp %163 : vector<8x128xf32>
      %cst_72 = arith.constant 1.000000e+00 : f32
      %165 = vector.broadcast %cst_72 : f32 to vector<8x128xf32>
      %166 = arith.addf %165, %164 : vector<8x128xf32>
      %167 = arith.divf %165, %166 : vector<8x128xf32>
      %168 = vector.extract_strided_slice %159 {offsets = [0, 128], sizes = [8, 128], strides = [1, 1]} : vector<8x384xf32> to vector<8x128xf32>
      %169 = vector.extract_strided_slice %129 {offsets = [0, 128], sizes = [8, 128], strides = [1, 1]} : vector<8x384xf32> to vector<8x128xf32>
      %170 = arith.addf %168, %169 : vector<8x128xf32>
      %171 = arith.negf %170 : vector<8x128xf32>
      %172 = math.exp %171 : vector<8x128xf32>
      %cst_73 = arith.constant 1.000000e+00 : f32
      %173 = vector.broadcast %cst_73 : f32 to vector<8x128xf32>
      %174 = arith.addf %173, %172 : vector<8x128xf32>
      %175 = arith.divf %173, %174 : vector<8x128xf32>
      %176 = vector.extract_strided_slice %159 {offsets = [0, 256], sizes = [8, 128], strides = [1, 1]} : vector<8x384xf32> to vector<8x128xf32>
      %177 = vector.extract_strided_slice %129 {offsets = [0, 256], sizes = [8, 128], strides = [1, 1]} : vector<8x384xf32> to vector<8x128xf32>
      %178 = arith.mulf %167, %177 : vector<8x128xf32>
      %179 = arith.addf %176, %178 : vector<8x128xf32>
      %180 = math.tanh %179 : vector<8x128xf32>
      %cst_74 = arith.constant 1.000000e+00 : f32
      %181 = vector.broadcast %cst_74 : f32 to vector<8x128xf32>
      %182 = arith.subf %181, %175 : vector<8x128xf32>
      %183 = arith.mulf %182, %180 : vector<8x128xf32>
      %184 = arith.mulf %175, %122 : vector<8x128xf32>
      %185 = arith.addf %183, %184 : vector<8x128xf32>
      %186 = arith.truncf %156 : vector<8x128xf32> to vector<8x128xbf16>
      %cst_75 = arith.constant dense<0.000000e+00> : vector<8x384xf32>
      %187 = tpu.matmul %186, %72, %cst_75 {dimension_numbers = #tpu.dot_dimension_numbers<[1], [0], [0], [1], [0, 0, 1, 1], [], []>} : vector<8x128xbf16>, vector<128x384xbf16>, vector<8x384xf32> -> vector<8x384xf32>
      %188 = arith.truncf %185 : vector<8x128xf32> to vector<8x128xbf16>
      %cst_76 = arith.constant dense<0.000000e+00> : vector<8x768xf32>
      %189 = tpu.matmul %188, %71, %cst_76 {dimension_numbers = #tpu.dot_dimension_numbers<[1], [0], [0], [1], [0, 0, 1, 1], [], []>} : vector<8x128xbf16>, vector<128x768xbf16>, vector<8x768xf32> -> vector<8x768xf32>
      %190 = arith.addf %189, %75 : vector<8x768xf32>
      %191 = vector.extract_strided_slice %190 {offsets = [0, 0], sizes = [8, 384], strides = [1, 1]} : vector<8x768xf32> to vector<8x384xf32>
      %192 = vector.extract_strided_slice %190 {offsets = [0, 384], sizes = [8, 384], strides = [1, 1]} : vector<8x768xf32> to vector<8x384xf32>
      %193 = vector.extract_strided_slice %191 {offsets = [0, 0], sizes = [8, 128], strides = [1, 1]} : vector<8x384xf32> to vector<8x128xf32>
      %194 = vector.extract_strided_slice %187 {offsets = [0, 0], sizes = [8, 128], strides = [1, 1]} : vector<8x384xf32> to vector<8x128xf32>
      %195 = arith.addf %193, %194 : vector<8x128xf32>
      %196 = arith.negf %195 : vector<8x128xf32>
      %197 = math.exp %196 : vector<8x128xf32>
      %cst_77 = arith.constant 1.000000e+00 : f32
      %198 = vector.broadcast %cst_77 : f32 to vector<8x128xf32>
      %199 = arith.addf %198, %197 : vector<8x128xf32>
      %200 = arith.divf %198, %199 : vector<8x128xf32>
      %201 = vector.extract_strided_slice %191 {offsets = [0, 128], sizes = [8, 128], strides = [1, 1]} : vector<8x384xf32> to vector<8x128xf32>
      %202 = vector.extract_strided_slice %187 {offsets = [0, 128], sizes = [8, 128], strides = [1, 1]} : vector<8x384xf32> to vector<8x128xf32>
      %203 = arith.addf %201, %202 : vector<8x128xf32>
      %204 = arith.negf %203 : vector<8x128xf32>
      %205 = math.exp %204 : vector<8x128xf32>
      %cst_78 = arith.constant 1.000000e+00 : f32
      %206 = vector.broadcast %cst_78 : f32 to vector<8x128xf32>
      %207 = arith.addf %206, %205 : vector<8x128xf32>
      %208 = arith.divf %206, %207 : vector<8x128xf32>
      %209 = vector.extract_strided_slice %191 {offsets = [0, 256], sizes = [8, 128], strides = [1, 1]} : vector<8x384xf32> to vector<8x128xf32>
      %210 = vector.extract_strided_slice %187 {offsets = [0, 256], sizes = [8, 128], strides = [1, 1]} : vector<8x384xf32> to vector<8x128xf32>
      %211 = arith.addf %210, %78 : vector<8x128xf32>
      %212 = arith.mulf %200, %211 : vector<8x128xf32>
      %213 = arith.addf %209, %212 : vector<8x128xf32>
      %214 = math.tanh %213 : vector<8x128xf32>
      %cst_79 = arith.constant 1.000000e+00 : f32
      %215 = vector.broadcast %cst_79 : f32 to vector<8x128xf32>
      %216 = arith.subf %215, %208 : vector<8x128xf32>
      %217 = arith.mulf %216, %214 : vector<8x128xf32>
      %218 = arith.mulf %208, %156 : vector<8x128xf32>
      %219 = arith.addf %217, %218 : vector<8x128xf32>
      %220 = arith.addf %157, %219 : vector<8x128xf32>
      %221 = vector.extract_strided_slice %94 {offsets = [0, 2, 0], sizes = [8, 1, 384], strides = [1, 1, 1]} : vector<8x8x384xf32> to vector<8x1x384xf32>
      %222 = vector.shape_cast %221 : vector<8x1x384xf32> to vector<8x384xf32>
      %223 = vector.extract_strided_slice %222 {offsets = [0, 0], sizes = [8, 128], strides = [1, 1]} : vector<8x384xf32> to vector<8x128xf32>
      %224 = vector.extract_strided_slice %192 {offsets = [0, 0], sizes = [8, 128], strides = [1, 1]} : vector<8x384xf32> to vector<8x128xf32>
      %225 = arith.addf %223, %224 : vector<8x128xf32>
      %226 = arith.negf %225 : vector<8x128xf32>
      %227 = math.exp %226 : vector<8x128xf32>
      %cst_80 = arith.constant 1.000000e+00 : f32
      %228 = vector.broadcast %cst_80 : f32 to vector<8x128xf32>
      %229 = arith.addf %228, %227 : vector<8x128xf32>
      %230 = arith.divf %228, %229 : vector<8x128xf32>
      %231 = vector.extract_strided_slice %222 {offsets = [0, 128], sizes = [8, 128], strides = [1, 1]} : vector<8x384xf32> to vector<8x128xf32>
      %232 = vector.extract_strided_slice %192 {offsets = [0, 128], sizes = [8, 128], strides = [1, 1]} : vector<8x384xf32> to vector<8x128xf32>
      %233 = arith.addf %231, %232 : vector<8x128xf32>
      %234 = arith.negf %233 : vector<8x128xf32>
      %235 = math.exp %234 : vector<8x128xf32>
      %cst_81 = arith.constant 1.000000e+00 : f32
      %236 = vector.broadcast %cst_81 : f32 to vector<8x128xf32>
      %237 = arith.addf %236, %235 : vector<8x128xf32>
      %238 = arith.divf %236, %237 : vector<8x128xf32>
      %239 = vector.extract_strided_slice %222 {offsets = [0, 256], sizes = [8, 128], strides = [1, 1]} : vector<8x384xf32> to vector<8x128xf32>
      %240 = vector.extract_strided_slice %192 {offsets = [0, 256], sizes = [8, 128], strides = [1, 1]} : vector<8x384xf32> to vector<8x128xf32>
      %241 = arith.mulf %230, %240 : vector<8x128xf32>
      %242 = arith.addf %239, %241 : vector<8x128xf32>
      %243 = math.tanh %242 : vector<8x128xf32>
      %cst_82 = arith.constant 1.000000e+00 : f32
      %244 = vector.broadcast %cst_82 : f32 to vector<8x128xf32>
      %245 = arith.subf %244, %238 : vector<8x128xf32>
      %246 = arith.mulf %245, %243 : vector<8x128xf32>
      %247 = arith.mulf %238, %185 : vector<8x128xf32>
      %248 = arith.addf %246, %247 : vector<8x128xf32>
      %249 = arith.truncf %219 : vector<8x128xf32> to vector<8x128xbf16>
      %cst_83 = arith.constant dense<0.000000e+00> : vector<8x384xf32>
      %250 = tpu.matmul %249, %72, %cst_83 {dimension_numbers = #tpu.dot_dimension_numbers<[1], [0], [0], [1], [0, 0, 1, 1], [], []>} : vector<8x128xbf16>, vector<128x384xbf16>, vector<8x384xf32> -> vector<8x384xf32>
      %251 = arith.truncf %248 : vector<8x128xf32> to vector<8x128xbf16>
      %cst_84 = arith.constant dense<0.000000e+00> : vector<8x768xf32>
      %252 = tpu.matmul %251, %71, %cst_84 {dimension_numbers = #tpu.dot_dimension_numbers<[1], [0], [0], [1], [0, 0, 1, 1], [], []>} : vector<8x128xbf16>, vector<128x768xbf16>, vector<8x768xf32> -> vector<8x768xf32>
      %253 = arith.addf %252, %75 : vector<8x768xf32>
      %254 = vector.extract_strided_slice %253 {offsets = [0, 0], sizes = [8, 384], strides = [1, 1]} : vector<8x768xf32> to vector<8x384xf32>
      %255 = vector.extract_strided_slice %253 {offsets = [0, 384], sizes = [8, 384], strides = [1, 1]} : vector<8x768xf32> to vector<8x384xf32>
      %256 = vector.extract_strided_slice %254 {offsets = [0, 0], sizes = [8, 128], strides = [1, 1]} : vector<8x384xf32> to vector<8x128xf32>
      %257 = vector.extract_strided_slice %250 {offsets = [0, 0], sizes = [8, 128], strides = [1, 1]} : vector<8x384xf32> to vector<8x128xf32>
      %258 = arith.addf %256, %257 : vector<8x128xf32>
      %259 = arith.negf %258 : vector<8x128xf32>
      %260 = math.exp %259 : vector<8x128xf32>
      %cst_85 = arith.constant 1.000000e+00 : f32
      %261 = vector.broadcast %cst_85 : f32 to vector<8x128xf32>
      %262 = arith.addf %261, %260 : vector<8x128xf32>
      %263 = arith.divf %261, %262 : vector<8x128xf32>
      %264 = vector.extract_strided_slice %254 {offsets = [0, 128], sizes = [8, 128], strides = [1, 1]} : vector<8x384xf32> to vector<8x128xf32>
      %265 = vector.extract_strided_slice %250 {offsets = [0, 128], sizes = [8, 128], strides = [1, 1]} : vector<8x384xf32> to vector<8x128xf32>
      %266 = arith.addf %264, %265 : vector<8x128xf32>
      %267 = arith.negf %266 : vector<8x128xf32>
      %268 = math.exp %267 : vector<8x128xf32>
      %cst_86 = arith.constant 1.000000e+00 : f32
      %269 = vector.broadcast %cst_86 : f32 to vector<8x128xf32>
      %270 = arith.addf %269, %268 : vector<8x128xf32>
      %271 = arith.divf %269, %270 : vector<8x128xf32>
      %272 = vector.extract_strided_slice %254 {offsets = [0, 256], sizes = [8, 128], strides = [1, 1]} : vector<8x384xf32> to vector<8x128xf32>
      %273 = vector.extract_strided_slice %250 {offsets = [0, 256], sizes = [8, 128], strides = [1, 1]} : vector<8x384xf32> to vector<8x128xf32>
      %274 = arith.addf %273, %78 : vector<8x128xf32>
      %275 = arith.mulf %263, %274 : vector<8x128xf32>
      %276 = arith.addf %272, %275 : vector<8x128xf32>
      %277 = math.tanh %276 : vector<8x128xf32>
      %cst_87 = arith.constant 1.000000e+00 : f32
      %278 = vector.broadcast %cst_87 : f32 to vector<8x128xf32>
      %279 = arith.subf %278, %271 : vector<8x128xf32>
      %280 = arith.mulf %279, %277 : vector<8x128xf32>
      %281 = arith.mulf %271, %219 : vector<8x128xf32>
      %282 = arith.addf %280, %281 : vector<8x128xf32>
      %283 = arith.addf %220, %282 : vector<8x128xf32>
      %284 = vector.extract_strided_slice %94 {offsets = [0, 3, 0], sizes = [8, 1, 384], strides = [1, 1, 1]} : vector<8x8x384xf32> to vector<8x1x384xf32>
      %285 = vector.shape_cast %284 : vector<8x1x384xf32> to vector<8x384xf32>
      %286 = vector.extract_strided_slice %285 {offsets = [0, 0], sizes = [8, 128], strides = [1, 1]} : vector<8x384xf32> to vector<8x128xf32>
      %287 = vector.extract_strided_slice %255 {offsets = [0, 0], sizes = [8, 128], strides = [1, 1]} : vector<8x384xf32> to vector<8x128xf32>
      %288 = arith.addf %286, %287 : vector<8x128xf32>
      %289 = arith.negf %288 : vector<8x128xf32>
      %290 = math.exp %289 : vector<8x128xf32>
      %cst_88 = arith.constant 1.000000e+00 : f32
      %291 = vector.broadcast %cst_88 : f32 to vector<8x128xf32>
      %292 = arith.addf %291, %290 : vector<8x128xf32>
      %293 = arith.divf %291, %292 : vector<8x128xf32>
      %294 = vector.extract_strided_slice %285 {offsets = [0, 128], sizes = [8, 128], strides = [1, 1]} : vector<8x384xf32> to vector<8x128xf32>
      %295 = vector.extract_strided_slice %255 {offsets = [0, 128], sizes = [8, 128], strides = [1, 1]} : vector<8x384xf32> to vector<8x128xf32>
      %296 = arith.addf %294, %295 : vector<8x128xf32>
      %297 = arith.negf %296 : vector<8x128xf32>
      %298 = math.exp %297 : vector<8x128xf32>
      %cst_89 = arith.constant 1.000000e+00 : f32
      %299 = vector.broadcast %cst_89 : f32 to vector<8x128xf32>
      %300 = arith.addf %299, %298 : vector<8x128xf32>
      %301 = arith.divf %299, %300 : vector<8x128xf32>
      %302 = vector.extract_strided_slice %285 {offsets = [0, 256], sizes = [8, 128], strides = [1, 1]} : vector<8x384xf32> to vector<8x128xf32>
      %303 = vector.extract_strided_slice %255 {offsets = [0, 256], sizes = [8, 128], strides = [1, 1]} : vector<8x384xf32> to vector<8x128xf32>
      %304 = arith.mulf %293, %303 : vector<8x128xf32>
      %305 = arith.addf %302, %304 : vector<8x128xf32>
      %306 = math.tanh %305 : vector<8x128xf32>
      %cst_90 = arith.constant 1.000000e+00 : f32
      %307 = vector.broadcast %cst_90 : f32 to vector<8x128xf32>
      %308 = arith.subf %307, %301 : vector<8x128xf32>
      %309 = arith.mulf %308, %306 : vector<8x128xf32>
      %310 = arith.mulf %301, %248 : vector<8x128xf32>
      %311 = arith.addf %309, %310 : vector<8x128xf32>
      %312 = arith.truncf %282 : vector<8x128xf32> to vector<8x128xbf16>
      %cst_91 = arith.constant dense<0.000000e+00> : vector<8x384xf32>
      %313 = tpu.matmul %312, %72, %cst_91 {dimension_numbers = #tpu.dot_dimension_numbers<[1], [0], [0], [1], [0, 0, 1, 1], [], []>} : vector<8x128xbf16>, vector<128x384xbf16>, vector<8x384xf32> -> vector<8x384xf32>
      %314 = arith.truncf %311 : vector<8x128xf32> to vector<8x128xbf16>
      %cst_92 = arith.constant dense<0.000000e+00> : vector<8x768xf32>
      %315 = tpu.matmul %314, %71, %cst_92 {dimension_numbers = #tpu.dot_dimension_numbers<[1], [0], [0], [1], [0, 0, 1, 1], [], []>} : vector<8x128xbf16>, vector<128x768xbf16>, vector<8x768xf32> -> vector<8x768xf32>
      %316 = arith.addf %315, %75 : vector<8x768xf32>
      %317 = vector.extract_strided_slice %316 {offsets = [0, 0], sizes = [8, 384], strides = [1, 1]} : vector<8x768xf32> to vector<8x384xf32>
      %318 = vector.extract_strided_slice %316 {offsets = [0, 384], sizes = [8, 384], strides = [1, 1]} : vector<8x768xf32> to vector<8x384xf32>
      %319 = vector.extract_strided_slice %317 {offsets = [0, 0], sizes = [8, 128], strides = [1, 1]} : vector<8x384xf32> to vector<8x128xf32>
      %320 = vector.extract_strided_slice %313 {offsets = [0, 0], sizes = [8, 128], strides = [1, 1]} : vector<8x384xf32> to vector<8x128xf32>
      %321 = arith.addf %319, %320 : vector<8x128xf32>
      %322 = arith.negf %321 : vector<8x128xf32>
      %323 = math.exp %322 : vector<8x128xf32>
      %cst_93 = arith.constant 1.000000e+00 : f32
      %324 = vector.broadcast %cst_93 : f32 to vector<8x128xf32>
      %325 = arith.addf %324, %323 : vector<8x128xf32>
      %326 = arith.divf %324, %325 : vector<8x128xf32>
      %327 = vector.extract_strided_slice %317 {offsets = [0, 128], sizes = [8, 128], strides = [1, 1]} : vector<8x384xf32> to vector<8x128xf32>
      %328 = vector.extract_strided_slice %313 {offsets = [0, 128], sizes = [8, 128], strides = [1, 1]} : vector<8x384xf32> to vector<8x128xf32>
      %329 = arith.addf %327, %328 : vector<8x128xf32>
      %330 = arith.negf %329 : vector<8x128xf32>
      %331 = math.exp %330 : vector<8x128xf32>
      %cst_94 = arith.constant 1.000000e+00 : f32
      %332 = vector.broadcast %cst_94 : f32 to vector<8x128xf32>
      %333 = arith.addf %332, %331 : vector<8x128xf32>
      %334 = arith.divf %332, %333 : vector<8x128xf32>
      %335 = vector.extract_strided_slice %317 {offsets = [0, 256], sizes = [8, 128], strides = [1, 1]} : vector<8x384xf32> to vector<8x128xf32>
      %336 = vector.extract_strided_slice %313 {offsets = [0, 256], sizes = [8, 128], strides = [1, 1]} : vector<8x384xf32> to vector<8x128xf32>
      %337 = arith.addf %336, %78 : vector<8x128xf32>
      %338 = arith.mulf %326, %337 : vector<8x128xf32>
      %339 = arith.addf %335, %338 : vector<8x128xf32>
      %340 = math.tanh %339 : vector<8x128xf32>
      %cst_95 = arith.constant 1.000000e+00 : f32
      %341 = vector.broadcast %cst_95 : f32 to vector<8x128xf32>
      %342 = arith.subf %341, %334 : vector<8x128xf32>
      %343 = arith.mulf %342, %340 : vector<8x128xf32>
      %344 = arith.mulf %334, %282 : vector<8x128xf32>
      %345 = arith.addf %343, %344 : vector<8x128xf32>
      %346 = arith.addf %283, %345 : vector<8x128xf32>
      %347 = vector.extract_strided_slice %94 {offsets = [0, 4, 0], sizes = [8, 1, 384], strides = [1, 1, 1]} : vector<8x8x384xf32> to vector<8x1x384xf32>
      %348 = vector.shape_cast %347 : vector<8x1x384xf32> to vector<8x384xf32>
      %349 = vector.extract_strided_slice %348 {offsets = [0, 0], sizes = [8, 128], strides = [1, 1]} : vector<8x384xf32> to vector<8x128xf32>
      %350 = vector.extract_strided_slice %318 {offsets = [0, 0], sizes = [8, 128], strides = [1, 1]} : vector<8x384xf32> to vector<8x128xf32>
      %351 = arith.addf %349, %350 : vector<8x128xf32>
      %352 = arith.negf %351 : vector<8x128xf32>
      %353 = math.exp %352 : vector<8x128xf32>
      %cst_96 = arith.constant 1.000000e+00 : f32
      %354 = vector.broadcast %cst_96 : f32 to vector<8x128xf32>
      %355 = arith.addf %354, %353 : vector<8x128xf32>
      %356 = arith.divf %354, %355 : vector<8x128xf32>
      %357 = vector.extract_strided_slice %348 {offsets = [0, 128], sizes = [8, 128], strides = [1, 1]} : vector<8x384xf32> to vector<8x128xf32>
      %358 = vector.extract_strided_slice %318 {offsets = [0, 128], sizes = [8, 128], strides = [1, 1]} : vector<8x384xf32> to vector<8x128xf32>
      %359 = arith.addf %357, %358 : vector<8x128xf32>
      %360 = arith.negf %359 : vector<8x128xf32>
      %361 = math.exp %360 : vector<8x128xf32>
      %cst_97 = arith.constant 1.000000e+00 : f32
      %362 = vector.broadcast %cst_97 : f32 to vector<8x128xf32>
      %363 = arith.addf %362, %361 : vector<8x128xf32>
      %364 = arith.divf %362, %363 : vector<8x128xf32>
      %365 = vector.extract_strided_slice %348 {offsets = [0, 256], sizes = [8, 128], strides = [1, 1]} : vector<8x384xf32> to vector<8x128xf32>
      %366 = vector.extract_strided_slice %318 {offsets = [0, 256], sizes = [8, 128], strides = [1, 1]} : vector<8x384xf32> to vector<8x128xf32>
      %367 = arith.mulf %356, %366 : vector<8x128xf32>
      %368 = arith.addf %365, %367 : vector<8x128xf32>
      %369 = math.tanh %368 : vector<8x128xf32>
      %cst_98 = arith.constant 1.000000e+00 : f32
      %370 = vector.broadcast %cst_98 : f32 to vector<8x128xf32>
      %371 = arith.subf %370, %364 : vector<8x128xf32>
      %372 = arith.mulf %371, %369 : vector<8x128xf32>
      %373 = arith.mulf %364, %311 : vector<8x128xf32>
      %374 = arith.addf %372, %373 : vector<8x128xf32>
      %375 = arith.truncf %345 : vector<8x128xf32> to vector<8x128xbf16>
      %cst_99 = arith.constant dense<0.000000e+00> : vector<8x384xf32>
      %376 = tpu.matmul %375, %72, %cst_99 {dimension_numbers = #tpu.dot_dimension_numbers<[1], [0], [0], [1], [0, 0, 1, 1], [], []>} : vector<8x128xbf16>, vector<128x384xbf16>, vector<8x384xf32> -> vector<8x384xf32>
      %377 = arith.truncf %374 : vector<8x128xf32> to vector<8x128xbf16>
      %cst_100 = arith.constant dense<0.000000e+00> : vector<8x768xf32>
      %378 = tpu.matmul %377, %71, %cst_100 {dimension_numbers = #tpu.dot_dimension_numbers<[1], [0], [0], [1], [0, 0, 1, 1], [], []>} : vector<8x128xbf16>, vector<128x768xbf16>, vector<8x768xf32> -> vector<8x768xf32>
      %379 = arith.addf %378, %75 : vector<8x768xf32>
      %380 = vector.extract_strided_slice %379 {offsets = [0, 0], sizes = [8, 384], strides = [1, 1]} : vector<8x768xf32> to vector<8x384xf32>
      %381 = vector.extract_strided_slice %379 {offsets = [0, 384], sizes = [8, 384], strides = [1, 1]} : vector<8x768xf32> to vector<8x384xf32>
      %382 = vector.extract_strided_slice %380 {offsets = [0, 0], sizes = [8, 128], strides = [1, 1]} : vector<8x384xf32> to vector<8x128xf32>
      %383 = vector.extract_strided_slice %376 {offsets = [0, 0], sizes = [8, 128], strides = [1, 1]} : vector<8x384xf32> to vector<8x128xf32>
      %384 = arith.addf %382, %383 : vector<8x128xf32>
      %385 = arith.negf %384 : vector<8x128xf32>
      %386 = math.exp %385 : vector<8x128xf32>
      %cst_101 = arith.constant 1.000000e+00 : f32
      %387 = vector.broadcast %cst_101 : f32 to vector<8x128xf32>
      %388 = arith.addf %387, %386 : vector<8x128xf32>
      %389 = arith.divf %387, %388 : vector<8x128xf32>
      %390 = vector.extract_strided_slice %380 {offsets = [0, 128], sizes = [8, 128], strides = [1, 1]} : vector<8x384xf32> to vector<8x128xf32>
      %391 = vector.extract_strided_slice %376 {offsets = [0, 128], sizes = [8, 128], strides = [1, 1]} : vector<8x384xf32> to vector<8x128xf32>
      %392 = arith.addf %390, %391 : vector<8x128xf32>
      %393 = arith.negf %392 : vector<8x128xf32>
      %394 = math.exp %393 : vector<8x128xf32>
      %cst_102 = arith.constant 1.000000e+00 : f32
      %395 = vector.broadcast %cst_102 : f32 to vector<8x128xf32>
      %396 = arith.addf %395, %394 : vector<8x128xf32>
      %397 = arith.divf %395, %396 : vector<8x128xf32>
      %398 = vector.extract_strided_slice %380 {offsets = [0, 256], sizes = [8, 128], strides = [1, 1]} : vector<8x384xf32> to vector<8x128xf32>
      %399 = vector.extract_strided_slice %376 {offsets = [0, 256], sizes = [8, 128], strides = [1, 1]} : vector<8x384xf32> to vector<8x128xf32>
      %400 = arith.addf %399, %78 : vector<8x128xf32>
      %401 = arith.mulf %389, %400 : vector<8x128xf32>
      %402 = arith.addf %398, %401 : vector<8x128xf32>
      %403 = math.tanh %402 : vector<8x128xf32>
      %cst_103 = arith.constant 1.000000e+00 : f32
      %404 = vector.broadcast %cst_103 : f32 to vector<8x128xf32>
      %405 = arith.subf %404, %397 : vector<8x128xf32>
      %406 = arith.mulf %405, %403 : vector<8x128xf32>
      %407 = arith.mulf %397, %345 : vector<8x128xf32>
      %408 = arith.addf %406, %407 : vector<8x128xf32>
      %409 = arith.addf %346, %408 : vector<8x128xf32>
      %410 = vector.extract_strided_slice %94 {offsets = [0, 5, 0], sizes = [8, 1, 384], strides = [1, 1, 1]} : vector<8x8x384xf32> to vector<8x1x384xf32>
      %411 = vector.shape_cast %410 : vector<8x1x384xf32> to vector<8x384xf32>
      %412 = vector.extract_strided_slice %411 {offsets = [0, 0], sizes = [8, 128], strides = [1, 1]} : vector<8x384xf32> to vector<8x128xf32>
      %413 = vector.extract_strided_slice %381 {offsets = [0, 0], sizes = [8, 128], strides = [1, 1]} : vector<8x384xf32> to vector<8x128xf32>
      %414 = arith.addf %412, %413 : vector<8x128xf32>
      %415 = arith.negf %414 : vector<8x128xf32>
      %416 = math.exp %415 : vector<8x128xf32>
      %cst_104 = arith.constant 1.000000e+00 : f32
      %417 = vector.broadcast %cst_104 : f32 to vector<8x128xf32>
      %418 = arith.addf %417, %416 : vector<8x128xf32>
      %419 = arith.divf %417, %418 : vector<8x128xf32>
      %420 = vector.extract_strided_slice %411 {offsets = [0, 128], sizes = [8, 128], strides = [1, 1]} : vector<8x384xf32> to vector<8x128xf32>
      %421 = vector.extract_strided_slice %381 {offsets = [0, 128], sizes = [8, 128], strides = [1, 1]} : vector<8x384xf32> to vector<8x128xf32>
      %422 = arith.addf %420, %421 : vector<8x128xf32>
      %423 = arith.negf %422 : vector<8x128xf32>
      %424 = math.exp %423 : vector<8x128xf32>
      %cst_105 = arith.constant 1.000000e+00 : f32
      %425 = vector.broadcast %cst_105 : f32 to vector<8x128xf32>
      %426 = arith.addf %425, %424 : vector<8x128xf32>
      %427 = arith.divf %425, %426 : vector<8x128xf32>
      %428 = vector.extract_strided_slice %411 {offsets = [0, 256], sizes = [8, 128], strides = [1, 1]} : vector<8x384xf32> to vector<8x128xf32>
      %429 = vector.extract_strided_slice %381 {offsets = [0, 256], sizes = [8, 128], strides = [1, 1]} : vector<8x384xf32> to vector<8x128xf32>
      %430 = arith.mulf %419, %429 : vector<8x128xf32>
      %431 = arith.addf %428, %430 : vector<8x128xf32>
      %432 = math.tanh %431 : vector<8x128xf32>
      %cst_106 = arith.constant 1.000000e+00 : f32
      %433 = vector.broadcast %cst_106 : f32 to vector<8x128xf32>
      %434 = arith.subf %433, %427 : vector<8x128xf32>
      %435 = arith.mulf %434, %432 : vector<8x128xf32>
      %436 = arith.mulf %427, %374 : vector<8x128xf32>
      %437 = arith.addf %435, %436 : vector<8x128xf32>
      %438 = arith.truncf %408 : vector<8x128xf32> to vector<8x128xbf16>
      %cst_107 = arith.constant dense<0.000000e+00> : vector<8x384xf32>
      %439 = tpu.matmul %438, %72, %cst_107 {dimension_numbers = #tpu.dot_dimension_numbers<[1], [0], [0], [1], [0, 0, 1, 1], [], []>} : vector<8x128xbf16>, vector<128x384xbf16>, vector<8x384xf32> -> vector<8x384xf32>
      %440 = arith.truncf %437 : vector<8x128xf32> to vector<8x128xbf16>
      %cst_108 = arith.constant dense<0.000000e+00> : vector<8x768xf32>
      %441 = tpu.matmul %440, %71, %cst_108 {dimension_numbers = #tpu.dot_dimension_numbers<[1], [0], [0], [1], [0, 0, 1, 1], [], []>} : vector<8x128xbf16>, vector<128x768xbf16>, vector<8x768xf32> -> vector<8x768xf32>
      %442 = arith.addf %441, %75 : vector<8x768xf32>
      %443 = vector.extract_strided_slice %442 {offsets = [0, 0], sizes = [8, 384], strides = [1, 1]} : vector<8x768xf32> to vector<8x384xf32>
      %444 = vector.extract_strided_slice %442 {offsets = [0, 384], sizes = [8, 384], strides = [1, 1]} : vector<8x768xf32> to vector<8x384xf32>
      %445 = vector.extract_strided_slice %443 {offsets = [0, 0], sizes = [8, 128], strides = [1, 1]} : vector<8x384xf32> to vector<8x128xf32>
      %446 = vector.extract_strided_slice %439 {offsets = [0, 0], sizes = [8, 128], strides = [1, 1]} : vector<8x384xf32> to vector<8x128xf32>
      %447 = arith.addf %445, %446 : vector<8x128xf32>
      %448 = arith.negf %447 : vector<8x128xf32>
      %449 = math.exp %448 : vector<8x128xf32>
      %cst_109 = arith.constant 1.000000e+00 : f32
      %450 = vector.broadcast %cst_109 : f32 to vector<8x128xf32>
      %451 = arith.addf %450, %449 : vector<8x128xf32>
      %452 = arith.divf %450, %451 : vector<8x128xf32>
      %453 = vector.extract_strided_slice %443 {offsets = [0, 128], sizes = [8, 128], strides = [1, 1]} : vector<8x384xf32> to vector<8x128xf32>
      %454 = vector.extract_strided_slice %439 {offsets = [0, 128], sizes = [8, 128], strides = [1, 1]} : vector<8x384xf32> to vector<8x128xf32>
      %455 = arith.addf %453, %454 : vector<8x128xf32>
      %456 = arith.negf %455 : vector<8x128xf32>
      %457 = math.exp %456 : vector<8x128xf32>
      %cst_110 = arith.constant 1.000000e+00 : f32
      %458 = vector.broadcast %cst_110 : f32 to vector<8x128xf32>
      %459 = arith.addf %458, %457 : vector<8x128xf32>
      %460 = arith.divf %458, %459 : vector<8x128xf32>
      %461 = vector.extract_strided_slice %443 {offsets = [0, 256], sizes = [8, 128], strides = [1, 1]} : vector<8x384xf32> to vector<8x128xf32>
      %462 = vector.extract_strided_slice %439 {offsets = [0, 256], sizes = [8, 128], strides = [1, 1]} : vector<8x384xf32> to vector<8x128xf32>
      %463 = arith.addf %462, %78 : vector<8x128xf32>
      %464 = arith.mulf %452, %463 : vector<8x128xf32>
      %465 = arith.addf %461, %464 : vector<8x128xf32>
      %466 = math.tanh %465 : vector<8x128xf32>
      %cst_111 = arith.constant 1.000000e+00 : f32
      %467 = vector.broadcast %cst_111 : f32 to vector<8x128xf32>
      %468 = arith.subf %467, %460 : vector<8x128xf32>
      %469 = arith.mulf %468, %466 : vector<8x128xf32>
      %470 = arith.mulf %460, %408 : vector<8x128xf32>
      %471 = arith.addf %469, %470 : vector<8x128xf32>
      %472 = arith.addf %409, %471 : vector<8x128xf32>
      %473 = vector.extract_strided_slice %94 {offsets = [0, 6, 0], sizes = [8, 1, 384], strides = [1, 1, 1]} : vector<8x8x384xf32> to vector<8x1x384xf32>
      %474 = vector.shape_cast %473 : vector<8x1x384xf32> to vector<8x384xf32>
      %475 = vector.extract_strided_slice %474 {offsets = [0, 0], sizes = [8, 128], strides = [1, 1]} : vector<8x384xf32> to vector<8x128xf32>
      %476 = vector.extract_strided_slice %444 {offsets = [0, 0], sizes = [8, 128], strides = [1, 1]} : vector<8x384xf32> to vector<8x128xf32>
      %477 = arith.addf %475, %476 : vector<8x128xf32>
      %478 = arith.negf %477 : vector<8x128xf32>
      %479 = math.exp %478 : vector<8x128xf32>
      %cst_112 = arith.constant 1.000000e+00 : f32
      %480 = vector.broadcast %cst_112 : f32 to vector<8x128xf32>
      %481 = arith.addf %480, %479 : vector<8x128xf32>
      %482 = arith.divf %480, %481 : vector<8x128xf32>
      %483 = vector.extract_strided_slice %474 {offsets = [0, 128], sizes = [8, 128], strides = [1, 1]} : vector<8x384xf32> to vector<8x128xf32>
      %484 = vector.extract_strided_slice %444 {offsets = [0, 128], sizes = [8, 128], strides = [1, 1]} : vector<8x384xf32> to vector<8x128xf32>
      %485 = arith.addf %483, %484 : vector<8x128xf32>
      %486 = arith.negf %485 : vector<8x128xf32>
      %487 = math.exp %486 : vector<8x128xf32>
      %cst_113 = arith.constant 1.000000e+00 : f32
      %488 = vector.broadcast %cst_113 : f32 to vector<8x128xf32>
      %489 = arith.addf %488, %487 : vector<8x128xf32>
      %490 = arith.divf %488, %489 : vector<8x128xf32>
      %491 = vector.extract_strided_slice %474 {offsets = [0, 256], sizes = [8, 128], strides = [1, 1]} : vector<8x384xf32> to vector<8x128xf32>
      %492 = vector.extract_strided_slice %444 {offsets = [0, 256], sizes = [8, 128], strides = [1, 1]} : vector<8x384xf32> to vector<8x128xf32>
      %493 = arith.mulf %482, %492 : vector<8x128xf32>
      %494 = arith.addf %491, %493 : vector<8x128xf32>
      %495 = math.tanh %494 : vector<8x128xf32>
      %cst_114 = arith.constant 1.000000e+00 : f32
      %496 = vector.broadcast %cst_114 : f32 to vector<8x128xf32>
      %497 = arith.subf %496, %490 : vector<8x128xf32>
      %498 = arith.mulf %497, %495 : vector<8x128xf32>
      %499 = arith.mulf %490, %437 : vector<8x128xf32>
      %500 = arith.addf %498, %499 : vector<8x128xf32>
      %501 = arith.truncf %471 : vector<8x128xf32> to vector<8x128xbf16>
      %cst_115 = arith.constant dense<0.000000e+00> : vector<8x384xf32>
      %502 = tpu.matmul %501, %72, %cst_115 {dimension_numbers = #tpu.dot_dimension_numbers<[1], [0], [0], [1], [0, 0, 1, 1], [], []>} : vector<8x128xbf16>, vector<128x384xbf16>, vector<8x384xf32> -> vector<8x384xf32>
      %503 = arith.truncf %500 : vector<8x128xf32> to vector<8x128xbf16>
      %cst_116 = arith.constant dense<0.000000e+00> : vector<8x768xf32>
      %504 = tpu.matmul %503, %71, %cst_116 {dimension_numbers = #tpu.dot_dimension_numbers<[1], [0], [0], [1], [0, 0, 1, 1], [], []>} : vector<8x128xbf16>, vector<128x768xbf16>, vector<8x768xf32> -> vector<8x768xf32>
      %505 = arith.addf %504, %75 : vector<8x768xf32>
      %506 = vector.extract_strided_slice %505 {offsets = [0, 0], sizes = [8, 384], strides = [1, 1]} : vector<8x768xf32> to vector<8x384xf32>
      %507 = vector.extract_strided_slice %505 {offsets = [0, 384], sizes = [8, 384], strides = [1, 1]} : vector<8x768xf32> to vector<8x384xf32>
      %508 = vector.extract_strided_slice %506 {offsets = [0, 0], sizes = [8, 128], strides = [1, 1]} : vector<8x384xf32> to vector<8x128xf32>
      %509 = vector.extract_strided_slice %502 {offsets = [0, 0], sizes = [8, 128], strides = [1, 1]} : vector<8x384xf32> to vector<8x128xf32>
      %510 = arith.addf %508, %509 : vector<8x128xf32>
      %511 = arith.negf %510 : vector<8x128xf32>
      %512 = math.exp %511 : vector<8x128xf32>
      %cst_117 = arith.constant 1.000000e+00 : f32
      %513 = vector.broadcast %cst_117 : f32 to vector<8x128xf32>
      %514 = arith.addf %513, %512 : vector<8x128xf32>
      %515 = arith.divf %513, %514 : vector<8x128xf32>
      %516 = vector.extract_strided_slice %506 {offsets = [0, 128], sizes = [8, 128], strides = [1, 1]} : vector<8x384xf32> to vector<8x128xf32>
      %517 = vector.extract_strided_slice %502 {offsets = [0, 128], sizes = [8, 128], strides = [1, 1]} : vector<8x384xf32> to vector<8x128xf32>
      %518 = arith.addf %516, %517 : vector<8x128xf32>
      %519 = arith.negf %518 : vector<8x128xf32>
      %520 = math.exp %519 : vector<8x128xf32>
      %cst_118 = arith.constant 1.000000e+00 : f32
      %521 = vector.broadcast %cst_118 : f32 to vector<8x128xf32>
      %522 = arith.addf %521, %520 : vector<8x128xf32>
      %523 = arith.divf %521, %522 : vector<8x128xf32>
      %524 = vector.extract_strided_slice %506 {offsets = [0, 256], sizes = [8, 128], strides = [1, 1]} : vector<8x384xf32> to vector<8x128xf32>
      %525 = vector.extract_strided_slice %502 {offsets = [0, 256], sizes = [8, 128], strides = [1, 1]} : vector<8x384xf32> to vector<8x128xf32>
      %526 = arith.addf %525, %78 : vector<8x128xf32>
      %527 = arith.mulf %515, %526 : vector<8x128xf32>
      %528 = arith.addf %524, %527 : vector<8x128xf32>
      %529 = math.tanh %528 : vector<8x128xf32>
      %cst_119 = arith.constant 1.000000e+00 : f32
      %530 = vector.broadcast %cst_119 : f32 to vector<8x128xf32>
      %531 = arith.subf %530, %523 : vector<8x128xf32>
      %532 = arith.mulf %531, %529 : vector<8x128xf32>
      %533 = arith.mulf %523, %471 : vector<8x128xf32>
      %534 = arith.addf %532, %533 : vector<8x128xf32>
      %535 = arith.addf %472, %534 : vector<8x128xf32>
      %536 = vector.extract_strided_slice %94 {offsets = [0, 7, 0], sizes = [8, 1, 384], strides = [1, 1, 1]} : vector<8x8x384xf32> to vector<8x1x384xf32>
      %537 = vector.shape_cast %536 : vector<8x1x384xf32> to vector<8x384xf32>
      %538 = vector.extract_strided_slice %537 {offsets = [0, 0], sizes = [8, 128], strides = [1, 1]} : vector<8x384xf32> to vector<8x128xf32>
      %539 = vector.extract_strided_slice %507 {offsets = [0, 0], sizes = [8, 128], strides = [1, 1]} : vector<8x384xf32> to vector<8x128xf32>
      %540 = arith.addf %538, %539 : vector<8x128xf32>
      %541 = arith.negf %540 : vector<8x128xf32>
      %542 = math.exp %541 : vector<8x128xf32>
      %cst_120 = arith.constant 1.000000e+00 : f32
      %543 = vector.broadcast %cst_120 : f32 to vector<8x128xf32>
      %544 = arith.addf %543, %542 : vector<8x128xf32>
      %545 = arith.divf %543, %544 : vector<8x128xf32>
      %546 = vector.extract_strided_slice %537 {offsets = [0, 128], sizes = [8, 128], strides = [1, 1]} : vector<8x384xf32> to vector<8x128xf32>
      %547 = vector.extract_strided_slice %507 {offsets = [0, 128], sizes = [8, 128], strides = [1, 1]} : vector<8x384xf32> to vector<8x128xf32>
      %548 = arith.addf %546, %547 : vector<8x128xf32>
      %549 = arith.negf %548 : vector<8x128xf32>
      %550 = math.exp %549 : vector<8x128xf32>
      %cst_121 = arith.constant 1.000000e+00 : f32
      %551 = vector.broadcast %cst_121 : f32 to vector<8x128xf32>
      %552 = arith.addf %551, %550 : vector<8x128xf32>
      %553 = arith.divf %551, %552 : vector<8x128xf32>
      %554 = vector.extract_strided_slice %537 {offsets = [0, 256], sizes = [8, 128], strides = [1, 1]} : vector<8x384xf32> to vector<8x128xf32>
      %555 = vector.extract_strided_slice %507 {offsets = [0, 256], sizes = [8, 128], strides = [1, 1]} : vector<8x384xf32> to vector<8x128xf32>
      %556 = arith.mulf %545, %555 : vector<8x128xf32>
      %557 = arith.addf %554, %556 : vector<8x128xf32>
      %558 = math.tanh %557 : vector<8x128xf32>
      %cst_122 = arith.constant 1.000000e+00 : f32
      %559 = vector.broadcast %cst_122 : f32 to vector<8x128xf32>
      %560 = arith.subf %559, %553 : vector<8x128xf32>
      %561 = arith.mulf %560, %558 : vector<8x128xf32>
      %562 = arith.mulf %553, %500 : vector<8x128xf32>
      %563 = arith.addf %561, %562 : vector<8x128xf32>
      %564 = arith.truncf %534 : vector<8x128xf32> to vector<8x128xbf16>
      %cst_123 = arith.constant dense<0.000000e+00> : vector<8x384xf32>
      %565 = tpu.matmul %564, %72, %cst_123 {dimension_numbers = #tpu.dot_dimension_numbers<[1], [0], [0], [1], [0, 0, 1, 1], [], []>} : vector<8x128xbf16>, vector<128x384xbf16>, vector<8x384xf32> -> vector<8x384xf32>
      %566 = arith.truncf %563 : vector<8x128xf32> to vector<8x128xbf16>
      %cst_124 = arith.constant dense<0.000000e+00> : vector<8x768xf32>
      %567 = tpu.matmul %566, %71, %cst_124 {dimension_numbers = #tpu.dot_dimension_numbers<[1], [0], [0], [1], [0, 0, 1, 1], [], []>} : vector<8x128xbf16>, vector<128x768xbf16>, vector<8x768xf32> -> vector<8x768xf32>
      %568 = arith.addf %567, %75 : vector<8x768xf32>
      %569 = vector.extract_strided_slice %568 {offsets = [0, 0], sizes = [8, 384], strides = [1, 1]} : vector<8x768xf32> to vector<8x384xf32>
      %570 = vector.extract_strided_slice %568 {offsets = [0, 384], sizes = [8, 384], strides = [1, 1]} : vector<8x768xf32> to vector<8x384xf32>
      %571 = vector.extract_strided_slice %569 {offsets = [0, 0], sizes = [8, 128], strides = [1, 1]} : vector<8x384xf32> to vector<8x128xf32>
      %572 = vector.extract_strided_slice %565 {offsets = [0, 0], sizes = [8, 128], strides = [1, 1]} : vector<8x384xf32> to vector<8x128xf32>
      %573 = arith.addf %571, %572 : vector<8x128xf32>
      %574 = arith.negf %573 : vector<8x128xf32>
      %575 = math.exp %574 : vector<8x128xf32>
      %cst_125 = arith.constant 1.000000e+00 : f32
      %576 = vector.broadcast %cst_125 : f32 to vector<8x128xf32>
      %577 = arith.addf %576, %575 : vector<8x128xf32>
      %578 = arith.divf %576, %577 : vector<8x128xf32>
      %579 = vector.extract_strided_slice %569 {offsets = [0, 128], sizes = [8, 128], strides = [1, 1]} : vector<8x384xf32> to vector<8x128xf32>
      %580 = vector.extract_strided_slice %565 {offsets = [0, 128], sizes = [8, 128], strides = [1, 1]} : vector<8x384xf32> to vector<8x128xf32>
      %581 = arith.addf %579, %580 : vector<8x128xf32>
      %582 = arith.negf %581 : vector<8x128xf32>
      %583 = math.exp %582 : vector<8x128xf32>
      %cst_126 = arith.constant 1.000000e+00 : f32
      %584 = vector.broadcast %cst_126 : f32 to vector<8x128xf32>
      %585 = arith.addf %584, %583 : vector<8x128xf32>
      %586 = arith.divf %584, %585 : vector<8x128xf32>
      %587 = vector.extract_strided_slice %569 {offsets = [0, 256], sizes = [8, 128], strides = [1, 1]} : vector<8x384xf32> to vector<8x128xf32>
      %588 = vector.extract_strided_slice %565 {offsets = [0, 256], sizes = [8, 128], strides = [1, 1]} : vector<8x384xf32> to vector<8x128xf32>
      %589 = arith.addf %588, %78 : vector<8x128xf32>
      %590 = arith.mulf %578, %589 : vector<8x128xf32>
      %591 = arith.addf %587, %590 : vector<8x128xf32>
      %592 = math.tanh %591 : vector<8x128xf32>
      %cst_127 = arith.constant 1.000000e+00 : f32
      %593 = vector.broadcast %cst_127 : f32 to vector<8x128xf32>
      %594 = arith.subf %593, %586 : vector<8x128xf32>
      %595 = arith.mulf %594, %592 : vector<8x128xf32>
      %596 = arith.mulf %586, %534 : vector<8x128xf32>
      %597 = arith.addf %595, %596 : vector<8x128xf32>
      %598 = arith.addf %535, %597 : vector<8x128xf32>
      scf.yield %563, %597, %570, %598 : vector<8x128xf32>, vector<8x128xf32>, vector<8x384xf32>, vector<8x128xf32>
    }
    %c2_i32_50 = arith.constant 2 : i32
    %c0_51 = arith.constant 0 : index
    %c0_52 = arith.constant 0 : index
    %85 = vector.load %arg18[%c0_51, %c0_52] : memref<8x128xf32, #tpu.memory_space<vmem>>, vector<8x128xf32>
    tpu.vector_store %arg18[%c0_51, %c0_52], %84#0 {strides = array<i32>} : memref<8x128xf32, #tpu.memory_space<vmem>>, vector<8x128xf32>,
    %c0_53 = arith.constant 0 : index
    %c0_54 = arith.constant 0 : index
    %86 = vector.load %arg19[%c0_53, %c0_54] : memref<8x128xf32, #tpu.memory_space<vmem>>, vector<8x128xf32>
    tpu.vector_store %arg19[%c0_53, %c0_54], %84#1 {strides = array<i32>} : memref<8x128xf32, #tpu.memory_space<vmem>>, vector<8x128xf32>,
    %c0_55 = arith.constant 0 : index
    %c0_56 = arith.constant 0 : index
    %87 = vector.load %arg20[%c0_55, %c0_56] : memref<8x384xf32, #tpu.memory_space<vmem>>, vector<8x384xf32>
    tpu.vector_store %arg20[%c0_55, %c0_56], %84#2 {strides = array<i32>} : memref<8x384xf32, #tpu.memory_space<vmem>>, vector<8x384xf32>,
    %c0_57 = arith.constant 0 : index
    %c0_58 = arith.constant 0 : index
    %88 = vector.load %arg21[%c0_57, %c0_58] : memref<8x128xf32, #tpu.memory_space<vmem>>, vector<8x128xf32>
    tpu.vector_store %arg21[%c0_57, %c0_58], %84#3 {strides = array<i32>} : memref<8x128xf32, #tpu.memory_space<vmem>>, vector<8x128xf32>,
    %c1_i32_59 = arith.constant 1 : i32
    %89 = arith.cmpi eq, %arg1, %c1_i32_59 : i32
    %90 = arith.extui %89 : i1 to i32
    %c0_i32_60 = arith.constant 0 : i32
    %91 = arith.cmpi ne, %90, %c0_i32_60 : i32
    scf.if %91 {
      %cst_61 = arith.constant 3.125000e-02 : f32
      %92 = vector.broadcast %cst_61 : f32 to vector<8x128xf32>
      %93 = arith.mulf %84#3, %92 : vector<8x128xf32>
      %94 = arith.truncf %93 : vector<8x128xf32> to vector<8x128xbf16>
      %c0_62 = arith.constant 0 : index
      %c0_63 = arith.constant 0 : index
      %95 = vector.load %arg12[%c0_62, %c0_63] : memref<128x128xbf16, #tpu.memory_space<vmem>>, vector<128x128xbf16>
      %cst_64 = arith.constant dense<0.000000e+00> : vector<8x128xf32>
      %96 = tpu.matmul %94, %95, %cst_64 {dimension_numbers = #tpu.dot_dimension_numbers<[1], [0], [0], [1], [0, 0, 1, 1], [], []>} : vector<8x128xbf16>, vector<128x128xbf16>, vector<8x128xf32> -> vector<8x128xf32>
      %c0_65 = arith.constant 0 : index
      %c0_66 = arith.constant 0 : index
      %97 = vector.load %arg13[%c0_65, %c0_66] : memref<1x128xf32, #tpu.memory_space<vmem>>, vector<1x128xf32>
      %98 = vector.broadcast %97 : vector<1x128xf32> to vector<8x128xf32>
      %99 = arith.addf %96, %98 : vector<8x128xf32>
      %cst_67 = arith.constant 0.000000e+00 : f32
      %100 = vector.broadcast %cst_67 : f32 to vector<8x128xf32>
      %101 = arith.maximumf %99, %100 : vector<8x128xf32>
      %102 = arith.truncf %101 : vector<8x128xf32> to vector<8x128xbf16>
      %c0_68 = arith.constant 0 : index
      %c0_69 = arith.constant 0 : index
      %103 = vector.load %arg14[%c0_68, %c0_69] : memref<128x2xbf16, #tpu.memory_space<vmem>>, vector<128x2xbf16>
      %cst_70 = arith.constant dense<0.000000e+00> : vector<8x2xf32>
      %104 = tpu.matmul %102, %103, %cst_70 {dimension_numbers = #tpu.dot_dimension_numbers<[1], [0], [0], [1], [0, 0, 1, 1], [], []>} : vector<8x128xbf16>, vector<128x2xbf16>, vector<8x2xf32> -> vector<8x2xf32>
      %c0_71 = arith.constant 0 : index
      %c0_72 = arith.constant 0 : index
      %105 = vector.load %arg15[%c0_71, %c0_72] : memref<1x2xf32, #tpu.memory_space<vmem>>, vector<1x2xf32>
      %106 = vector.broadcast %105 : vector<1x2xf32> to vector<8x2xf32>
      %107 = arith.addf %104, %106 : vector<8x2xf32>
      %cst_73 = arith.constant dense<0xFF800000> : vector<8xf32>
      %108 = vector.multi_reduction <maximumf>, %107, %cst_73 [1] : vector<8x2xf32> to vector<8xf32>
      %109 = vector.shape_cast %108 : vector<8xf32> to vector<8x1xf32>
      %110 = vector.broadcast %109 : vector<8x1xf32> to vector<8x2xf32>
      %111 = arith.subf %107, %110 : vector<8x2xf32>
      %112 = math.exp %111 : vector<8x2xf32>
      %cst_74 = arith.constant dense<0.000000e+00> : vector<8xf32>
      %113 = vector.multi_reduction <add>, %112, %cst_74 [1] : vector<8x2xf32> to vector<8xf32>
      %114 = vector.shape_cast %113 : vector<8xf32> to vector<8x1xf32>
      %115 = vector.broadcast %114 : vector<8x1xf32> to vector<8x2xf32>
      %116 = arith.divf %112, %115 : vector<8x2xf32>
      %c0_75 = arith.constant 0 : index
      %c0_76 = arith.constant 0 : index
      %117 = vector.load %arg16[%c0_75, %c0_76] : memref<8x2xf32, #tpu.memory_space<vmem>>, vector<8x2xf32>
      tpu.vector_store %arg16[%c0_75, %c0_76], %116 {strides = array<i32>} : memref<8x2xf32, #tpu.memory_space<vmem>>, vector<8x2xf32>,
    } else {
    }
    return
  }
  func.func @transform_0(%arg0: i32, %arg1: i32) -> (i32, i32, i32) {
    %c0_i32 = arith.constant 0 : i32
    %c0_i32_0 = arith.constant 0 : i32
    return %arg0, %arg1, %c0_i32 : i32, i32, i32
  }
  func.func @transform_1(%arg0: i32, %arg1: i32) -> (i32, i32, i32) {
    %c0_i32 = arith.constant 0 : i32
    %c0_i32_0 = arith.constant 0 : i32
    %c0_i32_1 = arith.constant 0 : i32
    %c0_i32_2 = arith.constant 0 : i32
    return %c0_i32, %c0_i32_0, %c0_i32_1 : i32, i32, i32
  }
  func.func @transform_2(%arg0: i32, %arg1: i32) -> (i32, i32, i32) {
    %c0_i32 = arith.constant 0 : i32
    %c0_i32_0 = arith.constant 0 : i32
    %c0_i32_1 = arith.constant 0 : i32
    %c0_i32_2 = arith.constant 0 : i32
    return %c0_i32, %c0_i32_0, %c0_i32_1 : i32, i32, i32
  }
  func.func @transform_3(%arg0: i32, %arg1: i32) -> (i32, i32) {
    %c0_i32 = arith.constant 0 : i32
    %c0_i32_0 = arith.constant 0 : i32
    %c0_i32_1 = arith.constant 0 : i32
    return %c0_i32, %c0_i32_0 : i32, i32
  }
  func.func @transform_4(%arg0: i32, %arg1: i32) -> (i32, i32) {
    %c0_i32 = arith.constant 0 : i32
    %c0_i32_0 = arith.constant 0 : i32
    %c0_i32_1 = arith.constant 0 : i32
    return %c0_i32, %c0_i32_0 : i32, i32
  }
  func.func @transform_5(%arg0: i32, %arg1: i32) -> (i32, i32) {
    %c0_i32 = arith.constant 0 : i32
    %c0_i32_0 = arith.constant 0 : i32
    %c0_i32_1 = arith.constant 0 : i32
    return %c0_i32, %c0_i32_0 : i32, i32
  }
  func.func @transform_6(%arg0: i32, %arg1: i32) -> (i32, i32) {
    %c0_i32 = arith.constant 0 : i32
    %c0_i32_0 = arith.constant 0 : i32
    %c0_i32_1 = arith.constant 0 : i32
    return %c0_i32, %c0_i32_0 : i32, i32
  }
  func.func @transform_7(%arg0: i32, %arg1: i32) -> (i32, i32) {
    %c0_i32 = arith.constant 0 : i32
    %c0_i32_0 = arith.constant 0 : i32
    %c0_i32_1 = arith.constant 0 : i32
    return %c0_i32, %c0_i32_0 : i32, i32
  }
  func.func @transform_8(%arg0: i32, %arg1: i32) -> (i32, i32) {
    %c0_i32 = arith.constant 0 : i32
    %c0_i32_0 = arith.constant 0 : i32
    %c0_i32_1 = arith.constant 0 : i32
    return %c0_i32, %c0_i32_0 : i32, i32
  }
  func.func @transform_9(%arg0: i32, %arg1: i32) -> (i32, i32) {
    %c0_i32 = arith.constant 0 : i32
    %c0_i32_0 = arith.constant 0 : i32
    %c0_i32_1 = arith.constant 0 : i32
    return %c0_i32, %c0_i32_0 : i32, i32
  }
  func.func @transform_10(%arg0: i32, %arg1: i32) -> (i32, i32) {
    %c0_i32 = arith.constant 0 : i32
    %c0_i32_0 = arith.constant 0 : i32
    %c0_i32_1 = arith.constant 0 : i32
    return %c0_i32, %c0_i32_0 : i32, i32
  }
  func.func @transform_11(%arg0: i32, %arg1: i32) -> (i32, i32) {
    %c0_i32 = arith.constant 0 : i32
    %c0_i32_0 = arith.constant 0 : i32
    %c0_i32_1 = arith.constant 0 : i32
    return %c0_i32, %c0_i32_0 : i32, i32
  }
  func.func @transform_12(%arg0: i32, %arg1: i32) -> (i32, i32) {
    %c0_i32 = arith.constant 0 : i32
    %c0_i32_0 = arith.constant 0 : i32
    %c0_i32_1 = arith.constant 0 : i32
    return %c0_i32, %c0_i32_0 : i32, i32
  }
  func.func @transform_13(%arg0: i32, %arg1: i32) -> (i32, i32) {
    %c0_i32 = arith.constant 0 : i32
    %c0_i32_0 = arith.constant 0 : i32
    %c0_i32_1 = arith.constant 0 : i32
    return %c0_i32, %c0_i32_0 : i32, i32
  }
  func.func @transform_14(%arg0: i32, %arg1: i32) -> (i32, i32) {
    %c0_i32 = arith.constant 0 : i32
    %c0_i32_0 = arith.constant 0 : i32
    return %arg0, %c0_i32 : i32, i32
  }
}

</mosaic_0001>

<llo_original>
// kernel: custom-call
$region0: #{custom-call}
  %s0 = inlined_call_operand.vmem [shape: f32[768], index: 0, kind: output, shape index: {}]

// kernel: audio_bilstm_net_forward.1
$region0: #{audio_bilstm_net_forward.1}
  #allocation0 [shape = 'u32[]', space=smem, size = 0x4, offset = 0x4, fixed_abs, tag = 'smem constant byte address 0x4 - core index']
  #allocation1 [shape = 'u32[144,128]{1,0:T(1,128)}', space=vmem, size = 0x12000, scoped, tag = 'internal scratch']
  #allocation2 [shape = 'f32[2,8,8,384]{3,2,1,0:T(8,128)}', space=vmem, size = 0x30000, scoped, tag = 'scratch operand']
  #allocation3 [shape = 'f32[8,128]{1,0:T(8,128)}', space=vmem, size = 0x1000, scoped, tag = 'scratch operand']
  #allocation4 [shape = 'f32[8,128]{1,0:T(8,128)}', space=vmem, size = 0x1000, scoped, tag = 'scratch operand']
  #allocation5 [shape = 'f32[8,384]{1,0:T(8,128)}', space=vmem, size = 0x3000, scoped, tag = 'scratch operand']
  #allocation6 [shape = 'f32[8,128]{1,0:T(8,128)}', space=vmem, size = 0x1000, scoped, tag = 'scratch operand']
  #allocation31 [shape = 's32[]', space=sflag, size = 0x4, offset = 0, fixed_abs, tag = 'sflag constant byte address 0x0 - dummy sync flag']
  %s0 = inlined_call_operand.hbm [shape: f32[16,32,128], index: 0, kind: input, shape index: {}]
  %s1 = inlined_call_operand.hbm [shape: f32[1,1,128], index: 1, kind: input, shape index: {}]
  %s2 = inlined_call_operand.hbm [shape: f32[1,1,128], index: 2, kind: input, shape index: {}]
  %s3 = inlined_call_operand.hbm [shape: bf16[128,384], index: 3, kind: input, shape index: {}]
  %s4 = inlined_call_operand.hbm [shape: f32[1,384], index: 4, kind: input, shape index: {}]
  %s5 = inlined_call_operand.hbm [shape: bf16[128,768], index: 5, kind: input, shape index: {}]
  %s6 = inlined_call_operand.hbm [shape: f32[1,768], index: 6, kind: input, shape index: {}]
  %s7 = inlined_call_operand.hbm [shape: bf16[128,384], index: 7, kind: input, shape index: {}]
  %s8 = inlined_call_operand.hbm [shape: f32[1,128], index: 8, kind: input, shape index: {}]
  %s9 = inlined_call_operand.hbm [shape: f32[1,384], index: 9, kind: input, shape index: {}]
  %s10 = inlined_call_operand.hbm [shape: bf16[128,128], index: 10, kind: input, shape index: {}]
  %s11 = inlined_call_operand.hbm [shape: f32[1,128], index: 11, kind: input, shape index: {}]
  %s12 = inlined_call_operand.hbm [shape: bf16[128,2], index: 12, kind: input, shape index: {}]
  %s13 = inlined_call_operand.hbm [shape: f32[1,2], index: 13, kind: input, shape index: {}]
  %s14 = inlined_call_operand.hbm [shape: f32[16,2], index: 14, kind: output, shape index: {}]
  %s15 = sld [smem:[#allocation0]]
  $region160: #{audio_bilstm_net_forward.1} parent=0
    _
  %s17 = ssub.s32 1, %s15
  %s18 = scalar_select 0, %s17, %s15
  $region1: #{audio_bilstm_net_forward.1} parent=0
    #allocation7 [shape = 'u8[131072]{0}', space=vmem, size = 0x20000, scoped, tag = 'input window, operand 0']
    #allocation8 [shape = 's32[2]{0}', space=sflag, size = 0x8, scoped, tag = 'scoped memory for audio_bilstm_net_forward.1']
    #allocation9 [shape = 's32[2]{0}', space=sflag, size = 0x8, scoped, tag = 'scoped memory for audio_bilstm_net_forward.1']
    #allocation10 [shape = 'u8[512]{0}', space=vmem, size = 0x400, scoped, tag = 'input window, operand 1, single buffered']
    #allocation11 [shape = 's32[1]{0}', space=sflag, size = 0x4, scoped, tag = 'scoped memory for audio_bilstm_net_forward.1']
    #allocation12 [shape = 'u8[512]{0}', space=vmem, size = 0x400, scoped, tag = 'input window, operand 2, single buffered']
    #allocation13 [shape = 'u8[98304]{0}', space=vmem, size = 0x18000, scoped, tag = 'input window, operand 3, single buffered']
    #allocation14 [shape = 's32[1]{0}', space=sflag, size = 0x4, scoped, tag = 'scoped memory for audio_bilstm_net_forward.1']
    #allocation15 [shape = 'u8[1536]{0}', space=vmem, size = 0x800, scoped, tag = 'input window, operand 4, single buffered']
    #allocation16 [shape = 'u8[196608]{0}', space=vmem, size = 0x30000, scoped, tag = 'input window, operand 5, single buffered']
    #allocation17 [shape = 's32[1]{0}', space=sflag, size = 0x4, scoped, tag = 'scoped memory for audio_bilstm_net_forward.1']
    #allocation18 [shape = 'u8[3072]{0}', space=vmem, size = 0xc00, scoped, tag = 'input window, operand 6, single buffered']
    #allocation19 [shape = 'u8[98304]{0}', space=vmem, size = 0x18000, scoped, tag = 'input window, operand 7, single buffered']
    #allocation20 [shape = 's32[1]{0}', space=sflag, size = 0x4, scoped, tag = 'scoped memory for audio_bilstm_net_forward.1']
    #allocation21 [shape = 'u8[512]{0}', space=vmem, size = 0x400, scoped, tag = 'input window, operand 8, single buffered']
    #allocation22 [shape = 'u8[1536]{0}', space=vmem, size = 0x800, scoped, tag = 'input window, operand 9, single buffered']
    #allocation23 [shape = 's32[1]{0}', space=sflag, size = 0x4, scoped, tag = 'scoped memory for audio_bilstm_net_forward.1']
    #allocation24 [shape = 'u8[32768]{0}', space=vmem, size = 0x8000, scoped, tag = 'input window, operand 10, single buffered']
    #allocation25 [shape = 'u8[512]{0}', space=vmem, size = 0x400, scoped, tag = 'input window, operand 11, single buffered']
    #allocation26 [shape = 's32[1]{0}', space=sflag, size = 0x4, scoped, tag = 'scoped memory for audio_bilstm_net_forward.1']
    #allocation27 [shape = 'u8[32768]{0}', space=vmem, size = 0x8000, scoped, tag = 'input window, operand 12, single buffered']
    #allocation28 [shape = 'u8[512]{0}', space=vmem, size = 0x400, scoped, tag = 'input window, operand 13, single buffered']
    #allocation29 [shape = 's32[1]{0}', space=sflag, size = 0x4, scoped, tag = 'scoped memory for audio_bilstm_net_forward.1']
    #allocation30 [shape = 'u8[8192]{0}', space=vmem, size = 0x2000, scoped, tag = 'output window, operand 0']
    %19 = vsyncpa [#allocation8], 0
    %s20 = scalar_lea.sflag [#allocation8], 1
    %21 = vsyncpa %s20, 0
    %22 = vsyncpa [#allocation11], 0
    %23 = vsyncpa [#allocation14], 0
    %24 = vsyncpa [#allocation17], 0
    %25 = vsyncpa [#allocation20], 0
    %26 = vsyncpa [#allocation23], 0
    %27 = vsyncpa [#allocation26], 0
    %28 = vsyncpa [#allocation29], 0
    %29 = vsyncpa [#allocation9], 0
    %s30 = scalar_lea.sflag [#allocation9], 1
    %31 = vsyncpa %s30, 0
    loop: start=0, step=1, limit=6
    $region2: #{audio_bilstm_net_forward.1} parent=1 // loop_pre_header
      _
    $region3: #{audio_bilstm_net_forward.1} parent=1 // loop_header
      %s33 = sphi 0, %s37
      %p34 = scmp.ge.s32.totalorder %s33, 6
      %s40 = sphi 0, %s52
      %s41 = sphi 0, %s48
      %s42 = sphi 0, %s40
      %s43 = sphi 0, %s41
      %s44 = sphi 0, %s42
      %s45 = sphi 0, %s43
      %s57 = sphi 0, %s59
      %s60 = sphi 0, %s57
      %s61 = sphi 0, %s60
      %s77 = sphi 0, %s61
      %s81 = sphi 0, %s81
      %s83 = sphi 0, %s81
      %s84 = sphi 0, %s83
      %s98 = sphi 0, %s84
      %s102 = sphi 0, %s102
      %s104 = sphi 0, %s102
      %s105 = sphi 0, %s104
      %s119 = sphi 0, %s105
      %s123 = sphi 0, %s123
      %s125 = sphi 0, %s123
      %s126 = sphi 0, %s125
      %s140 = sphi 0, %s126
      %s144 = sphi 0, %s144
      %s146 = sphi 0, %s144
      %s147 = sphi 0, %s146
      %s161 = sphi 0, %s147
      %s165 = sphi 0, %s165
      %s167 = sphi 0, %s165
      %s168 = sphi 0, %s167
      %s182 = sphi 0, %s168
      %s186 = sphi 0, %s186
      %s188 = sphi 0, %s186
      %s189 = sphi 0, %s188
      %s203 = sphi 0, %s189
      %s207 = sphi 0, %s207
      %s209 = sphi 0, %s207
      %s210 = sphi 0, %s209
      %s224 = sphi 0, %s210
      %s228 = sphi 0, %s228
      %s230 = sphi 0, %s228
      %s231 = sphi 0, %s230
      %s245 = sphi 0, %s231
      %s249 = sphi 0, %s249
      %s251 = sphi 0, %s249
      %s252 = sphi 0, %s251
      %s266 = sphi 0, %s252
      %s270 = sphi 0, %s270
      %s272 = sphi 0, %s270
      %s273 = sphi 0, %s272
      %s287 = sphi 0, %s273
      %s291 = sphi 0, %s291
      %s293 = sphi 0, %s291
      %s294 = sphi 0, %s293
      %s308 = sphi 0, %s294
      %s312 = sphi 0, %s312
      %s314 = sphi 0, %s312
      %s315 = sphi 0, %s314
      %s329 = sphi 0, %s315
      %s333 = sphi 0, %s333
      %s335 = sphi 0, %s333
      %s336 = sphi 0, %s335
      %s350 = sphi 0, %s336
      %s356 = sphi 0, %s358
      %s359 = sphi 0, %s356
      %s360 = sphi 0, %s359
      %s376 = sphi 0, %s360
    $region4: #{audio_bilstm_net_forward.1} parent=1 // loop_header_branch
      %36 = sbr.rel (%p34) target = $region8
    $region5: #{audio_bilstm_net_forward.1} parent=1 // loop_body
      %s38 = ssub.s32 %s33, 1
      %s39 = ssub.s32 %s33, 2
      %s46 = sadd.s32 1, %s41
      %p47 = scmp.ge.s32.totalorder %s46, 2
      %s48 = scalar_select %p47, 0, %s46
      %s49 = sadd.s32 1, %s40
      %s50 = scalar_select %p47, %s49, %s40
      %p51 = scmp.ge.s32.totalorder %s50, 2
      %s52 = scalar_select %p51, 0, %s50
      %s53 = ssub.s32 %s40, %s52
      %s54 = ssub.s32 %s41, %s48
      %s55 = sor.u32 %s53, %s54
      %p56 = scmp.eq.s32.totalorder %s55, 0
      %s58 = sadd.s32 %s57, 1
      %s59 = scalar_select %p56, %s57, %s58
      %p62 = pneg %p56
      %p63 = scmp.eq.s32.totalorder %s33, 3
      %p64 = por %p62, %p63
      %p65 = scmp.ne.s32.totalorder %s57, %s60
      %p66 = scmp.eq.s32.totalorder %s33, 0
      %p67 = por %p65, %p66
      %p68 = scmp.ne.s32.totalorder %s57, %s60
      %p69 = scmp.eq.s32.totalorder %s38, 3
      %p70 = por %p68, %p69
      %p71 = scmp.ne.s32.totalorder %s60, %s61
      %p72 = scmp.eq.s32.totalorder %s38, 0
      %p73 = por %p71, %p72
      %p74 = scmp.ne.s32.totalorder %s60, %s61
      %p75 = scmp.eq.s32.totalorder %s39, 3
      %p76 = por %p74, %p75
      %p78 = scmp.ne.s32.totalorder %s61, %s77
      %p79 = scmp.eq.s32.totalorder %s39, 0
      %p80 = por %p78, %p79
      %s82 = sadd.s32 %s81, 1
      %p85 = scmp.eq.s32.totalorder %s33, 3
      %p86 = scmp.ne.s32.totalorder %s81, %s83
      %p87 = scmp.eq.s32.totalorder %s33, 0
      %p88 = por %p86, %p87
      %p89 = scmp.ne.s32.totalorder %s81, %s83
      %p90 = scmp.eq.s32.totalorder %s38, 3
      %p91 = por %p89, %p90
      %p92 = scmp.ne.s32.totalorder %s83, %s84
      %p93 = scmp.eq.s32.totalorder %s38, 0
      %p94 = por %p92, %p93
      %p95 = scmp.ne.s32.totalorder %s83, %s84
      %p96 = scmp.eq.s32.totalorder %s39, 3
      %p97 = por %p95, %p96
      %p99 = scmp.ne.s32.totalorder %s84, %s98
      %p100 = scmp.eq.s32.totalorder %s39, 0
      %p101 = por %p99, %p100
      %s103 = sadd.s32 %s102, 1
      %p106 = scmp.eq.s32.totalorder %s33, 3
      %p107 = scmp.ne.s32.totalorder %s102, %s104
      %p108 = scmp.eq.s32.totalorder %s33, 0
      %p109 = por %p107, %p108
      %p110 = scmp.ne.s32.totalorder %s102, %s104
      %p111 = scmp.eq.s32.totalorder %s38, 3
      %p112 = por %p110, %p111
      %p113 = scmp.ne.s32.totalorder %s104, %s105
      %p114 = scmp.eq.s32.totalorder %s38, 0
      %p115 = por %p113, %p114
      %p116 = scmp.ne.s32.totalorder %s104, %s105
      %p117 = scmp.eq.s32.totalorder %s39, 3
      %p118 = por %p116, %p117
      %p120 = scmp.ne.s32.totalorder %s105, %s119
      %p121 = scmp.eq.s32.totalorder %s39, 0
      %p122 = por %p120, %p121
      %s124 = sadd.s32 %s123, 1
      %p127 = scmp.eq.s32.totalorder %s33, 3
      %p128 = scmp.ne.s32.totalorder %s123, %s125
      %p129 = scmp.eq.s32.totalorder %s33, 0
      %p130 = por %p128, %p129
      %p131 = scmp.ne.s32.totalorder %s123, %s125
      %p132 = scmp.eq.s32.totalorder %s38, 3
      %p133 = por %p131, %p132
      %p134 = scmp.ne.s32.totalorder %s125, %s126
      %p135 = scmp.eq.s32.totalorder %s38, 0
      %p136 = por %p134, %p135
      %p137 = scmp.ne.s32.totalorder %s125, %s126
      %p138 = scmp.eq.s32.totalorder %s39, 3
      %p139 = por %p137, %p138
      %p141 = scmp.ne.s32.totalorder %s126, %s140
      %p142 = scmp.eq.s32.totalorder %s39, 0
      %p143 = por %p141, %p142
      %s145 = sadd.s32 %s144, 1
      %p148 = scmp.eq.s32.totalorder %s33, 3
      %p149 = scmp.ne.s32.totalorder %s144, %s146
      %p150 = scmp.eq.s32.totalorder %s33, 0
      %p151 = por %p149, %p150
      %p152 = scmp.ne.s32.totalorder %s144, %s146
      %p153 = scmp.eq.s32.totalorder %s38, 3
      %p154 = por %p152, %p153
      %p155 = scmp.ne.s32.totalorder %s146, %s147
      %p156 = scmp.eq.s32.totalorder %s38, 0
      %p157 = por %p155, %p156
      %p158 = scmp.ne.s32.totalorder %s146, %s147
      %p159 = scmp.eq.s32.totalorder %s39, 3
      %p160 = por %p158, %p159
      %p162 = scmp.ne.s32.totalorder %s147, %s161
      %p163 = scmp.eq.s32.totalorder %s39, 0
      %p164 = por %p162, %p163
      %s166 = sadd.s32 %s165, 1
      %p169 = scmp.eq.s32.totalorder %s33, 3
      %p170 = scmp.ne.s32.totalorder %s165, %s167
      %p171 = scmp.eq.s32.totalorder %s33, 0
      %p172 = por %p170, %p171
      %p173 = scmp.ne.s32.totalorder %s165, %s167
      %p174 = scmp.eq.s32.totalorder %s38, 3
      %p175 = por %p173, %p174
      %p176 = scmp.ne.s32.totalorder %s167, %s168
      %p177 = scmp.eq.s32.totalorder %s38, 0
      %p178 = por %p176, %p177
      %p179 = scmp.ne.s32.totalorder %s167, %s168
      %p180 = scmp.eq.s32.totalorder %s39, 3
      %p181 = por %p179, %p180
      %p183 = scmp.ne.s32.totalorder %s168, %s182
      %p184 = scmp.eq.s32.totalorder %s39, 0
      %p185 = por %p183, %p184
      %s187 = sadd.s32 %s186, 1
      %p190 = scmp.eq.s32.totalorder %s33, 3
      %p191 = scmp.ne.s32.totalorder %s186, %s188
      %p192 = scmp.eq.s32.totalorder %s33, 0
      %p193 = por %p191, %p192
      %p194 = scmp.ne.s32.totalorder %s186, %s188
      %p195 = scmp.eq.s32.totalorder %s38, 3
      %p196 = por %p194, %p195
      %p197 = scmp.ne.s32.totalorder %s188, %s189
      %p198 = scmp.eq.s32.totalorder %s38, 0
      %p199 = por %p197, %p198
      %p200 = scmp.ne.s32.totalorder %s188, %s189
      %p201 = scmp.eq.s32.totalorder %s39, 3
      %p202 = por %p200, %p201
      %p204 = scmp.ne.s32.totalorder %s189, %s203
      %p205 = scmp.eq.s32.totalorder %s39, 0
      %p206 = por %p204, %p205
      %s208 = sadd.s32 %s207, 1
      %p211 = scmp.eq.s32.totalorder %s33, 3
      %p212 = scmp.ne.s32.totalorder %s207, %s209
      %p213 = scmp.eq.s32.totalorder %s33, 0
      %p214 = por %p212, %p213
      %p215 = scmp.ne.s32.totalorder %s207, %s209
      %p216 = scmp.eq.s32.totalorder %s38, 3
      %p217 = por %p215, %p216
      %p218 = scmp.ne.s32.totalorder %s209, %s210
      %p219 = scmp.eq.s32.totalorder %s38, 0
      %p220 = por %p218, %p219
      %p221 = scmp.ne.s32.totalorder %s209, %s210
      %p222 = scmp.eq.s32.totalorder %s39, 3
      %p223 = por %p221, %p222
      %p225 = scmp.ne.s32.totalorder %s210, %s224
      %p226 = scmp.eq.s32.totalorder %s39, 0
      %p227 = por %p225, %p226
      %s229 = sadd.s32 %s228, 1
      %p232 = scmp.eq.s32.totalorder %s33, 3
      %p233 = scmp.ne.s32.totalorder %s228, %s230
      %p234 = scmp.eq.s32.totalorder %s33, 0
      %p235 = por %p233, %p234
      %p236 = scmp.ne.s32.totalorder %s228, %s230
      %p237 = scmp.eq.s32.totalorder %s38, 3
      %p238 = por %p236, %p237
      %p239 = scmp.ne.s32.totalorder %s230, %s231
      %p240 = scmp.eq.s32.totalorder %s38, 0
      %p241 = por %p239, %p240
      %p242 = scmp.ne.s32.totalorder %s230, %s231
      %p243 = scmp.eq.s32.totalorder %s39, 3
      %p244 = por %p242, %p243
      %p246 = scmp.ne.s32.totalorder %s231, %s245
      %p247 = scmp.eq.s32.totalorder %s39, 0
      %p248 = por %p246, %p247
      %s250 = sadd.s32 %s249, 1
      %p253 = scmp.eq.s32.totalorder %s33, 3
      %p254 = scmp.ne.s32.totalorder %s249, %s251
      %p255 = scmp.eq.s32.totalorder %s33, 0
      %p256 = por %p254, %p255
      %p257 = scmp.ne.s32.totalorder %s249, %s251
      %p258 = scmp.eq.s32.totalorder %s38, 3
      %p259 = por %p257, %p258
      %p260 = scmp.ne.s32.totalorder %s251, %s252
      %p261 = scmp.eq.s32.totalorder %s38, 0
      %p262 = por %p260, %p261
      %p263 = scmp.ne.s32.totalorder %s251, %s252
      %p264 = scmp.eq.s32.totalorder %s39, 3
      %p265 = por %p263, %p264
      %p267 = scmp.ne.s32.totalorder %s252, %s266
      %p268 = scmp.eq.s32.totalorder %s39, 0
      %p269 = por %p267, %p268
      %s271 = sadd.s32 %s270, 1
      %p274 = scmp.eq.s32.totalorder %s33, 3
      %p275 = scmp.ne.s32.totalorder %s270, %s272
      %p276 = scmp.eq.s32.totalorder %s33, 0
      %p277 = por %p275, %p276
      %p278 = scmp.ne.s32.totalorder %s270, %s272
      %p279 = scmp.eq.s32.totalorder %s38, 3
      %p280 = por %p278, %p279
      %p281 = scmp.ne.s32.totalorder %s272, %s273
      %p282 = scmp.eq.s32.totalorder %s38, 0
      %p283 = por %p281, %p282
      %p284 = scmp.ne.s32.totalorder %s272, %s273
      %p285 = scmp.eq.s32.totalorder %s39, 3
      %p286 = por %p284, %p285
      %p288 = scmp.ne.s32.totalorder %s273, %s287
      %p289 = scmp.eq.s32.totalorder %s39, 0
      %p290 = por %p288, %p289
      %s292 = sadd.s32 %s291, 1
      %p295 = scmp.eq.s32.totalorder %s33, 3
      %p296 = scmp.ne.s32.totalorder %s291, %s293
      %p297 = scmp.eq.s32.totalorder %s33, 0
      %p298 = por %p296, %p297
      %p299 = scmp.ne.s32.totalorder %s291, %s293
      %p300 = scmp.eq.s32.totalorder %s38, 3
      %p301 = por %p299, %p300
      %p302 = scmp.ne.s32.totalorder %s293, %s294
      %p303 = scmp.eq.s32.totalorder %s38, 0
      %p304 = por %p302, %p303
      %p305 = scmp.ne.s32.totalorder %s293, %s294
      %p306 = scmp.eq.s32.totalorder %s39, 3
      %p307 = por %p305, %p306
      %p309 = scmp.ne.s32.totalorder %s294, %s308
      %p310 = scmp.eq.s32.totalorder %s39, 0
      %p311 = por %p309, %p310
      %s313 = sadd.s32 %s312, 1
      %p316 = scmp.eq.s32.totalorder %s33, 3
      %p317 = scmp.ne.s32.totalorder %s312, %s314
      %p318 = scmp.eq.s32.totalorder %s33, 0
      %p319 = por %p317, %p318
      %p320 = scmp.ne.s32.totalorder %s312, %s314
      %p321 = scmp.eq.s32.totalorder %s38, 3
      %p322 = por %p320, %p321
      %p323 = scmp.ne.s32.totalorder %s314, %s315
      %p324 = scmp.eq.s32.totalorder %s38, 0
      %p325 = por %p323, %p324
      %p326 = scmp.ne.s32.totalorder %s314, %s315
      %p327 = scmp.eq.s32.totalorder %s39, 3
      %p328 = por %p326, %p327
      %p330 = scmp.ne.s32.totalorder %s315, %s329
      %p331 = scmp.eq.s32.totalorder %s39, 0
      %p332 = por %p330, %p331
      %s334 = sadd.s32 %s333, 1
      %p337 = scmp.eq.s32.totalorder %s33, 3
      %p338 = scmp.ne.s32.totalorder %s333, %s335
      %p339 = scmp.eq.s32.totalorder %s33, 0
      %p340 = por %p338, %p339
      %p341 = scmp.ne.s32.totalorder %s333, %s335
      %p342 = scmp.eq.s32.totalorder %s38, 3
      %p343 = por %p341, %p342
      %p344 = scmp.ne.s32.totalorder %s335, %s336
      %p345 = scmp.eq.s32.totalorder %s38, 0
      %p346 = por %p344, %p345
      %p347 = scmp.ne.s32.totalorder %s335, %s336
      %p348 = scmp.eq.s32.totalorder %s39, 3
      %p349 = por %p347, %p348
      %p351 = scmp.ne.s32.totalorder %s336, %s350
      %p352 = scmp.eq.s32.totalorder %s39, 0
      %p353 = por %p351, %p352
      %s354 = ssub.s32 %s40, %s52
      %p355 = scmp.eq.s32.totalorder %s354, 0
      %s357 = sadd.s32 %s356, 1
      %s358 = scalar_select %p355, %s356, %s357
      %p361 = pneg %p355
      %p362 = scmp.eq.s32.totalorder %s33, 3
      %p363 = por %p361, %p362
      %p364 = scmp.ne.s32.totalorder %s356, %s359
      %p365 = scmp.eq.s32.totalorder %s33, 0
      %p366 = por %p364, %p365
      %p367 = scmp.ne.s32.totalorder %s356, %s359
      %p368 = scmp.eq.s32.totalorder %s38, 3
      %p369 = por %p367, %p368
      %p370 = scmp.ne.s32.totalorder %s359, %s360
      %p371 = scmp.eq.s32.totalorder %s38, 0
      %p372 = por %p370, %p371
      %p373 = scmp.ne.s32.totalorder %s359, %s360
      %p374 = scmp.eq.s32.totalorder %s39, 3
      %p375 = por %p373, %p374
      %p377 = scmp.ne.s32.totalorder %s360, %s376
      %p378 = scmp.eq.s32.totalorder %s39, 0
      %p379 = por %p377, %p378
      %p380 = scmp.le.s32.totalorder 1, %s33
      %p381 = scmp.lt.s32.totalorder %s33, 5
      %p382 = pnand %p380, %p381
      %p383 = pneg %p382
      // Predicated region
      $region9: #{audio_bilstm_net_forward.1} parent=5 // pred_check
        _
      $region10: #{audio_bilstm_net_forward.1} parent=5 // pred_check_branch
        %385 = sbr.rel (%p382) target = $region12
      $region11: #{audio_bilstm_net_forward.1} parent=5 // pred_region
        %s386 = ssub.s32 %s33, 1
        // Predicated region
        $region13: #{audio_bilstm_net_forward.1} parent=11 // pred_check
          %p387 = pneg %p94
        $region14: #{audio_bilstm_net_forward.1} parent=11 // pred_check_branch
          %389 = sbr.rel (%p387) target = $region16
        $region15: #{audio_bilstm_net_forward.1} parent=11 // pred_region
          %s391 = ssub.s32 16, 16
          %392 = vsyncadd [#allocation11], %s391
          %s394 = sshll.u32 [#allocation10], 4
          %s395 = int_to_ptr.vmem [resolvable:$true] %s394
          %397 = dma.hbm_to_vmem [thread:$0]  %s1, 16, %s395, [#allocation11]
        $region16: #{audio_bilstm_net_forward.1} parent=11 // pred_fallthru
          _
        // Predicated region
        $region17: #{audio_bilstm_net_forward.1} parent=11 // pred_check
          %p398 = pneg %p115
        $region18: #{audio_bilstm_net_forward.1} parent=11 // pred_check_branch
          %400 = sbr.rel (%p398) target = $region20
        $region19: #{audio_bilstm_net_forward.1} parent=11 // pred_region
          %s402 = ssub.s32 16, 16
          %403 = vsyncadd [#allocation11], %s402
          %s405 = sshll.u32 [#allocation12], 4
          %s406 = int_to_ptr.vmem [resolvable:$true] %s405
          %408 = dma.hbm_to_vmem [thread:$0]  %s2, 16, %s406, [#allocation11]
        $region20: #{audio_bilstm_net_forward.1} parent=11 // pred_fallthru
          _
        // Predicated region
        $region21: #{audio_bilstm_net_forward.1} parent=11 // pred_check
          %p409 = pneg %p136
        $region22: #{audio_bilstm_net_forward.1} parent=11 // pred_check_branch
          %411 = sbr.rel (%p409) target = $region24
        $region23: #{audio_bilstm_net_forward.1} parent=11 // pred_region
          %s413 = ssub.s32 3072, 3072
          %414 = vsyncadd [#allocation14], %s413
          %s415 = sshll.u32 [#allocation13], 4
          %s416 = int_to_ptr.vmem [resolvable:$true] %s415
          %421 = dma.hbm_to_vmem [thread:$0]  %s3, 3072, %s416, [#allocation14], 192, 192, 12
        $region24: #{audio_bilstm_net_forward.1} parent=11 // pred_fallthru
          _
        // Predicated region
        $region25: #{audio_bilstm_net_forward.1} parent=11 // pred_check
          %p422 = pneg %p157
        $region26: #{audio_bilstm_net_forward.1} parent=11 // pred_check_branch
          %424 = sbr.rel (%p422) target = $region28
        $region27: #{audio_bilstm_net_forward.1} parent=11 // pred_region
          %s426 = ssub.s32 48, 48
          %427 = vsyncadd [#allocation14], %s426
          %s429 = sshll.u32 [#allocation15], 4
          %s430 = int_to_ptr.vmem [resolvable:$true] %s429
          %432 = dma.hbm_to_vmem [thread:$0]  %s4, 48, %s430, [#allocation14]
        $region28: #{audio_bilstm_net_forward.1} parent=11 // pred_fallthru
          _
        // Predicated region
        $region29: #{audio_bilstm_net_forward.1} parent=11 // pred_check
          %p433 = pneg %p178
        $region30: #{audio_bilstm_net_forward.1} parent=11 // pred_check_branch
          %435 = sbr.rel (%p433) target = $region32
        $region31: #{audio_bilstm_net_forward.1} parent=11 // pred_region
          %s437 = ssub.s32 6144, 6144
          %438 = vsyncadd [#allocation17], %s437
          %s439 = sshll.u32 [#allocation16], 4
          %s440 = int_to_ptr.vmem [resolvable:$true] %s439
          %445 = dma.hbm_to_vmem [thread:$0]  %s5, 6144, %s440, [#allocation17], 384, 384, 24
        $region32: #{audio_bilstm_net_forward.1} parent=11 // pred_fallthru
          _
        // Predicated region
        $region33: #{audio_bilstm_net_forward.1} parent=11 // pred_check
          %p446 = pneg %p199
        $region34: #{audio_bilstm_net_forward.1} parent=11 // pred_check_branch
          %448 = sbr.rel (%p446) target = $region36
        $region35: #{audio_bilstm_net_forward.1} parent=11 // pred_region
          %s450 = ssub.s32 96, 96
          %451 = vsyncadd [#allocation17], %s450
          %s453 = sshll.u32 [#allocation18], 4
          %s454 = int_to_ptr.vmem [resolvable:$true] %s453
          %456 = dma.hbm_to_vmem [thread:$0]  %s6, 96, %s454, [#allocation17]
        $region36: #{audio_bilstm_net_forward.1} parent=11 // pred_fallthru
          _
        // Predicated region
        $region37: #{audio_bilstm_net_forward.1} parent=11 // pred_check
          %p457 = pneg %p220
        $region38: #{audio_bilstm_net_forward.1} parent=11 // pred_check_branch
          %459 = sbr.rel (%p457) target = $region40
        $region39: #{audio_bilstm_net_forward.1} parent=11 // pred_region
          %s461 = ssub.s32 3072, 3072
          %462 = vsyncadd [#allocation20], %s461
          %s463 = sshll.u32 [#allocation19], 4
          %s464 = int_to_ptr.vmem [resolvable:$true] %s463
          %469 = dma.hbm_to_vmem [thread:$0]  %s7, 3072, %s464, [#allocation20], 192, 192, 12
        $region40: #{audio_bilstm_net_forward.1} parent=11 // pred_fallthru
          _
        // Predicated region
        $region41: #{audio_bilstm_net_forward.1} parent=11 // pred_check
          %p470 = pneg %p241
        $region42: #{audio_bilstm_net_forward.1} parent=11 // pred_check_branch
          %472 = sbr.rel (%p470) target = $region44
        $region43: #{audio_bilstm_net_forward.1} parent=11 // pred_region
          %s474 = ssub.s32 16, 16
          %475 = vsyncadd [#allocation20], %s474
          %s477 = sshll.u32 [#allocation21], 4
          %s478 = int_to_ptr.vmem [resolvable:$true] %s477
          %480 = dma.hbm_to_vmem [thread:$0]  %s8, 16, %s478, [#allocation20]
        $region44: #{audio_bilstm_net_forward.1} parent=11 // pred_fallthru
          _
        // Predicated region
        $region45: #{audio_bilstm_net_forward.1} parent=11 // pred_check
          %p481 = pneg %p262
        $region46: #{audio_bilstm_net_forward.1} parent=11 // pred_check_branch
          %483 = sbr.rel (%p481) target = $region48
        $region47: #{audio_bilstm_net_forward.1} parent=11 // pred_region
          %s485 = ssub.s32 48, 48
          %486 = vsyncadd [#allocation23], %s485
          %s488 = sshll.u32 [#allocation22], 4
          %s489 = int_to_ptr.vmem [resolvable:$true] %s488
          %491 = dma.hbm_to_vmem [thread:$0]  %s9, 48, %s489, [#allocation23]
        $region48: #{audio_bilstm_net_forward.1} parent=11 // pred_fallthru
          _
        // Predicated region
        $region49: #{audio_bilstm_net_forward.1} parent=11 // pred_check
          %p492 = pneg %p283
        $region50: #{audio_bilstm_net_forward.1} parent=11 // pred_check_branch
          %494 = sbr.rel (%p492) target = $region52
        $region51: #{audio_bilstm_net_forward.1} parent=11 // pred_region
          %s496 = ssub.s32 1024, 1024
          %497 = vsyncadd [#allocation23], %s496
          %s498 = sshll.u32 [#allocation24], 4
          %s499 = int_to_ptr.vmem [resolvable:$true] %s498
          %504 = dma.hbm_to_vmem [thread:$0]  %s10, 1024, %s499, [#allocation23], 64, 64, 4
        $region52: #{audio_bilstm_net_forward.1} parent=11 // pred_fallthru
          _
        // Predicated region
        $region53: #{audio_bilstm_net_forward.1} parent=11 // pred_check
          %p505 = pneg %p304
        $region54: #{audio_bilstm_net_forward.1} parent=11 // pred_check_branch
          %507 = sbr.rel (%p505) target = $region56
        $region55: #{audio_bilstm_net_forward.1} parent=11 // pred_region
          %s509 = ssub.s32 16, 16
          %510 = vsyncadd [#allocation26], %s509
          %s512 = sshll.u32 [#allocation25], 4
          %s513 = int_to_ptr.vmem [resolvable:$true] %s512
          %515 = dma.hbm_to_vmem [thread:$0]  %s11, 16, %s513, [#allocation26]
        $region56: #{audio_bilstm_net_forward.1} parent=11 // pred_fallthru
          _
        // Predicated region
        $region57: #{audio_bilstm_net_forward.1} parent=11 // pred_check
          %p516 = pneg %p325
        $region58: #{audio_bilstm_net_forward.1} parent=11 // pred_check_branch
          %518 = sbr.rel (%p516) target = $region60
        $region59: #{audio_bilstm_net_forward.1} parent=11 // pred_region
          %s520 = ssub.s32 1024, 1024
          %521 = vsyncadd [#allocation26], %s520
          %s522 = sshll.u32 [#allocation27], 4
          %s523 = int_to_ptr.vmem [resolvable:$true] %s522
          %528 = dma.hbm_to_vmem [thread:$0]  %s12, 1024, %s523, [#allocation26], 64, 64, 4
        $region60: #{audio_bilstm_net_forward.1} parent=11 // pred_fallthru
          _
        // Predicated region
        $region61: #{audio_bilstm_net_forward.1} parent=11 // pred_check
          %p529 = pneg %p346
        $region62: #{audio_bilstm_net_forward.1} parent=11 // pred_check_branch
          %531 = sbr.rel (%p529) target = $region64
        $region63: #{audio_bilstm_net_forward.1} parent=11 // pred_region
          %s533 = ssub.s32 16, 16
          %534 = vsyncadd [#allocation29], %s533
          %s536 = sshll.u32 [#allocation28], 4
          %s537 = int_to_ptr.vmem [resolvable:$true] %s536
          %539 = dma.hbm_to_vmem [thread:$0]  %s13, 16, %s537, [#allocation29]
        $region64: #{audio_bilstm_net_forward.1} parent=11 // pred_fallthru
          _
      $region12: #{audio_bilstm_net_forward.1} parent=5 // pred_fallthru
        _
      %p540 = scmp.lt.s32.totalorder %s33, 4
      // Predicated region
      $region65: #{audio_bilstm_net_forward.1} parent=5 // pred_check
        %p541 = pneg %p540
      $region66: #{audio_bilstm_net_forward.1} parent=5 // pred_check_branch
        %543 = sbr.rel (%p541) target = $region68
      $region67: #{audio_bilstm_net_forward.1} parent=5 // pred_region
        // Predicated region
        $region69: #{audio_bilstm_net_forward.1} parent=67 // pred_check
          %p544 = pneg %p67
        $region70: #{audio_bilstm_net_forward.1} parent=67 // pred_check_branch
          %546 = sbr.rel (%p544) target = $region72
        $region71: #{audio_bilstm_net_forward.1} parent=67 // pred_region
          #allocation32 [shape = 'u32[6]{0}', space=smem, size = 0x18, scoped, tag = 'DMA stride descriptor']
          %s547 = sand.u32 %s57, 1
          %s548 = scalar_lea.sflag [#allocation8], %s547
          %s549 = sand.u32 %s57, 1
          %s550 = smul.addr %s549, 128
          %s551 = scalar_lea.vmem [#allocation7], %s550
          %s552 = smul.u32 8, %s40
          %s553 = smul.u32 2, %s41
          %s555 = ssub.s32 2048, 2048
          %556 = vsyncadd %s548, %s555
          %s557 = smul.addr %s552, 4
          %s558 = sadd.s32 %s553, %s557
          %s559 = smul.addr %s558, 128
          %s560 = scalar_lea.hbm %s0, %s559
          %s562 = sshll.u32 1, 14
          %s563 = sxor.u32 4294967295, %s562
          %s565 = sld [smem:[#allocation0]]
          %s566 = sadd.s32 2, %s565
          %s568 = sshll.u32 7, 26
          %s569 = sxor.u32 4294967295, %s568
          %s570 = sand.u32 0, %s569
          %s571 = sshll.u32 %s566, 26
          %s572 = sor.u32 %s570, %s571
          %s573 = sshll.u32 %s551, 4
          %s574 = int_to_ptr.vmem [resolvable:$true] %s573
          %580 = sst [smem:[#allocation32]] 512
          %s581 = scalar_lea.smem [#allocation32], 1
          %582 = sst [smem:[%s581]] 256
          %s583 = scalar_lea.smem [#allocation32], 2
          %584 = sst [smem:[%s583]] 2
          %s585 = scalar_lea.smem [#allocation32], 3
          %586 = sst [smem:[%s585]] 128
          %s587 = scalar_lea.smem [#allocation32], 4
          %588 = sst [smem:[%s587]] 128
          %s589 = scalar_lea.smem [#allocation32], 5
          %590 = sst [smem:[%s589]] 8
          %592 = dma.general %s560, 2048, %s574, %s548, [#allocation31], [#allocation32], %s572, 0
        $region72: #{audio_bilstm_net_forward.1} parent=67 // pred_fallthru
          _
      $region68: #{audio_bilstm_net_forward.1} parent=5 // pred_fallthru
        _
      %p593 = scmp.le.s32.totalorder 1, %s33
      %p594 = scmp.lt.s32.totalorder %s33, 5
      %p595 = pnand %p593, %p594
      %p596 = pneg %p595
      // Predicated region
      $region73: #{audio_bilstm_net_forward.1} parent=5 // pred_check
        _
      $region74: #{audio_bilstm_net_forward.1} parent=5 // pred_check_branch
        %598 = sbr.rel (%p595) target = $region76
      $region75: #{audio_bilstm_net_forward.1} parent=5 // pred_region
        %s599 = ssub.s32 %s33, 1
        %s600 = sand.u32 %s60, 1
        %s601 = scalar_lea.sflag [#allocation8], %s600
        %s602 = sand.u32 %s60, 1
        %s603 = smul.addr %s602, 128
        %s604 = scalar_lea.vmem [#allocation7], %s603
        // Predicated region
        $region77: #{audio_bilstm_net_forward.1} parent=75 // pred_check
          %p605 = pneg %p73
        $region78: #{audio_bilstm_net_forward.1} parent=75 // pred_check_branch
          %607 = sbr.rel (%p605) target = $region80
        $region79: #{audio_bilstm_net_forward.1} parent=75 // pred_region
          %608 = dma.done %s601, 2048
        $region80: #{audio_bilstm_net_forward.1} parent=75 // pred_fallthru
          _
        // Predicated region
        $region81: #{audio_bilstm_net_forward.1} parent=75 // pred_check
          %p609 = pneg %p94
        $region82: #{audio_bilstm_net_forward.1} parent=75 // pred_check_branch
          %611 = sbr.rel (%p609) target = $region84
        $region83: #{audio_bilstm_net_forward.1} parent=75 // pred_region
          %612 = dma.done [#allocation11], 16
        $region84: #{audio_bilstm_net_forward.1} parent=75 // pred_fallthru
          _
        // Predicated region
        $region85: #{audio_bilstm_net_forward.1} parent=75 // pred_check
          %p613 = pneg %p115
        $region86: #{audio_bilstm_net_forward.1} parent=75 // pred_check_branch
          %615 = sbr.rel (%p613) target = $region88
        $region87: #{audio_bilstm_net_forward.1} parent=75 // pred_region
          %616 = dma.done [#allocation11], 16
        $region88: #{audio_bilstm_net_forward.1} parent=75 // pred_fallthru
          _
        // Predicated region
        $region89: #{audio_bilstm_net_forward.1} parent=75 // pred_check
          %p617 = pneg %p136
        $region90: #{audio_bilstm_net_forward.1} parent=75 // pred_check_branch
          %619 = sbr.rel (%p617) target = $region92
        $region91: #{audio_bilstm_net_forward.1} parent=75 // pred_region
          %620 = dma.done [#allocation14], 3072
        $region92: #{audio_bilstm_net_forward.1} parent=75 // pred_fallthru
          _
        // Predicated region
        $region93: #{audio_bilstm_net_forward.1} parent=75 // pred_check
          %p621 = pneg %p157
        $region94: #{audio_bilstm_net_forward.1} parent=75 // pred_check_branch
          %623 = sbr.rel (%p621) target = $region96
        $region95: #{audio_bilstm_net_forward.1} parent=75 // pred_region
          %624 = dma.done [#allocation14], 48
        $region96: #{audio_bilstm_net_forward.1} parent=75 // pred_fallthru
          _
        // Predicated region
        $region97: #{audio_bilstm_net_forward.1} parent=75 // pred_check
          %p625 = pneg %p178
        $region98: #{audio_bilstm_net_forward.1} parent=75 // pred_check_branch
          %627 = sbr.rel (%p625) target = $region100
        $region99: #{audio_bilstm_net_forward.1} parent=75 // pred_region
          %628 = dma.done [#allocation17], 6144
        $region100: #{audio_bilstm_net_forward.1} parent=75 // pred_fallthru
          _
        // Predicated region
        $region101: #{audio_bilstm_net_forward.1} parent=75 // pred_check
          %p629 = pneg %p199
        $region102: #{audio_bilstm_net_forward.1} parent=75 // pred_check_branch
          %631 = sbr.rel (%p629) target = $region104
        $region103: #{audio_bilstm_net_forward.1} parent=75 // pred_region
          %632 = dma.done [#allocation17], 96
        $region104: #{audio_bilstm_net_forward.1} parent=75 // pred_fallthru
          _
        // Predicated region
        $region105: #{audio_bilstm_net_forward.1} parent=75 // pred_check
          %p633 = pneg %p220
        $region106: #{audio_bilstm_net_forward.1} parent=75 // pred_check_branch
          %635 = sbr.rel (%p633) target = $region108
        $region107: #{audio_bilstm_net_forward.1} parent=75 // pred_region
          %636 = dma.done [#allocation20], 3072
        $region108: #{audio_bilstm_net_forward.1} parent=75 // pred_fallthru
          _
        // Predicated region
        $region109: #{audio_bilstm_net_forward.1} parent=75 // pred_check
          %p637 = pneg %p241
        $region110: #{audio_bilstm_net_forward.1} parent=75 // pred_check_branch
          %639 = sbr.rel (%p637) target = $region112
        $region111: #{audio_bilstm_net_forward.1} parent=75 // pred_region
          %640 = dma.done [#allocation20], 16
        $region112: #{audio_bilstm_net_forward.1} parent=75 // pred_fallthru
          _
        // Predicated region
        $region113: #{audio_bilstm_net_forward.1} parent=75 // pred_check
          %p641 = pneg %p262
        $region114: #{audio_bilstm_net_forward.1} parent=75 // pred_check_branch
          %643 = sbr.rel (%p641) target = $region116
        $region115: #{audio_bilstm_net_forward.1} parent=75 // pred_region
          %644 = dma.done [#allocation23], 48
        $region116: #{audio_bilstm_net_forward.1} parent=75 // pred_fallthru
          _
        // Predicated region
        $region117: #{audio_bilstm_net_forward.1} parent=75 // pred_check
          %p645 = pneg %p283
        $region118: #{audio_bilstm_net_forward.1} parent=75 // pred_check_branch
          %647 = sbr.rel (%p645) target = $region120
        $region119: #{audio_bilstm_net_forward.1} parent=75 // pred_region
          %648 = dma.done [#allocation23], 1024
        $region120: #{audio_bilstm_net_forward.1} parent=75 // pred_fallthru
          _
        // Predicated region
        $region121: #{audio_bilstm_net_forward.1} parent=75 // pred_check
          %p649 = pneg %p304
        $region122: #{audio_bilstm_net_forward.1} parent=75 // pred_check_branch
          %651 = sbr.rel (%p649) target = $region124
        $region123: #{audio_bilstm_net_forward.1} parent=75 // pred_region
          %652 = dma.done [#allocation26], 16
        $region124: #{audio_bilstm_net_forward.1} parent=75 // pred_fallthru
          _
        // Predicated region
        $region125: #{audio_bilstm_net_forward.1} parent=75 // pred_check
          %p653 = pneg %p325
        $region126: #{audio_bilstm_net_forward.1} parent=75 // pred_check_branch
          %655 = sbr.rel (%p653) target = $region128
        $region127: #{audio_bilstm_net_forward.1} parent=75 // pred_region
          %656 = dma.done [#allocation26], 1024
        $region128: #{audio_bilstm_net_forward.1} parent=75 // pred_fallthru
          _
        // Predicated region
        $region129: #{audio_bilstm_net_forward.1} parent=75 // pred_check
          %p657 = pneg %p346
        $region130: #{audio_bilstm_net_forward.1} parent=75 // pred_check_branch
          %659 = sbr.rel (%p657) target = $region132
        $region131: #{audio_bilstm_net_forward.1} parent=75 // pred_region
          %660 = dma.done [#allocation29], 16
        $region132: #{audio_bilstm_net_forward.1} parent=75 // pred_fallthru
          _
        %s661 = sand.u32 %s60, 1
        %s662 = scalar_lea.sflag [#allocation8], %s661
        %s663 = sand.u32 %s60, 1
        %s664 = smul.addr %s663, 128
        %s665 = scalar_lea.vmem [#allocation7], %s664
        %p666 = pneg %p73
        %p667 = pneg %p70
        %p668 = pneg %p94
        %p669 = pneg %p91
        %p670 = pneg %p115
        %p671 = pneg %p112
        %p672 = pneg %p136
        %p673 = pneg %p133
        %p674 = pneg %p157
        %p675 = pneg %p154
        %p676 = pneg %p178
        %p677 = pneg %p175
        %p678 = pneg %p199
        %p679 = pneg %p196
        %p680 = pneg %p220
        %p681 = pneg %p217
        %p682 = pneg %p241
        %p683 = pneg %p238
        %p684 = pneg %p262
        %p685 = pneg %p259
        %p686 = pneg %p283
        %p687 = pneg %p280
        %p688 = pneg %p304
        %p689 = pneg %p301
        %p690 = pneg %p325
        %p691 = pneg %p322
        %p692 = pneg %p346
        %p693 = pneg %p343
        %p694 = pneg %p372
        %p695 = pneg %p369
        %s696 = sand.u32 %s359, 1
        %s697 = scalar_lea.sflag [#allocation9], %s696
        %s698 = sand.u32 %s359, 1
        %s699 = smul.addr %s698, 8
        %s700 = scalar_lea.vmem [#allocation30], %s699
        %s701 = smul.u32 8, %s42
        %s702 = smul.u32 2, %s43
        %p704 = scmp.eq.s32.totalorder %s43, 0
        // Predicated region
        $region133: #{audio_bilstm_net_forward.1} parent=75 // pred_check
          %p705 = pneg %p704
        $region134: #{audio_bilstm_net_forward.1} parent=75 // pred_check_branch
          %707 = sbr.rel (%p705) target = $region136
        $region135: #{audio_bilstm_net_forward.1} parent=75 // pred_region
          %708 = vst [vmem:[#allocation3] sm:$0xff] 0.0
          %709 = vst [vmem:[#allocation4] sm:$0xff] 0.0
          %710 = vst [vmem:[#allocation6] sm:$0xff] 0.0
          %v711 = vld [vmem:[#allocation22] sm:$0x7]
          %v713 = vlaneseq
          %v714 = vshrl.u32 %v713, 7
          %v715 = vsub.s32 0, %v714
          %v716 = vrot.slane %v711, %v715
          %v717 = vlaneseq
          %v718 = vshrl.u32 %v717, 7
          %v719 = vsub.s32 1, %v718
          %v720 = vrot.slane %v711, %v719
          %v721 = vlaneseq
          %v722 = vshrl.u32 %v721, 7
          %v723 = vsub.s32 2, %v722
          %v724 = vrot.slane %v711, %v723
          %728 = vst [vmem:[#allocation5] sm:$0xff] %v716
          %729 = vst [vmem:[#allocation5 + $0x8] sm:$0xff] %v720
          %730 = vst [vmem:[#allocation5 + $0x10] sm:$0xff] %v724
        $region136: #{audio_bilstm_net_forward.1} parent=75 // pred_fallthru
          _
        %v731 = vld [vmem:[#allocation10] sm:$0x1]
        %v732 = vld [vmem:[#allocation12] sm:$0x1]
        %v733 = vld [vmem:[#allocation13] sm:$0xff]
        %v734 = vld [vmem:[#allocation13 + $0x8] sm:$0xf]
        %v735 = vld [vmem:[#allocation13 + $0xc] sm:$0xff]
        %v736 = vld [vmem:[#allocation13 + $0x14] sm:$0xf]
        %v737 = vld [vmem:[#allocation13 + $0x18] sm:$0xff]
        %v738 = vld [vmem:[#allocation13 + $0x20] sm:$0xf]
        %v739 = vld [vmem:[#allocation13 + $0x24] sm:$0xff]
        %v740 = vld [vmem:[#allocation13 + $0x2c] sm:$0xf]
        %v741 = vld [vmem:[#allocation13 + $0x30] sm:$0xff]
        %v742 = vld [vmem:[#allocation13 + $0x38] sm:$0xf]
        %v743 = vld [vmem:[#allocation13 + $0x3c] sm:$0xff]
        %v744 = vld [vmem:[#allocation13 + $0x44] sm:$0xf]
        %v745 = vld [vmem:[#allocation13 + $0x48] sm:$0xff]
        %v746 = vld [vmem:[#allocation13 + $0x50] sm:$0xf]
        %v747 = vld [vmem:[#allocation13 + $0x54] sm:$0xff]
        %v748 = vld [vmem:[#allocation13 + $0x5c] sm:$0xf]
        %v749 = vld [vmem:[#allocation13 + $0x60] sm:$0xff]
        %v750 = vld [vmem:[#allocation13 + $0x68] sm:$0xf]
        %v751 = vld [vmem:[#allocation13 + $0x6c] sm:$0xff]
        %v752 = vld [vmem:[#allocation13 + $0x74] sm:$0xf]
        %v753 = vld [vmem:[#allocation13 + $0x78] sm:$0xff]
        %v754 = vld [vmem:[#allocation13 + $0x80] sm:$0xf]
        %v755 = vld [vmem:[#allocation13 + $0x84] sm:$0xff]
        %v756 = vld [vmem:[#allocation13 + $0x8c] sm:$0xf]
        %v757 = vld [vmem:[#allocation13 + $0x90] sm:$0xff]
        %v758 = vld [vmem:[#allocation13 + $0x98] sm:$0xf]
        %v759 = vld [vmem:[#allocation13 + $0x9c] sm:$0xff]
        %v760 = vld [vmem:[#allocation13 + $0xa4] sm:$0xf]
        %v761 = vld [vmem:[#allocation13 + $0xa8] sm:$0xff]
        %v762 = vld [vmem:[#allocation13 + $0xb0] sm:$0xf]
        %v763 = vld [vmem:[#allocation13 + $0xb4] sm:$0xff]
        %v764 = vld [vmem:[#allocation13 + $0xbc] sm:$0xf]
        %v765 = vld [vmem:[#allocation15] sm:$0x7]
        %v767 = vlaneseq
        %v768 = vshrl.u32 %v767, 7
        %v769 = vsub.s32 0, %v768
        %v770 = vrot.slane %v765, %v769
        %v771 = vlaneseq
        %v772 = vshrl.u32 %v771, 7
        %v773 = vsub.s32 1, %v772
        %v774 = vrot.slane %v765, %v773
        %v775 = vlaneseq
        %v776 = vshrl.u32 %v775, 7
        %v777 = vsub.s32 2, %v776
        %v778 = vrot.slane %v765, %v777
        %v782 = vld [vmem:[%s604] sm:$0xff]
        %v783 = vld [vmem:[%s604 + $0x10] sm:$0xff]
        %v784 = vld [vmem:[%s604 + $0x20] sm:$0xff]
        %v785 = vld [vmem:[%s604 + $0x30] sm:$0xff]
        %v786 = vld [vmem:[%s604 + $0x40] sm:$0xff]
        %v787 = vld [vmem:[%s604 + $0x50] sm:$0xff]
        %v788 = vld [vmem:[%s604 + $0x60] sm:$0xff]
        %v789 = vld [vmem:[%s604 + $0x70] sm:$0xff]
        %790 = vadd.xlane.f32.xlu0 %v782
        %v791 = vpop.xlane.xlu0 %790
        %792 = vadd.xlane.f32.xlu0 %v783
        %v793 = vpop.xlane.xlu0 %792
        %794 = vadd.xlane.f32.xlu0 %v784
        %v795 = vpop.xlane.xlu0 %794
        %796 = vadd.xlane.f32.xlu0 %v785
        %v797 = vpop.xlane.xlu0 %796
        %798 = vadd.xlane.f32.xlu0 %v786
        %v799 = vpop.xlane.xlu0 %798
        %800 = vadd.xlane.f32.xlu0 %v787
        %v801 = vpop.xlane.xlu0 %800
        %802 = vadd.xlane.f32.xlu0 %v788
        %v803 = vpop.xlane.xlu0 %802
        %804 = vadd.xlane.f32.xlu0 %v789
        %v805 = vpop.xlane.xlu0 %804
        %v806 = vrcp.pop 128.0
        %v807 = vmul.f32 %v791, %v806
        %v808 = vmul.f32 %v793, %v806
        %v809 = vmul.f32 %v795, %v806
        %v810 = vmul.f32 %v797, %v806
        %v811 = vmul.f32 %v799, %v806
        %v812 = vmul.f32 %v801, %v806
        %v813 = vmul.f32 %v803, %v806
        %v814 = vmul.f32 %v805, %v806
        %v815 = vsub.f32 %v782, %v807
        %v816 = vsub.f32 %v783, %v808
        %v817 = vsub.f32 %v784, %v809
        %v818 = vsub.f32 %v785, %v810
        %v819 = vsub.f32 %v786, %v811
        %v820 = vsub.f32 %v787, %v812
        %v821 = vsub.f32 %v788, %v813
        %v822 = vsub.f32 %v789, %v814
        %v823 = vmul.f32 %v815, %v815
        %v824 = vmul.f32 %v816, %v816
        %v825 = vmul.f32 %v817, %v817
        %v826 = vmul.f32 %v818, %v818
        %v827 = vmul.f32 %v819, %v819
        %v828 = vmul.f32 %v820, %v820
        %v829 = vmul.f32 %v821, %v821
        %v830 = vmul.f32 %v822, %v822
        %831 = vadd.xlane.f32.xlu0 %v823
        %v832 = vpop.xlane.xlu0 %831
        %833 = vadd.xlane.f32.xlu0 %v824
        %v834 = vpop.xlane.xlu0 %833
        %835 = vadd.xlane.f32.xlu0 %v825
        %v836 = vpop.xlane.xlu0 %835
        %837 = vadd.xlane.f32.xlu0 %v826
        %v838 = vpop.xlane.xlu0 %837
        %839 = vadd.xlane.f32.xlu0 %v827
        %v840 = vpop.xlane.xlu0 %839
        %841 = vadd.xlane.f32.xlu0 %v828
        %v842 = vpop.xlane.xlu0 %841
        %843 = vadd.xlane.f32.xlu0 %v829
        %v844 = vpop.xlane.xlu0 %843
        %845 = vadd.xlane.f32.xlu0 %v830
        %v846 = vpop.xlane.xlu0 %845
        %v847 = vmul.f32 %v832, %v806
        %v848 = vmul.f32 %v834, %v806
        %v849 = vmul.f32 %v836, %v806
        %v850 = vmul.f32 %v838, %v806
        %v851 = vmul.f32 %v840, %v806
        %v852 = vmul.f32 %v842, %v806
        %v853 = vmul.f32 %v844, %v806
        %v854 = vmul.f32 %v846, %v806
        %v855 = vadd.f32 %v847, 1e-05
        %v856 = vadd.f32 %v848, 1e-05
        %v857 = vadd.f32 %v849, 1e-05
        %v858 = vadd.f32 %v850, 1e-05
        %v859 = vadd.f32 %v851, 1e-05
        %v860 = vadd.f32 %v852, 1e-05
        %v861 = vadd.f32 %v853, 1e-05
        %v862 = vadd.f32 %v854, 1e-05
        %v863 = vrsqrt.pop %v855
        %v864 = vrsqrt.pop %v856
        %v865 = vrsqrt.pop %v857
        %v866 = vrsqrt.pop %v858
        %v867 = vrsqrt.pop %v859
        %v868 = vrsqrt.pop %v860
        %v869 = vrsqrt.pop %v861
        %v870 = vrsqrt.pop %v862
        %v871 = vmul.f32 %v815, %v863
        %v872 = vmul.f32 %v816, %v864
        %v873 = vmul.f32 %v817, %v865
        %v874 = vmul.f32 %v818, %v866
        %v875 = vmul.f32 %v819, %v867
        %v876 = vmul.f32 %v820, %v868
        %v877 = vmul.f32 %v821, %v869
        %v878 = vmul.f32 %v822, %v870
        %v880 = vlaneseq
        %v881 = vshrl.u32 %v880, 7
        %v882 = vsub.s32 0, %v881
        %v883 = vrot.slane %v731, %v882
        %v885 = vmul.f32 %v871, %v883
        %v886 = vmul.f32 %v872, %v883
        %v887 = vmul.f32 %v873, %v883
        %v888 = vmul.f32 %v874, %v883
        %v889 = vmul.f32 %v875, %v883
        %v890 = vmul.f32 %v876, %v883
        %v891 = vmul.f32 %v877, %v883
        %v892 = vmul.f32 %v878, %v883
        %v894 = vlaneseq
        %v895 = vshrl.u32 %v894, 7
        %v896 = vsub.s32 0, %v895
        %v897 = vrot.slane %v732, %v896
        %v899 = vadd.f32 %v885, %v897
        %v900 = vadd.f32 %v886, %v897
        %v901 = vadd.f32 %v887, %v897
        %v902 = vadd.f32 %v888, %v897
        %v903 = vadd.f32 %v889, %v897
        %v904 = vadd.f32 %v890, %v897
        %v905 = vadd.f32 %v891, %v897
        %v906 = vadd.f32 %v892, %v897
        %v907 = vpack.c.bf16 %v900, %v899
        %v908 = vpack.c.bf16 %v902, %v901
        %v909 = vpack.c.bf16 %v904, %v903
        %v910 = vpack.c.bf16 %v906, %v905
        %v943 = vunpack.c.l.b16 %v733
        %v944 = vunpack.c.h.b16 %v733
        %v945 = vunpack.c.l.b16 %v734
        %v946 = vunpack.c.l.b16 %v735
        %v947 = vunpack.c.h.b16 %v735
        %v948 = vunpack.c.l.b16 %v736
        %v949 = vunpack.c.l.b16 %v737
        %v950 = vunpack.c.h.b16 %v737
        %v951 = vunpack.c.l.b16 %v738
        %v952 = vunpack.c.l.b16 %v739
        %v953 = vunpack.c.h.b16 %v739
        %v954 = vunpack.c.l.b16 %v740
        %v955 = vunpack.c.l.b16 %v741
        %v956 = vunpack.c.h.b16 %v741
        %v957 = vunpack.c.l.b16 %v742
        %v958 = vunpack.c.l.b16 %v743
        %v959 = vunpack.c.h.b16 %v743
        %v960 = vunpack.c.l.b16 %v744
        %v961 = vunpack.c.l.b16 %v745
        %v962 = vunpack.c.h.b16 %v745
        %v963 = vunpack.c.l.b16 %v746
        %v964 = vunpack.c.l.b16 %v747
        %v965 = vunpack.c.h.b16 %v747
        %v966 = vunpack.c.l.b16 %v748
        %v967 = vunpack.c.l.b16 %v749
        %v968 = vunpack.c.h.b16 %v749
        %v969 = vunpack.c.l.b16 %v750
        %v970 = vunpack.c.l.b16 %v751
        %v971 = vunpack.c.h.b16 %v751
        %v972 = vunpack.c.l.b16 %v752
        %v973 = vunpack.c.l.b16 %v753
        %v974 = vunpack.c.h.b16 %v753
        %v975 = vunpack.c.l.b16 %v754
        %v976 = vunpack.c.l.b16 %v755
        %v977 = vunpack.c.h.b16 %v755
        %v978 = vunpack.c.l.b16 %v756
        %v979 = vunpack.c.l.b16 %v757
        %v980 = vunpack.c.h.b16 %v757
        %v981 = vunpack.c.l.b16 %v758
        %v982 = vunpack.c.l.b16 %v759
        %v983 = vunpack.c.h.b16 %v759
        %v984 = vunpack.c.l.b16 %v760
        %v985 = vunpack.c.l.b16 %v761
        %v986 = vunpack.c.h.b16 %v761
        %v987 = vunpack.c.l.b16 %v762
        %v988 = vunpack.c.l.b16 %v763
        %v989 = vunpack.c.h.b16 %v763
        %v990 = vunpack.c.l.b16 %v764
        %v991 = vpack.c.b16 %v946, %v943
        %v992 = vpack.c.b16 %v947, %v944
        %v993 = vpack.c.b16 %v948, %v945
        %v994 = vpack.c.b16 %v952, %v949
        %v995 = vpack.c.b16 %v953, %v950
        %v996 = vpack.c.b16 %v954, %v951
        %v997 = vpack.c.b16 %v958, %v955
        %v998 = vpack.c.b16 %v959, %v956
        %v999 = vpack.c.b16 %v960, %v957
        %v1000 = vpack.c.b16 %v964, %v961
        %v1001 = vpack.c.b16 %v965, %v962
        %v1002 = vpack.c.b16 %v966, %v963
        %v1003 = vpack.c.b16 %v970, %v967
        %v1004 = vpack.c.b16 %v971, %v968
        %v1005 = vpack.c.b16 %v972, %v969
        %v1006 = vpack.c.b16 %v976, %v973
        %v1007 = vpack.c.b16 %v977, %v974
        %v1008 = vpack.c.b16 %v978, %v975
        %v1009 = vpack.c.b16 %v982, %v979
        %v1010 = vpack.c.b16 %v983, %v980
        %v1011 = vpack.c.b16 %v984, %v981
        %v1012 = vpack.c.b16 %v988, %v985
        %v1013 = vpack.c.b16 %v989, %v986
        %v1014 = vpack.c.b16 %v990, %v987
        %1039 = vmatprep.subr.bf16.mxu0 %v992
        %1040 = vmatpush1.bf16.msra.mxu0 %v991
        %1041 = vmatprep.subr.bf16.mxu0 %v995
        %1042 = vmatpush1.bf16.msra.mxu0 %v994
        %1043 = vmatprep.subr.bf16.mxu0 %v998
        %1044 = vmatpush1.bf16.msra.mxu0 %v997
        %1045 = vmatprep.subr.bf16.mxu0 %v1001
        %1046 = vmatpush1.bf16.msra.mxu0 %v1000
        %1047 = vmatprep.subr.bf16.mxu0 %v1004
        %1048 = vmatpush1.bf16.msra.mxu0 %v1003
        %1049 = vmatprep.subr.bf16.mxu0 %v1007
        %1050 = vmatpush1.bf16.msra.mxu0 %v1006
        %1051 = vmatprep.subr.bf16.mxu0 %v1010
        %1052 = vmatpush1.bf16.msra.mxu0 %v1009
        %1053 = vmatprep.subr.bf16.mxu0 %v1013
        %1054 = vmatpush1.bf16.msra.mxu0 %v1012
        %1055 = vmatprep.subr.bf16.mxu0 0
        %1056 = vmatpush1.bf16.msra.mxu0 0
        %1057 = vmatprep.subr.bf16.mxu0 0
        %1058 = vmatpush1.bf16.msra.mxu0 0
        %1059 = vmatprep.subr.bf16.mxu0 0
        %1060 = vmatpush1.bf16.msra.mxu0 0
        %1061 = vmatprep.subr.bf16.mxu0 0
        %1062 = vmatpush1.bf16.msra.mxu0 0
        %1063 = vmatprep.subr.bf16.mxu0 0
        %1064 = vmatpush1.bf16.msra.mxu0 0
        %1065 = vmatprep.subr.bf16.mxu0 0
        %1066 = vmatpush1.bf16.msra.mxu0 0
        %1067 = vmatprep.subr.bf16.mxu0 0
        %1068 = vmatpush1.bf16.msra.mxu0 0
        %1069 = vmatprep.subr.bf16.mxu0 0
        %1070 = vmatpush1.bf16.msra.mxu0 0
        %1071 = vmatprep.mubr.bf16.mxu0 0
        %1072 = vmatmul.mubr.bf16.gmra.mrb[0].mxu0 %v907
        %v1073 = vpop.f32.mrb[0].mxu0
        %v1074 = vadd.f32 %v770, %v1073
        %v1075 = vpop.f32.mrb[0].mxu0
        %v1076 = vadd.f32 %v774, %v1075
        %v1077 = vpop.f32.mrb[0].mxu0
        %v1078 = vadd.f32 %v770, %v1077
        %v1079 = vpop.f32.mrb[0].mxu0
        %v1080 = vadd.f32 %v774, %v1079
        %1081 = vmatprep.mubr.bf16.mxu0 0
        %1082 = vmatmul.mubr.bf16.gmra.mrb[0].mxu0 %v908
        %v1083 = vpop.f32.mrb[0].mxu0
        %v1084 = vadd.f32 %v770, %v1083
        %v1085 = vpop.f32.mrb[0].mxu0
        %v1086 = vadd.f32 %v774, %v1085
        %v1087 = vpop.f32.mrb[0].mxu0
        %v1088 = vadd.f32 %v770, %v1087
        %v1089 = vpop.f32.mrb[0].mxu0
        %v1090 = vadd.f32 %v774, %v1089
        %1091 = vmatprep.mubr.bf16.mxu0 0
        %1092 = vmatmul.mubr.bf16.gmra.mrb[0].mxu0 %v909
        %v1093 = vpop.f32.mrb[0].mxu0
        %v1094 = vadd.f32 %v770, %v1093
        %v1095 = vpop.f32.mrb[0].mxu0
        %v1096 = vadd.f32 %v774, %v1095
        %v1097 = vpop.f32.mrb[0].mxu0
        %v1098 = vadd.f32 %v770, %v1097
        %v1099 = vpop.f32.mrb[0].mxu0
        %v1100 = vadd.f32 %v774, %v1099
        %1101 = vmatprep.mubr.bf16.mxu0 0
        %1102 = vmatmul.mubr.bf16.gmra.mrb[0].mxu0 %v910
        %v1103 = vpop.f32.mrb[0].mxu0
        %v1104 = vadd.f32 %v770, %v1103
        %v1105 = vpop.f32.mrb[0].mxu0
        %v1106 = vadd.f32 %v774, %v1105
        %v1107 = vpop.f32.mrb[0].mxu0
        %v1108 = vadd.f32 %v770, %v1107
        %v1109 = vpop.f32.mrb[0].mxu0
        %v1110 = vadd.f32 %v774, %v1109
        %1111 = vdwg.mxu0
        %1112 = vmatprep.subr.bf16.mxu0 0
        %1113 = vmatpush1.bf16.msra.mxu0 %v993
        %1114 = vmatprep.subr.bf16.mxu0 0
        %1115 = vmatpush1.bf16.msra.mxu0 %v996
        %1116 = vmatprep.subr.bf16.mxu0 0
        %1117 = vmatpush1.bf16.msra.mxu0 %v999
        %1118 = vmatprep.subr.bf16.mxu0 0
        %1119 = vmatpush1.bf16.msra.mxu0 %v1002
        %1120 = vmatprep.subr.bf16.mxu0 0
        %1121 = vmatpush1.bf16.msra.mxu0 %v1005
        %1122 = vmatprep.subr.bf16.mxu0 0
        %1123 = vmatpush1.bf16.msra.mxu0 %v1008
        %1124 = vmatprep.subr.bf16.mxu0 0
        %1125 = vmatpush1.bf16.msra.mxu0 %v1011
        %1126 = vmatprep.subr.bf16.mxu0 0
        %1127 = vmatpush1.bf16.msra.mxu0 %v1014
        %1128 = vmatprep.subr.bf16.mxu0 0
        %1129 = vmatpush1.bf16.msra.mxu0 0
        %1130 = vmatprep.subr.bf16.mxu0 0
        %1131 = vmatpush1.bf16.msra.mxu0 0
        %1132 = vmatprep.subr.bf16.mxu0 0
        %1133 = vmatpush1.bf16.msra.mxu0 0
        %1134 = vmatprep.subr.bf16.mxu0 0
        %1135 = vmatpush1.bf16.msra.mxu0 0
        %1136 = vmatprep.subr.bf16.mxu0 0
        %1137 = vmatpush1.bf16.msra.mxu0 0
        %1138 = vmatprep.subr.bf16.mxu0 0
        %1139 = vmatpush1.bf16.msra.mxu0 0
        %1140 = vmatprep.subr.bf16.mxu0 0
        %1141 = vmatpush1.bf16.msra.mxu0 0
        %1142 = vmatprep.subr.bf16.mxu0 0
        %1143 = vmatpush1.bf16.msra.mxu0 0
        %1144 = vmatprep.mubr.bf16.mxu0 0
        %1145 = vmatmul.mubr.bf16.gmra.mrb[0].mxu0 %v907
        %v1146 = vpop.f32.mrb[0].mxu0
        %v1147 = vadd.f32 %v778, %v1146
        %v1148 = vpop.f32.mrb[0].mxu0
        %v1149 = vpop.f32.mrb[0].mxu0
        %v1150 = vadd.f32 %v778, %v1149
        %v1151 = vpop.f32.mrb[0].mxu0
        %1152 = vmatprep.mubr.bf16.mxu0 0
        %1153 = vmatmul.mubr.bf16.gmra.mrb[0].mxu0 %v908
        %v1154 = vpop.f32.mrb[0].mxu0
        %v1155 = vadd.f32 %v778, %v1154
        %v1156 = vpop.f32.mrb[0].mxu0
        %v1157 = vpop.f32.mrb[0].mxu0
        %v1158 = vadd.f32 %v778, %v1157
        %v1159 = vpop.f32.mrb[0].mxu0
        %1160 = vmatprep.mubr.bf16.mxu0 0
        %1161 = vmatmul.mubr.bf16.gmra.mrb[0].mxu0 %v909
        %v1162 = vpop.f32.mrb[0].mxu0
        %v1163 = vadd.f32 %v778, %v1162
        %v1164 = vpop.f32.mrb[0].mxu0
        %v1165 = vpop.f32.mrb[0].mxu0
        %v1166 = vadd.f32 %v778, %v1165
        %v1167 = vpop.f32.mrb[0].mxu0
        %1168 = vmatprep.mubr.bf16.mxu0 0
        %1169 = vmatmul.mubr.bf16.gmra.mrb[0].mxu0 %v910
        %v1170 = vpop.f32.mrb[0].mxu0
        %v1171 = vadd.f32 %v778, %v1170
        %v1172 = vpop.f32.mrb[0].mxu0
        %v1173 = vpop.f32.mrb[0].mxu0
        %v1174 = vadd.f32 %v778, %v1173
        %v1175 = vpop.f32.mrb[0].mxu0
        %1176 = vdwg.mxu0
        %1177 = vst [vmem:[#allocation2] sm:$0xff] %v1074
        %1178 = vst [vmem:[#allocation2 + $0x8] sm:$0xff] %v1076
        %1179 = vst [vmem:[#allocation2 + $0x10] sm:$0xff] %v1147
        %1180 = vst [vmem:[#allocation2 + $0x18] sm:$0xff] %v1078
        %1181 = vst [vmem:[#allocation2 + $0x20] sm:$0xff] %v1080
        %1182 = vst [vmem:[#allocation2 + $0x28] sm:$0xff] %v1150
        %1183 = vst [vmem:[#allocation2 + $0x30] sm:$0xff] %v1084
        %1184 = vst [vmem:[#allocation2 + $0x38] sm:$0xff] %v1086
        %1185 = vst [vmem:[#allocation2 + $0x40] sm:$0xff] %v1155
        %1186 = vst [vmem:[#allocation2 + $0x48] sm:$0xff] %v1088
        %1187 = vst [vmem:[#allocation2 + $0x50] sm:$0xff] %v1090
        %1188 = vst [vmem:[#allocation2 + $0x58] sm:$0xff] %v1158
        %1189 = vst [vmem:[#allocation2 + $0x60] sm:$0xff] %v1094
        %1190 = vst [vmem:[#allocation2 + $0x68] sm:$0xff] %v1096
        %1191 = vst [vmem:[#allocation2 + $0x70] sm:$0xff] %v1163
        %1192 = vst [vmem:[#allocation2 + $0x78] sm:$0xff] %v1098
        %1193 = vst [vmem:[#allocation2 + $0x80] sm:$0xff] %v1100
        %1194 = vst [vmem:[#allocation2 + $0x88] sm:$0xff] %v1166
        %1195 = vst [vmem:[#allocation2 + $0x90] sm:$0xff] %v1104
        %1196 = vst [vmem:[#allocation2 + $0x98] sm:$0xff] %v1106
        %1197 = vst [vmem:[#allocation2 + $0xa0] sm:$0xff] %v1171
        %1198 = vst [vmem:[#allocation2 + $0xa8] sm:$0xff] %v1108
        %1199 = vst [vmem:[#allocation2 + $0xb0] sm:$0xff] %v1110
        %1200 = vst [vmem:[#allocation2 + $0xb8] sm:$0xff] %v1174
        %v1201 = vld [vmem:[%s604 + $0x8] sm:$0xff]
        %v1202 = vld [vmem:[%s604 + $0x18] sm:$0xff]
        %v1203 = vld [vmem:[%s604 + $0x28] sm:$0xff]
        %v1204 = vld [vmem:[%s604 + $0x38] sm:$0xff]
        %v1205 = vld [vmem:[%s604 + $0x48] sm:$0xff]
        %v1206 = vld [vmem:[%s604 + $0x58] sm:$0xff]
        %v1207 = vld [vmem:[%s604 + $0x68] sm:$0xff]
        %v1208 = vld [vmem:[%s604 + $0x78] sm:$0xff]
        %1209 = vadd.xlane.f32.xlu0 %v1201
        %v1210 = vpop.xlane.xlu0 %1209
        %1211 = vadd.xlane.f32.xlu0 %v1202
        %v1212 = vpop.xlane.xlu0 %1211
        %1213 = vadd.xlane.f32.xlu0 %v1203
        %v1214 = vpop.xlane.xlu0 %1213
        %1215 = vadd.xlane.f32.xlu0 %v1204
        %v1216 = vpop.xlane.xlu0 %1215
        %1217 = vadd.xlane.f32.xlu0 %v1205
        %v1218 = vpop.xlane.xlu0 %1217
        %1219 = vadd.xlane.f32.xlu0 %v1206
        %v1220 = vpop.xlane.xlu0 %1219
        %1221 = vadd.xlane.f32.xlu0 %v1207
        %v1222 = vpop.xlane.xlu0 %1221
        %1223 = vadd.xlane.f32.xlu0 %v1208
        %v1224 = vpop.xlane.xlu0 %1223
        %v1225 = vmul.f32 %v1210, %v806
        %v1226 = vmul.f32 %v1212, %v806
        %v1227 = vmul.f32 %v1214, %v806
        %v1228 = vmul.f32 %v1216, %v806
        %v1229 = vmul.f32 %v1218, %v806
        %v1230 = vmul.f32 %v1220, %v806
        %v1231 = vmul.f32 %v1222, %v806
        %v1232 = vmul.f32 %v1224, %v806
        %v1233 = vsub.f32 %v1201, %v1225
        %v1234 = vsub.f32 %v1202, %v1226
        %v1235 = vsub.f32 %v1203, %v1227
        %v1236 = vsub.f32 %v1204, %v1228
        %v1237 = vsub.f32 %v1205, %v1229
        %v1238 = vsub.f32 %v1206, %v1230
        %v1239 = vsub.f32 %v1207, %v1231
        %v1240 = vsub.f32 %v1208, %v1232
        %v1241 = vmul.f32 %v1233, %v1233
        %v1242 = vmul.f32 %v1234, %v1234
        %v1243 = vmul.f32 %v1235, %v1235
        %v1244 = vmul.f32 %v1236, %v1236
        %v1245 = vmul.f32 %v1237, %v1237
        %v1246 = vmul.f32 %v1238, %v1238
        %v1247 = vmul.f32 %v1239, %v1239
        %v1248 = vmul.f32 %v1240, %v1240
        %1249 = vadd.xlane.f32.xlu0 %v1241
        %v1250 = vpop.xlane.xlu0 %1249
        %1251 = vadd.xlane.f32.xlu0 %v1242
        %v1252 = vpop.xlane.xlu0 %1251
        %1253 = vadd.xlane.f32.xlu0 %v1243
        %v1254 = vpop.xlane.xlu0 %1253
        %1255 = vadd.xlane.f32.xlu0 %v1244
        %v1256 = vpop.xlane.xlu0 %1255
        %1257 = vadd.xlane.f32.xlu0 %v1245
        %v1258 = vpop.xlane.xlu0 %1257
        %1259 = vadd.xlane.f32.xlu0 %v1246
        %v1260 = vpop.xlane.xlu0 %1259
        %1261 = vadd.xlane.f32.xlu0 %v1247
        %v1262 = vpop.xlane.xlu0 %1261
        %1263 = vadd.xlane.f32.xlu0 %v1248
        %v1264 = vpop.xlane.xlu0 %1263
        %v1265 = vmul.f32 %v1250, %v806
        %v1266 = vmul.f32 %v1252, %v806
        %v1267 = vmul.f32 %v1254, %v806
        %v1268 = vmul.f32 %v1256, %v806
        %v1269 = vmul.f32 %v1258, %v806
        %v1270 = vmul.f32 %v1260, %v806
        %v1271 = vmul.f32 %v1262, %v806
        %v1272 = vmul.f32 %v1264, %v806
        %v1273 = vadd.f32 %v1265, 1e-05
        %v1274 = vadd.f32 %v1266, 1e-05
        %v1275 = vadd.f32 %v1267, 1e-05
        %v1276 = vadd.f32 %v1268, 1e-05
        %v1277 = vadd.f32 %v1269, 1e-05
        %v1278 = vadd.f32 %v1270, 1e-05
        %v1279 = vadd.f32 %v1271, 1e-05
        %v1280 = vadd.f32 %v1272, 1e-05
        %v1281 = vrsqrt.pop %v1273
        %v1282 = vrsqrt.pop %v1274
        %v1283 = vrsqrt.pop %v1275
        %v1284 = vrsqrt.pop %v1276
        %v1285 = vrsqrt.pop %v1277
        %v1286 = vrsqrt.pop %v1278
        %v1287 = vrsqrt.pop %v1279
        %v1288 = vrsqrt.pop %v1280
        %v1289 = vmul.f32 %v1233, %v1281
        %v1290 = vmul.f32 %v1234, %v1282
        %v1291 = vmul.f32 %v1235, %v1283
        %v1292 = vmul.f32 %v1236, %v1284
        %v1293 = vmul.f32 %v1237, %v1285
        %v1294 = vmul.f32 %v1238, %v1286
        %v1295 = vmul.f32 %v1239, %v1287
        %v1296 = vmul.f32 %v1240, %v1288
        %v1297 = vmul.f32 %v1289, %v883
        %v1298 = vmul.f32 %v1290, %v883
        %v1299 = vmul.f32 %v1291, %v883
        %v1300 = vmul.f32 %v1292, %v883
        %v1301 = vmul.f32 %v1293, %v883
        %v1302 = vmul.f32 %v1294, %v883
        %v1303 = vmul.f32 %v1295, %v883
        %v1304 = vmul.f32 %v1296, %v883
        %v1305 = vadd.f32 %v1297, %v897
        %v1306 = vadd.f32 %v1298, %v897
        %v1307 = vadd.f32 %v1299, %v897
        %v1308 = vadd.f32 %v1300, %v897
        %v1309 = vadd.f32 %v1301, %v897
        %v1310 = vadd.f32 %v1302, %v897
        %v1311 = vadd.f32 %v1303, %v897
        %v1312 = vadd.f32 %v1304, %v897
        %v1313 = vpack.c.bf16 %v1306, %v1305
        %v1314 = vpack.c.bf16 %v1308, %v1307
        %v1315 = vpack.c.bf16 %v1310, %v1309
        %v1316 = vpack.c.bf16 %v1312, %v1311
        %1317 = vmatprep.subr.bf16.mxu0 %v992
        %1318 = vmatpush1.bf16.msra.mxu0 %v991
        %1319 = vmatprep.subr.bf16.mxu0 %v995
        %1320 = vmatpush1.bf16.msra.mxu0 %v994
        %1321 = vmatprep.subr.bf16.mxu0 %v998
        %1322 = vmatpush1.bf16.msra.mxu0 %v997
        %1323 = vmatprep.subr.bf16.mxu0 %v1001
        %1324 = vmatpush1.bf16.msra.mxu0 %v1000
        %1325 = vmatprep.subr.bf16.mxu0 %v1004
        %1326 = vmatpush1.bf16.msra.mxu0 %v1003
        %1327 = vmatprep.subr.bf16.mxu0 %v1007
        %1328 = vmatpush1.bf16.msra.mxu0 %v1006
        %1329 = vmatprep.subr.bf16.mxu0 %v1010
        %1330 = vmatpush1.bf16.msra.mxu0 %v1009
        %1331 = vmatprep.subr.bf16.mxu0 %v1013
        %1332 = vmatpush1.bf16.msra.mxu0 %v1012
        %1333 = vmatprep.subr.bf16.mxu0 0
        %1334 = vmatpush1.bf16.msra.mxu0 0
        %1335 = vmatprep.subr.bf16.mxu0 0
        %1336 = vmatpush1.bf16.msra.mxu0 0
        %1337 = vmatprep.subr.bf16.mxu0 0
        %1338 = vmatpush1.bf16.msra.mxu0 0
        %1339 = vmatprep.subr.bf16.mxu0 0
        %1340 = vmatpush1.bf16.msra.mxu0 0
        %1341 = vmatprep.subr.bf16.mxu0 0
        %1342 = vmatpush1.bf16.msra.mxu0 0
        %1343 = vmatprep.subr.bf16.mxu0 0
        %1344 = vmatpush1.bf16.msra.mxu0 0
        %1345 = vmatprep.subr.bf16.mxu0 0
        %1346 = vmatpush1.bf16.msra.mxu0 0
        %1347 = vmatprep.subr.bf16.mxu0 0
        %1348 = vmatpush1.bf16.msra.mxu0 0
        %1349 = vmatprep.mubr.bf16.mxu0 0
        %1350 = vmatmul.mubr.bf16.gmra.mrb[0].mxu0 %v1313
        %v1351 = vpop.f32.mrb[0].mxu0
        %v1352 = vadd.f32 %v770, %v1351
        %v1353 = vpop.f32.mrb[0].mxu0
        %v1354 = vadd.f32 %v774, %v1353
        %v1355 = vpop.f32.mrb[0].mxu0
        %v1356 = vadd.f32 %v770, %v1355
        %v1357 = vpop.f32.mrb[0].mxu0
        %v1358 = vadd.f32 %v774, %v1357
        %1359 = vmatprep.mubr.bf16.mxu0 0
        %1360 = vmatmul.mubr.bf16.gmra.mrb[0].mxu0 %v1314
        %v1361 = vpop.f32.mrb[0].mxu0
        %v1362 = vadd.f32 %v770, %v1361
        %v1363 = vpop.f32.mrb[0].mxu0
        %v1364 = vadd.f32 %v774, %v1363
        %v1365 = vpop.f32.mrb[0].mxu0
        %v1366 = vadd.f32 %v770, %v1365
        %v1367 = vpop.f32.mrb[0].mxu0
        %v1368 = vadd.f32 %v774, %v1367
        %1369 = vmatprep.mubr.bf16.mxu0 0
        %1370 = vmatmul.mubr.bf16.gmra.mrb[0].mxu0 %v1315
        %v1371 = vpop.f32.mrb[0].mxu0
        %v1372 = vadd.f32 %v770, %v1371
        %v1373 = vpop.f32.mrb[0].mxu0
        %v1374 = vadd.f32 %v774, %v1373
        %v1375 = vpop.f32.mrb[0].mxu0
        %v1376 = vadd.f32 %v770, %v1375
        %v1377 = vpop.f32.mrb[0].mxu0
        %v1378 = vadd.f32 %v774, %v1377
        %1379 = vmatprep.mubr.bf16.mxu0 0
        %1380 = vmatmul.mubr.bf16.gmra.mrb[0].mxu0 %v1316
        %v1381 = vpop.f32.mrb[0].mxu0
        %v1382 = vadd.f32 %v770, %v1381
        %v1383 = vpop.f32.mrb[0].mxu0
        %v1384 = vadd.f32 %v774, %v1383
        %v1385 = vpop.f32.mrb[0].mxu0
        %v1386 = vadd.f32 %v770, %v1385
        %v1387 = vpop.f32.mrb[0].mxu0
        %v1388 = vadd.f32 %v774, %v1387
        %1389 = vdwg.mxu0
        %1390 = vmatprep.subr.bf16.mxu0 0
        %1391 = vmatpush1.bf16.msra.mxu0 %v993
        %1392 = vmatprep.subr.bf16.mxu0 0
        %1393 = vmatpush1.bf16.msra.mxu0 %v996
        %1394 = vmatprep.subr.bf16.mxu0 0
        %1395 = vmatpush1.bf16.msra.mxu0 %v999
        %1396 = vmatprep.subr.bf16.mxu0 0
        %1397 = vmatpush1.bf16.msra.mxu0 %v1002
        %1398 = vmatprep.subr.bf16.mxu0 0
        %1399 = vmatpush1.bf16.msra.mxu0 %v1005
        %1400 = vmatprep.subr.bf16.mxu0 0
        %1401 = vmatpush1.bf16.msra.mxu0 %v1008
        %1402 = vmatprep.subr.bf16.mxu0 0
        %1403 = vmatpush1.bf16.msra.mxu0 %v1011
        %1404 = vmatprep.subr.bf16.mxu0 0
        %1405 = vmatpush1.bf16.msra.mxu0 %v1014
        %1406 = vmatprep.subr.bf16.mxu0 0
        %1407 = vmatpush1.bf16.msra.mxu0 0
        %1408 = vmatprep.subr.bf16.mxu0 0
        %1409 = vmatpush1.bf16.msra.mxu0 0
        %1410 = vmatprep.subr.bf16.mxu0 0
        %1411 = vmatpush1.bf16.msra.mxu0 0
        %1412 = vmatprep.subr.bf16.mxu0 0
        %1413 = vmatpush1.bf16.msra.mxu0 0
        %1414 = vmatprep.subr.bf16.mxu0 0
        %1415 = vmatpush1.bf16.msra.mxu0 0
        %1416 = vmatprep.subr.bf16.mxu0 0
        %1417 = vmatpush1.bf16.msra.mxu0 0
        %1418 = vmatprep.subr.bf16.mxu0 0
        %1419 = vmatpush1.bf16.msra.mxu0 0
        %1420 = vmatprep.subr.bf16.mxu0 0
        %1421 = vmatpush1.bf16.msra.mxu0 0
        %1422 = vmatprep.mubr.bf16.mxu0 0
        %1423 = vmatmul.mubr.bf16.gmra.mrb[0].mxu0 %v1313
        %v1424 = vpop.f32.mrb[0].mxu0
        %v1425 = vadd.f32 %v778, %v1424
        %v1426 = vpop.f32.mrb[0].mxu0
        %v1427 = vpop.f32.mrb[0].mxu0
        %v1428 = vadd.f32 %v778, %v1427
        %v1429 = vpop.f32.mrb[0].mxu0
        %1430 = vmatprep.mubr.bf16.mxu0 0
        %1431 = vmatmul.mubr.bf16.gmra.mrb[0].mxu0 %v1314
        %v1432 = vpop.f32.mrb[0].mxu0
        %v1433 = vadd.f32 %v778, %v1432
        %v1434 = vpop.f32.mrb[0].mxu0
        %v1435 = vpop.f32.mrb[0].mxu0
        %v1436 = vadd.f32 %v778, %v1435
        %v1437 = vpop.f32.mrb[0].mxu0
        %1438 = vmatprep.mubr.bf16.mxu0 0
        %1439 = vmatmul.mubr.bf16.gmra.mrb[0].mxu0 %v1315
        %v1440 = vpop.f32.mrb[0].mxu0
        %v1441 = vadd.f32 %v778, %v1440
        %v1442 = vpop.f32.mrb[0].mxu0
        %v1443 = vpop.f32.mrb[0].mxu0
        %v1444 = vadd.f32 %v778, %v1443
        %v1445 = vpop.f32.mrb[0].mxu0
        %1446 = vmatprep.mubr.bf16.mxu0 0
        %1447 = vmatmul.mubr.bf16.gmra.mrb[0].mxu0 %v1316
        %v1448 = vpop.f32.mrb[0].mxu0
        %v1449 = vadd.f32 %v778, %v1448
        %v1450 = vpop.f32.mrb[0].mxu0
        %v1451 = vpop.f32.mrb[0].mxu0
        %v1452 = vadd.f32 %v778, %v1451
        %v1453 = vpop.f32.mrb[0].mxu0
        %1454 = vdwg.mxu0
        %s1455 = scalar_lea.vmem [#allocation2], 192
        %1456 = vst [vmem:[%s1455] sm:$0xff] %v1352
        %1457 = vst [vmem:[%s1455 + $0x8] sm:$0xff] %v1354
        %1458 = vst [vmem:[%s1455 + $0x10] sm:$0xff] %v1425
        %1459 = vst [vmem:[%s1455 + $0x18] sm:$0xff] %v1356
        %1460 = vst [vmem:[%s1455 + $0x20] sm:$0xff] %v1358
        %1461 = vst [vmem:[%s1455 + $0x28] sm:$0xff] %v1428
        %1462 = vst [vmem:[%s1455 + $0x30] sm:$0xff] %v1362
        %1463 = vst [vmem:[%s1455 + $0x38] sm:$0xff] %v1364
        %1464 = vst [vmem:[%s1455 + $0x40] sm:$0xff] %v1433
        %1465 = vst [vmem:[%s1455 + $0x48] sm:$0xff] %v1366
        %1466 = vst [vmem:[%s1455 + $0x50] sm:$0xff] %v1368
        %1467 = vst [vmem:[%s1455 + $0x58] sm:$0xff] %v1436
        %1468 = vst [vmem:[%s1455 + $0x60] sm:$0xff] %v1372
        %1469 = vst [vmem:[%s1455 + $0x68] sm:$0xff] %v1374
        %1470 = vst [vmem:[%s1455 + $0x70] sm:$0xff] %v1441
        %1471 = vst [vmem:[%s1455 + $0x78] sm:$0xff] %v1376
        %1472 = vst [vmem:[%s1455 + $0x80] sm:$0xff] %v1378
        %1473 = vst [vmem:[%s1455 + $0x88] sm:$0xff] %v1444
        %1474 = vst [vmem:[%s1455 + $0x90] sm:$0xff] %v1382
        %1475 = vst [vmem:[%s1455 + $0x98] sm:$0xff] %v1384
        %1476 = vst [vmem:[%s1455 + $0xa0] sm:$0xff] %v1449
        %1477 = vst [vmem:[%s1455 + $0xa8] sm:$0xff] %v1386
        %1478 = vst [vmem:[%s1455 + $0xb0] sm:$0xff] %v1388
        %1479 = vst [vmem:[%s1455 + $0xb8] sm:$0xff] %v1452
        %v1480 = vld [vmem:[#allocation16] sm:$0xff]
        %v1481 = vld [vmem:[#allocation16 + $0x8] sm:$0xff]
        %v1482 = vld [vmem:[#allocation16 + $0x10] sm:$0xff]
        %v1483 = vld [vmem:[#allocation16 + $0x18] sm:$0xff]
        %v1484 = vld [vmem:[#allocation16 + $0x20] sm:$0xff]
        %v1485 = vld [vmem:[#allocation16 + $0x28] sm:$0xff]
        %v1486 = vld [vmem:[#allocation16 + $0x30] sm:$0xff]
        %v1487 = vld [vmem:[#allocation16 + $0x38] sm:$0xff]
        %v1488 = vld [vmem:[#allocation16 + $0x40] sm:$0xff]
        %v1489 = vld [vmem:[#allocation16 + $0x48] sm:$0xff]
        %v1490 = vld [vmem:[#allocation16 + $0x50] sm:$0xff]
        %v1491 = vld [vmem:[#allocation16 + $0x58] sm:$0xff]
        %v1492 = vld [vmem:[#allocation16 + $0x60] sm:$0xff]
        %v1493 = vld [vmem:[#allocation16 + $0x68] sm:$0xff]
        %v1494 = vld [vmem:[#allocation16 + $0x70] sm:$0xff]
        %v1495 = vld [vmem:[#allocation16 + $0x78] sm:$0xff]
        %v1496 = vld [vmem:[#allocation16 + $0x80] sm:$0xff]
        %v1497 = vld [vmem:[#allocation16 + $0x88] sm:$0xff]
        %v1498 = vld [vmem:[#allocation16 + $0x90] sm:$0xff]
        %v1499 = vld [vmem:[#allocation16 + $0x98] sm:$0xff]
        %v1500 = vld [vmem:[#allocation16 + $0xa0] sm:$0xff]
        %v1501 = vld [vmem:[#allocation16 + $0xa8] sm:$0xff]
        %v1502 = vld [vmem:[#allocation16 + $0xb0] sm:$0xff]
        %v1503 = vld [vmem:[#allocation16 + $0xb8] sm:$0xff]
        %v1504 = vld [vmem:[#allocation16 + $0xc0] sm:$0xff]
        %v1505 = vld [vmem:[#allocation16 + $0xc8] sm:$0xff]
        %v1506 = vld [vmem:[#allocation16 + $0xd0] sm:$0xff]
        %v1507 = vld [vmem:[#allocation16 + $0xd8] sm:$0xff]
        %v1508 = vld [vmem:[#allocation16 + $0xe0] sm:$0xff]
        %v1509 = vld [vmem:[#allocation16 + $0xe8] sm:$0xff]
        %v1510 = vld [vmem:[#allocation16 + $0xf0] sm:$0xff]
        %v1511 = vld [vmem:[#allocation16 + $0xf8] sm:$0xff]
        %v1512 = vld [vmem:[#allocation16 + $0x100] sm:$0xff]
        %v1513 = vld [vmem:[#allocation16 + $0x108] sm:$0xff]
        %v1514 = vld [vmem:[#allocation16 + $0x110] sm:$0xff]
        %v1515 = vld [vmem:[#allocation16 + $0x118] sm:$0xff]
        %v1516 = vld [vmem:[#allocation16 + $0x120] sm:$0xff]
        %v1517 = vld [vmem:[#allocation16 + $0x128] sm:$0xff]
        %v1518 = vld [vmem:[#allocation16 + $0x130] sm:$0xff]
        %v1519 = vld [vmem:[#allocation16 + $0x138] sm:$0xff]
        %v1520 = vld [vmem:[#allocation16 + $0x140] sm:$0xff]
        %v1521 = vld [vmem:[#allocation16 + $0x148] sm:$0xff]
        %v1522 = vld [vmem:[#allocation16 + $0x150] sm:$0xff]
        %v1523 = vld [vmem:[#allocation16 + $0x158] sm:$0xff]
        %v1524 = vld [vmem:[#allocation16 + $0x160] sm:$0xff]
        %v1525 = vld [vmem:[#allocation16 + $0x168] sm:$0xff]
        %v1526 = vld [vmem:[#allocation16 + $0x170] sm:$0xff]
        %v1527 = vld [vmem:[#allocation16 + $0x178] sm:$0xff]
        %v1528 = vld [vmem:[#allocation19] sm:$0xff]
        %v1529 = vld [vmem:[#allocation19 + $0x8] sm:$0xf]
        %v1530 = vld [vmem:[#allocation19 + $0xc] sm:$0xff]
        %v1531 = vld [vmem:[#allocation19 + $0x14] sm:$0xf]
        %v1532 = vld [vmem:[#allocation19 + $0x18] sm:$0xff]
        %v1533 = vld [vmem:[#allocation19 + $0x20] sm:$0xf]
        %v1534 = vld [vmem:[#allocation19 + $0x24] sm:$0xff]
        %v1535 = vld [vmem:[#allocation19 + $0x2c] sm:$0xf]
        %v1536 = vld [vmem:[#allocation19 + $0x30] sm:$0xff]
        %v1537 = vld [vmem:[#allocation19 + $0x38] sm:$0xf]
        %v1538 = vld [vmem:[#allocation19 + $0x3c] sm:$0xff]
        %v1539 = vld [vmem:[#allocation19 + $0x44] sm:$0xf]
        %v1540 = vld [vmem:[#allocation19 + $0x48] sm:$0xff]
        %v1541 = vld [vmem:[#allocation19 + $0x50] sm:$0xf]
        %v1542 = vld [vmem:[#allocation19 + $0x54] sm:$0xff]
        %v1543 = vld [vmem:[#allocation19 + $0x5c] sm:$0xf]
        %v1544 = vld [vmem:[#allocation19 + $0x60] sm:$0xff]
        %v1545 = vld [vmem:[#allocation19 + $0x68] sm:$0xf]
        %v1546 = vld [vmem:[#allocation19 + $0x6c] sm:$0xff]
        %v1547 = vld [vmem:[#allocation19 + $0x74] sm:$0xf]
        %v1548 = vld [vmem:[#allocation19 + $0x78] sm:$0xff]
        %v1549 = vld [vmem:[#allocation19 + $0x80] sm:$0xf]
        %v1550 = vld [vmem:[#allocation19 + $0x84] sm:$0xff]
        %v1551 = vld [vmem:[#allocation19 + $0x8c] sm:$0xf]
        %v1552 = vld [vmem:[#allocation19 + $0x90] sm:$0xff]
        %v1553 = vld [vmem:[#allocation19 + $0x98] sm:$0xf]
        %v1554 = vld [vmem:[#allocation19 + $0x9c] sm:$0xff]
        %v1555 = vld [vmem:[#allocation19 + $0xa4] sm:$0xf]
        %v1556 = vld [vmem:[#allocation19 + $0xa8] sm:$0xff]
        %v1557 = vld [vmem:[#allocation19 + $0xb0] sm:$0xf]
        %v1558 = vld [vmem:[#allocation19 + $0xb4] sm:$0xff]
        %v1559 = vld [vmem:[#allocation19 + $0xbc] sm:$0xf]
        %v1560 = vld [vmem:[#allocation18] sm:$0x3f]
        %v1562 = vlaneseq
        %v1563 = vshrl.u32 %v1562, 7
        %v1564 = vsub.s32 0, %v1563
        %v1565 = vrot.slane %v1560, %v1564
        %v1566 = vlaneseq
        %v1567 = vshrl.u32 %v1566, 7
        %v1568 = vsub.s32 1, %v1567
        %v1569 = vrot.slane %v1560, %v1568
        %v1570 = vlaneseq
        %v1571 = vshrl.u32 %v1570, 7
        %v1572 = vsub.s32 2, %v1571
        %v1573 = vrot.slane %v1560, %v1572
        %v1574 = vlaneseq
        %v1575 = vshrl.u32 %v1574, 7
        %v1576 = vsub.s32 3, %v1575
        %v1577 = vrot.slane %v1560, %v1576
        %v1578 = vlaneseq
        %v1579 = vshrl.u32 %v1578, 7
        %v1580 = vsub.s32 4, %v1579
        %v1581 = vrot.slane %v1560, %v1580
        %v1582 = vlaneseq
        %v1583 = vshrl.u32 %v1582, 7
        %v1584 = vsub.s32 5, %v1583
        %v1585 = vrot.slane %v1560, %v1584
        %v1592 = vld [vmem:[#allocation21] sm:$0x1]
        %v1594 = vlaneseq
        %v1595 = vshrl.u32 %v1594, 7
        %v1596 = vsub.s32 0, %v1595
        %v1597 = vrot.slane %v1592, %v1596
        %v1599 = vld [vmem:[#allocation3] sm:$0xff]
        %v1600 = vld [vmem:[#allocation4] sm:$0xff]
        %v1601 = vld [vmem:[#allocation5] sm:$0xff]
        %v1602 = vld [vmem:[#allocation5 + $0x8] sm:$0xff]
        %v1603 = vld [vmem:[#allocation5 + $0x10] sm:$0xff]
        %v1604 = vld [vmem:[#allocation6] sm:$0xff]
        loop: start=0, step=1, limit=2
        $region137: #{audio_bilstm_net_forward.1} parent=75 // loop_pre_header
          _
        $region138: #{audio_bilstm_net_forward.1} parent=75 // loop_header
          %s1606 = sphi 0, %s1610
          %p1607 = scmp.ge.s32.totalorder %s1606, 2
          %v1611 = vphi %v1599, %v6096
          %v1612 = vphi %v1600, %v6073
          %v1613 = vphi %v1601, %v6007
          %v1614 = vphi %v1602, %v6046
          %v1615 = vphi %v1603, %v6048
          %v1616 = vphi %v1604, %v6074
        $region139: #{audio_bilstm_net_forward.1} parent=75 // loop_header_branch
          %1609 = sbr.rel (%p1607) target = $region143
        $region140: #{audio_bilstm_net_forward.1} parent=75 // loop_body
          %s1617 = smul.u32 %s1606, 24
          %s1618 = smul.addr %s1617, 8
          %s1619 = scalar_lea.vmem [#allocation2], %s1618
          %v1620 = vld [vmem:[%s1619] sm:$0xff]
          %v1621 = vld [vmem:[%s1619 + $0x8] sm:$0xff]
          %v1622 = vld [vmem:[%s1619 + $0x10] sm:$0xff]
          %v1623 = vld [vmem:[%s1619 + $0x18] sm:$0xff]
          %v1624 = vld [vmem:[%s1619 + $0x20] sm:$0xff]
          %v1625 = vld [vmem:[%s1619 + $0x28] sm:$0xff]
          %v1626 = vld [vmem:[%s1619 + $0x30] sm:$0xff]
          %v1627 = vld [vmem:[%s1619 + $0x38] sm:$0xff]
          %v1628 = vld [vmem:[%s1619 + $0x40] sm:$0xff]
          %v1629 = vld [vmem:[%s1619 + $0x48] sm:$0xff]
          %v1630 = vld [vmem:[%s1619 + $0x50] sm:$0xff]
          %v1631 = vld [vmem:[%s1619 + $0x58] sm:$0xff]
          %v1632 = vld [vmem:[%s1619 + $0x60] sm:$0xff]
          %v1633 = vld [vmem:[%s1619 + $0x68] sm:$0xff]
          %v1634 = vld [vmem:[%s1619 + $0x70] sm:$0xff]
          %v1635 = vld [vmem:[%s1619 + $0x78] sm:$0xff]
          %v1636 = vld [vmem:[%s1619 + $0x80] sm:$0xff]
          %v1637 = vld [vmem:[%s1619 + $0x88] sm:$0xff]
          %v1638 = vld [vmem:[%s1619 + $0x90] sm:$0xff]
          %v1639 = vld [vmem:[%s1619 + $0x98] sm:$0xff]
          %v1640 = vld [vmem:[%s1619 + $0xa0] sm:$0xff]
          %v1641 = vld [vmem:[%s1619 + $0xa8] sm:$0xff]
          %v1642 = vld [vmem:[%s1619 + $0xb0] sm:$0xff]
          %v1643 = vld [vmem:[%s1619 + $0xb8] sm:$0xff]
          %v1645 = vrot.slane %v1613, 1
          %v1646 = vrot.slane %v1613, 2
          %v1647 = vrot.slane %v1613, 3
          %v1648 = vrot.slane %v1613, 4
          %v1649 = vrot.slane %v1613, 5
          %v1650 = vrot.slane %v1613, 6
          %v1651 = vrot.slane %v1613, 7
          %v1660 = vadd.f32 %v1620, %v1613
          %v1661 = vadd.f32 %v1623, %v1645
          %v1662 = vadd.f32 %v1626, %v1646
          %v1663 = vadd.f32 %v1629, %v1647
          %v1664 = vadd.f32 %v1632, %v1648
          %v1665 = vadd.f32 %v1635, %v1649
          %v1666 = vadd.f32 %v1638, %v1650
          %v1667 = vadd.f32 %v1641, %v1651
          %v1668 = vxor.u32 %v1660, 2147483648
          %v1669 = vxor.u32 %v1661, 2147483648
          %v1670 = vxor.u32 %v1662, 2147483648
          %v1671 = vxor.u32 %v1663, 2147483648
          %v1672 = vxor.u32 %v1664, 2147483648
          %v1673 = vxor.u32 %v1665, 2147483648
          %v1674 = vxor.u32 %v1666, 2147483648
          %v1675 = vxor.u32 %v1667, 2147483648
          %v1676 = vmul.f32 %v1668, 1.442695
          %v1677 = vpow.pop %v1676
          %v1678 = vmul.f32 %v1669, 1.442695
          %v1679 = vpow.pop %v1678
          %v1680 = vmul.f32 %v1670, 1.442695
          %v1681 = vpow.pop %v1680
          %v1682 = vmul.f32 %v1671, 1.442695
          %v1683 = vpow.pop %v1682
          %v1684 = vmul.f32 %v1672, 1.442695
          %v1685 = vpow.pop %v1684
          %v1686 = vmul.f32 %v1673, 1.442695
          %v1687 = vpow.pop %v1686
          %v1688 = vmul.f32 %v1674, 1.442695
          %v1689 = vpow.pop %v1688
          %v1690 = vmul.f32 %v1675, 1.442695
          %v1691 = vpow.pop %v1690
          %v1692 = vadd.f32 %v1677, 1.0
          %v1693 = vadd.f32 %v1679, 1.0
          %v1694 = vadd.f32 %v1681, 1.0
          %v1695 = vadd.f32 %v1683, 1.0
          %v1696 = vadd.f32 %v1685, 1.0
          %v1697 = vadd.f32 %v1687, 1.0
          %v1698 = vadd.f32 %v1689, 1.0
          %v1699 = vadd.f32 %v1691, 1.0
          %v1700 = vrcp.pop %v1692
          %v1701 = vmul.f32 1.0, %v1700
          %v1702 = vrcp.pop %v1693
          %v1703 = vmul.f32 1.0, %v1702
          %v1704 = vrcp.pop %v1694
          %v1705 = vmul.f32 1.0, %v1704
          %v1706 = vrcp.pop %v1695
          %v1707 = vmul.f32 1.0, %v1706
          %v1708 = vrcp.pop %v1696
          %v1709 = vmul.f32 1.0, %v1708
          %v1710 = vrcp.pop %v1697
          %v1711 = vmul.f32 1.0, %v1710
          %v1712 = vrcp.pop %v1698
          %v1713 = vmul.f32 1.0, %v1712
          %v1714 = vrcp.pop %v1699
          %v1715 = vmul.f32 1.0, %v1714
          %v1717 = vrot.slane %v1614, 1
          %v1718 = vrot.slane %v1614, 2
          %v1719 = vrot.slane %v1614, 3
          %v1720 = vrot.slane %v1614, 4
          %v1721 = vrot.slane %v1614, 5
          %v1722 = vrot.slane %v1614, 6
          %v1723 = vrot.slane %v1614, 7
          %v1732 = vadd.f32 %v1621, %v1614
          %v1733 = vadd.f32 %v1624, %v1717
          %v1734 = vadd.f32 %v1627, %v1718
          %v1735 = vadd.f32 %v1630, %v1719
          %v1736 = vadd.f32 %v1633, %v1720
          %v1737 = vadd.f32 %v1636, %v1721
          %v1738 = vadd.f32 %v1639, %v1722
          %v1739 = vadd.f32 %v1642, %v1723
          %v1740 = vxor.u32 %v1732, 2147483648
          %v1741 = vxor.u32 %v1733, 2147483648
          %v1742 = vxor.u32 %v1734, 2147483648
          %v1743 = vxor.u32 %v1735, 2147483648
          %v1744 = vxor.u32 %v1736, 2147483648
          %v1745 = vxor.u32 %v1737, 2147483648
          %v1746 = vxor.u32 %v1738, 2147483648
          %v1747 = vxor.u32 %v1739, 2147483648
          %v1748 = vmul.f32 %v1740, 1.442695
          %v1749 = vpow.pop %v1748
          %v1750 = vmul.f32 %v1741, 1.442695
          %v1751 = vpow.pop %v1750
          %v1752 = vmul.f32 %v1742, 1.442695
          %v1753 = vpow.pop %v1752
          %v1754 = vmul.f32 %v1743, 1.442695
          %v1755 = vpow.pop %v1754
          %v1756 = vmul.f32 %v1744, 1.442695
          %v1757 = vpow.pop %v1756
          %v1758 = vmul.f32 %v1745, 1.442695
          %v1759 = vpow.pop %v1758
          %v1760 = vmul.f32 %v1746, 1.442695
          %v1761 = vpow.pop %v1760
          %v1762 = vmul.f32 %v1747, 1.442695
          %v1763 = vpow.pop %v1762
          %v1764 = vadd.f32 %v1749, 1.0
          %v1765 = vadd.f32 %v1751, 1.0
          %v1766 = vadd.f32 %v1753, 1.0
          %v1767 = vadd.f32 %v1755, 1.0
          %v1768 = vadd.f32 %v1757, 1.0
          %v1769 = vadd.f32 %v1759, 1.0
          %v1770 = vadd.f32 %v1761, 1.0
          %v1771 = vadd.f32 %v1763, 1.0
          %v1772 = vrcp.pop %v1764
          %v1773 = vmul.f32 1.0, %v1772
          %v1774 = vrcp.pop %v1765
          %v1775 = vmul.f32 1.0, %v1774
          %v1776 = vrcp.pop %v1766
          %v1777 = vmul.f32 1.0, %v1776
          %v1778 = vrcp.pop %v1767
          %v1779 = vmul.f32 1.0, %v1778
          %v1780 = vrcp.pop %v1768
          %v1781 = vmul.f32 1.0, %v1780
          %v1782 = vrcp.pop %v1769
          %v1783 = vmul.f32 1.0, %v1782
          %v1784 = vrcp.pop %v1770
          %v1785 = vmul.f32 1.0, %v1784
          %v1786 = vrcp.pop %v1771
          %v1787 = vmul.f32 1.0, %v1786
          %v1789 = vrot.slane %v1615, 1
          %v1790 = vrot.slane %v1615, 2
          %v1791 = vrot.slane %v1615, 3
          %v1792 = vrot.slane %v1615, 4
          %v1793 = vrot.slane %v1615, 5
          %v1794 = vrot.slane %v1615, 6
          %v1795 = vrot.slane %v1615, 7
          %v1804 = vmul.f32 %v1701, %v1615
          %v1805 = vmul.f32 %v1703, %v1789
          %v1806 = vmul.f32 %v1705, %v1790
          %v1807 = vmul.f32 %v1707, %v1791
          %v1808 = vmul.f32 %v1709, %v1792
          %v1809 = vmul.f32 %v1711, %v1793
          %v1810 = vmul.f32 %v1713, %v1794
          %v1811 = vmul.f32 %v1715, %v1795
          %v1812 = vadd.f32 %v1622, %v1804
          %v1813 = vadd.f32 %v1625, %v1805
          %v1814 = vadd.f32 %v1628, %v1806
          %v1815 = vadd.f32 %v1631, %v1807
          %v1816 = vadd.f32 %v1634, %v1808
          %v1817 = vadd.f32 %v1637, %v1809
          %v1818 = vadd.f32 %v1640, %v1810
          %v1819 = vadd.f32 %v1643, %v1811
          %v1820 = vtanh.pop %v1812
          %v1821 = vtanh.pop %v1813
          %v1822 = vtanh.pop %v1814
          %v1823 = vtanh.pop %v1815
          %v1824 = vtanh.pop %v1816
          %v1825 = vtanh.pop %v1817
          %v1826 = vtanh.pop %v1818
          %v1827 = vtanh.pop %v1819
          %v1828 = vsub.f32 1.0, %v1773
          %v1829 = vsub.f32 1.0, %v1775
          %v1830 = vsub.f32 1.0, %v1777
          %v1831 = vsub.f32 1.0, %v1779
          %v1832 = vsub.f32 1.0, %v1781
          %v1833 = vsub.f32 1.0, %v1783
          %v1834 = vsub.f32 1.0, %v1785
          %v1835 = vsub.f32 1.0, %v1787
          %v1836 = vmul.f32 %v1828, %v1820
          %v1837 = vmul.f32 %v1829, %v1821
          %v1838 = vmul.f32 %v1830, %v1822
          %v1839 = vmul.f32 %v1831, %v1823
          %v1840 = vmul.f32 %v1832, %v1824
          %v1841 = vmul.f32 %v1833, %v1825
          %v1842 = vmul.f32 %v1834, %v1826
          %v1843 = vmul.f32 %v1835, %v1827
          %v1845 = vrot.slane %v1611, 1
          %v1846 = vrot.slane %v1611, 2
          %v1847 = vrot.slane %v1611, 3
          %v1848 = vrot.slane %v1611, 4
          %v1849 = vrot.slane %v1611, 5
          %v1850 = vrot.slane %v1611, 6
          %v1851 = vrot.slane %v1611, 7
          %v1860 = vmul.f32 %v1773, %v1611
          %v1861 = vmul.f32 %v1775, %v1845
          %v1862 = vmul.f32 %v1777, %v1846
          %v1863 = vmul.f32 %v1779, %v1847
          %v1864 = vmul.f32 %v1781, %v1848
          %v1865 = vmul.f32 %v1783, %v1849
          %v1866 = vmul.f32 %v1785, %v1850
          %v1867 = vmul.f32 %v1787, %v1851
          %v1868 = vadd.f32 %v1836, %v1860
          %v1869 = vadd.f32 %v1837, %v1861
          %v1870 = vadd.f32 %v1838, %v1862
          %v1871 = vadd.f32 %v1839, %v1863
          %v1872 = vadd.f32 %v1840, %v1864
          %v1873 = vadd.f32 %v1841, %v1865
          %v1874 = vadd.f32 %v1842, %v1866
          %v1875 = vadd.f32 %v1843, %v1867
          %v1876 = vpack.c.bf16 %v1612, %v1612
          %v1909 = vunpack.c.l.b16 %v1528
          %v1910 = vunpack.c.h.b16 %v1528
          %v1911 = vunpack.c.l.b16 %v1529
          %v1912 = vunpack.c.l.b16 %v1530
          %v1913 = vunpack.c.h.b16 %v1530
          %v1914 = vunpack.c.l.b16 %v1531
          %v1915 = vunpack.c.l.b16 %v1532
          %v1916 = vunpack.c.h.b16 %v1532
          %v1917 = vunpack.c.l.b16 %v1533
          %v1918 = vunpack.c.l.b16 %v1534
          %v1919 = vunpack.c.h.b16 %v1534
          %v1920 = vunpack.c.l.b16 %v1535
          %v1921 = vunpack.c.l.b16 %v1536
          %v1922 = vunpack.c.h.b16 %v1536
          %v1923 = vunpack.c.l.b16 %v1537
          %v1924 = vunpack.c.l.b16 %v1538
          %v1925 = vunpack.c.h.b16 %v1538
          %v1926 = vunpack.c.l.b16 %v1539
          %v1927 = vunpack.c.l.b16 %v1540
          %v1928 = vunpack.c.h.b16 %v1540
          %v1929 = vunpack.c.l.b16 %v1541
          %v1930 = vunpack.c.l.b16 %v1542
          %v1931 = vunpack.c.h.b16 %v1542
          %v1932 = vunpack.c.l.b16 %v1543
          %v1933 = vunpack.c.l.b16 %v1544
          %v1934 = vunpack.c.h.b16 %v1544
          %v1935 = vunpack.c.l.b16 %v1545
          %v1936 = vunpack.c.l.b16 %v1546
          %v1937 = vunpack.c.h.b16 %v1546
          %v1938 = vunpack.c.l.b16 %v1547
          %v1939 = vunpack.c.l.b16 %v1548
          %v1940 = vunpack.c.h.b16 %v1548
          %v1941 = vunpack.c.l.b16 %v1549
          %v1942 = vunpack.c.l.b16 %v1550
          %v1943 = vunpack.c.h.b16 %v1550
          %v1944 = vunpack.c.l.b16 %v1551
          %v1945 = vunpack.c.l.b16 %v1552
          %v1946 = vunpack.c.h.b16 %v1552
          %v1947 = vunpack.c.l.b16 %v1553
          %v1948 = vunpack.c.l.b16 %v1554
          %v1949 = vunpack.c.h.b16 %v1554
          %v1950 = vunpack.c.l.b16 %v1555
          %v1951 = vunpack.c.l.b16 %v1556
          %v1952 = vunpack.c.h.b16 %v1556
          %v1953 = vunpack.c.l.b16 %v1557
          %v1954 = vunpack.c.l.b16 %v1558
          %v1955 = vunpack.c.h.b16 %v1558
          %v1956 = vunpack.c.l.b16 %v1559
          %v1957 = vpack.c.b16 %v1912, %v1909
          %v1958 = vpack.c.b16 %v1913, %v1910
          %v1959 = vpack.c.b16 %v1914, %v1911
          %v1960 = vpack.c.b16 %v1918, %v1915
          %v1961 = vpack.c.b16 %v1919, %v1916
          %v1962 = vpack.c.b16 %v1920, %v1917
          %v1963 = vpack.c.b16 %v1924, %v1921
          %v1964 = vpack.c.b16 %v1925, %v1922
          %v1965 = vpack.c.b16 %v1926, %v1923
          %v1966 = vpack.c.b16 %v1930, %v1927
          %v1967 = vpack.c.b16 %v1931, %v1928
          %v1968 = vpack.c.b16 %v1932, %v1929
          %v1969 = vpack.c.b16 %v1936, %v1933
          %v1970 = vpack.c.b16 %v1937, %v1934
          %v1971 = vpack.c.b16 %v1938, %v1935
          %v1972 = vpack.c.b16 %v1942, %v1939
          %v1973 = vpack.c.b16 %v1943, %v1940
          %v1974 = vpack.c.b16 %v1944, %v1941
          %v1975 = vpack.c.b16 %v1948, %v1945
          %v1976 = vpack.c.b16 %v1949, %v1946
          %v1977 = vpack.c.b16 %v1950, %v1947
          %v1978 = vpack.c.b16 %v1954, %v1951
          %v1979 = vpack.c.b16 %v1955, %v1952
          %v1980 = vpack.c.b16 %v1956, %v1953
          %2005 = vmatprep.subr.bf16.mxu0 %v1958
          %2006 = vmatpush1.bf16.msra.mxu0 %v1957
          %2007 = vmatprep.subr.bf16.mxu0 %v1961
          %2008 = vmatpush1.bf16.msra.mxu0 %v1960
          %2009 = vmatprep.subr.bf16.mxu0 %v1964
          %2010 = vmatpush1.bf16.msra.mxu0 %v1963
          %2011 = vmatprep.subr.bf16.mxu0 %v1967
          %2012 = vmatpush1.bf16.msra.mxu0 %v1966
          %2013 = vmatprep.subr.bf16.mxu0 %v1970
          %2014 = vmatpush1.bf16.msra.mxu0 %v1969
          %2015 = vmatprep.subr.bf16.mxu0 %v1973
          %2016 = vmatpush1.bf16.msra.mxu0 %v1972
          %2017 = vmatprep.subr.bf16.mxu0 %v1976
          %2018 = vmatpush1.bf16.msra.mxu0 %v1975
          %2019 = vmatprep.subr.bf16.mxu0 %v1979
          %2020 = vmatpush1.bf16.msra.mxu0 %v1978
          %2021 = vmatprep.subr.bf16.mxu0 0
          %2022 = vmatpush1.bf16.msra.mxu0 0
          %2023 = vmatprep.subr.bf16.mxu0 0
          %2024 = vmatpush1.bf16.msra.mxu0 0
          %2025 = vmatprep.subr.bf16.mxu0 0
          %2026 = vmatpush1.bf16.msra.mxu0 0
          %2027 = vmatprep.subr.bf16.mxu0 0
          %2028 = vmatpush1.bf16.msra.mxu0 0
          %2029 = vmatprep.subr.bf16.mxu0 0
          %2030 = vmatpush1.bf16.msra.mxu0 0
          %2031 = vmatprep.subr.bf16.mxu0 0
          %2032 = vmatpush1.bf16.msra.mxu0 0
          %2033 = vmatprep.subr.bf16.mxu0 0
          %2034 = vmatpush1.bf16.msra.mxu0 0
          %2035 = vmatprep.subr.bf16.mxu0 0
          %2036 = vmatpush1.bf16.msra.mxu0 0
          %2037 = vmatprep.mubr.bf16.mxu0 0
          %2038 = vmatmul.mubr.bf16.gmra.mrb[0].mxu0 %v1876
          %v2039 = vpop.f32.mrb[0].mxu0
          %v2040 = vadd.f32 0.0, %v2039
          %v2041 = vpop.f32.mrb[0].mxu0
          %v2042 = vadd.f32 0.0, %v2041
          %v2043 = vpop.f32.mrb[0].mxu0
          %v2044 = vpop.f32.mrb[0].mxu0
          %2045 = vdwg.mxu0
          %2046 = vmatprep.subr.bf16.mxu0 0
          %2047 = vmatpush1.bf16.msra.mxu0 %v1959
          %2048 = vmatprep.subr.bf16.mxu0 0
          %2049 = vmatpush1.bf16.msra.mxu0 %v1962
          %2050 = vmatprep.subr.bf16.mxu0 0
          %2051 = vmatpush1.bf16.msra.mxu0 %v1965
          %2052 = vmatprep.subr.bf16.mxu0 0
          %2053 = vmatpush1.bf16.msra.mxu0 %v1968
          %2054 = vmatprep.subr.bf16.mxu0 0
          %2055 = vmatpush1.bf16.msra.mxu0 %v1971
          %2056 = vmatprep.subr.bf16.mxu0 0
          %2057 = vmatpush1.bf16.msra.mxu0 %v1974
          %2058 = vmatprep.subr.bf16.mxu0 0
          %2059 = vmatpush1.bf16.msra.mxu0 %v1977
          %2060 = vmatprep.subr.bf16.mxu0 0
          %2061 = vmatpush1.bf16.msra.mxu0 %v1980
          %2062 = vmatprep.subr.bf16.mxu0 0
          %2063 = vmatpush1.bf16.msra.mxu0 0
          %2064 = vmatprep.subr.bf16.mxu0 0
          %2065 = vmatpush1.bf16.msra.mxu0 0
          %2066 = vmatprep.subr.bf16.mxu0 0
          %2067 = vmatpush1.bf16.msra.mxu0 0
          %2068 = vmatprep.subr.bf16.mxu0 0
          %2069 = vmatpush1.bf16.msra.mxu0 0
          %2070 = vmatprep.subr.bf16.mxu0 0
          %2071 = vmatpush1.bf16.msra.mxu0 0
          %2072 = vmatprep.subr.bf16.mxu0 0
          %2073 = vmatpush1.bf16.msra.mxu0 0
          %2074 = vmatprep.subr.bf16.mxu0 0
          %2075 = vmatpush1.bf16.msra.mxu0 0
          %2076 = vmatprep.subr.bf16.mxu0 0
          %2077 = vmatpush1.bf16.msra.mxu0 0
          %2078 = vmatprep.mubr.bf16.mxu0 0
          %2079 = vmatmul.mubr.bf16.gmra.mrb[0].mxu0 %v1876
          %v2080 = vpop.f32.mrb[0].mxu0
          %v2081 = vadd.f32 0.0, %v2080
          %v2082 = vpop.f32.mrb[0].mxu0
          %v2083 = vpop.f32.mrb[0].mxu0
          %v2084 = vpop.f32.mrb[0].mxu0
          %2085 = vdwg.mxu0
          %v2086 = vpack.c.bf16 %v1868, %v1868
          %v2087 = vpack.c.bf16 %v1869, %v1869
          %v2088 = vpack.c.bf16 %v1870, %v1870
          %v2089 = vpack.c.bf16 %v1871, %v1871
          %v2090 = vpack.c.bf16 %v1872, %v1872
          %v2091 = vpack.c.bf16 %v1873, %v1873
          %v2092 = vpack.c.bf16 %v1874, %v1874
          %v2093 = vpack.c.bf16 %v1875, %v1875
          %v2102 = vunpack.c.l.b16 %v2086
          %v2103 = vunpack.c.l.b16 %v2087
          %v2104 = vunpack.c.l.b16 %v2088
          %v2105 = vunpack.c.l.b16 %v2089
          %v2106 = vunpack.c.l.b16 %v2090
          %v2107 = vunpack.c.l.b16 %v2091
          %v2108 = vunpack.c.l.b16 %v2092
          %v2109 = vunpack.c.l.b16 %v2093
          %v2110 = vrot.slane %v2103, 7
          %vm2111 = vcmask 1041409
          %v2112 = vsel %vm2111, %v2110, %v2102
          %v2113 = vrot.slane %v2104, 6
          %vm2114 = vcmask 1042434
          %v2115 = vsel %vm2114, %v2113, %v2112
          %v2116 = vrot.slane %v2105, 5
          %vm2117 = vcmask 1043459
          %v2118 = vsel %vm2117, %v2116, %v2115
          %v2119 = vrot.slane %v2106, 4
          %vm2120 = vcmask 1044484
          %v2121 = vsel %vm2120, %v2119, %v2118
          %v2122 = vrot.slane %v2107, 3
          %vm2123 = vcmask 1045509
          %v2124 = vsel %vm2123, %v2122, %v2121
          %v2125 = vrot.slane %v2108, 2
          %vm2126 = vcmask 1046534
          %v2127 = vsel %vm2126, %v2125, %v2124
          %v2128 = vrot.slane %v2109, 1
          %vm2129 = vcmask 1047559
          %v2130 = vsel %vm2129, %v2128, %v2127
          %v2131 = vpack.c.b16 %v2130, %v2130
          %v2181 = vunpack.c.l.b16 %v1480
          %v2182 = vunpack.c.h.b16 %v1480
          %v2183 = vunpack.c.l.b16 %v1481
          %v2184 = vunpack.c.h.b16 %v1481
          %v2185 = vunpack.c.l.b16 %v1482
          %v2186 = vunpack.c.h.b16 %v1482
          %v2187 = vunpack.c.l.b16 %v1483
          %v2188 = vunpack.c.h.b16 %v1483
          %v2189 = vunpack.c.l.b16 %v1484
          %v2190 = vunpack.c.h.b16 %v1484
          %v2191 = vunpack.c.l.b16 %v1485
          %v2192 = vunpack.c.h.b16 %v1485
          %v2193 = vunpack.c.l.b16 %v1486
          %v2194 = vunpack.c.h.b16 %v1486
          %v2195 = vunpack.c.l.b16 %v1487
          %v2196 = vunpack.c.h.b16 %v1487
          %v2197 = vunpack.c.l.b16 %v1488
          %v2198 = vunpack.c.h.b16 %v1488
          %v2199 = vunpack.c.l.b16 %v1489
          %v2200 = vunpack.c.h.b16 %v1489
          %v2201 = vunpack.c.l.b16 %v1490
          %v2202 = vunpack.c.h.b16 %v1490
          %v2203 = vunpack.c.l.b16 %v1491
          %v2204 = vunpack.c.h.b16 %v1491
          %v2205 = vunpack.c.l.b16 %v1492
          %v2206 = vunpack.c.h.b16 %v1492
          %v2207 = vunpack.c.l.b16 %v1493
          %v2208 = vunpack.c.h.b16 %v1493
          %v2209 = vunpack.c.l.b16 %v1494
          %v2210 = vunpack.c.h.b16 %v1494
          %v2211 = vunpack.c.l.b16 %v1495
          %v2212 = vunpack.c.h.b16 %v1495
          %v2213 = vunpack.c.l.b16 %v1496
          %v2214 = vunpack.c.h.b16 %v1496
          %v2215 = vunpack.c.l.b16 %v1497
          %v2216 = vunpack.c.h.b16 %v1497
          %v2217 = vunpack.c.l.b16 %v1498
          %v2218 = vunpack.c.h.b16 %v1498
          %v2219 = vunpack.c.l.b16 %v1499
          %v2220 = vunpack.c.h.b16 %v1499
          %v2221 = vunpack.c.l.b16 %v1500
          %v2222 = vunpack.c.h.b16 %v1500
          %v2223 = vunpack.c.l.b16 %v1501
          %v2224 = vunpack.c.h.b16 %v1501
          %v2225 = vunpack.c.l.b16 %v1502
          %v2226 = vunpack.c.h.b16 %v1502
          %v2227 = vunpack.c.l.b16 %v1503
          %v2228 = vunpack.c.h.b16 %v1503
          %v2229 = vunpack.c.l.b16 %v1504
          %v2230 = vunpack.c.h.b16 %v1504
          %v2231 = vunpack.c.l.b16 %v1505
          %v2232 = vunpack.c.h.b16 %v1505
          %v2233 = vunpack.c.l.b16 %v1506
          %v2234 = vunpack.c.h.b16 %v1506
          %v2235 = vunpack.c.l.b16 %v1507
          %v2236 = vunpack.c.h.b16 %v1507
          %v2237 = vunpack.c.l.b16 %v1508
          %v2238 = vunpack.c.h.b16 %v1508
          %v2239 = vunpack.c.l.b16 %v1509
          %v2240 = vunpack.c.h.b16 %v1509
          %v2241 = vunpack.c.l.b16 %v1510
          %v2242 = vunpack.c.h.b16 %v1510
          %v2243 = vunpack.c.l.b16 %v1511
          %v2244 = vunpack.c.h.b16 %v1511
          %v2245 = vunpack.c.l.b16 %v1512
          %v2246 = vunpack.c.h.b16 %v1512
          %v2247 = vunpack.c.l.b16 %v1513
          %v2248 = vunpack.c.h.b16 %v1513
          %v2249 = vunpack.c.l.b16 %v1514
          %v2250 = vunpack.c.h.b16 %v1514
          %v2251 = vunpack.c.l.b16 %v1515
          %v2252 = vunpack.c.h.b16 %v1515
          %v2253 = vunpack.c.l.b16 %v1516
          %v2254 = vunpack.c.h.b16 %v1516
          %v2255 = vunpack.c.l.b16 %v1517
          %v2256 = vunpack.c.h.b16 %v1517
          %v2257 = vunpack.c.l.b16 %v1518
          %v2258 = vunpack.c.h.b16 %v1518
          %v2259 = vunpack.c.l.b16 %v1519
          %v2260 = vunpack.c.h.b16 %v1519
          %v2261 = vunpack.c.l.b16 %v1520
          %v2262 = vunpack.c.h.b16 %v1520
          %v2263 = vunpack.c.l.b16 %v1521
          %v2264 = vunpack.c.h.b16 %v1521
          %v2265 = vunpack.c.l.b16 %v1522
          %v2266 = vunpack.c.h.b16 %v1522
          %v2267 = vunpack.c.l.b16 %v1523
          %v2268 = vunpack.c.h.b16 %v1523
          %v2269 = vunpack.c.l.b16 %v1524
          %v2270 = vunpack.c.h.b16 %v1524
          %v2271 = vunpack.c.l.b16 %v1525
          %v2272 = vunpack.c.h.b16 %v1525
          %v2273 = vunpack.c.l.b16 %v1526
          %v2274 = vunpack.c.h.b16 %v1526
          %v2275 = vunpack.c.l.b16 %v1527
          %v2276 = vunpack.c.h.b16 %v1527
          %v2277 = vpack.c.b16 %v2187, %v2181
          %v2278 = vpack.c.b16 %v2188, %v2182
          %v2279 = vpack.c.b16 %v2189, %v2183
          %v2280 = vpack.c.b16 %v2190, %v2184
          %v2281 = vpack.c.b16 %v2191, %v2185
          %v2282 = vpack.c.b16 %v2192, %v2186
          %v2283 = vpack.c.b16 %v2199, %v2193
          %v2284 = vpack.c.b16 %v2200, %v2194
          %v2285 = vpack.c.b16 %v2201, %v2195
          %v2286 = vpack.c.b16 %v2202, %v2196
          %v2287 = vpack.c.b16 %v2203, %v2197
          %v2288 = vpack.c.b16 %v2204, %v2198
          %v2289 = vpack.c.b16 %v2211, %v2205
          %v2290 = vpack.c.b16 %v2212, %v2206
          %v2291 = vpack.c.b16 %v2213, %v2207
          %v2292 = vpack.c.b16 %v2214, %v2208
          %v2293 = vpack.c.b16 %v2215, %v2209
          %v2294 = vpack.c.b16 %v2216, %v2210
          %v2295 = vpack.c.b16 %v2223, %v2217
          %v2296 = vpack.c.b16 %v2224, %v2218
          %v2297 = vpack.c.b16 %v2225, %v2219
          %v2298 = vpack.c.b16 %v2226, %v2220
          %v2299 = vpack.c.b16 %v2227, %v2221
          %v2300 = vpack.c.b16 %v2228, %v2222
          %v2301 = vpack.c.b16 %v2235, %v2229
          %v2302 = vpack.c.b16 %v2236, %v2230
          %v2303 = vpack.c.b16 %v2237, %v2231
          %v2304 = vpack.c.b16 %v2238, %v2232
          %v2305 = vpack.c.b16 %v2239, %v2233
          %v2306 = vpack.c.b16 %v2240, %v2234
          %v2307 = vpack.c.b16 %v2247, %v2241
          %v2308 = vpack.c.b16 %v2248, %v2242
          %v2309 = vpack.c.b16 %v2249, %v2243
          %v2310 = vpack.c.b16 %v2250, %v2244
          %v2311 = vpack.c.b16 %v2251, %v2245
          %v2312 = vpack.c.b16 %v2252, %v2246
          %v2313 = vpack.c.b16 %v2259, %v2253
          %v2314 = vpack.c.b16 %v2260, %v2254
          %v2315 = vpack.c.b16 %v2261, %v2255
          %v2316 = vpack.c.b16 %v2262, %v2256
          %v2317 = vpack.c.b16 %v2263, %v2257
          %v2318 = vpack.c.b16 %v2264, %v2258
          %v2319 = vpack.c.b16 %v2271, %v2265
          %v2320 = vpack.c.b16 %v2272, %v2266
          %v2321 = vpack.c.b16 %v2273, %v2267
          %v2322 = vpack.c.b16 %v2274, %v2268
          %v2323 = vpack.c.b16 %v2275, %v2269
          %v2324 = vpack.c.b16 %v2276, %v2270
          %2373 = vmatprep.subr.bf16.mxu0 %v2278
          %2374 = vmatpush1.bf16.msra.mxu0 %v2277
          %2375 = vmatprep.subr.bf16.mxu0 %v2284
          %2376 = vmatpush1.bf16.msra.mxu0 %v2283
          %2377 = vmatprep.subr.bf16.mxu0 %v2290
          %2378 = vmatpush1.bf16.msra.mxu0 %v2289
          %2379 = vmatprep.subr.bf16.mxu0 %v2296
          %2380 = vmatpush1.bf16.msra.mxu0 %v2295
          %2381 = vmatprep.subr.bf16.mxu0 %v2302
          %2382 = vmatpush1.bf16.msra.mxu0 %v2301
          %2383 = vmatprep.subr.bf16.mxu0 %v2308
          %2384 = vmatpush1.bf16.msra.mxu0 %v2307
          %2385 = vmatprep.subr.bf16.mxu0 %v2314
          %2386 = vmatpush1.bf16.msra.mxu0 %v2313
          %2387 = vmatprep.subr.bf16.mxu0 %v2320
          %2388 = vmatpush1.bf16.msra.mxu0 %v2319
          %2389 = vmatprep.subr.bf16.mxu0 0
          %2390 = vmatpush1.bf16.msra.mxu0 0
          %2391 = vmatprep.subr.bf16.mxu0 0
          %2392 = vmatpush1.bf16.msra.mxu0 0
          %2393 = vmatprep.subr.bf16.mxu0 0
          %2394 = vmatpush1.bf16.msra.mxu0 0
          %2395 = vmatprep.subr.bf16.mxu0 0
          %2396 = vmatpush1.bf16.msra.mxu0 0
          %2397 = vmatprep.subr.bf16.mxu0 0
          %2398 = vmatpush1.bf16.msra.mxu0 0
          %2399 = vmatprep.subr.bf16.mxu0 0
          %2400 = vmatpush1.bf16.msra.mxu0 0
          %2401 = vmatprep.subr.bf16.mxu0 0
          %2402 = vmatpush1.bf16.msra.mxu0 0
          %2403 = vmatprep.subr.bf16.mxu0 0
          %2404 = vmatpush1.bf16.msra.mxu0 0
          %2405 = vmatprep.mubr.bf16.mxu0 0
          %2406 = vmatmul.mubr.bf16.gmra.mrb[0].mxu0 %v2131
          %v2407 = vpop.f32.mrb[0].mxu0
          %v2408 = vadd.f32 %v1565, %v2407
          %v2409 = vpop.f32.mrb[0].mxu0
          %v2410 = vadd.f32 %v1569, %v2409
          %v2411 = vpop.f32.mrb[0].mxu0
          %v2412 = vpop.f32.mrb[0].mxu0
          %2413 = vdwg.mxu0
          %2414 = vmatprep.subr.bf16.mxu0 %v2280
          %2415 = vmatpush1.bf16.msra.mxu0 %v2279
          %2416 = vmatprep.subr.bf16.mxu0 %v2286
          %2417 = vmatpush1.bf16.msra.mxu0 %v2285
          %2418 = vmatprep.subr.bf16.mxu0 %v2292
          %2419 = vmatpush1.bf16.msra.mxu0 %v2291
          %2420 = vmatprep.subr.bf16.mxu0 %v2298
          %2421 = vmatpush1.bf16.msra.mxu0 %v2297
          %2422 = vmatprep.subr.bf16.mxu0 %v2304
          %2423 = vmatpush1.bf16.msra.mxu0 %v2303
          %2424 = vmatprep.subr.bf16.mxu0 %v2310
          %2425 = vmatpush1.bf16.msra.mxu0 %v2309
          %2426 = vmatprep.subr.bf16.mxu0 %v2316
          %2427 = vmatpush1.bf16.msra.mxu0 %v2315
          %2428 = vmatprep.subr.bf16.mxu0 %v2322
          %2429 = vmatpush1.bf16.msra.mxu0 %v2321
          %2430 = vmatprep.subr.bf16.mxu0 0
          %2431 = vmatpush1.bf16.msra.mxu0 0
          %2432 = vmatprep.subr.bf16.mxu0 0
          %2433 = vmatpush1.bf16.msra.mxu0 0
          %2434 = vmatprep.subr.bf16.mxu0 0
          %2435 = vmatpush1.bf16.msra.mxu0 0
          %2436 = vmatprep.subr.bf16.mxu0 0
          %2437 = vmatpush1.bf16.msra.mxu0 0
          %2438 = vmatprep.subr.bf16.mxu0 0
          %2439 = vmatpush1.bf16.msra.mxu0 0
          %2440 = vmatprep.subr.bf16.mxu0 0
          %2441 = vmatpush1.bf16.msra.mxu0 0
          %2442 = vmatprep.subr.bf16.mxu0 0
          %2443 = vmatpush1.bf16.msra.mxu0 0
          %2444 = vmatprep.subr.bf16.mxu0 0
          %2445 = vmatpush1.bf16.msra.mxu0 0
          %2446 = vmatprep.mubr.bf16.mxu0 0
          %2447 = vmatmul.mubr.bf16.gmra.mrb[0].mxu0 %v2131
          %v2448 = vpop.f32.mrb[0].mxu0
          %v2449 = vadd.f32 %v1573, %v2448
          %v2450 = vpop.f32.mrb[0].mxu0
          %v2451 = vadd.f32 %v1577, %v2450
          %v2452 = vpop.f32.mrb[0].mxu0
          %v2453 = vpop.f32.mrb[0].mxu0
          %2454 = vdwg.mxu0
          %2455 = vmatprep.subr.bf16.mxu0 %v2282
          %2456 = vmatpush1.bf16.msra.mxu0 %v2281
          %2457 = vmatprep.subr.bf16.mxu0 %v2288
          %2458 = vmatpush1.bf16.msra.mxu0 %v2287
          %2459 = vmatprep.subr.bf16.mxu0 %v2294
          %2460 = vmatpush1.bf16.msra.mxu0 %v2293
          %2461 = vmatprep.subr.bf16.mxu0 %v2300
          %2462 = vmatpush1.bf16.msra.mxu0 %v2299
          %2463 = vmatprep.subr.bf16.mxu0 %v2306
          %2464 = vmatpush1.bf16.msra.mxu0 %v2305
          %2465 = vmatprep.subr.bf16.mxu0 %v2312
          %2466 = vmatpush1.bf16.msra.mxu0 %v2311
          %2467 = vmatprep.subr.bf16.mxu0 %v2318
          %2468 = vmatpush1.bf16.msra.mxu0 %v2317
          %2469 = vmatprep.subr.bf16.mxu0 %v2324
          %2470 = vmatpush1.bf16.msra.mxu0 %v2323
          %2471 = vmatprep.subr.bf16.mxu0 0
          %2472 = vmatpush1.bf16.msra.mxu0 0
          %2473 = vmatprep.subr.bf16.mxu0 0
          %2474 = vmatpush1.bf16.msra.mxu0 0
          %2475 = vmatprep.subr.bf16.mxu0 0
          %2476 = vmatpush1.bf16.msra.mxu0 0
          %2477 = vmatprep.subr.bf16.mxu0 0
          %2478 = vmatpush1.bf16.msra.mxu0 0
          %2479 = vmatprep.subr.bf16.mxu0 0
          %2480 = vmatpush1.bf16.msra.mxu0 0
          %2481 = vmatprep.subr.bf16.mxu0 0
          %2482 = vmatpush1.bf16.msra.mxu0 0
          %2483 = vmatprep.subr.bf16.mxu0 0
          %2484 = vmatpush1.bf16.msra.mxu0 0
          %2485 = vmatprep.subr.bf16.mxu0 0
          %2486 = vmatpush1.bf16.msra.mxu0 0
          %2487 = vmatprep.mubr.bf16.mxu0 0
          %2488 = vmatmul.mubr.bf16.gmra.mrb[0].mxu0 %v2131
          %v2489 = vpop.f32.mrb[0].mxu0
          %v2490 = vadd.f32 %v1581, %v2489
          %v2491 = vpop.f32.mrb[0].mxu0
          %v2492 = vadd.f32 %v1585, %v2491
          %v2493 = vpop.f32.mrb[0].mxu0
          %v2494 = vpop.f32.mrb[0].mxu0
          %2495 = vdwg.mxu0
          %v2496 = vadd.f32 %v2408, %v2040
          %v2497 = vxor.u32 %v2496, 2147483648
          %v2498 = vmul.f32 %v2497, 1.442695
          %v2499 = vpow.pop %v2498
          %v2500 = vadd.f32 %v2499, 1.0
          %v2501 = vrcp.pop %v2500
          %v2502 = vmul.f32 1.0, %v2501
          %v2503 = vadd.f32 %v2410, %v2042
          %v2504 = vxor.u32 %v2503, 2147483648
          %v2505 = vmul.f32 %v2504, 1.442695
          %v2506 = vpow.pop %v2505
          %v2507 = vadd.f32 %v2506, 1.0
          %v2508 = vrcp.pop %v2507
          %v2509 = vmul.f32 1.0, %v2508
          %v2510 = vadd.f32 %v2081, %v1597
          %v2511 = vmul.f32 %v2502, %v2510
          %v2512 = vadd.f32 %v2449, %v2511
          %v2513 = vtanh.pop %v2512
          %v2514 = vsub.f32 1.0, %v2509
          %v2515 = vmul.f32 %v2514, %v2513
          %v2516 = vmul.f32 %v2509, %v1612
          %v2517 = vadd.f32 %v2515, %v2516
          %v2518 = vadd.f32 %v1616, %v2517
          %v2520 = vrot.slane %v2451, 7
          %v2521 = vrot.slane %v2451, 1
          %v2522 = vrot.slane %v2451, 2
          %v2523 = vrot.slane %v2451, 3
          %v2524 = vrot.slane %v2451, 4
          %v2525 = vrot.slane %v2451, 5
          %v2526 = vrot.slane %v2451, 6
          %v2535 = vadd.f32 %v1620, %v2520
          %v2536 = vadd.f32 %v1623, %v2451
          %v2537 = vadd.f32 %v1626, %v2521
          %v2538 = vadd.f32 %v1629, %v2522
          %v2539 = vadd.f32 %v1632, %v2523
          %v2540 = vadd.f32 %v1635, %v2524
          %v2541 = vadd.f32 %v1638, %v2525
          %v2542 = vadd.f32 %v1641, %v2526
          %v2543 = vxor.u32 %v2535, 2147483648
          %v2544 = vxor.u32 %v2536, 2147483648
          %v2545 = vxor.u32 %v2537, 2147483648
          %v2546 = vxor.u32 %v2538, 2147483648
          %v2547 = vxor.u32 %v2539, 2147483648
          %v2548 = vxor.u32 %v2540, 2147483648
          %v2549 = vxor.u32 %v2541, 2147483648
          %v2550 = vxor.u32 %v2542, 2147483648
          %v2551 = vmul.f32 %v2543, 1.442695
          %v2552 = vpow.pop %v2551
          %v2553 = vmul.f32 %v2544, 1.442695
          %v2554 = vpow.pop %v2553
          %v2555 = vmul.f32 %v2545, 1.442695
          %v2556 = vpow.pop %v2555
          %v2557 = vmul.f32 %v2546, 1.442695
          %v2558 = vpow.pop %v2557
          %v2559 = vmul.f32 %v2547, 1.442695
          %v2560 = vpow.pop %v2559
          %v2561 = vmul.f32 %v2548, 1.442695
          %v2562 = vpow.pop %v2561
          %v2563 = vmul.f32 %v2549, 1.442695
          %v2564 = vpow.pop %v2563
          %v2565 = vmul.f32 %v2550, 1.442695
          %v2566 = vpow.pop %v2565
          %v2567 = vadd.f32 %v2552, 1.0
          %v2568 = vadd.f32 %v2554, 1.0
          %v2569 = vadd.f32 %v2556, 1.0
          %v2570 = vadd.f32 %v2558, 1.0
          %v2571 = vadd.f32 %v2560, 1.0
          %v2572 = vadd.f32 %v2562, 1.0
          %v2573 = vadd.f32 %v2564, 1.0
          %v2574 = vadd.f32 %v2566, 1.0
          %v2575 = vrcp.pop %v2567
          %v2576 = vmul.f32 1.0, %v2575
          %v2577 = vrcp.pop %v2568
          %v2578 = vmul.f32 1.0, %v2577
          %v2579 = vrcp.pop %v2569
          %v2580 = vmul.f32 1.0, %v2579
          %v2581 = vrcp.pop %v2570
          %v2582 = vmul.f32 1.0, %v2581
          %v2583 = vrcp.pop %v2571
          %v2584 = vmul.f32 1.0, %v2583
          %v2585 = vrcp.pop %v2572
          %v2586 = vmul.f32 1.0, %v2585
          %v2587 = vrcp.pop %v2573
          %v2588 = vmul.f32 1.0, %v2587
          %v2589 = vrcp.pop %v2574
          %v2590 = vmul.f32 1.0, %v2589
          %v2592 = vrot.slane %v2490, 7
          %v2593 = vrot.slane %v2490, 1
          %v2594 = vrot.slane %v2490, 2
          %v2595 = vrot.slane %v2490, 3
          %v2596 = vrot.slane %v2490, 4
          %v2597 = vrot.slane %v2490, 5
          %v2598 = vrot.slane %v2490, 6
          %v2607 = vadd.f32 %v1621, %v2592
          %v2608 = vadd.f32 %v1624, %v2490
          %v2609 = vadd.f32 %v1627, %v2593
          %v2610 = vadd.f32 %v1630, %v2594
          %v2611 = vadd.f32 %v1633, %v2595
          %v2612 = vadd.f32 %v1636, %v2596
          %v2613 = vadd.f32 %v1639, %v2597
          %v2614 = vadd.f32 %v1642, %v2598
          %v2615 = vxor.u32 %v2607, 2147483648
          %v2616 = vxor.u32 %v2608, 2147483648
          %v2617 = vxor.u32 %v2609, 2147483648
          %v2618 = vxor.u32 %v2610, 2147483648
          %v2619 = vxor.u32 %v2611, 2147483648
          %v2620 = vxor.u32 %v2612, 2147483648
          %v2621 = vxor.u32 %v2613, 2147483648
          %v2622 = vxor.u32 %v2614, 2147483648
          %v2623 = vmul.f32 %v2615, 1.442695
          %v2624 = vpow.pop %v2623
          %v2625 = vmul.f32 %v2616, 1.442695
          %v2626 = vpow.pop %v2625
          %v2627 = vmul.f32 %v2617, 1.442695
          %v2628 = vpow.pop %v2627
          %v2629 = vmul.f32 %v2618, 1.442695
          %v2630 = vpow.pop %v2629
          %v2631 = vmul.f32 %v2619, 1.442695
          %v2632 = vpow.pop %v2631
          %v2633 = vmul.f32 %v2620, 1.442695
          %v2634 = vpow.pop %v2633
          %v2635 = vmul.f32 %v2621, 1.442695
          %v2636 = vpow.pop %v2635
          %v2637 = vmul.f32 %v2622, 1.442695
          %v2638 = vpow.pop %v2637
          %v2639 = vadd.f32 %v2624, 1.0
          %v2640 = vadd.f32 %v2626, 1.0
          %v2641 = vadd.f32 %v2628, 1.0
          %v2642 = vadd.f32 %v2630, 1.0
          %v2643 = vadd.f32 %v2632, 1.0
          %v2644 = vadd.f32 %v2634, 1.0
          %v2645 = vadd.f32 %v2636, 1.0
          %v2646 = vadd.f32 %v2638, 1.0
          %v2647 = vrcp.pop %v2639
          %v2648 = vmul.f32 1.0, %v2647
          %v2649 = vrcp.pop %v2640
          %v2650 = vmul.f32 1.0, %v2649
          %v2651 = vrcp.pop %v2641
          %v2652 = vmul.f32 1.0, %v2651
          %v2653 = vrcp.pop %v2642
          %v2654 = vmul.f32 1.0, %v2653
          %v2655 = vrcp.pop %v2643
          %v2656 = vmul.f32 1.0, %v2655
          %v2657 = vrcp.pop %v2644
          %v2658 = vmul.f32 1.0, %v2657
          %v2659 = vrcp.pop %v2645
          %v2660 = vmul.f32 1.0, %v2659
          %v2661 = vrcp.pop %v2646
          %v2662 = vmul.f32 1.0, %v2661
          %v2664 = vrot.slane %v2492, 7
          %v2665 = vrot.slane %v2492, 1
          %v2666 = vrot.slane %v2492, 2
          %v2667 = vrot.slane %v2492, 3
          %v2668 = vrot.slane %v2492, 4
          %v2669 = vrot.slane %v2492, 5
          %v2670 = vrot.slane %v2492, 6
          %v2679 = vmul.f32 %v2576, %v2664
          %v2680 = vmul.f32 %v2578, %v2492
          %v2681 = vmul.f32 %v2580, %v2665
          %v2682 = vmul.f32 %v2582, %v2666
          %v2683 = vmul.f32 %v2584, %v2667
          %v2684 = vmul.f32 %v2586, %v2668
          %v2685 = vmul.f32 %v2588, %v2669
          %v2686 = vmul.f32 %v2590, %v2670
          %v2687 = vadd.f32 %v1622, %v2679
          %v2688 = vadd.f32 %v1625, %v2680
          %v2689 = vadd.f32 %v1628, %v2681
          %v2690 = vadd.f32 %v1631, %v2682
          %v2691 = vadd.f32 %v1634, %v2683
          %v2692 = vadd.f32 %v1637, %v2684
          %v2693 = vadd.f32 %v1640, %v2685
          %v2694 = vadd.f32 %v1643, %v2686
          %v2695 = vtanh.pop %v2687
          %v2696 = vtanh.pop %v2688
          %v2697 = vtanh.pop %v2689
          %v2698 = vtanh.pop %v2690
          %v2699 = vtanh.pop %v2691
          %v2700 = vtanh.pop %v2692
          %v2701 = vtanh.pop %v2693
          %v2702 = vtanh.pop %v2694
          %v2703 = vsub.f32 1.0, %v2648
          %v2704 = vsub.f32 1.0, %v2650
          %v2705 = vsub.f32 1.0, %v2652
          %v2706 = vsub.f32 1.0, %v2654
          %v2707 = vsub.f32 1.0, %v2656
          %v2708 = vsub.f32 1.0, %v2658
          %v2709 = vsub.f32 1.0, %v2660
          %v2710 = vsub.f32 1.0, %v2662
          %v2711 = vmul.f32 %v2703, %v2695
          %v2712 = vmul.f32 %v2704, %v2696
          %v2713 = vmul.f32 %v2705, %v2697
          %v2714 = vmul.f32 %v2706, %v2698
          %v2715 = vmul.f32 %v2707, %v2699
          %v2716 = vmul.f32 %v2708, %v2700
          %v2717 = vmul.f32 %v2709, %v2701
          %v2718 = vmul.f32 %v2710, %v2702
          %v2727 = vrot.slane %v1868, 7
          %v2728 = vrot.slane %v1869, 7
          %v2729 = vrot.slane %v1870, 7
          %v2730 = vrot.slane %v1871, 7
          %v2731 = vrot.slane %v1872, 7
          %v2732 = vrot.slane %v1873, 7
          %v2733 = vrot.slane %v1874, 7
          %v2734 = vrot.slane %v1875, 7
          %v2743 = vmul.f32 %v2648, %v2727
          %v2744 = vmul.f32 %v2650, %v2728
          %v2745 = vmul.f32 %v2652, %v2729
          %v2746 = vmul.f32 %v2654, %v2730
          %v2747 = vmul.f32 %v2656, %v2731
          %v2748 = vmul.f32 %v2658, %v2732
          %v2749 = vmul.f32 %v2660, %v2733
          %v2750 = vmul.f32 %v2662, %v2734
          %v2751 = vadd.f32 %v2711, %v2743
          %v2752 = vadd.f32 %v2712, %v2744
          %v2753 = vadd.f32 %v2713, %v2745
          %v2754 = vadd.f32 %v2714, %v2746
          %v2755 = vadd.f32 %v2715, %v2747
          %v2756 = vadd.f32 %v2716, %v2748
          %v2757 = vadd.f32 %v2717, %v2749
          %v2758 = vadd.f32 %v2718, %v2750
          %v2759 = vpack.c.bf16 %v2517, %v2517
          %2760 = vmatprep.subr.bf16.mxu0 %v1958
          %2761 = vmatpush1.bf16.msra.mxu0 %v1957
          %2762 = vmatprep.subr.bf16.mxu0 %v1961
          %2763 = vmatpush1.bf16.msra.mxu0 %v1960
          %2764 = vmatprep.subr.bf16.mxu0 %v1964
          %2765 = vmatpush1.bf16.msra.mxu0 %v1963
          %2766 = vmatprep.subr.bf16.mxu0 %v1967
          %2767 = vmatpush1.bf16.msra.mxu0 %v1966
          %2768 = vmatprep.subr.bf16.mxu0 %v1970
          %2769 = vmatpush1.bf16.msra.mxu0 %v1969
          %2770 = vmatprep.subr.bf16.mxu0 %v1973
          %2771 = vmatpush1.bf16.msra.mxu0 %v1972
          %2772 = vmatprep.subr.bf16.mxu0 %v1976
          %2773 = vmatpush1.bf16.msra.mxu0 %v1975
          %2774 = vmatprep.subr.bf16.mxu0 %v1979
          %2775 = vmatpush1.bf16.msra.mxu0 %v1978
          %2776 = vmatprep.subr.bf16.mxu0 0
          %2777 = vmatpush1.bf16.msra.mxu0 0
          %2778 = vmatprep.subr.bf16.mxu0 0
          %2779 = vmatpush1.bf16.msra.mxu0 0
          %2780 = vmatprep.subr.bf16.mxu0 0
          %2781 = vmatpush1.bf16.msra.mxu0 0
          %2782 = vmatprep.subr.bf16.mxu0 0
          %2783 = vmatpush1.bf16.msra.mxu0 0
          %2784 = vmatprep.subr.bf16.mxu0 0
          %2785 = vmatpush1.bf16.msra.mxu0 0
          %2786 = vmatprep.subr.bf16.mxu0 0
          %2787 = vmatpush1.bf16.msra.mxu0 0
          %2788 = vmatprep.subr.bf16.mxu0 0
          %2789 = vmatpush1.bf16.msra.mxu0 0
          %2790 = vmatprep.subr.bf16.mxu0 0
          %2791 = vmatpush1.bf16.msra.mxu0 0
          %2792 = vmatprep.mubr.bf16.mxu0 0
          %2793 = vmatmul.mubr.bf16.gmra.mrb[0].mxu0 %v2759
          %v2794 = vpop.f32.mrb[0].mxu0
          %v2795 = vadd.f32 0.0, %v2794
          %v2796 = vpop.f32.mrb[0].mxu0
          %v2797 = vadd.f32 0.0, %v2796
          %v2798 = vpop.f32.mrb[0].mxu0
          %v2799 = vpop.f32.mrb[0].mxu0
          %2800 = vdwg.mxu0
          %2801 = vmatprep.subr.bf16.mxu0 0
          %2802 = vmatpush1.bf16.msra.mxu0 %v1959
          %2803 = vmatprep.subr.bf16.mxu0 0
          %2804 = vmatpush1.bf16.msra.mxu0 %v1962
          %2805 = vmatprep.subr.bf16.mxu0 0
          %2806 = vmatpush1.bf16.msra.mxu0 %v1965
          %2807 = vmatprep.subr.bf16.mxu0 0
          %2808 = vmatpush1.bf16.msra.mxu0 %v1968
          %2809 = vmatprep.subr.bf16.mxu0 0
          %2810 = vmatpush1.bf16.msra.mxu0 %v1971
          %2811 = vmatprep.subr.bf16.mxu0 0
          %2812 = vmatpush1.bf16.msra.mxu0 %v1974
          %2813 = vmatprep.subr.bf16.mxu0 0
          %2814 = vmatpush1.bf16.msra.mxu0 %v1977
          %2815 = vmatprep.subr.bf16.mxu0 0
          %2816 = vmatpush1.bf16.msra.mxu0 %v1980
          %2817 = vmatprep.subr.bf16.mxu0 0
          %2818 = vmatpush1.bf16.msra.mxu0 0
          %2819 = vmatprep.subr.bf16.mxu0 0
          %2820 = vmatpush1.bf16.msra.mxu0 0
          %2821 = vmatprep.subr.bf16.mxu0 0
          %2822 = vmatpush1.bf16.msra.mxu0 0
          %2823 = vmatprep.subr.bf16.mxu0 0
          %2824 = vmatpush1.bf16.msra.mxu0 0
          %2825 = vmatprep.subr.bf16.mxu0 0
          %2826 = vmatpush1.bf16.msra.mxu0 0
          %2827 = vmatprep.subr.bf16.mxu0 0
          %2828 = vmatpush1.bf16.msra.mxu0 0
          %2829 = vmatprep.subr.bf16.mxu0 0
          %2830 = vmatpush1.bf16.msra.mxu0 0
          %2831 = vmatprep.subr.bf16.mxu0 0
          %2832 = vmatpush1.bf16.msra.mxu0 0
          %2833 = vmatprep.mubr.bf16.mxu0 0
          %2834 = vmatmul.mubr.bf16.gmra.mrb[0].mxu0 %v2759
          %v2835 = vpop.f32.mrb[0].mxu0
          %v2836 = vadd.f32 0.0, %v2835
          %v2837 = vpop.f32.mrb[0].mxu0
          %v2838 = vpop.f32.mrb[0].mxu0
          %v2839 = vpop.f32.mrb[0].mxu0
          %2840 = vdwg.mxu0
          %v2841 = vpack.c.bf16 %v2751, %v2751
          %v2842 = vpack.c.bf16 %v2752, %v2752
          %v2843 = vpack.c.bf16 %v2753, %v2753
          %v2844 = vpack.c.bf16 %v2754, %v2754
          %v2845 = vpack.c.bf16 %v2755, %v2755
          %v2846 = vpack.c.bf16 %v2756, %v2756
          %v2847 = vpack.c.bf16 %v2757, %v2757
          %v2848 = vpack.c.bf16 %v2758, %v2758
          %v2857 = vunpack.c.l.b16 %v2841
          %v2858 = vunpack.c.l.b16 %v2842
          %v2859 = vunpack.c.l.b16 %v2843
          %v2860 = vunpack.c.l.b16 %v2844
          %v2861 = vunpack.c.l.b16 %v2845
          %v2862 = vunpack.c.l.b16 %v2846
          %v2863 = vunpack.c.l.b16 %v2847
          %v2864 = vunpack.c.l.b16 %v2848
          %v2865 = vrot.slane %v2857, 1
          %v2866 = vsel %vm2111, %v2858, %v2865
          %v2867 = vrot.slane %v2859, 7
          %v2868 = vsel %vm2114, %v2867, %v2866
          %v2869 = vrot.slane %v2860, 6
          %v2870 = vsel %vm2117, %v2869, %v2868
          %v2871 = vrot.slane %v2861, 5
          %v2872 = vsel %vm2120, %v2871, %v2870
          %v2873 = vrot.slane %v2862, 4
          %v2874 = vsel %vm2123, %v2873, %v2872
          %v2875 = vrot.slane %v2863, 3
          %v2876 = vsel %vm2126, %v2875, %v2874
          %v2877 = vrot.slane %v2864, 2
          %v2878 = vsel %vm2129, %v2877, %v2876
          %v2879 = vpack.c.b16 %v2878, %v2878
          %2881 = vmatprep.subr.bf16.mxu0 %v2278
          %2882 = vmatpush1.bf16.msra.mxu0 %v2277
          %2883 = vmatprep.subr.bf16.mxu0 %v2284
          %2884 = vmatpush1.bf16.msra.mxu0 %v2283
          %2885 = vmatprep.subr.bf16.mxu0 %v2290
          %2886 = vmatpush1.bf16.msra.mxu0 %v2289
          %2887 = vmatprep.subr.bf16.mxu0 %v2296
          %2888 = vmatpush1.bf16.msra.mxu0 %v2295
          %2889 = vmatprep.subr.bf16.mxu0 %v2302
          %2890 = vmatpush1.bf16.msra.mxu0 %v2301
          %2891 = vmatprep.subr.bf16.mxu0 %v2308
          %2892 = vmatpush1.bf16.msra.mxu0 %v2307
          %2893 = vmatprep.subr.bf16.mxu0 %v2314
          %2894 = vmatpush1.bf16.msra.mxu0 %v2313
          %2895 = vmatprep.subr.bf16.mxu0 %v2320
          %2896 = vmatpush1.bf16.msra.mxu0 %v2319
          %2897 = vmatprep.subr.bf16.mxu0 0
          %2898 = vmatpush1.bf16.msra.mxu0 0
          %2899 = vmatprep.subr.bf16.mxu0 0
          %2900 = vmatpush1.bf16.msra.mxu0 0
          %2901 = vmatprep.subr.bf16.mxu0 0
          %2902 = vmatpush1.bf16.msra.mxu0 0
          %2903 = vmatprep.subr.bf16.mxu0 0
          %2904 = vmatpush1.bf16.msra.mxu0 0
          %2905 = vmatprep.subr.bf16.mxu0 0
          %2906 = vmatpush1.bf16.msra.mxu0 0
          %2907 = vmatprep.subr.bf16.mxu0 0
          %2908 = vmatpush1.bf16.msra.mxu0 0
          %2909 = vmatprep.subr.bf16.mxu0 0
          %2910 = vmatpush1.bf16.msra.mxu0 0
          %2911 = vmatprep.subr.bf16.mxu0 0
          %2912 = vmatpush1.bf16.msra.mxu0 0
          %2913 = vmatprep.mubr.bf16.mxu0 0
          %2914 = vmatmul.mubr.bf16.gmra.mrb[0].mxu0 %v2879
          %v2915 = vpop.f32.mrb[0].mxu0
          %v2916 = vadd.f32 %v1565, %v2915
          %v2917 = vpop.f32.mrb[0].mxu0
          %v2918 = vadd.f32 %v1569, %v2917
          %v2919 = vpop.f32.mrb[0].mxu0
          %v2920 = vpop.f32.mrb[0].mxu0
          %2921 = vdwg.mxu0
          %2922 = vmatprep.subr.bf16.mxu0 %v2280
          %2923 = vmatpush1.bf16.msra.mxu0 %v2279
          %2924 = vmatprep.subr.bf16.mxu0 %v2286
          %2925 = vmatpush1.bf16.msra.mxu0 %v2285
          %2926 = vmatprep.subr.bf16.mxu0 %v2292
          %2927 = vmatpush1.bf16.msra.mxu0 %v2291
          %2928 = vmatprep.subr.bf16.mxu0 %v2298
          %2929 = vmatpush1.bf16.msra.mxu0 %v2297
          %2930 = vmatprep.subr.bf16.mxu0 %v2304
          %2931 = vmatpush1.bf16.msra.mxu0 %v2303
          %2932 = vmatprep.subr.bf16.mxu0 %v2310
          %2933 = vmatpush1.bf16.msra.mxu0 %v2309
          %2934 = vmatprep.subr.bf16.mxu0 %v2316
          %2935 = vmatpush1.bf16.msra.mxu0 %v2315
          %2936 = vmatprep.subr.bf16.mxu0 %v2322
          %2937 = vmatpush1.bf16.msra.mxu0 %v2321
          %2938 = vmatprep.subr.bf16.mxu0 0
          %2939 = vmatpush1.bf16.msra.mxu0 0
          %2940 = vmatprep.subr.bf16.mxu0 0
          %2941 = vmatpush1.bf16.msra.mxu0 0
          %2942 = vmatprep.subr.bf16.mxu0 0
          %2943 = vmatpush1.bf16.msra.mxu0 0
          %2944 = vmatprep.subr.bf16.mxu0 0
          %2945 = vmatpush1.bf16.msra.mxu0 0
          %2946 = vmatprep.subr.bf16.mxu0 0
          %2947 = vmatpush1.bf16.msra.mxu0 0
          %2948 = vmatprep.subr.bf16.mxu0 0
          %2949 = vmatpush1.bf16.msra.mxu0 0
          %2950 = vmatprep.subr.bf16.mxu0 0
          %2951 = vmatpush1.bf16.msra.mxu0 0
          %2952 = vmatprep.subr.bf16.mxu0 0
          %2953 = vmatpush1.bf16.msra.mxu0 0
          %2954 = vmatprep.mubr.bf16.mxu0 0
          %2955 = vmatmul.mubr.bf16.gmra.mrb[0].mxu0 %v2879
          %v2956 = vpop.f32.mrb[0].mxu0
          %v2957 = vadd.f32 %v1573, %v2956
          %v2958 = vpop.f32.mrb[0].mxu0
          %v2959 = vadd.f32 %v1577, %v2958
          %v2960 = vpop.f32.mrb[0].mxu0
          %v2961 = vpop.f32.mrb[0].mxu0
          %2962 = vdwg.mxu0
          %2963 = vmatprep.subr.bf16.mxu0 %v2282
          %2964 = vmatpush1.bf16.msra.mxu0 %v2281
          %2965 = vmatprep.subr.bf16.mxu0 %v2288
          %2966 = vmatpush1.bf16.msra.mxu0 %v2287
          %2967 = vmatprep.subr.bf16.mxu0 %v2294
          %2968 = vmatpush1.bf16.msra.mxu0 %v2293
          %2969 = vmatprep.subr.bf16.mxu0 %v2300
          %2970 = vmatpush1.bf16.msra.mxu0 %v2299
          %2971 = vmatprep.subr.bf16.mxu0 %v2306
          %2972 = vmatpush1.bf16.msra.mxu0 %v2305
          %2973 = vmatprep.subr.bf16.mxu0 %v2312
          %2974 = vmatpush1.bf16.msra.mxu0 %v2311
          %2975 = vmatprep.subr.bf16.mxu0 %v2318
          %2976 = vmatpush1.bf16.msra.mxu0 %v2317
          %2977 = vmatprep.subr.bf16.mxu0 %v2324
          %2978 = vmatpush1.bf16.msra.mxu0 %v2323
          %2979 = vmatprep.subr.bf16.mxu0 0
          %2980 = vmatpush1.bf16.msra.mxu0 0
          %2981 = vmatprep.subr.bf16.mxu0 0
          %2982 = vmatpush1.bf16.msra.mxu0 0
          %2983 = vmatprep.subr.bf16.mxu0 0
          %2984 = vmatpush1.bf16.msra.mxu0 0
          %2985 = vmatprep.subr.bf16.mxu0 0
          %2986 = vmatpush1.bf16.msra.mxu0 0
          %2987 = vmatprep.subr.bf16.mxu0 0
          %2988 = vmatpush1.bf16.msra.mxu0 0
          %2989 = vmatprep.subr.bf16.mxu0 0
          %2990 = vmatpush1.bf16.msra.mxu0 0
          %2991 = vmatprep.subr.bf16.mxu0 0
          %2992 = vmatpush1.bf16.msra.mxu0 0
          %2993 = vmatprep.subr.bf16.mxu0 0
          %2994 = vmatpush1.bf16.msra.mxu0 0
          %2995 = vmatprep.mubr.bf16.mxu0 0
          %2996 = vmatmul.mubr.bf16.gmra.mrb[0].mxu0 %v2879
          %v2997 = vpop.f32.mrb[0].mxu0
          %v2998 = vadd.f32 %v1581, %v2997
          %v2999 = vpop.f32.mrb[0].mxu0
          %v3000 = vadd.f32 %v1585, %v2999
          %v3001 = vpop.f32.mrb[0].mxu0
          %v3002 = vpop.f32.mrb[0].mxu0
          %3003 = vdwg.mxu0
          %v3004 = vadd.f32 %v2916, %v2795
          %v3005 = vxor.u32 %v3004, 2147483648
          %v3006 = vmul.f32 %v3005, 1.442695
          %v3007 = vpow.pop %v3006
          %v3008 = vadd.f32 %v3007, 1.0
          %v3009 = vrcp.pop %v3008
          %v3010 = vmul.f32 1.0, %v3009
          %v3011 = vadd.f32 %v2918, %v2797
          %v3012 = vxor.u32 %v3011, 2147483648
          %v3013 = vmul.f32 %v3012, 1.442695
          %v3014 = vpow.pop %v3013
          %v3015 = vadd.f32 %v3014, 1.0
          %v3016 = vrcp.pop %v3015
          %v3017 = vmul.f32 1.0, %v3016
          %v3018 = vadd.f32 %v2836, %v1597
          %v3019 = vmul.f32 %v3010, %v3018
          %v3020 = vadd.f32 %v2957, %v3019
          %v3021 = vtanh.pop %v3020
          %v3022 = vsub.f32 1.0, %v3017
          %v3023 = vmul.f32 %v3022, %v3021
          %v3024 = vmul.f32 %v3017, %v2517
          %v3025 = vadd.f32 %v3023, %v3024
          %v3026 = vadd.f32 %v2518, %v3025
          %v3028 = vrot.slane %v2959, 6
          %v3029 = vrot.slane %v2959, 7
          %v3030 = vrot.slane %v2959, 1
          %v3031 = vrot.slane %v2959, 2
          %v3032 = vrot.slane %v2959, 3
          %v3033 = vrot.slane %v2959, 4
          %v3034 = vrot.slane %v2959, 5
          %v3043 = vadd.f32 %v1620, %v3028
          %v3044 = vadd.f32 %v1623, %v3029
          %v3045 = vadd.f32 %v1626, %v2959
          %v3046 = vadd.f32 %v1629, %v3030
          %v3047 = vadd.f32 %v1632, %v3031
          %v3048 = vadd.f32 %v1635, %v3032
          %v3049 = vadd.f32 %v1638, %v3033
          %v3050 = vadd.f32 %v1641, %v3034
          %v3051 = vxor.u32 %v3043, 2147483648
          %v3052 = vxor.u32 %v3044, 2147483648
          %v3053 = vxor.u32 %v3045, 2147483648
          %v3054 = vxor.u32 %v3046, 2147483648
          %v3055 = vxor.u32 %v3047, 2147483648
          %v3056 = vxor.u32 %v3048, 2147483648
          %v3057 = vxor.u32 %v3049, 2147483648
          %v3058 = vxor.u32 %v3050, 2147483648
          %v3059 = vmul.f32 %v3051, 1.442695
          %v3060 = vpow.pop %v3059
          %v3061 = vmul.f32 %v3052, 1.442695
          %v3062 = vpow.pop %v3061
          %v3063 = vmul.f32 %v3053, 1.442695
          %v3064 = vpow.pop %v3063
          %v3065 = vmul.f32 %v3054, 1.442695
          %v3066 = vpow.pop %v3065
          %v3067 = vmul.f32 %v3055, 1.442695
          %v3068 = vpow.pop %v3067
          %v3069 = vmul.f32 %v3056, 1.442695
          %v3070 = vpow.pop %v3069
          %v3071 = vmul.f32 %v3057, 1.442695
          %v3072 = vpow.pop %v3071
          %v3073 = vmul.f32 %v3058, 1.442695
          %v3074 = vpow.pop %v3073
          %v3075 = vadd.f32 %v3060, 1.0
          %v3076 = vadd.f32 %v3062, 1.0
          %v3077 = vadd.f32 %v3064, 1.0
          %v3078 = vadd.f32 %v3066, 1.0
          %v3079 = vadd.f32 %v3068, 1.0
          %v3080 = vadd.f32 %v3070, 1.0
          %v3081 = vadd.f32 %v3072, 1.0
          %v3082 = vadd.f32 %v3074, 1.0
          %v3083 = vrcp.pop %v3075
          %v3084 = vmul.f32 1.0, %v3083
          %v3085 = vrcp.pop %v3076
          %v3086 = vmul.f32 1.0, %v3085
          %v3087 = vrcp.pop %v3077
          %v3088 = vmul.f32 1.0, %v3087
          %v3089 = vrcp.pop %v3078
          %v3090 = vmul.f32 1.0, %v3089
          %v3091 = vrcp.pop %v3079
          %v3092 = vmul.f32 1.0, %v3091
          %v3093 = vrcp.pop %v3080
          %v3094 = vmul.f32 1.0, %v3093
          %v3095 = vrcp.pop %v3081
          %v3096 = vmul.f32 1.0, %v3095
          %v3097 = vrcp.pop %v3082
          %v3098 = vmul.f32 1.0, %v3097
          %v3100 = vrot.slane %v2998, 6
          %v3101 = vrot.slane %v2998, 7
          %v3102 = vrot.slane %v2998, 1
          %v3103 = vrot.slane %v2998, 2
          %v3104 = vrot.slane %v2998, 3
          %v3105 = vrot.slane %v2998, 4
          %v3106 = vrot.slane %v2998, 5
          %v3115 = vadd.f32 %v1621, %v3100
          %v3116 = vadd.f32 %v1624, %v3101
          %v3117 = vadd.f32 %v1627, %v2998
          %v3118 = vadd.f32 %v1630, %v3102
          %v3119 = vadd.f32 %v1633, %v3103
          %v3120 = vadd.f32 %v1636, %v3104
          %v3121 = vadd.f32 %v1639, %v3105
          %v3122 = vadd.f32 %v1642, %v3106
          %v3123 = vxor.u32 %v3115, 2147483648
          %v3124 = vxor.u32 %v3116, 2147483648
          %v3125 = vxor.u32 %v3117, 2147483648
          %v3126 = vxor.u32 %v3118, 2147483648
          %v3127 = vxor.u32 %v3119, 2147483648
          %v3128 = vxor.u32 %v3120, 2147483648
          %v3129 = vxor.u32 %v3121, 2147483648
          %v3130 = vxor.u32 %v3122, 2147483648
          %v3131 = vmul.f32 %v3123, 1.442695
          %v3132 = vpow.pop %v3131
          %v3133 = vmul.f32 %v3124, 1.442695
          %v3134 = vpow.pop %v3133
          %v3135 = vmul.f32 %v3125, 1.442695
          %v3136 = vpow.pop %v3135
          %v3137 = vmul.f32 %v3126, 1.442695
          %v3138 = vpow.pop %v3137
          %v3139 = vmul.f32 %v3127, 1.442695
          %v3140 = vpow.pop %v3139
          %v3141 = vmul.f32 %v3128, 1.442695
          %v3142 = vpow.pop %v3141
          %v3143 = vmul.f32 %v3129, 1.442695
          %v3144 = vpow.pop %v3143
          %v3145 = vmul.f32 %v3130, 1.442695
          %v3146 = vpow.pop %v3145
          %v3147 = vadd.f32 %v3132, 1.0
          %v3148 = vadd.f32 %v3134, 1.0
          %v3149 = vadd.f32 %v3136, 1.0
          %v3150 = vadd.f32 %v3138, 1.0
          %v3151 = vadd.f32 %v3140, 1.0
          %v3152 = vadd.f32 %v3142, 1.0
          %v3153 = vadd.f32 %v3144, 1.0
          %v3154 = vadd.f32 %v3146, 1.0
          %v3155 = vrcp.pop %v3147
          %v3156 = vmul.f32 1.0, %v3155
          %v3157 = vrcp.pop %v3148
          %v3158 = vmul.f32 1.0, %v3157
          %v3159 = vrcp.pop %v3149
          %v3160 = vmul.f32 1.0, %v3159
          %v3161 = vrcp.pop %v3150
          %v3162 = vmul.f32 1.0, %v3161
          %v3163 = vrcp.pop %v3151
          %v3164 = vmul.f32 1.0, %v3163
          %v3165 = vrcp.pop %v3152
          %v3166 = vmul.f32 1.0, %v3165
          %v3167 = vrcp.pop %v3153
          %v3168 = vmul.f32 1.0, %v3167
          %v3169 = vrcp.pop %v3154
          %v3170 = vmul.f32 1.0, %v3169
          %v3172 = vrot.slane %v3000, 6
          %v3173 = vrot.slane %v3000, 7
          %v3174 = vrot.slane %v3000, 1
          %v3175 = vrot.slane %v3000, 2
          %v3176 = vrot.slane %v3000, 3
          %v3177 = vrot.slane %v3000, 4
          %v3178 = vrot.slane %v3000, 5
          %v3187 = vmul.f32 %v3084, %v3172
          %v3188 = vmul.f32 %v3086, %v3173
          %v3189 = vmul.f32 %v3088, %v3000
          %v3190 = vmul.f32 %v3090, %v3174
          %v3191 = vmul.f32 %v3092, %v3175
          %v3192 = vmul.f32 %v3094, %v3176
          %v3193 = vmul.f32 %v3096, %v3177
          %v3194 = vmul.f32 %v3098, %v3178
          %v3195 = vadd.f32 %v1622, %v3187
          %v3196 = vadd.f32 %v1625, %v3188
          %v3197 = vadd.f32 %v1628, %v3189
          %v3198 = vadd.f32 %v1631, %v3190
          %v3199 = vadd.f32 %v1634, %v3191
          %v3200 = vadd.f32 %v1637, %v3192
          %v3201 = vadd.f32 %v1640, %v3193
          %v3202 = vadd.f32 %v1643, %v3194
          %v3203 = vtanh.pop %v3195
          %v3204 = vtanh.pop %v3196
          %v3205 = vtanh.pop %v3197
          %v3206 = vtanh.pop %v3198
          %v3207 = vtanh.pop %v3199
          %v3208 = vtanh.pop %v3200
          %v3209 = vtanh.pop %v3201
          %v3210 = vtanh.pop %v3202
          %v3211 = vsub.f32 1.0, %v3156
          %v3212 = vsub.f32 1.0, %v3158
          %v3213 = vsub.f32 1.0, %v3160
          %v3214 = vsub.f32 1.0, %v3162
          %v3215 = vsub.f32 1.0, %v3164
          %v3216 = vsub.f32 1.0, %v3166
          %v3217 = vsub.f32 1.0, %v3168
          %v3218 = vsub.f32 1.0, %v3170
          %v3219 = vmul.f32 %v3211, %v3203
          %v3220 = vmul.f32 %v3212, %v3204
          %v3221 = vmul.f32 %v3213, %v3205
          %v3222 = vmul.f32 %v3214, %v3206
          %v3223 = vmul.f32 %v3215, %v3207
          %v3224 = vmul.f32 %v3216, %v3208
          %v3225 = vmul.f32 %v3217, %v3209
          %v3226 = vmul.f32 %v3218, %v3210
          %v3235 = vrot.slane %v2751, 7
          %v3236 = vrot.slane %v2752, 7
          %v3237 = vrot.slane %v2753, 7
          %v3238 = vrot.slane %v2754, 7
          %v3239 = vrot.slane %v2755, 7
          %v3240 = vrot.slane %v2756, 7
          %v3241 = vrot.slane %v2757, 7
          %v3242 = vrot.slane %v2758, 7
          %v3251 = vmul.f32 %v3156, %v3235
          %v3252 = vmul.f32 %v3158, %v3236
          %v3253 = vmul.f32 %v3160, %v3237
          %v3254 = vmul.f32 %v3162, %v3238
          %v3255 = vmul.f32 %v3164, %v3239
          %v3256 = vmul.f32 %v3166, %v3240
          %v3257 = vmul.f32 %v3168, %v3241
          %v3258 = vmul.f32 %v3170, %v3242
          %v3259 = vadd.f32 %v3219, %v3251
          %v3260 = vadd.f32 %v3220, %v3252
          %v3261 = vadd.f32 %v3221, %v3253
          %v3262 = vadd.f32 %v3222, %v3254
          %v3263 = vadd.f32 %v3223, %v3255
          %v3264 = vadd.f32 %v3224, %v3256
          %v3265 = vadd.f32 %v3225, %v3257
          %v3266 = vadd.f32 %v3226, %v3258
          %v3267 = vpack.c.bf16 %v3025, %v3025
          %3268 = vmatprep.subr.bf16.mxu0 %v1958
          %3269 = vmatpush1.bf16.msra.mxu0 %v1957
          %3270 = vmatprep.subr.bf16.mxu0 %v1961
          %3271 = vmatpush1.bf16.msra.mxu0 %v1960
          %3272 = vmatprep.subr.bf16.mxu0 %v1964
          %3273 = vmatpush1.bf16.msra.mxu0 %v1963
          %3274 = vmatprep.subr.bf16.mxu0 %v1967
          %3275 = vmatpush1.bf16.msra.mxu0 %v1966
          %3276 = vmatprep.subr.bf16.mxu0 %v1970
          %3277 = vmatpush1.bf16.msra.mxu0 %v1969
          %3278 = vmatprep.subr.bf16.mxu0 %v1973
          %3279 = vmatpush1.bf16.msra.mxu0 %v1972
          %3280 = vmatprep.subr.bf16.mxu0 %v1976
          %3281 = vmatpush1.bf16.msra.mxu0 %v1975
          %3282 = vmatprep.subr.bf16.mxu0 %v1979
          %3283 = vmatpush1.bf16.msra.mxu0 %v1978
          %3284 = vmatprep.subr.bf16.mxu0 0
          %3285 = vmatpush1.bf16.msra.mxu0 0
          %3286 = vmatprep.subr.bf16.mxu0 0
          %3287 = vmatpush1.bf16.msra.mxu0 0
          %3288 = vmatprep.subr.bf16.mxu0 0
          %3289 = vmatpush1.bf16.msra.mxu0 0
          %3290 = vmatprep.subr.bf16.mxu0 0
          %3291 = vmatpush1.bf16.msra.mxu0 0
          %3292 = vmatprep.subr.bf16.mxu0 0
          %3293 = vmatpush1.bf16.msra.mxu0 0
          %3294 = vmatprep.subr.bf16.mxu0 0
          %3295 = vmatpush1.bf16.msra.mxu0 0
          %3296 = vmatprep.subr.bf16.mxu0 0
          %3297 = vmatpush1.bf16.msra.mxu0 0
          %3298 = vmatprep.subr.bf16.mxu0 0
          %3299 = vmatpush1.bf16.msra.mxu0 0
          %3300 = vmatprep.mubr.bf16.mxu0 0
          %3301 = vmatmul.mubr.bf16.gmra.mrb[0].mxu0 %v3267
          %v3302 = vpop.f32.mrb[0].mxu0
          %v3303 = vadd.f32 0.0, %v3302
          %v3304 = vpop.f32.mrb[0].mxu0
          %v3305 = vadd.f32 0.0, %v3304
          %v3306 = vpop.f32.mrb[0].mxu0
          %v3307 = vpop.f32.mrb[0].mxu0
          %3308 = vdwg.mxu0
          %3309 = vmatprep.subr.bf16.mxu0 0
          %3310 = vmatpush1.bf16.msra.mxu0 %v1959
          %3311 = vmatprep.subr.bf16.mxu0 0
          %3312 = vmatpush1.bf16.msra.mxu0 %v1962
          %3313 = vmatprep.subr.bf16.mxu0 0
          %3314 = vmatpush1.bf16.msra.mxu0 %v1965
          %3315 = vmatprep.subr.bf16.mxu0 0
          %3316 = vmatpush1.bf16.msra.mxu0 %v1968
          %3317 = vmatprep.subr.bf16.mxu0 0
          %3318 = vmatpush1.bf16.msra.mxu0 %v1971
          %3319 = vmatprep.subr.bf16.mxu0 0
          %3320 = vmatpush1.bf16.msra.mxu0 %v1974
          %3321 = vmatprep.subr.bf16.mxu0 0
          %3322 = vmatpush1.bf16.msra.mxu0 %v1977
          %3323 = vmatprep.subr.bf16.mxu0 0
          %3324 = vmatpush1.bf16.msra.mxu0 %v1980
          %3325 = vmatprep.subr.bf16.mxu0 0
          %3326 = vmatpush1.bf16.msra.mxu0 0
          %3327 = vmatprep.subr.bf16.mxu0 0
          %3328 = vmatpush1.bf16.msra.mxu0 0
          %3329 = vmatprep.subr.bf16.mxu0 0
          %3330 = vmatpush1.bf16.msra.mxu0 0
          %3331 = vmatprep.subr.bf16.mxu0 0
          %3332 = vmatpush1.bf16.msra.mxu0 0
          %3333 = vmatprep.subr.bf16.mxu0 0
          %3334 = vmatpush1.bf16.msra.mxu0 0
          %3335 = vmatprep.subr.bf16.mxu0 0
          %3336 = vmatpush1.bf16.msra.mxu0 0
          %3337 = vmatprep.subr.bf16.mxu0 0
          %3338 = vmatpush1.bf16.msra.mxu0 0
          %3339 = vmatprep.subr.bf16.mxu0 0
          %3340 = vmatpush1.bf16.msra.mxu0 0
          %3341 = vmatprep.mubr.bf16.mxu0 0
          %3342 = vmatmul.mubr.bf16.gmra.mrb[0].mxu0 %v3267
          %v3343 = vpop.f32.mrb[0].mxu0
          %v3344 = vadd.f32 0.0, %v3343
          %v3345 = vpop.f32.mrb[0].mxu0
          %v3346 = vpop.f32.mrb[0].mxu0
          %v3347 = vpop.f32.mrb[0].mxu0
          %3348 = vdwg.mxu0
          %v3349 = vpack.c.bf16 %v3259, %v3259
          %v3350 = vpack.c.bf16 %v3260, %v3260
          %v3351 = vpack.c.bf16 %v3261, %v3261
          %v3352 = vpack.c.bf16 %v3262, %v3262
          %v3353 = vpack.c.bf16 %v3263, %v3263
          %v3354 = vpack.c.bf16 %v3264, %v3264
          %v3355 = vpack.c.bf16 %v3265, %v3265
          %v3356 = vpack.c.bf16 %v3266, %v3266
          %v3365 = vunpack.c.l.b16 %v3349
          %v3366 = vunpack.c.l.b16 %v3350
          %v3367 = vunpack.c.l.b16 %v3351
          %v3368 = vunpack.c.l.b16 %v3352
          %v3369 = vunpack.c.l.b16 %v3353
          %v3370 = vunpack.c.l.b16 %v3354
          %v3371 = vunpack.c.l.b16 %v3355
          %v3372 = vunpack.c.l.b16 %v3356
          %v3373 = vrot.slane %v3365, 2
          %v3374 = vrot.slane %v3366, 1
          %v3375 = vsel %vm2111, %v3374, %v3373
          %v3376 = vsel %vm2114, %v3367, %v3375
          %v3377 = vrot.slane %v3368, 7
          %v3378 = vsel %vm2117, %v3377, %v3376
          %v3379 = vrot.slane %v3369, 6
          %v3380 = vsel %vm2120, %v3379, %v3378
          %v3381 = vrot.slane %v3370, 5
          %v3382 = vsel %vm2123, %v3381, %v3380
          %v3383 = vrot.slane %v3371, 4
          %v3384 = vsel %vm2126, %v3383, %v3382
          %v3385 = vrot.slane %v3372, 3
          %v3386 = vsel %vm2129, %v3385, %v3384
          %v3387 = vpack.c.b16 %v3386, %v3386
          %3389 = vmatprep.subr.bf16.mxu0 %v2278
          %3390 = vmatpush1.bf16.msra.mxu0 %v2277
          %3391 = vmatprep.subr.bf16.mxu0 %v2284
          %3392 = vmatpush1.bf16.msra.mxu0 %v2283
          %3393 = vmatprep.subr.bf16.mxu0 %v2290
          %3394 = vmatpush1.bf16.msra.mxu0 %v2289
          %3395 = vmatprep.subr.bf16.mxu0 %v2296
          %3396 = vmatpush1.bf16.msra.mxu0 %v2295
          %3397 = vmatprep.subr.bf16.mxu0 %v2302
          %3398 = vmatpush1.bf16.msra.mxu0 %v2301
          %3399 = vmatprep.subr.bf16.mxu0 %v2308
          %3400 = vmatpush1.bf16.msra.mxu0 %v2307
          %3401 = vmatprep.subr.bf16.mxu0 %v2314
          %3402 = vmatpush1.bf16.msra.mxu0 %v2313
          %3403 = vmatprep.subr.bf16.mxu0 %v2320
          %3404 = vmatpush1.bf16.msra.mxu0 %v2319
          %3405 = vmatprep.subr.bf16.mxu0 0
          %3406 = vmatpush1.bf16.msra.mxu0 0
          %3407 = vmatprep.subr.bf16.mxu0 0
          %3408 = vmatpush1.bf16.msra.mxu0 0
          %3409 = vmatprep.subr.bf16.mxu0 0
          %3410 = vmatpush1.bf16.msra.mxu0 0
          %3411 = vmatprep.subr.bf16.mxu0 0
          %3412 = vmatpush1.bf16.msra.mxu0 0
          %3413 = vmatprep.subr.bf16.mxu0 0
          %3414 = vmatpush1.bf16.msra.mxu0 0
          %3415 = vmatprep.subr.bf16.mxu0 0
          %3416 = vmatpush1.bf16.msra.mxu0 0
          %3417 = vmatprep.subr.bf16.mxu0 0
          %3418 = vmatpush1.bf16.msra.mxu0 0
          %3419 = vmatprep.subr.bf16.mxu0 0
          %3420 = vmatpush1.bf16.msra.mxu0 0
          %3421 = vmatprep.mubr.bf16.mxu0 0
          %3422 = vmatmul.mubr.bf16.gmra.mrb[0].mxu0 %v3387
          %v3423 = vpop.f32.mrb[0].mxu0
          %v3424 = vadd.f32 %v1565, %v3423
          %v3425 = vpop.f32.mrb[0].mxu0
          %v3426 = vadd.f32 %v1569, %v3425
          %v3427 = vpop.f32.mrb[0].mxu0
          %v3428 = vpop.f32.mrb[0].mxu0
          %3429 = vdwg.mxu0
          %3430 = vmatprep.subr.bf16.mxu0 %v2280
          %3431 = vmatpush1.bf16.msra.mxu0 %v2279
          %3432 = vmatprep.subr.bf16.mxu0 %v2286
          %3433 = vmatpush1.bf16.msra.mxu0 %v2285
          %3434 = vmatprep.subr.bf16.mxu0 %v2292
          %3435 = vmatpush1.bf16.msra.mxu0 %v2291
          %3436 = vmatprep.subr.bf16.mxu0 %v2298
          %3437 = vmatpush1.bf16.msra.mxu0 %v2297
          %3438 = vmatprep.subr.bf16.mxu0 %v2304
          %3439 = vmatpush1.bf16.msra.mxu0 %v2303
          %3440 = vmatprep.subr.bf16.mxu0 %v2310
          %3441 = vmatpush1.bf16.msra.mxu0 %v2309
          %3442 = vmatprep.subr.bf16.mxu0 %v2316
          %3443 = vmatpush1.bf16.msra.mxu0 %v2315
          %3444 = vmatprep.subr.bf16.mxu0 %v2322
          %3445 = vmatpush1.bf16.msra.mxu0 %v2321
          %3446 = vmatprep.subr.bf16.mxu0 0
          %3447 = vmatpush1.bf16.msra.mxu0 0
          %3448 = vmatprep.subr.bf16.mxu0 0
          %3449 = vmatpush1.bf16.msra.mxu0 0
          %3450 = vmatprep.subr.bf16.mxu0 0
          %3451 = vmatpush1.bf16.msra.mxu0 0
          %3452 = vmatprep.subr.bf16.mxu0 0
          %3453 = vmatpush1.bf16.msra.mxu0 0
          %3454 = vmatprep.subr.bf16.mxu0 0
          %3455 = vmatpush1.bf16.msra.mxu0 0
          %3456 = vmatprep.subr.bf16.mxu0 0
          %3457 = vmatpush1.bf16.msra.mxu0 0
          %3458 = vmatprep.subr.bf16.mxu0 0
          %3459 = vmatpush1.bf16.msra.mxu0 0
          %3460 = vmatprep.subr.bf16.mxu0 0
          %3461 = vmatpush1.bf16.msra.mxu0 0
          %3462 = vmatprep.mubr.bf16.mxu0 0
          %3463 = vmatmul.mubr.bf16.gmra.mrb[0].mxu0 %v3387
          %v3464 = vpop.f32.mrb[0].mxu0
          %v3465 = vadd.f32 %v1573, %v3464
          %v3466 = vpop.f32.mrb[0].mxu0
          %v3467 = vadd.f32 %v1577, %v3466
          %v3468 = vpop.f32.mrb[0].mxu0
          %v3469 = vpop.f32.mrb[0].mxu0
          %3470 = vdwg.mxu0
          %3471 = vmatprep.subr.bf16.mxu0 %v2282
          %3472 = vmatpush1.bf16.msra.mxu0 %v2281
          %3473 = vmatprep.subr.bf16.mxu0 %v2288
          %3474 = vmatpush1.bf16.msra.mxu0 %v2287
          %3475 = vmatprep.subr.bf16.mxu0 %v2294
          %3476 = vmatpush1.bf16.msra.mxu0 %v2293
          %3477 = vmatprep.subr.bf16.mxu0 %v2300
          %3478 = vmatpush1.bf16.msra.mxu0 %v2299
          %3479 = vmatprep.subr.bf16.mxu0 %v2306
          %3480 = vmatpush1.bf16.msra.mxu0 %v2305
          %3481 = vmatprep.subr.bf16.mxu0 %v2312
          %3482 = vmatpush1.bf16.msra.mxu0 %v2311
          %3483 = vmatprep.subr.bf16.mxu0 %v2318
          %3484 = vmatpush1.bf16.msra.mxu0 %v2317
          %3485 = vmatprep.subr.bf16.mxu0 %v2324
          %3486 = vmatpush1.bf16.msra.mxu0 %v2323
          %3487 = vmatprep.subr.bf16.mxu0 0
          %3488 = vmatpush1.bf16.msra.mxu0 0
          %3489 = vmatprep.subr.bf16.mxu0 0
          %3490 = vmatpush1.bf16.msra.mxu0 0
          %3491 = vmatprep.subr.bf16.mxu0 0
          %3492 = vmatpush1.bf16.msra.mxu0 0
          %3493 = vmatprep.subr.bf16.mxu0 0
          %3494 = vmatpush1.bf16.msra.mxu0 0
          %3495 = vmatprep.subr.bf16.mxu0 0
          %3496 = vmatpush1.bf16.msra.mxu0 0
          %3497 = vmatprep.subr.bf16.mxu0 0
          %3498 = vmatpush1.bf16.msra.mxu0 0
          %3499 = vmatprep.subr.bf16.mxu0 0
          %3500 = vmatpush1.bf16.msra.mxu0 0
          %3501 = vmatprep.subr.bf16.mxu0 0
          %3502 = vmatpush1.bf16.msra.mxu0 0
          %3503 = vmatprep.mubr.bf16.mxu0 0
          %3504 = vmatmul.mubr.bf16.gmra.mrb[0].mxu0 %v3387
          %v3505 = vpop.f32.mrb[0].mxu0
          %v3506 = vadd.f32 %v1581, %v3505
          %v3507 = vpop.f32.mrb[0].mxu0
          %v3508 = vadd.f32 %v1585, %v3507
          %v3509 = vpop.f32.mrb[0].mxu0
          %v3510 = vpop.f32.mrb[0].mxu0
          %3511 = vdwg.mxu0
          %v3512 = vadd.f32 %v3424, %v3303
          %v3513 = vxor.u32 %v3512, 2147483648
          %v3514 = vmul.f32 %v3513, 1.442695
          %v3515 = vpow.pop %v3514
          %v3516 = vadd.f32 %v3515, 1.0
          %v3517 = vrcp.pop %v3516
          %v3518 = vmul.f32 1.0, %v3517
          %v3519 = vadd.f32 %v3426, %v3305
          %v3520 = vxor.u32 %v3519, 2147483648
          %v3521 = vmul.f32 %v3520, 1.442695
          %v3522 = vpow.pop %v3521
          %v3523 = vadd.f32 %v3522, 1.0
          %v3524 = vrcp.pop %v3523
          %v3525 = vmul.f32 1.0, %v3524
          %v3526 = vadd.f32 %v3344, %v1597
          %v3527 = vmul.f32 %v3518, %v3526
          %v3528 = vadd.f32 %v3465, %v3527
          %v3529 = vtanh.pop %v3528
          %v3530 = vsub.f32 1.0, %v3525
          %v3531 = vmul.f32 %v3530, %v3529
          %v3532 = vmul.f32 %v3525, %v3025
          %v3533 = vadd.f32 %v3531, %v3532
          %v3534 = vadd.f32 %v3026, %v3533
          %v3536 = vrot.slane %v3467, 5
          %v3537 = vrot.slane %v3467, 6
          %v3538 = vrot.slane %v3467, 7
          %v3539 = vrot.slane %v3467, 1
          %v3540 = vrot.slane %v3467, 2
          %v3541 = vrot.slane %v3467, 3
          %v3542 = vrot.slane %v3467, 4
          %v3551 = vadd.f32 %v1620, %v3536
          %v3552 = vadd.f32 %v1623, %v3537
          %v3553 = vadd.f32 %v1626, %v3538
          %v3554 = vadd.f32 %v1629, %v3467
          %v3555 = vadd.f32 %v1632, %v3539
          %v3556 = vadd.f32 %v1635, %v3540
          %v3557 = vadd.f32 %v1638, %v3541
          %v3558 = vadd.f32 %v1641, %v3542
          %v3559 = vxor.u32 %v3551, 2147483648
          %v3560 = vxor.u32 %v3552, 2147483648
          %v3561 = vxor.u32 %v3553, 2147483648
          %v3562 = vxor.u32 %v3554, 2147483648
          %v3563 = vxor.u32 %v3555, 2147483648
          %v3564 = vxor.u32 %v3556, 2147483648
          %v3565 = vxor.u32 %v3557, 2147483648
          %v3566 = vxor.u32 %v3558, 2147483648
          %v3567 = vmul.f32 %v3559, 1.442695
          %v3568 = vpow.pop %v3567
          %v3569 = vmul.f32 %v3560, 1.442695
          %v3570 = vpow.pop %v3569
          %v3571 = vmul.f32 %v3561, 1.442695
          %v3572 = vpow.pop %v3571
          %v3573 = vmul.f32 %v3562, 1.442695
          %v3574 = vpow.pop %v3573
          %v3575 = vmul.f32 %v3563, 1.442695
          %v3576 = vpow.pop %v3575
          %v3577 = vmul.f32 %v3564, 1.442695
          %v3578 = vpow.pop %v3577
          %v3579 = vmul.f32 %v3565, 1.442695
          %v3580 = vpow.pop %v3579
          %v3581 = vmul.f32 %v3566, 1.442695
          %v3582 = vpow.pop %v3581
          %v3583 = vadd.f32 %v3568, 1.0
          %v3584 = vadd.f32 %v3570, 1.0
          %v3585 = vadd.f32 %v3572, 1.0
          %v3586 = vadd.f32 %v3574, 1.0
          %v3587 = vadd.f32 %v3576, 1.0
          %v3588 = vadd.f32 %v3578, 1.0
          %v3589 = vadd.f32 %v3580, 1.0
          %v3590 = vadd.f32 %v3582, 1.0
          %v3591 = vrcp.pop %v3583
          %v3592 = vmul.f32 1.0, %v3591
          %v3593 = vrcp.pop %v3584
          %v3594 = vmul.f32 1.0, %v3593
          %v3595 = vrcp.pop %v3585
          %v3596 = vmul.f32 1.0, %v3595
          %v3597 = vrcp.pop %v3586
          %v3598 = vmul.f32 1.0, %v3597
          %v3599 = vrcp.pop %v3587
          %v3600 = vmul.f32 1.0, %v3599
          %v3601 = vrcp.pop %v3588
          %v3602 = vmul.f32 1.0, %v3601
          %v3603 = vrcp.pop %v3589
          %v3604 = vmul.f32 1.0, %v3603
          %v3605 = vrcp.pop %v3590
          %v3606 = vmul.f32 1.0, %v3605
          %v3608 = vrot.slane %v3506, 5
          %v3609 = vrot.slane %v3506, 6
          %v3610 = vrot.slane %v3506, 7
          %v3611 = vrot.slane %v3506, 1
          %v3612 = vrot.slane %v3506, 2
          %v3613 = vrot.slane %v3506, 3
          %v3614 = vrot.slane %v3506, 4
          %v3623 = vadd.f32 %v1621, %v3608
          %v3624 = vadd.f32 %v1624, %v3609
          %v3625 = vadd.f32 %v1627, %v3610
          %v3626 = vadd.f32 %v1630, %v3506
          %v3627 = vadd.f32 %v1633, %v3611
          %v3628 = vadd.f32 %v1636, %v3612
          %v3629 = vadd.f32 %v1639, %v3613
          %v3630 = vadd.f32 %v1642, %v3614
          %v3631 = vxor.u32 %v3623, 2147483648
          %v3632 = vxor.u32 %v3624, 2147483648
          %v3633 = vxor.u32 %v3625, 2147483648
          %v3634 = vxor.u32 %v3626, 2147483648
          %v3635 = vxor.u32 %v3627, 2147483648
          %v3636 = vxor.u32 %v3628, 2147483648
          %v3637 = vxor.u32 %v3629, 2147483648
          %v3638 = vxor.u32 %v3630, 2147483648
          %v3639 = vmul.f32 %v3631, 1.442695
          %v3640 = vpow.pop %v3639
          %v3641 = vmul.f32 %v3632, 1.442695
          %v3642 = vpow.pop %v3641
          %v3643 = vmul.f32 %v3633, 1.442695
          %v3644 = vpow.pop %v3643
          %v3645 = vmul.f32 %v3634, 1.442695
          %v3646 = vpow.pop %v3645
          %v3647 = vmul.f32 %v3635, 1.442695
          %v3648 = vpow.pop %v3647
          %v3649 = vmul.f32 %v3636, 1.442695
          %v3650 = vpow.pop %v3649
          %v3651 = vmul.f32 %v3637, 1.442695
          %v3652 = vpow.pop %v3651
          %v3653 = vmul.f32 %v3638, 1.442695
          %v3654 = vpow.pop %v3653
          %v3655 = vadd.f32 %v3640, 1.0
          %v3656 = vadd.f32 %v3642, 1.0
          %v3657 = vadd.f32 %v3644, 1.0
          %v3658 = vadd.f32 %v3646, 1.0
          %v3659 = vadd.f32 %v3648, 1.0
          %v3660 = vadd.f32 %v3650, 1.0
          %v3661 = vadd.f32 %v3652, 1.0
          %v3662 = vadd.f32 %v3654, 1.0
          %v3663 = vrcp.pop %v3655
          %v3664 = vmul.f32 1.0, %v3663
          %v3665 = vrcp.pop %v3656
          %v3666 = vmul.f32 1.0, %v3665
          %v3667 = vrcp.pop %v3657
          %v3668 = vmul.f32 1.0, %v3667
          %v3669 = vrcp.pop %v3658
          %v3670 = vmul.f32 1.0, %v3669
          %v3671 = vrcp.pop %v3659
          %v3672 = vmul.f32 1.0, %v3671
          %v3673 = vrcp.pop %v3660
          %v3674 = vmul.f32 1.0, %v3673
          %v3675 = vrcp.pop %v3661
          %v3676 = vmul.f32 1.0, %v3675
          %v3677 = vrcp.pop %v3662
          %v3678 = vmul.f32 1.0, %v3677
          %v3680 = vrot.slane %v3508, 5
          %v3681 = vrot.slane %v3508, 6
          %v3682 = vrot.slane %v3508, 7
          %v3683 = vrot.slane %v3508, 1
          %v3684 = vrot.slane %v3508, 2
          %v3685 = vrot.slane %v3508, 3
          %v3686 = vrot.slane %v3508, 4
          %v3695 = vmul.f32 %v3592, %v3680
          %v3696 = vmul.f32 %v3594, %v3681
          %v3697 = vmul.f32 %v3596, %v3682
          %v3698 = vmul.f32 %v3598, %v3508
          %v3699 = vmul.f32 %v3600, %v3683
          %v3700 = vmul.f32 %v3602, %v3684
          %v3701 = vmul.f32 %v3604, %v3685
          %v3702 = vmul.f32 %v3606, %v3686
          %v3703 = vadd.f32 %v1622, %v3695
          %v3704 = vadd.f32 %v1625, %v3696
          %v3705 = vadd.f32 %v1628, %v3697
          %v3706 = vadd.f32 %v1631, %v3698
          %v3707 = vadd.f32 %v1634, %v3699
          %v3708 = vadd.f32 %v1637, %v3700
          %v3709 = vadd.f32 %v1640, %v3701
          %v3710 = vadd.f32 %v1643, %v3702
          %v3711 = vtanh.pop %v3703
          %v3712 = vtanh.pop %v3704
          %v3713 = vtanh.pop %v3705
          %v3714 = vtanh.pop %v3706
          %v3715 = vtanh.pop %v3707
          %v3716 = vtanh.pop %v3708
          %v3717 = vtanh.pop %v3709
          %v3718 = vtanh.pop %v3710
          %v3719 = vsub.f32 1.0, %v3664
          %v3720 = vsub.f32 1.0, %v3666
          %v3721 = vsub.f32 1.0, %v3668
          %v3722 = vsub.f32 1.0, %v3670
          %v3723 = vsub.f32 1.0, %v3672
          %v3724 = vsub.f32 1.0, %v3674
          %v3725 = vsub.f32 1.0, %v3676
          %v3726 = vsub.f32 1.0, %v3678
          %v3727 = vmul.f32 %v3719, %v3711
          %v3728 = vmul.f32 %v3720, %v3712
          %v3729 = vmul.f32 %v3721, %v3713
          %v3730 = vmul.f32 %v3722, %v3714
          %v3731 = vmul.f32 %v3723, %v3715
          %v3732 = vmul.f32 %v3724, %v3716
          %v3733 = vmul.f32 %v3725, %v3717
          %v3734 = vmul.f32 %v3726, %v3718
          %v3743 = vrot.slane %v3259, 7
          %v3744 = vrot.slane %v3260, 7
          %v3745 = vrot.slane %v3261, 7
          %v3746 = vrot.slane %v3262, 7
          %v3747 = vrot.slane %v3263, 7
          %v3748 = vrot.slane %v3264, 7
          %v3749 = vrot.slane %v3265, 7
          %v3750 = vrot.slane %v3266, 7
          %v3759 = vmul.f32 %v3664, %v3743
          %v3760 = vmul.f32 %v3666, %v3744
          %v3761 = vmul.f32 %v3668, %v3745
          %v3762 = vmul.f32 %v3670, %v3746
          %v3763 = vmul.f32 %v3672, %v3747
          %v3764 = vmul.f32 %v3674, %v3748
          %v3765 = vmul.f32 %v3676, %v3749
          %v3766 = vmul.f32 %v3678, %v3750
          %v3767 = vadd.f32 %v3727, %v3759
          %v3768 = vadd.f32 %v3728, %v3760
          %v3769 = vadd.f32 %v3729, %v3761
          %v3770 = vadd.f32 %v3730, %v3762
          %v3771 = vadd.f32 %v3731, %v3763
          %v3772 = vadd.f32 %v3732, %v3764
          %v3773 = vadd.f32 %v3733, %v3765
          %v3774 = vadd.f32 %v3734, %v3766
          %v3775 = vpack.c.bf16 %v3533, %v3533
          %3776 = vmatprep.subr.bf16.mxu0 %v1958
          %3777 = vmatpush1.bf16.msra.mxu0 %v1957
          %3778 = vmatprep.subr.bf16.mxu0 %v1961
          %3779 = vmatpush1.bf16.msra.mxu0 %v1960
          %3780 = vmatprep.subr.bf16.mxu0 %v1964
          %3781 = vmatpush1.bf16.msra.mxu0 %v1963
          %3782 = vmatprep.subr.bf16.mxu0 %v1967
          %3783 = vmatpush1.bf16.msra.mxu0 %v1966
          %3784 = vmatprep.subr.bf16.mxu0 %v1970
          %3785 = vmatpush1.bf16.msra.mxu0 %v1969
          %3786 = vmatprep.subr.bf16.mxu0 %v1973
          %3787 = vmatpush1.bf16.msra.mxu0 %v1972
          %3788 = vmatprep.subr.bf16.mxu0 %v1976
          %3789 = vmatpush1.bf16.msra.mxu0 %v1975
          %3790 = vmatprep.subr.bf16.mxu0 %v1979
          %3791 = vmatpush1.bf16.msra.mxu0 %v1978
          %3792 = vmatprep.subr.bf16.mxu0 0
          %3793 = vmatpush1.bf16.msra.mxu0 0
          %3794 = vmatprep.subr.bf16.mxu0 0
          %3795 = vmatpush1.bf16.msra.mxu0 0
          %3796 = vmatprep.subr.bf16.mxu0 0
          %3797 = vmatpush1.bf16.msra.mxu0 0
          %3798 = vmatprep.subr.bf16.mxu0 0
          %3799 = vmatpush1.bf16.msra.mxu0 0
          %3800 = vmatprep.subr.bf16.mxu0 0
          %3801 = vmatpush1.bf16.msra.mxu0 0
          %3802 = vmatprep.subr.bf16.mxu0 0
          %3803 = vmatpush1.bf16.msra.mxu0 0
          %3804 = vmatprep.subr.bf16.mxu0 0
          %3805 = vmatpush1.bf16.msra.mxu0 0
          %3806 = vmatprep.subr.bf16.mxu0 0
          %3807 = vmatpush1.bf16.msra.mxu0 0
          %3808 = vmatprep.mubr.bf16.mxu0 0
          %3809 = vmatmul.mubr.bf16.gmra.mrb[0].mxu0 %v3775
          %v3810 = vpop.f32.mrb[0].mxu0
          %v3811 = vadd.f32 0.0, %v3810
          %v3812 = vpop.f32.mrb[0].mxu0
          %v3813 = vadd.f32 0.0, %v3812
          %v3814 = vpop.f32.mrb[0].mxu0
          %v3815 = vpop.f32.mrb[0].mxu0
          %3816 = vdwg.mxu0
          %3817 = vmatprep.subr.bf16.mxu0 0
          %3818 = vmatpush1.bf16.msra.mxu0 %v1959
          %3819 = vmatprep.subr.bf16.mxu0 0
          %3820 = vmatpush1.bf16.msra.mxu0 %v1962
          %3821 = vmatprep.subr.bf16.mxu0 0
          %3822 = vmatpush1.bf16.msra.mxu0 %v1965
          %3823 = vmatprep.subr.bf16.mxu0 0
          %3824 = vmatpush1.bf16.msra.mxu0 %v1968
          %3825 = vmatprep.subr.bf16.mxu0 0
          %3826 = vmatpush1.bf16.msra.mxu0 %v1971
          %3827 = vmatprep.subr.bf16.mxu0 0
          %3828 = vmatpush1.bf16.msra.mxu0 %v1974
          %3829 = vmatprep.subr.bf16.mxu0 0
          %3830 = vmatpush1.bf16.msra.mxu0 %v1977
          %3831 = vmatprep.subr.bf16.mxu0 0
          %3832 = vmatpush1.bf16.msra.mxu0 %v1980
          %3833 = vmatprep.subr.bf16.mxu0 0
          %3834 = vmatpush1.bf16.msra.mxu0 0
          %3835 = vmatprep.subr.bf16.mxu0 0
          %3836 = vmatpush1.bf16.msra.mxu0 0
          %3837 = vmatprep.subr.bf16.mxu0 0
          %3838 = vmatpush1.bf16.msra.mxu0 0
          %3839 = vmatprep.subr.bf16.mxu0 0
          %3840 = vmatpush1.bf16.msra.mxu0 0
          %3841 = vmatprep.subr.bf16.mxu0 0
          %3842 = vmatpush1.bf16.msra.mxu0 0
          %3843 = vmatprep.subr.bf16.mxu0 0
          %3844 = vmatpush1.bf16.msra.mxu0 0
          %3845 = vmatprep.subr.bf16.mxu0 0
          %3846 = vmatpush1.bf16.msra.mxu0 0
          %3847 = vmatprep.subr.bf16.mxu0 0
          %3848 = vmatpush1.bf16.msra.mxu0 0
          %3849 = vmatprep.mubr.bf16.mxu0 0
          %3850 = vmatmul.mubr.bf16.gmra.mrb[0].mxu0 %v3775
          %v3851 = vpop.f32.mrb[0].mxu0
          %v3852 = vadd.f32 0.0, %v3851
          %v3853 = vpop.f32.mrb[0].mxu0
          %v3854 = vpop.f32.mrb[0].mxu0
          %v3855 = vpop.f32.mrb[0].mxu0
          %3856 = vdwg.mxu0
          %v3857 = vpack.c.bf16 %v3767, %v3767
          %v3858 = vpack.c.bf16 %v3768, %v3768
          %v3859 = vpack.c.bf16 %v3769, %v3769
          %v3860 = vpack.c.bf16 %v3770, %v3770
          %v3861 = vpack.c.bf16 %v3771, %v3771
          %v3862 = vpack.c.bf16 %v3772, %v3772
          %v3863 = vpack.c.bf16 %v3773, %v3773
          %v3864 = vpack.c.bf16 %v3774, %v3774
          %v3873 = vunpack.c.l.b16 %v3857
          %v3874 = vunpack.c.l.b16 %v3858
          %v3875 = vunpack.c.l.b16 %v3859
          %v3876 = vunpack.c.l.b16 %v3860
          %v3877 = vunpack.c.l.b16 %v3861
          %v3878 = vunpack.c.l.b16 %v3862
          %v3879 = vunpack.c.l.b16 %v3863
          %v3880 = vunpack.c.l.b16 %v3864
          %v3881 = vrot.slane %v3873, 3
          %v3882 = vrot.slane %v3874, 2
          %v3883 = vsel %vm2111, %v3882, %v3881
          %v3884 = vrot.slane %v3875, 1
          %v3885 = vsel %vm2114, %v3884, %v3883
          %v3886 = vsel %vm2117, %v3876, %v3885
          %v3887 = vrot.slane %v3877, 7
          %v3888 = vsel %vm2120, %v3887, %v3886
          %v3889 = vrot.slane %v3878, 6
          %v3890 = vsel %vm2123, %v3889, %v3888
          %v3891 = vrot.slane %v3879, 5
          %v3892 = vsel %vm2126, %v3891, %v3890
          %v3893 = vrot.slane %v3880, 4
          %v3894 = vsel %vm2129, %v3893, %v3892
          %v3895 = vpack.c.b16 %v3894, %v3894
          %3897 = vmatprep.subr.bf16.mxu0 %v2278
          %3898 = vmatpush1.bf16.msra.mxu0 %v2277
          %3899 = vmatprep.subr.bf16.mxu0 %v2284
          %3900 = vmatpush1.bf16.msra.mxu0 %v2283
          %3901 = vmatprep.subr.bf16.mxu0 %v2290
          %3902 = vmatpush1.bf16.msra.mxu0 %v2289
          %3903 = vmatprep.subr.bf16.mxu0 %v2296
          %3904 = vmatpush1.bf16.msra.mxu0 %v2295
          %3905 = vmatprep.subr.bf16.mxu0 %v2302
          %3906 = vmatpush1.bf16.msra.mxu0 %v2301
          %3907 = vmatprep.subr.bf16.mxu0 %v2308
          %3908 = vmatpush1.bf16.msra.mxu0 %v2307
          %3909 = vmatprep.subr.bf16.mxu0 %v2314
          %3910 = vmatpush1.bf16.msra.mxu0 %v2313
          %3911 = vmatprep.subr.bf16.mxu0 %v2320
          %3912 = vmatpush1.bf16.msra.mxu0 %v2319
          %3913 = vmatprep.subr.bf16.mxu0 0
          %3914 = vmatpush1.bf16.msra.mxu0 0
          %3915 = vmatprep.subr.bf16.mxu0 0
          %3916 = vmatpush1.bf16.msra.mxu0 0
          %3917 = vmatprep.subr.bf16.mxu0 0
          %3918 = vmatpush1.bf16.msra.mxu0 0
          %3919 = vmatprep.subr.bf16.mxu0 0
          %3920 = vmatpush1.bf16.msra.mxu0 0
          %3921 = vmatprep.subr.bf16.mxu0 0
          %3922 = vmatpush1.bf16.msra.mxu0 0
          %3923 = vmatprep.subr.bf16.mxu0 0
          %3924 = vmatpush1.bf16.msra.mxu0 0
          %3925 = vmatprep.subr.bf16.mxu0 0
          %3926 = vmatpush1.bf16.msra.mxu0 0
          %3927 = vmatprep.subr.bf16.mxu0 0
          %3928 = vmatpush1.bf16.msra.mxu0 0
          %3929 = vmatprep.mubr.bf16.mxu0 0
          %3930 = vmatmul.mubr.bf16.gmra.mrb[0].mxu0 %v3895
          %v3931 = vpop.f32.mrb[0].mxu0
          %v3932 = vadd.f32 %v1565, %v3931
          %v3933 = vpop.f32.mrb[0].mxu0
          %v3934 = vadd.f32 %v1569, %v3933
          %v3935 = vpop.f32.mrb[0].mxu0
          %v3936 = vpop.f32.mrb[0].mxu0
          %3937 = vdwg.mxu0
          %3938 = vmatprep.subr.bf16.mxu0 %v2280
          %3939 = vmatpush1.bf16.msra.mxu0 %v2279
          %3940 = vmatprep.subr.bf16.mxu0 %v2286
          %3941 = vmatpush1.bf16.msra.mxu0 %v2285
          %3942 = vmatprep.subr.bf16.mxu0 %v2292
          %3943 = vmatpush1.bf16.msra.mxu0 %v2291
          %3944 = vmatprep.subr.bf16.mxu0 %v2298
          %3945 = vmatpush1.bf16.msra.mxu0 %v2297
          %3946 = vmatprep.subr.bf16.mxu0 %v2304
          %3947 = vmatpush1.bf16.msra.mxu0 %v2303
          %3948 = vmatprep.subr.bf16.mxu0 %v2310
          %3949 = vmatpush1.bf16.msra.mxu0 %v2309
          %3950 = vmatprep.subr.bf16.mxu0 %v2316
          %3951 = vmatpush1.bf16.msra.mxu0 %v2315
          %3952 = vmatprep.subr.bf16.mxu0 %v2322
          %3953 = vmatpush1.bf16.msra.mxu0 %v2321
          %3954 = vmatprep.subr.bf16.mxu0 0
          %3955 = vmatpush1.bf16.msra.mxu0 0
          %3956 = vmatprep.subr.bf16.mxu0 0
          %3957 = vmatpush1.bf16.msra.mxu0 0
          %3958 = vmatprep.subr.bf16.mxu0 0
          %3959 = vmatpush1.bf16.msra.mxu0 0
          %3960 = vmatprep.subr.bf16.mxu0 0
          %3961 = vmatpush1.bf16.msra.mxu0 0
          %3962 = vmatprep.subr.bf16.mxu0 0
          %3963 = vmatpush1.bf16.msra.mxu0 0
          %3964 = vmatprep.subr.bf16.mxu0 0
          %3965 = vmatpush1.bf16.msra.mxu0 0
          %3966 = vmatprep.subr.bf16.mxu0 0
          %3967 = vmatpush1.bf16.msra.mxu0 0
          %3968 = vmatprep.subr.bf16.mxu0 0
          %3969 = vmatpush1.bf16.msra.mxu0 0
          %3970 = vmatprep.mubr.bf16.mxu0 0
          %3971 = vmatmul.mubr.bf16.gmra.mrb[0].mxu0 %v3895
          %v3972 = vpop.f32.mrb[0].mxu0
          %v3973 = vadd.f32 %v1573, %v3972
          %v3974 = vpop.f32.mrb[0].mxu0
          %v3975 = vadd.f32 %v1577, %v3974
          %v3976 = vpop.f32.mrb[0].mxu0
          %v3977 = vpop.f32.mrb[0].mxu0
          %3978 = vdwg.mxu0
          %3979 = vmatprep.subr.bf16.mxu0 %v2282
          %3980 = vmatpush1.bf16.msra.mxu0 %v2281
          %3981 = vmatprep.subr.bf16.mxu0 %v2288
          %3982 = vmatpush1.bf16.msra.mxu0 %v2287
          %3983 = vmatprep.subr.bf16.mxu0 %v2294
          %3984 = vmatpush1.bf16.msra.mxu0 %v2293
          %3985 = vmatprep.subr.bf16.mxu0 %v2300
          %3986 = vmatpush1.bf16.msra.mxu0 %v2299
          %3987 = vmatprep.subr.bf16.mxu0 %v2306
          %3988 = vmatpush1.bf16.msra.mxu0 %v2305
          %3989 = vmatprep.subr.bf16.mxu0 %v2312
          %3990 = vmatpush1.bf16.msra.mxu0 %v2311
          %3991 = vmatprep.subr.bf16.mxu0 %v2318
          %3992 = vmatpush1.bf16.msra.mxu0 %v2317
          %3993 = vmatprep.subr.bf16.mxu0 %v2324
          %3994 = vmatpush1.bf16.msra.mxu0 %v2323
          %3995 = vmatprep.subr.bf16.mxu0 0
          %3996 = vmatpush1.bf16.msra.mxu0 0
          %3997 = vmatprep.subr.bf16.mxu0 0
          %3998 = vmatpush1.bf16.msra.mxu0 0
          %3999 = vmatprep.subr.bf16.mxu0 0
          %4000 = vmatpush1.bf16.msra.mxu0 0
          %4001 = vmatprep.subr.bf16.mxu0 0
          %4002 = vmatpush1.bf16.msra.mxu0 0
          %4003 = vmatprep.subr.bf16.mxu0 0
          %4004 = vmatpush1.bf16.msra.mxu0 0
          %4005 = vmatprep.subr.bf16.mxu0 0
          %4006 = vmatpush1.bf16.msra.mxu0 0
          %4007 = vmatprep.subr.bf16.mxu0 0
          %4008 = vmatpush1.bf16.msra.mxu0 0
          %4009 = vmatprep.subr.bf16.mxu0 0
          %4010 = vmatpush1.bf16.msra.mxu0 0
          %4011 = vmatprep.mubr.bf16.mxu0 0
          %4012 = vmatmul.mubr.bf16.gmra.mrb[0].mxu0 %v3895
          %v4013 = vpop.f32.mrb[0].mxu0
          %v4014 = vadd.f32 %v1581, %v4013
          %v4015 = vpop.f32.mrb[0].mxu0
          %v4016 = vadd.f32 %v1585, %v4015
          %v4017 = vpop.f32.mrb[0].mxu0
          %v4018 = vpop.f32.mrb[0].mxu0
          %4019 = vdwg.mxu0
          %v4020 = vadd.f32 %v3932, %v3811
          %v4021 = vxor.u32 %v4020, 2147483648
          %v4022 = vmul.f32 %v4021, 1.442695
          %v4023 = vpow.pop %v4022
          %v4024 = vadd.f32 %v4023, 1.0
          %v4025 = vrcp.pop %v4024
          %v4026 = vmul.f32 1.0, %v4025
          %v4027 = vadd.f32 %v3934, %v3813
          %v4028 = vxor.u32 %v4027, 2147483648
          %v4029 = vmul.f32 %v4028, 1.442695
          %v4030 = vpow.pop %v4029
          %v4031 = vadd.f32 %v4030, 1.0
          %v4032 = vrcp.pop %v4031
          %v4033 = vmul.f32 1.0, %v4032
          %v4034 = vadd.f32 %v3852, %v1597
          %v4035 = vmul.f32 %v4026, %v4034
          %v4036 = vadd.f32 %v3973, %v4035
          %v4037 = vtanh.pop %v4036
          %v4038 = vsub.f32 1.0, %v4033
          %v4039 = vmul.f32 %v4038, %v4037
          %v4040 = vmul.f32 %v4033, %v3533
          %v4041 = vadd.f32 %v4039, %v4040
          %v4042 = vadd.f32 %v3534, %v4041
          %v4044 = vrot.slane %v3975, 4
          %v4045 = vrot.slane %v3975, 5
          %v4046 = vrot.slane %v3975, 6
          %v4047 = vrot.slane %v3975, 7
          %v4048 = vrot.slane %v3975, 1
          %v4049 = vrot.slane %v3975, 2
          %v4050 = vrot.slane %v3975, 3
          %v4059 = vadd.f32 %v1620, %v4044
          %v4060 = vadd.f32 %v1623, %v4045
          %v4061 = vadd.f32 %v1626, %v4046
          %v4062 = vadd.f32 %v1629, %v4047
          %v4063 = vadd.f32 %v1632, %v3975
          %v4064 = vadd.f32 %v1635, %v4048
          %v4065 = vadd.f32 %v1638, %v4049
          %v4066 = vadd.f32 %v1641, %v4050
          %v4067 = vxor.u32 %v4059, 2147483648
          %v4068 = vxor.u32 %v4060, 2147483648
          %v4069 = vxor.u32 %v4061, 2147483648
          %v4070 = vxor.u32 %v4062, 2147483648
          %v4071 = vxor.u32 %v4063, 2147483648
          %v4072 = vxor.u32 %v4064, 2147483648
          %v4073 = vxor.u32 %v4065, 2147483648
          %v4074 = vxor.u32 %v4066, 2147483648
          %v4075 = vmul.f32 %v4067, 1.442695
          %v4076 = vpow.pop %v4075
          %v4077 = vmul.f32 %v4068, 1.442695
          %v4078 = vpow.pop %v4077
          %v4079 = vmul.f32 %v4069, 1.442695
          %v4080 = vpow.pop %v4079
          %v4081 = vmul.f32 %v4070, 1.442695
          %v4082 = vpow.pop %v4081
          %v4083 = vmul.f32 %v4071, 1.442695
          %v4084 = vpow.pop %v4083
          %v4085 = vmul.f32 %v4072, 1.442695
          %v4086 = vpow.pop %v4085
          %v4087 = vmul.f32 %v4073, 1.442695
          %v4088 = vpow.pop %v4087
          %v4089 = vmul.f32 %v4074, 1.442695
          %v4090 = vpow.pop %v4089
          %v4091 = vadd.f32 %v4076, 1.0
          %v4092 = vadd.f32 %v4078, 1.0
          %v4093 = vadd.f32 %v4080, 1.0
          %v4094 = vadd.f32 %v4082, 1.0
          %v4095 = vadd.f32 %v4084, 1.0
          %v4096 = vadd.f32 %v4086, 1.0
          %v4097 = vadd.f32 %v4088, 1.0
          %v4098 = vadd.f32 %v4090, 1.0
          %v4099 = vrcp.pop %v4091
          %v4100 = vmul.f32 1.0, %v4099
          %v4101 = vrcp.pop %v4092
          %v4102 = vmul.f32 1.0, %v4101
          %v4103 = vrcp.pop %v4093
          %v4104 = vmul.f32 1.0, %v4103
          %v4105 = vrcp.pop %v4094
          %v4106 = vmul.f32 1.0, %v4105
          %v4107 = vrcp.pop %v4095
          %v4108 = vmul.f32 1.0, %v4107
          %v4109 = vrcp.pop %v4096
          %v4110 = vmul.f32 1.0, %v4109
          %v4111 = vrcp.pop %v4097
          %v4112 = vmul.f32 1.0, %v4111
          %v4113 = vrcp.pop %v4098
          %v4114 = vmul.f32 1.0, %v4113
          %v4116 = vrot.slane %v4014, 4
          %v4117 = vrot.slane %v4014, 5
          %v4118 = vrot.slane %v4014, 6
          %v4119 = vrot.slane %v4014, 7
          %v4120 = vrot.slane %v4014, 1
          %v4121 = vrot.slane %v4014, 2
          %v4122 = vrot.slane %v4014, 3
          %v4131 = vadd.f32 %v1621, %v4116
          %v4132 = vadd.f32 %v1624, %v4117
          %v4133 = vadd.f32 %v1627, %v4118
          %v4134 = vadd.f32 %v1630, %v4119
          %v4135 = vadd.f32 %v1633, %v4014
          %v4136 = vadd.f32 %v1636, %v4120
          %v4137 = vadd.f32 %v1639, %v4121
          %v4138 = vadd.f32 %v1642, %v4122
          %v4139 = vxor.u32 %v4131, 2147483648
          %v4140 = vxor.u32 %v4132, 2147483648
          %v4141 = vxor.u32 %v4133, 2147483648
          %v4142 = vxor.u32 %v4134, 2147483648
          %v4143 = vxor.u32 %v4135, 2147483648
          %v4144 = vxor.u32 %v4136, 2147483648
          %v4145 = vxor.u32 %v4137, 2147483648
          %v4146 = vxor.u32 %v4138, 2147483648
          %v4147 = vmul.f32 %v4139, 1.442695
          %v4148 = vpow.pop %v4147
          %v4149 = vmul.f32 %v4140, 1.442695
          %v4150 = vpow.pop %v4149
          %v4151 = vmul.f32 %v4141, 1.442695
          %v4152 = vpow.pop %v4151
          %v4153 = vmul.f32 %v4142, 1.442695
          %v4154 = vpow.pop %v4153
          %v4155 = vmul.f32 %v4143, 1.442695
          %v4156 = vpow.pop %v4155
          %v4157 = vmul.f32 %v4144, 1.442695
          %v4158 = vpow.pop %v4157
          %v4159 = vmul.f32 %v4145, 1.442695
          %v4160 = vpow.pop %v4159
          %v4161 = vmul.f32 %v4146, 1.442695
          %v4162 = vpow.pop %v4161
          %v4163 = vadd.f32 %v4148, 1.0
          %v4164 = vadd.f32 %v4150, 1.0
          %v4165 = vadd.f32 %v4152, 1.0
          %v4166 = vadd.f32 %v4154, 1.0
          %v4167 = vadd.f32 %v4156, 1.0
          %v4168 = vadd.f32 %v4158, 1.0
          %v4169 = vadd.f32 %v4160, 1.0
          %v4170 = vadd.f32 %v4162, 1.0
          %v4171 = vrcp.pop %v4163
          %v4172 = vmul.f32 1.0, %v4171
          %v4173 = vrcp.pop %v4164
          %v4174 = vmul.f32 1.0, %v4173
          %v4175 = vrcp.pop %v4165
          %v4176 = vmul.f32 1.0, %v4175
          %v4177 = vrcp.pop %v4166
          %v4178 = vmul.f32 1.0, %v4177
          %v4179 = vrcp.pop %v4167
          %v4180 = vmul.f32 1.0, %v4179
          %v4181 = vrcp.pop %v4168
          %v4182 = vmul.f32 1.0, %v4181
          %v4183 = vrcp.pop %v4169
          %v4184 = vmul.f32 1.0, %v4183
          %v4185 = vrcp.pop %v4170
          %v4186 = vmul.f32 1.0, %v4185
          %v4188 = vrot.slane %v4016, 4
          %v4189 = vrot.slane %v4016, 5
          %v4190 = vrot.slane %v4016, 6
          %v4191 = vrot.slane %v4016, 7
          %v4192 = vrot.slane %v4016, 1
          %v4193 = vrot.slane %v4016, 2
          %v4194 = vrot.slane %v4016, 3
          %v4203 = vmul.f32 %v4100, %v4188
          %v4204 = vmul.f32 %v4102, %v4189
          %v4205 = vmul.f32 %v4104, %v4190
          %v4206 = vmul.f32 %v4106, %v4191
          %v4207 = vmul.f32 %v4108, %v4016
          %v4208 = vmul.f32 %v4110, %v4192
          %v4209 = vmul.f32 %v4112, %v4193
          %v4210 = vmul.f32 %v4114, %v4194
          %v4211 = vadd.f32 %v1622, %v4203
          %v4212 = vadd.f32 %v1625, %v4204
          %v4213 = vadd.f32 %v1628, %v4205
          %v4214 = vadd.f32 %v1631, %v4206
          %v4215 = vadd.f32 %v1634, %v4207
          %v4216 = vadd.f32 %v1637, %v4208
          %v4217 = vadd.f32 %v1640, %v4209
          %v4218 = vadd.f32 %v1643, %v4210
          %v4219 = vtanh.pop %v4211
          %v4220 = vtanh.pop %v4212
          %v4221 = vtanh.pop %v4213
          %v4222 = vtanh.pop %v4214
          %v4223 = vtanh.pop %v4215
          %v4224 = vtanh.pop %v4216
          %v4225 = vtanh.pop %v4217
          %v4226 = vtanh.pop %v4218
          %v4227 = vsub.f32 1.0, %v4172
          %v4228 = vsub.f32 1.0, %v4174
          %v4229 = vsub.f32 1.0, %v4176
          %v4230 = vsub.f32 1.0, %v4178
          %v4231 = vsub.f32 1.0, %v4180
          %v4232 = vsub.f32 1.0, %v4182
          %v4233 = vsub.f32 1.0, %v4184
          %v4234 = vsub.f32 1.0, %v4186
          %v4235 = vmul.f32 %v4227, %v4219
          %v4236 = vmul.f32 %v4228, %v4220
          %v4237 = vmul.f32 %v4229, %v4221
          %v4238 = vmul.f32 %v4230, %v4222
          %v4239 = vmul.f32 %v4231, %v4223
          %v4240 = vmul.f32 %v4232, %v4224
          %v4241 = vmul.f32 %v4233, %v4225
          %v4242 = vmul.f32 %v4234, %v4226
          %v4251 = vrot.slane %v3767, 7
          %v4252 = vrot.slane %v3768, 7
          %v4253 = vrot.slane %v3769, 7
          %v4254 = vrot.slane %v3770, 7
          %v4255 = vrot.slane %v3771, 7
          %v4256 = vrot.slane %v3772, 7
          %v4257 = vrot.slane %v3773, 7
          %v4258 = vrot.slane %v3774, 7
          %v4267 = vmul.f32 %v4172, %v4251
          %v4268 = vmul.f32 %v4174, %v4252
          %v4269 = vmul.f32 %v4176, %v4253
          %v4270 = vmul.f32 %v4178, %v4254
          %v4271 = vmul.f32 %v4180, %v4255
          %v4272 = vmul.f32 %v4182, %v4256
          %v4273 = vmul.f32 %v4184, %v4257
          %v4274 = vmul.f32 %v4186, %v4258
          %v4275 = vadd.f32 %v4235, %v4267
          %v4276 = vadd.f32 %v4236, %v4268
          %v4277 = vadd.f32 %v4237, %v4269
          %v4278 = vadd.f32 %v4238, %v4270
          %v4279 = vadd.f32 %v4239, %v4271
          %v4280 = vadd.f32 %v4240, %v4272
          %v4281 = vadd.f32 %v4241, %v4273
          %v4282 = vadd.f32 %v4242, %v4274
          %v4283 = vpack.c.bf16 %v4041, %v4041
          %4284 = vmatprep.subr.bf16.mxu0 %v1958
          %4285 = vmatpush1.bf16.msra.mxu0 %v1957
          %4286 = vmatprep.subr.bf16.mxu0 %v1961
          %4287 = vmatpush1.bf16.msra.mxu0 %v1960
          %4288 = vmatprep.subr.bf16.mxu0 %v1964
          %4289 = vmatpush1.bf16.msra.mxu0 %v1963
          %4290 = vmatprep.subr.bf16.mxu0 %v1967
          %4291 = vmatpush1.bf16.msra.mxu0 %v1966
          %4292 = vmatprep.subr.bf16.mxu0 %v1970
          %4293 = vmatpush1.bf16.msra.mxu0 %v1969
          %4294 = vmatprep.subr.bf16.mxu0 %v1973
          %4295 = vmatpush1.bf16.msra.mxu0 %v1972
          %4296 = vmatprep.subr.bf16.mxu0 %v1976
          %4297 = vmatpush1.bf16.msra.mxu0 %v1975
          %4298 = vmatprep.subr.bf16.mxu0 %v1979
          %4299 = vmatpush1.bf16.msra.mxu0 %v1978
          %4300 = vmatprep.subr.bf16.mxu0 0
          %4301 = vmatpush1.bf16.msra.mxu0 0
          %4302 = vmatprep.subr.bf16.mxu0 0
          %4303 = vmatpush1.bf16.msra.mxu0 0
          %4304 = vmatprep.subr.bf16.mxu0 0
          %4305 = vmatpush1.bf16.msra.mxu0 0
          %4306 = vmatprep.subr.bf16.mxu0 0
          %4307 = vmatpush1.bf16.msra.mxu0 0
          %4308 = vmatprep.subr.bf16.mxu0 0
          %4309 = vmatpush1.bf16.msra.mxu0 0
          %4310 = vmatprep.subr.bf16.mxu0 0
          %4311 = vmatpush1.bf16.msra.mxu0 0
          %4312 = vmatprep.subr.bf16.mxu0 0
          %4313 = vmatpush1.bf16.msra.mxu0 0
          %4314 = vmatprep.subr.bf16.mxu0 0
          %4315 = vmatpush1.bf16.msra.mxu0 0
          %4316 = vmatprep.mubr.bf16.mxu0 0
          %4317 = vmatmul.mubr.bf16.gmra.mrb[0].mxu0 %v4283
          %v4318 = vpop.f32.mrb[0].mxu0
          %v4319 = vadd.f32 0.0, %v4318
          %v4320 = vpop.f32.mrb[0].mxu0
          %v4321 = vadd.f32 0.0, %v4320
          %v4322 = vpop.f32.mrb[0].mxu0
          %v4323 = vpop.f32.mrb[0].mxu0
          %4324 = vdwg.mxu0
          %4325 = vmatprep.subr.bf16.mxu0 0
          %4326 = vmatpush1.bf16.msra.mxu0 %v1959
          %4327 = vmatprep.subr.bf16.mxu0 0
          %4328 = vmatpush1.bf16.msra.mxu0 %v1962
          %4329 = vmatprep.subr.bf16.mxu0 0
          %4330 = vmatpush1.bf16.msra.mxu0 %v1965
          %4331 = vmatprep.subr.bf16.mxu0 0
          %4332 = vmatpush1.bf16.msra.mxu0 %v1968
          %4333 = vmatprep.subr.bf16.mxu0 0
          %4334 = vmatpush1.bf16.msra.mxu0 %v1971
          %4335 = vmatprep.subr.bf16.mxu0 0
          %4336 = vmatpush1.bf16.msra.mxu0 %v1974
          %4337 = vmatprep.subr.bf16.mxu0 0
          %4338 = vmatpush1.bf16.msra.mxu0 %v1977
          %4339 = vmatprep.subr.bf16.mxu0 0
          %4340 = vmatpush1.bf16.msra.mxu0 %v1980
          %4341 = vmatprep.subr.bf16.mxu0 0
          %4342 = vmatpush1.bf16.msra.mxu0 0
          %4343 = vmatprep.subr.bf16.mxu0 0
          %4344 = vmatpush1.bf16.msra.mxu0 0
          %4345 = vmatprep.subr.bf16.mxu0 0
          %4346 = vmatpush1.bf16.msra.mxu0 0
          %4347 = vmatprep.subr.bf16.mxu0 0
          %4348 = vmatpush1.bf16.msra.mxu0 0
          %4349 = vmatprep.subr.bf16.mxu0 0
          %4350 = vmatpush1.bf16.msra.mxu0 0
          %4351 = vmatprep.subr.bf16.mxu0 0
          %4352 = vmatpush1.bf16.msra.mxu0 0
          %4353 = vmatprep.subr.bf16.mxu0 0
          %4354 = vmatpush1.bf16.msra.mxu0 0
          %4355 = vmatprep.subr.bf16.mxu0 0
          %4356 = vmatpush1.bf16.msra.mxu0 0
          %4357 = vmatprep.mubr.bf16.mxu0 0
          %4358 = vmatmul.mubr.bf16.gmra.mrb[0].mxu0 %v4283
          %v4359 = vpop.f32.mrb[0].mxu0
          %v4360 = vadd.f32 0.0, %v4359
          %v4361 = vpop.f32.mrb[0].mxu0
          %v4362 = vpop.f32.mrb[0].mxu0
          %v4363 = vpop.f32.mrb[0].mxu0
          %4364 = vdwg.mxu0
          %v4365 = vpack.c.bf16 %v4275, %v4275
          %v4366 = vpack.c.bf16 %v4276, %v4276
          %v4367 = vpack.c.bf16 %v4277, %v4277
          %v4368 = vpack.c.bf16 %v4278, %v4278
          %v4369 = vpack.c.bf16 %v4279, %v4279
          %v4370 = vpack.c.bf16 %v4280, %v4280
          %v4371 = vpack.c.bf16 %v4281, %v4281
          %v4372 = vpack.c.bf16 %v4282, %v4282
          %v4381 = vunpack.c.l.b16 %v4365
          %v4382 = vunpack.c.l.b16 %v4366
          %v4383 = vunpack.c.l.b16 %v4367
          %v4384 = vunpack.c.l.b16 %v4368
          %v4385 = vunpack.c.l.b16 %v4369
          %v4386 = vunpack.c.l.b16 %v4370
          %v4387 = vunpack.c.l.b16 %v4371
          %v4388 = vunpack.c.l.b16 %v4372
          %v4389 = vrot.slane %v4381, 4
          %v4390 = vrot.slane %v4382, 3
          %v4391 = vsel %vm2111, %v4390, %v4389
          %v4392 = vrot.slane %v4383, 2
          %v4393 = vsel %vm2114, %v4392, %v4391
          %v4394 = vrot.slane %v4384, 1
          %v4395 = vsel %vm2117, %v4394, %v4393
          %v4396 = vsel %vm2120, %v4385, %v4395
          %v4397 = vrot.slane %v4386, 7
          %v4398 = vsel %vm2123, %v4397, %v4396
          %v4399 = vrot.slane %v4387, 6
          %v4400 = vsel %vm2126, %v4399, %v4398
          %v4401 = vrot.slane %v4388, 5
          %v4402 = vsel %vm2129, %v4401, %v4400
          %v4403 = vpack.c.b16 %v4402, %v4402
          %4405 = vmatprep.subr.bf16.mxu0 %v2278
          %4406 = vmatpush1.bf16.msra.mxu0 %v2277
          %4407 = vmatprep.subr.bf16.mxu0 %v2284
          %4408 = vmatpush1.bf16.msra.mxu0 %v2283
          %4409 = vmatprep.subr.bf16.mxu0 %v2290
          %4410 = vmatpush1.bf16.msra.mxu0 %v2289
          %4411 = vmatprep.subr.bf16.mxu0 %v2296
          %4412 = vmatpush1.bf16.msra.mxu0 %v2295
          %4413 = vmatprep.subr.bf16.mxu0 %v2302
          %4414 = vmatpush1.bf16.msra.mxu0 %v2301
          %4415 = vmatprep.subr.bf16.mxu0 %v2308
          %4416 = vmatpush1.bf16.msra.mxu0 %v2307
          %4417 = vmatprep.subr.bf16.mxu0 %v2314
          %4418 = vmatpush1.bf16.msra.mxu0 %v2313
          %4419 = vmatprep.subr.bf16.mxu0 %v2320
          %4420 = vmatpush1.bf16.msra.mxu0 %v2319
          %4421 = vmatprep.subr.bf16.mxu0 0
          %4422 = vmatpush1.bf16.msra.mxu0 0
          %4423 = vmatprep.subr.bf16.mxu0 0
          %4424 = vmatpush1.bf16.msra.mxu0 0
          %4425 = vmatprep.subr.bf16.mxu0 0
          %4426 = vmatpush1.bf16.msra.mxu0 0
          %4427 = vmatprep.subr.bf16.mxu0 0
          %4428 = vmatpush1.bf16.msra.mxu0 0
          %4429 = vmatprep.subr.bf16.mxu0 0
          %4430 = vmatpush1.bf16.msra.mxu0 0
          %4431 = vmatprep.subr.bf16.mxu0 0
          %4432 = vmatpush1.bf16.msra.mxu0 0
          %4433 = vmatprep.subr.bf16.mxu0 0
          %4434 = vmatpush1.bf16.msra.mxu0 0
          %4435 = vmatprep.subr.bf16.mxu0 0
          %4436 = vmatpush1.bf16.msra.mxu0 0
          %4437 = vmatprep.mubr.bf16.mxu0 0
          %4438 = vmatmul.mubr.bf16.gmra.mrb[0].mxu0 %v4403
          %v4439 = vpop.f32.mrb[0].mxu0
          %v4440 = vadd.f32 %v1565, %v4439
          %v4441 = vpop.f32.mrb[0].mxu0
          %v4442 = vadd.f32 %v1569, %v4441
          %v4443 = vpop.f32.mrb[0].mxu0
          %v4444 = vpop.f32.mrb[0].mxu0
          %4445 = vdwg.mxu0
          %4446 = vmatprep.subr.bf16.mxu0 %v2280
          %4447 = vmatpush1.bf16.msra.mxu0 %v2279
          %4448 = vmatprep.subr.bf16.mxu0 %v2286
          %4449 = vmatpush1.bf16.msra.mxu0 %v2285
          %4450 = vmatprep.subr.bf16.mxu0 %v2292
          %4451 = vmatpush1.bf16.msra.mxu0 %v2291
          %4452 = vmatprep.subr.bf16.mxu0 %v2298
          %4453 = vmatpush1.bf16.msra.mxu0 %v2297
          %4454 = vmatprep.subr.bf16.mxu0 %v2304
          %4455 = vmatpush1.bf16.msra.mxu0 %v2303
          %4456 = vmatprep.subr.bf16.mxu0 %v2310
          %4457 = vmatpush1.bf16.msra.mxu0 %v2309
          %4458 = vmatprep.subr.bf16.mxu0 %v2316
          %4459 = vmatpush1.bf16.msra.mxu0 %v2315
          %4460 = vmatprep.subr.bf16.mxu0 %v2322
          %4461 = vmatpush1.bf16.msra.mxu0 %v2321
          %4462 = vmatprep.subr.bf16.mxu0 0
          %4463 = vmatpush1.bf16.msra.mxu0 0
          %4464 = vmatprep.subr.bf16.mxu0 0
          %4465 = vmatpush1.bf16.msra.mxu0 0
          %4466 = vmatprep.subr.bf16.mxu0 0
          %4467 = vmatpush1.bf16.msra.mxu0 0
          %4468 = vmatprep.subr.bf16.mxu0 0
          %4469 = vmatpush1.bf16.msra.mxu0 0
          %4470 = vmatprep.subr.bf16.mxu0 0
          %4471 = vmatpush1.bf16.msra.mxu0 0
          %4472 = vmatprep.subr.bf16.mxu0 0
          %4473 = vmatpush1.bf16.msra.mxu0 0
          %4474 = vmatprep.subr.bf16.mxu0 0
          %4475 = vmatpush1.bf16.msra.mxu0 0
          %4476 = vmatprep.subr.bf16.mxu0 0
          %4477 = vmatpush1.bf16.msra.mxu0 0
          %4478 = vmatprep.mubr.bf16.mxu0 0
          %4479 = vmatmul.mubr.bf16.gmra.mrb[0].mxu0 %v4403
          %v4480 = vpop.f32.mrb[0].mxu0
          %v4481 = vadd.f32 %v1573, %v4480
          %v4482 = vpop.f32.mrb[0].mxu0
          %v4483 = vadd.f32 %v1577, %v4482
          %v4484 = vpop.f32.mrb[0].mxu0
          %v4485 = vpop.f32.mrb[0].mxu0
          %4486 = vdwg.mxu0
          %4487 = vmatprep.subr.bf16.mxu0 %v2282
          %4488 = vmatpush1.bf16.msra.mxu0 %v2281
          %4489 = vmatprep.subr.bf16.mxu0 %v2288
          %4490 = vmatpush1.bf16.msra.mxu0 %v2287
          %4491 = vmatprep.subr.bf16.mxu0 %v2294
          %4492 = vmatpush1.bf16.msra.mxu0 %v2293
          %4493 = vmatprep.subr.bf16.mxu0 %v2300
          %4494 = vmatpush1.bf16.msra.mxu0 %v2299
          %4495 = vmatprep.subr.bf16.mxu0 %v2306
          %4496 = vmatpush1.bf16.msra.mxu0 %v2305
          %4497 = vmatprep.subr.bf16.mxu0 %v2312
          %4498 = vmatpush1.bf16.msra.mxu0 %v2311
          %4499 = vmatprep.subr.bf16.mxu0 %v2318
          %4500 = vmatpush1.bf16.msra.mxu0 %v2317
          %4501 = vmatprep.subr.bf16.mxu0 %v2324
          %4502 = vmatpush1.bf16.msra.mxu0 %v2323
          %4503 = vmatprep.subr.bf16.mxu0 0
          %4504 = vmatpush1.bf16.msra.mxu0 0
          %4505 = vmatprep.subr.bf16.mxu0 0
          %4506 = vmatpush1.bf16.msra.mxu0 0
          %4507 = vmatprep.subr.bf16.mxu0 0
          %4508 = vmatpush1.bf16.msra.mxu0 0
          %4509 = vmatprep.subr.bf16.mxu0 0
          %4510 = vmatpush1.bf16.msra.mxu0 0
          %4511 = vmatprep.subr.bf16.mxu0 0
          %4512 = vmatpush1.bf16.msra.mxu0 0
          %4513 = vmatprep.subr.bf16.mxu0 0
          %4514 = vmatpush1.bf16.msra.mxu0 0
          %4515 = vmatprep.subr.bf16.mxu0 0
          %4516 = vmatpush1.bf16.msra.mxu0 0
          %4517 = vmatprep.subr.bf16.mxu0 0
          %4518 = vmatpush1.bf16.msra.mxu0 0
          %4519 = vmatprep.mubr.bf16.mxu0 0
          %4520 = vmatmul.mubr.bf16.gmra.mrb[0].mxu0 %v4403
          %v4521 = vpop.f32.mrb[0].mxu0
          %v4522 = vadd.f32 %v1581, %v4521
          %v4523 = vpop.f32.mrb[0].mxu0
          %v4524 = vadd.f32 %v1585, %v4523
          %v4525 = vpop.f32.mrb[0].mxu0
          %v4526 = vpop.f32.mrb[0].mxu0
          %4527 = vdwg.mxu0
          %v4528 = vadd.f32 %v4440, %v4319
          %v4529 = vxor.u32 %v4528, 2147483648
          %v4530 = vmul.f32 %v4529, 1.442695
          %v4531 = vpow.pop %v4530
          %v4532 = vadd.f32 %v4531, 1.0
          %v4533 = vrcp.pop %v4532
          %v4534 = vmul.f32 1.0, %v4533
          %v4535 = vadd.f32 %v4442, %v4321
          %v4536 = vxor.u32 %v4535, 2147483648
          %v4537 = vmul.f32 %v4536, 1.442695
          %v4538 = vpow.pop %v4537
          %v4539 = vadd.f32 %v4538, 1.0
          %v4540 = vrcp.pop %v4539
          %v4541 = vmul.f32 1.0, %v4540
          %v4542 = vadd.f32 %v4360, %v1597
          %v4543 = vmul.f32 %v4534, %v4542
          %v4544 = vadd.f32 %v4481, %v4543
          %v4545 = vtanh.pop %v4544
          %v4546 = vsub.f32 1.0, %v4541
          %v4547 = vmul.f32 %v4546, %v4545
          %v4548 = vmul.f32 %v4541, %v4041
          %v4549 = vadd.f32 %v4547, %v4548
          %v4550 = vadd.f32 %v4042, %v4549
          %v4552 = vrot.slane %v4483, 3
          %v4553 = vrot.slane %v4483, 4
          %v4554 = vrot.slane %v4483, 5
          %v4555 = vrot.slane %v4483, 6
          %v4556 = vrot.slane %v4483, 7
          %v4557 = vrot.slane %v4483, 1
          %v4558 = vrot.slane %v4483, 2
          %v4567 = vadd.f32 %v1620, %v4552
          %v4568 = vadd.f32 %v1623, %v4553
          %v4569 = vadd.f32 %v1626, %v4554
          %v4570 = vadd.f32 %v1629, %v4555
          %v4571 = vadd.f32 %v1632, %v4556
          %v4572 = vadd.f32 %v1635, %v4483
          %v4573 = vadd.f32 %v1638, %v4557
          %v4574 = vadd.f32 %v1641, %v4558
          %v4575 = vxor.u32 %v4567, 2147483648
          %v4576 = vxor.u32 %v4568, 2147483648
          %v4577 = vxor.u32 %v4569, 2147483648
          %v4578 = vxor.u32 %v4570, 2147483648
          %v4579 = vxor.u32 %v4571, 2147483648
          %v4580 = vxor.u32 %v4572, 2147483648
          %v4581 = vxor.u32 %v4573, 2147483648
          %v4582 = vxor.u32 %v4574, 2147483648
          %v4583 = vmul.f32 %v4575, 1.442695
          %v4584 = vpow.pop %v4583
          %v4585 = vmul.f32 %v4576, 1.442695
          %v4586 = vpow.pop %v4585
          %v4587 = vmul.f32 %v4577, 1.442695
          %v4588 = vpow.pop %v4587
          %v4589 = vmul.f32 %v4578, 1.442695
          %v4590 = vpow.pop %v4589
          %v4591 = vmul.f32 %v4579, 1.442695
          %v4592 = vpow.pop %v4591
          %v4593 = vmul.f32 %v4580, 1.442695
          %v4594 = vpow.pop %v4593
          %v4595 = vmul.f32 %v4581, 1.442695
          %v4596 = vpow.pop %v4595
          %v4597 = vmul.f32 %v4582, 1.442695
          %v4598 = vpow.pop %v4597
          %v4599 = vadd.f32 %v4584, 1.0
          %v4600 = vadd.f32 %v4586, 1.0
          %v4601 = vadd.f32 %v4588, 1.0
          %v4602 = vadd.f32 %v4590, 1.0
          %v4603 = vadd.f32 %v4592, 1.0
          %v4604 = vadd.f32 %v4594, 1.0
          %v4605 = vadd.f32 %v4596, 1.0
          %v4606 = vadd.f32 %v4598, 1.0
          %v4607 = vrcp.pop %v4599
          %v4608 = vmul.f32 1.0, %v4607
          %v4609 = vrcp.pop %v4600
          %v4610 = vmul.f32 1.0, %v4609
          %v4611 = vrcp.pop %v4601
          %v4612 = vmul.f32 1.0, %v4611
          %v4613 = vrcp.pop %v4602
          %v4614 = vmul.f32 1.0, %v4613
          %v4615 = vrcp.pop %v4603
          %v4616 = vmul.f32 1.0, %v4615
          %v4617 = vrcp.pop %v4604
          %v4618 = vmul.f32 1.0, %v4617
          %v4619 = vrcp.pop %v4605
          %v4620 = vmul.f32 1.0, %v4619
          %v4621 = vrcp.pop %v4606
          %v4622 = vmul.f32 1.0, %v4621
          %v4624 = vrot.slane %v4522, 3
          %v4625 = vrot.slane %v4522, 4
          %v4626 = vrot.slane %v4522, 5
          %v4627 = vrot.slane %v4522, 6
          %v4628 = vrot.slane %v4522, 7
          %v4629 = vrot.slane %v4522, 1
          %v4630 = vrot.slane %v4522, 2
          %v4639 = vadd.f32 %v1621, %v4624
          %v4640 = vadd.f32 %v1624, %v4625
          %v4641 = vadd.f32 %v1627, %v4626
          %v4642 = vadd.f32 %v1630, %v4627
          %v4643 = vadd.f32 %v1633, %v4628
          %v4644 = vadd.f32 %v1636, %v4522
          %v4645 = vadd.f32 %v1639, %v4629
          %v4646 = vadd.f32 %v1642, %v4630
          %v4647 = vxor.u32 %v4639, 2147483648
          %v4648 = vxor.u32 %v4640, 2147483648
          %v4649 = vxor.u32 %v4641, 2147483648
          %v4650 = vxor.u32 %v4642, 2147483648
          %v4651 = vxor.u32 %v4643, 2147483648
          %v4652 = vxor.u32 %v4644, 2147483648
          %v4653 = vxor.u32 %v4645, 2147483648
          %v4654 = vxor.u32 %v4646, 2147483648
          %v4655 = vmul.f32 %v4647, 1.442695
          %v4656 = vpow.pop %v4655
          %v4657 = vmul.f32 %v4648, 1.442695
          %v4658 = vpow.pop %v4657
          %v4659 = vmul.f32 %v4649, 1.442695
          %v4660 = vpow.pop %v4659
          %v4661 = vmul.f32 %v4650, 1.442695
          %v4662 = vpow.pop %v4661
          %v4663 = vmul.f32 %v4651, 1.442695
          %v4664 = vpow.pop %v4663
          %v4665 = vmul.f32 %v4652, 1.442695
          %v4666 = vpow.pop %v4665
          %v4667 = vmul.f32 %v4653, 1.442695
          %v4668 = vpow.pop %v4667
          %v4669 = vmul.f32 %v4654, 1.442695
          %v4670 = vpow.pop %v4669
          %v4671 = vadd.f32 %v4656, 1.0
          %v4672 = vadd.f32 %v4658, 1.0
          %v4673 = vadd.f32 %v4660, 1.0
          %v4674 = vadd.f32 %v4662, 1.0
          %v4675 = vadd.f32 %v4664, 1.0
          %v4676 = vadd.f32 %v4666, 1.0
          %v4677 = vadd.f32 %v4668, 1.0
          %v4678 = vadd.f32 %v4670, 1.0
          %v4679 = vrcp.pop %v4671
          %v4680 = vmul.f32 1.0, %v4679
          %v4681 = vrcp.pop %v4672
          %v4682 = vmul.f32 1.0, %v4681
          %v4683 = vrcp.pop %v4673
          %v4684 = vmul.f32 1.0, %v4683
          %v4685 = vrcp.pop %v4674
          %v4686 = vmul.f32 1.0, %v4685
          %v4687 = vrcp.pop %v4675
          %v4688 = vmul.f32 1.0, %v4687
          %v4689 = vrcp.pop %v4676
          %v4690 = vmul.f32 1.0, %v4689
          %v4691 = vrcp.pop %v4677
          %v4692 = vmul.f32 1.0, %v4691
          %v4693 = vrcp.pop %v4678
          %v4694 = vmul.f32 1.0, %v4693
          %v4696 = vrot.slane %v4524, 3
          %v4697 = vrot.slane %v4524, 4
          %v4698 = vrot.slane %v4524, 5
          %v4699 = vrot.slane %v4524, 6
          %v4700 = vrot.slane %v4524, 7
          %v4701 = vrot.slane %v4524, 1
          %v4702 = vrot.slane %v4524, 2
          %v4711 = vmul.f32 %v4608, %v4696
          %v4712 = vmul.f32 %v4610, %v4697
          %v4713 = vmul.f32 %v4612, %v4698
          %v4714 = vmul.f32 %v4614, %v4699
          %v4715 = vmul.f32 %v4616, %v4700
          %v4716 = vmul.f32 %v4618, %v4524
          %v4717 = vmul.f32 %v4620, %v4701
          %v4718 = vmul.f32 %v4622, %v4702
          %v4719 = vadd.f32 %v1622, %v4711
          %v4720 = vadd.f32 %v1625, %v4712
          %v4721 = vadd.f32 %v1628, %v4713
          %v4722 = vadd.f32 %v1631, %v4714
          %v4723 = vadd.f32 %v1634, %v4715
          %v4724 = vadd.f32 %v1637, %v4716
          %v4725 = vadd.f32 %v1640, %v4717
          %v4726 = vadd.f32 %v1643, %v4718
          %v4727 = vtanh.pop %v4719
          %v4728 = vtanh.pop %v4720
          %v4729 = vtanh.pop %v4721
          %v4730 = vtanh.pop %v4722
          %v4731 = vtanh.pop %v4723
          %v4732 = vtanh.pop %v4724
          %v4733 = vtanh.pop %v4725
          %v4734 = vtanh.pop %v4726
          %v4735 = vsub.f32 1.0, %v4680
          %v4736 = vsub.f32 1.0, %v4682
          %v4737 = vsub.f32 1.0, %v4684
          %v4738 = vsub.f32 1.0, %v4686
          %v4739 = vsub.f32 1.0, %v4688
          %v4740 = vsub.f32 1.0, %v4690
          %v4741 = vsub.f32 1.0, %v4692
          %v4742 = vsub.f32 1.0, %v4694
          %v4743 = vmul.f32 %v4735, %v4727
          %v4744 = vmul.f32 %v4736, %v4728
          %v4745 = vmul.f32 %v4737, %v4729
          %v4746 = vmul.f32 %v4738, %v4730
          %v4747 = vmul.f32 %v4739, %v4731
          %v4748 = vmul.f32 %v4740, %v4732
          %v4749 = vmul.f32 %v4741, %v4733
          %v4750 = vmul.f32 %v4742, %v4734
          %v4759 = vrot.slane %v4275, 7
          %v4760 = vrot.slane %v4276, 7
          %v4761 = vrot.slane %v4277, 7
          %v4762 = vrot.slane %v4278, 7
          %v4763 = vrot.slane %v4279, 7
          %v4764 = vrot.slane %v4280, 7
          %v4765 = vrot.slane %v4281, 7
          %v4766 = vrot.slane %v4282, 7
          %v4775 = vmul.f32 %v4680, %v4759
          %v4776 = vmul.f32 %v4682, %v4760
          %v4777 = vmul.f32 %v4684, %v4761
          %v4778 = vmul.f32 %v4686, %v4762
          %v4779 = vmul.f32 %v4688, %v4763
          %v4780 = vmul.f32 %v4690, %v4764
          %v4781 = vmul.f32 %v4692, %v4765
          %v4782 = vmul.f32 %v4694, %v4766
          %v4783 = vadd.f32 %v4743, %v4775
          %v4784 = vadd.f32 %v4744, %v4776
          %v4785 = vadd.f32 %v4745, %v4777
          %v4786 = vadd.f32 %v4746, %v4778
          %v4787 = vadd.f32 %v4747, %v4779
          %v4788 = vadd.f32 %v4748, %v4780
          %v4789 = vadd.f32 %v4749, %v4781
          %v4790 = vadd.f32 %v4750, %v4782
          %v4791 = vpack.c.bf16 %v4549, %v4549
          %4792 = vmatprep.subr.bf16.mxu0 %v1958
          %4793 = vmatpush1.bf16.msra.mxu0 %v1957
          %4794 = vmatprep.subr.bf16.mxu0 %v1961
          %4795 = vmatpush1.bf16.msra.mxu0 %v1960
          %4796 = vmatprep.subr.bf16.mxu0 %v1964
          %4797 = vmatpush1.bf16.msra.mxu0 %v1963
          %4798 = vmatprep.subr.bf16.mxu0 %v1967
          %4799 = vmatpush1.bf16.msra.mxu0 %v1966
          %4800 = vmatprep.subr.bf16.mxu0 %v1970
          %4801 = vmatpush1.bf16.msra.mxu0 %v1969
          %4802 = vmatprep.subr.bf16.mxu0 %v1973
          %4803 = vmatpush1.bf16.msra.mxu0 %v1972
          %4804 = vmatprep.subr.bf16.mxu0 %v1976
          %4805 = vmatpush1.bf16.msra.mxu0 %v1975
          %4806 = vmatprep.subr.bf16.mxu0 %v1979
          %4807 = vmatpush1.bf16.msra.mxu0 %v1978
          %4808 = vmatprep.subr.bf16.mxu0 0
          %4809 = vmatpush1.bf16.msra.mxu0 0
          %4810 = vmatprep.subr.bf16.mxu0 0
          %4811 = vmatpush1.bf16.msra.mxu0 0
          %4812 = vmatprep.subr.bf16.mxu0 0
          %4813 = vmatpush1.bf16.msra.mxu0 0
          %4814 = vmatprep.subr.bf16.mxu0 0
          %4815 = vmatpush1.bf16.msra.mxu0 0
          %4816 = vmatprep.subr.bf16.mxu0 0
          %4817 = vmatpush1.bf16.msra.mxu0 0
          %4818 = vmatprep.subr.bf16.mxu0 0
          %4819 = vmatpush1.bf16.msra.mxu0 0
          %4820 = vmatprep.subr.bf16.mxu0 0
          %4821 = vmatpush1.bf16.msra.mxu0 0
          %4822 = vmatprep.subr.bf16.mxu0 0
          %4823 = vmatpush1.bf16.msra.mxu0 0
          %4824 = vmatprep.mubr.bf16.mxu0 0
          %4825 = vmatmul.mubr.bf16.gmra.mrb[0].mxu0 %v4791
          %v4826 = vpop.f32.mrb[0].mxu0
          %v4827 = vadd.f32 0.0, %v4826
          %v4828 = vpop.f32.mrb[0].mxu0
          %v4829 = vadd.f32 0.0, %v4828
          %v4830 = vpop.f32.mrb[0].mxu0
          %v4831 = vpop.f32.mrb[0].mxu0
          %4832 = vdwg.mxu0
          %4833 = vmatprep.subr.bf16.mxu0 0
          %4834 = vmatpush1.bf16.msra.mxu0 %v1959
          %4835 = vmatprep.subr.bf16.mxu0 0
          %4836 = vmatpush1.bf16.msra.mxu0 %v1962
          %4837 = vmatprep.subr.bf16.mxu0 0
          %4838 = vmatpush1.bf16.msra.mxu0 %v1965
          %4839 = vmatprep.subr.bf16.mxu0 0
          %4840 = vmatpush1.bf16.msra.mxu0 %v1968
          %4841 = vmatprep.subr.bf16.mxu0 0
          %4842 = vmatpush1.bf16.msra.mxu0 %v1971
          %4843 = vmatprep.subr.bf16.mxu0 0
          %4844 = vmatpush1.bf16.msra.mxu0 %v1974
          %4845 = vmatprep.subr.bf16.mxu0 0
          %4846 = vmatpush1.bf16.msra.mxu0 %v1977
          %4847 = vmatprep.subr.bf16.mxu0 0
          %4848 = vmatpush1.bf16.msra.mxu0 %v1980
          %4849 = vmatprep.subr.bf16.mxu0 0
          %4850 = vmatpush1.bf16.msra.mxu0 0
          %4851 = vmatprep.subr.bf16.mxu0 0
          %4852 = vmatpush1.bf16.msra.mxu0 0
          %4853 = vmatprep.subr.bf16.mxu0 0
          %4854 = vmatpush1.bf16.msra.mxu0 0
          %4855 = vmatprep.subr.bf16.mxu0 0
          %4856 = vmatpush1.bf16.msra.mxu0 0
          %4857 = vmatprep.subr.bf16.mxu0 0
          %4858 = vmatpush1.bf16.msra.mxu0 0
          %4859 = vmatprep.subr.bf16.mxu0 0
          %4860 = vmatpush1.bf16.msra.mxu0 0
          %4861 = vmatprep.subr.bf16.mxu0 0
          %4862 = vmatpush1.bf16.msra.mxu0 0
          %4863 = vmatprep.subr.bf16.mxu0 0
          %4864 = vmatpush1.bf16.msra.mxu0 0
          %4865 = vmatprep.mubr.bf16.mxu0 0
          %4866 = vmatmul.mubr.bf16.gmra.mrb[0].mxu0 %v4791
          %v4867 = vpop.f32.mrb[0].mxu0
          %v4868 = vadd.f32 0.0, %v4867
          %v4869 = vpop.f32.mrb[0].mxu0
          %v4870 = vpop.f32.mrb[0].mxu0
          %v4871 = vpop.f32.mrb[0].mxu0
          %4872 = vdwg.mxu0
          %v4873 = vpack.c.bf16 %v4783, %v4783
          %v4874 = vpack.c.bf16 %v4784, %v4784
          %v4875 = vpack.c.bf16 %v4785, %v4785
          %v4876 = vpack.c.bf16 %v4786, %v4786
          %v4877 = vpack.c.bf16 %v4787, %v4787
          %v4878 = vpack.c.bf16 %v4788, %v4788
          %v4879 = vpack.c.bf16 %v4789, %v4789
          %v4880 = vpack.c.bf16 %v4790, %v4790
          %v4889 = vunpack.c.l.b16 %v4873
          %v4890 = vunpack.c.l.b16 %v4874
          %v4891 = vunpack.c.l.b16 %v4875
          %v4892 = vunpack.c.l.b16 %v4876
          %v4893 = vunpack.c.l.b16 %v4877
          %v4894 = vunpack.c.l.b16 %v4878
          %v4895 = vunpack.c.l.b16 %v4879
          %v4896 = vunpack.c.l.b16 %v4880
          %v4897 = vrot.slane %v4889, 5
          %v4898 = vrot.slane %v4890, 4
          %v4899 = vsel %vm2111, %v4898, %v4897
          %v4900 = vrot.slane %v4891, 3
          %v4901 = vsel %vm2114, %v4900, %v4899
          %v4902 = vrot.slane %v4892, 2
          %v4903 = vsel %vm2117, %v4902, %v4901
          %v4904 = vrot.slane %v4893, 1
          %v4905 = vsel %vm2120, %v4904, %v4903
          %v4906 = vsel %vm2123, %v4894, %v4905
          %v4907 = vrot.slane %v4895, 7
          %v4908 = vsel %vm2126, %v4907, %v4906
          %v4909 = vrot.slane %v4896, 6
          %v4910 = vsel %vm2129, %v4909, %v4908
          %v4911 = vpack.c.b16 %v4910, %v4910
          %4913 = vmatprep.subr.bf16.mxu0 %v2278
          %4914 = vmatpush1.bf16.msra.mxu0 %v2277
          %4915 = vmatprep.subr.bf16.mxu0 %v2284
          %4916 = vmatpush1.bf16.msra.mxu0 %v2283
          %4917 = vmatprep.subr.bf16.mxu0 %v2290
          %4918 = vmatpush1.bf16.msra.mxu0 %v2289
          %4919 = vmatprep.subr.bf16.mxu0 %v2296
          %4920 = vmatpush1.bf16.msra.mxu0 %v2295
          %4921 = vmatprep.subr.bf16.mxu0 %v2302
          %4922 = vmatpush1.bf16.msra.mxu0 %v2301
          %4923 = vmatprep.subr.bf16.mxu0 %v2308
          %4924 = vmatpush1.bf16.msra.mxu0 %v2307
          %4925 = vmatprep.subr.bf16.mxu0 %v2314
          %4926 = vmatpush1.bf16.msra.mxu0 %v2313
          %4927 = vmatprep.subr.bf16.mxu0 %v2320
          %4928 = vmatpush1.bf16.msra.mxu0 %v2319
          %4929 = vmatprep.subr.bf16.mxu0 0
          %4930 = vmatpush1.bf16.msra.mxu0 0
          %4931 = vmatprep.subr.bf16.mxu0 0
          %4932 = vmatpush1.bf16.msra.mxu0 0
          %4933 = vmatprep.subr.bf16.mxu0 0
          %4934 = vmatpush1.bf16.msra.mxu0 0
          %4935 = vmatprep.subr.bf16.mxu0 0
          %4936 = vmatpush1.bf16.msra.mxu0 0
          %4937 = vmatprep.subr.bf16.mxu0 0
          %4938 = vmatpush1.bf16.msra.mxu0 0
          %4939 = vmatprep.subr.bf16.mxu0 0
          %4940 = vmatpush1.bf16.msra.mxu0 0
          %4941 = vmatprep.subr.bf16.mxu0 0
          %4942 = vmatpush1.bf16.msra.mxu0 0
          %4943 = vmatprep.subr.bf16.mxu0 0
          %4944 = vmatpush1.bf16.msra.mxu0 0
          %4945 = vmatprep.mubr.bf16.mxu0 0
          %4946 = vmatmul.mubr.bf16.gmra.mrb[0].mxu0 %v4911
          %v4947 = vpop.f32.mrb[0].mxu0
          %v4948 = vadd.f32 %v1565, %v4947
          %v4949 = vpop.f32.mrb[0].mxu0
          %v4950 = vadd.f32 %v1569, %v4949
          %v4951 = vpop.f32.mrb[0].mxu0
          %v4952 = vpop.f32.mrb[0].mxu0
          %4953 = vdwg.mxu0
          %4954 = vmatprep.subr.bf16.mxu0 %v2280
          %4955 = vmatpush1.bf16.msra.mxu0 %v2279
          %4956 = vmatprep.subr.bf16.mxu0 %v2286
          %4957 = vmatpush1.bf16.msra.mxu0 %v2285
          %4958 = vmatprep.subr.bf16.mxu0 %v2292
          %4959 = vmatpush1.bf16.msra.mxu0 %v2291
          %4960 = vmatprep.subr.bf16.mxu0 %v2298
          %4961 = vmatpush1.bf16.msra.mxu0 %v2297
          %4962 = vmatprep.subr.bf16.mxu0 %v2304
          %4963 = vmatpush1.bf16.msra.mxu0 %v2303
          %4964 = vmatprep.subr.bf16.mxu0 %v2310
          %4965 = vmatpush1.bf16.msra.mxu0 %v2309
          %4966 = vmatprep.subr.bf16.mxu0 %v2316
          %4967 = vmatpush1.bf16.msra.mxu0 %v2315
          %4968 = vmatprep.subr.bf16.mxu0 %v2322
          %4969 = vmatpush1.bf16.msra.mxu0 %v2321
          %4970 = vmatprep.subr.bf16.mxu0 0
          %4971 = vmatpush1.bf16.msra.mxu0 0
          %4972 = vmatprep.subr.bf16.mxu0 0
          %4973 = vmatpush1.bf16.msra.mxu0 0
          %4974 = vmatprep.subr.bf16.mxu0 0
          %4975 = vmatpush1.bf16.msra.mxu0 0
          %4976 = vmatprep.subr.bf16.mxu0 0
          %4977 = vmatpush1.bf16.msra.mxu0 0
          %4978 = vmatprep.subr.bf16.mxu0 0
          %4979 = vmatpush1.bf16.msra.mxu0 0
          %4980 = vmatprep.subr.bf16.mxu0 0
          %4981 = vmatpush1.bf16.msra.mxu0 0
          %4982 = vmatprep.subr.bf16.mxu0 0
          %4983 = vmatpush1.bf16.msra.mxu0 0
          %4984 = vmatprep.subr.bf16.mxu0 0
          %4985 = vmatpush1.bf16.msra.mxu0 0
          %4986 = vmatprep.mubr.bf16.mxu0 0
          %4987 = vmatmul.mubr.bf16.gmra.mrb[0].mxu0 %v4911
          %v4988 = vpop.f32.mrb[0].mxu0
          %v4989 = vadd.f32 %v1573, %v4988
          %v4990 = vpop.f32.mrb[0].mxu0
          %v4991 = vadd.f32 %v1577, %v4990
          %v4992 = vpop.f32.mrb[0].mxu0
          %v4993 = vpop.f32.mrb[0].mxu0
          %4994 = vdwg.mxu0
          %4995 = vmatprep.subr.bf16.mxu0 %v2282
          %4996 = vmatpush1.bf16.msra.mxu0 %v2281
          %4997 = vmatprep.subr.bf16.mxu0 %v2288
          %4998 = vmatpush1.bf16.msra.mxu0 %v2287
          %4999 = vmatprep.subr.bf16.mxu0 %v2294
          %5000 = vmatpush1.bf16.msra.mxu0 %v2293
          %5001 = vmatprep.subr.bf16.mxu0 %v2300
          %5002 = vmatpush1.bf16.msra.mxu0 %v2299
          %5003 = vmatprep.subr.bf16.mxu0 %v2306
          %5004 = vmatpush1.bf16.msra.mxu0 %v2305
          %5005 = vmatprep.subr.bf16.mxu0 %v2312
          %5006 = vmatpush1.bf16.msra.mxu0 %v2311
          %5007 = vmatprep.subr.bf16.mxu0 %v2318
          %5008 = vmatpush1.bf16.msra.mxu0 %v2317
          %5009 = vmatprep.subr.bf16.mxu0 %v2324
          %5010 = vmatpush1.bf16.msra.mxu0 %v2323
          %5011 = vmatprep.subr.bf16.mxu0 0
          %5012 = vmatpush1.bf16.msra.mxu0 0
          %5013 = vmatprep.subr.bf16.mxu0 0
          %5014 = vmatpush1.bf16.msra.mxu0 0
          %5015 = vmatprep.subr.bf16.mxu0 0
          %5016 = vmatpush1.bf16.msra.mxu0 0
          %5017 = vmatprep.subr.bf16.mxu0 0
          %5018 = vmatpush1.bf16.msra.mxu0 0
          %5019 = vmatprep.subr.bf16.mxu0 0
          %5020 = vmatpush1.bf16.msra.mxu0 0
          %5021 = vmatprep.subr.bf16.mxu0 0
          %5022 = vmatpush1.bf16.msra.mxu0 0
          %5023 = vmatprep.subr.bf16.mxu0 0
          %5024 = vmatpush1.bf16.msra.mxu0 0
          %5025 = vmatprep.subr.bf16.mxu0 0
          %5026 = vmatpush1.bf16.msra.mxu0 0
          %5027 = vmatprep.mubr.bf16.mxu0 0
          %5028 = vmatmul.mubr.bf16.gmra.mrb[0].mxu0 %v4911
          %v5029 = vpop.f32.mrb[0].mxu0
          %v5030 = vadd.f32 %v1581, %v5029
          %v5031 = vpop.f32.mrb[0].mxu0
          %v5032 = vadd.f32 %v1585, %v5031
          %v5033 = vpop.f32.mrb[0].mxu0
          %v5034 = vpop.f32.mrb[0].mxu0
          %5035 = vdwg.mxu0
          %v5036 = vadd.f32 %v4948, %v4827
          %v5037 = vxor.u32 %v5036, 2147483648
          %v5038 = vmul.f32 %v5037, 1.442695
          %v5039 = vpow.pop %v5038
          %v5040 = vadd.f32 %v5039, 1.0
          %v5041 = vrcp.pop %v5040
          %v5042 = vmul.f32 1.0, %v5041
          %v5043 = vadd.f32 %v4950, %v4829
          %v5044 = vxor.u32 %v5043, 2147483648
          %v5045 = vmul.f32 %v5044, 1.442695
          %v5046 = vpow.pop %v5045
          %v5047 = vadd.f32 %v5046, 1.0
          %v5048 = vrcp.pop %v5047
          %v5049 = vmul.f32 1.0, %v5048
          %v5050 = vadd.f32 %v4868, %v1597
          %v5051 = vmul.f32 %v5042, %v5050
          %v5052 = vadd.f32 %v4989, %v5051
          %v5053 = vtanh.pop %v5052
          %v5054 = vsub.f32 1.0, %v5049
          %v5055 = vmul.f32 %v5054, %v5053
          %v5056 = vmul.f32 %v5049, %v4549
          %v5057 = vadd.f32 %v5055, %v5056
          %v5058 = vadd.f32 %v4550, %v5057
          %v5060 = vrot.slane %v4991, 2
          %v5061 = vrot.slane %v4991, 3
          %v5062 = vrot.slane %v4991, 4
          %v5063 = vrot.slane %v4991, 5
          %v5064 = vrot.slane %v4991, 6
          %v5065 = vrot.slane %v4991, 7
          %v5066 = vrot.slane %v4991, 1
          %v5075 = vadd.f32 %v1620, %v5060
          %v5076 = vadd.f32 %v1623, %v5061
          %v5077 = vadd.f32 %v1626, %v5062
          %v5078 = vadd.f32 %v1629, %v5063
          %v5079 = vadd.f32 %v1632, %v5064
          %v5080 = vadd.f32 %v1635, %v5065
          %v5081 = vadd.f32 %v1638, %v4991
          %v5082 = vadd.f32 %v1641, %v5066
          %v5083 = vxor.u32 %v5075, 2147483648
          %v5084 = vxor.u32 %v5076, 2147483648
          %v5085 = vxor.u32 %v5077, 2147483648
          %v5086 = vxor.u32 %v5078, 2147483648
          %v5087 = vxor.u32 %v5079, 2147483648
          %v5088 = vxor.u32 %v5080, 2147483648
          %v5089 = vxor.u32 %v5081, 2147483648
          %v5090 = vxor.u32 %v5082, 2147483648
          %v5091 = vmul.f32 %v5083, 1.442695
          %v5092 = vpow.pop %v5091
          %v5093 = vmul.f32 %v5084, 1.442695
          %v5094 = vpow.pop %v5093
          %v5095 = vmul.f32 %v5085, 1.442695
          %v5096 = vpow.pop %v5095
          %v5097 = vmul.f32 %v5086, 1.442695
          %v5098 = vpow.pop %v5097
          %v5099 = vmul.f32 %v5087, 1.442695
          %v5100 = vpow.pop %v5099
          %v5101 = vmul.f32 %v5088, 1.442695
          %v5102 = vpow.pop %v5101
          %v5103 = vmul.f32 %v5089, 1.442695
          %v5104 = vpow.pop %v5103
          %v5105 = vmul.f32 %v5090, 1.442695
          %v5106 = vpow.pop %v5105
          %v5107 = vadd.f32 %v5092, 1.0
          %v5108 = vadd.f32 %v5094, 1.0
          %v5109 = vadd.f32 %v5096, 1.0
          %v5110 = vadd.f32 %v5098, 1.0
          %v5111 = vadd.f32 %v5100, 1.0
          %v5112 = vadd.f32 %v5102, 1.0
          %v5113 = vadd.f32 %v5104, 1.0
          %v5114 = vadd.f32 %v5106, 1.0
          %v5115 = vrcp.pop %v5107
          %v5116 = vmul.f32 1.0, %v5115
          %v5117 = vrcp.pop %v5108
          %v5118 = vmul.f32 1.0, %v5117
          %v5119 = vrcp.pop %v5109
          %v5120 = vmul.f32 1.0, %v5119
          %v5121 = vrcp.pop %v5110
          %v5122 = vmul.f32 1.0, %v5121
          %v5123 = vrcp.pop %v5111
          %v5124 = vmul.f32 1.0, %v5123
          %v5125 = vrcp.pop %v5112
          %v5126 = vmul.f32 1.0, %v5125
          %v5127 = vrcp.pop %v5113
          %v5128 = vmul.f32 1.0, %v5127
          %v5129 = vrcp.pop %v5114
          %v5130 = vmul.f32 1.0, %v5129
          %v5132 = vrot.slane %v5030, 2
          %v5133 = vrot.slane %v5030, 3
          %v5134 = vrot.slane %v5030, 4
          %v5135 = vrot.slane %v5030, 5
          %v5136 = vrot.slane %v5030, 6
          %v5137 = vrot.slane %v5030, 7
          %v5138 = vrot.slane %v5030, 1
          %v5147 = vadd.f32 %v1621, %v5132
          %v5148 = vadd.f32 %v1624, %v5133
          %v5149 = vadd.f32 %v1627, %v5134
          %v5150 = vadd.f32 %v1630, %v5135
          %v5151 = vadd.f32 %v1633, %v5136
          %v5152 = vadd.f32 %v1636, %v5137
          %v5153 = vadd.f32 %v1639, %v5030
          %v5154 = vadd.f32 %v1642, %v5138
          %v5155 = vxor.u32 %v5147, 2147483648
          %v5156 = vxor.u32 %v5148, 2147483648
          %v5157 = vxor.u32 %v5149, 2147483648
          %v5158 = vxor.u32 %v5150, 2147483648
          %v5159 = vxor.u32 %v5151, 2147483648
          %v5160 = vxor.u32 %v5152, 2147483648
          %v5161 = vxor.u32 %v5153, 2147483648
          %v5162 = vxor.u32 %v5154, 2147483648
          %v5163 = vmul.f32 %v5155, 1.442695
          %v5164 = vpow.pop %v5163
          %v5165 = vmul.f32 %v5156, 1.442695
          %v5166 = vpow.pop %v5165
          %v5167 = vmul.f32 %v5157, 1.442695
          %v5168 = vpow.pop %v5167
          %v5169 = vmul.f32 %v5158, 1.442695
          %v5170 = vpow.pop %v5169
          %v5171 = vmul.f32 %v5159, 1.442695
          %v5172 = vpow.pop %v5171
          %v5173 = vmul.f32 %v5160, 1.442695
          %v5174 = vpow.pop %v5173
          %v5175 = vmul.f32 %v5161, 1.442695
          %v5176 = vpow.pop %v5175
          %v5177 = vmul.f32 %v5162, 1.442695
          %v5178 = vpow.pop %v5177
          %v5179 = vadd.f32 %v5164, 1.0
          %v5180 = vadd.f32 %v5166, 1.0
          %v5181 = vadd.f32 %v5168, 1.0
          %v5182 = vadd.f32 %v5170, 1.0
          %v5183 = vadd.f32 %v5172, 1.0
          %v5184 = vadd.f32 %v5174, 1.0
          %v5185 = vadd.f32 %v5176, 1.0
          %v5186 = vadd.f32 %v5178, 1.0
          %v5187 = vrcp.pop %v5179
          %v5188 = vmul.f32 1.0, %v5187
          %v5189 = vrcp.pop %v5180
          %v5190 = vmul.f32 1.0, %v5189
          %v5191 = vrcp.pop %v5181
          %v5192 = vmul.f32 1.0, %v5191
          %v5193 = vrcp.pop %v5182
          %v5194 = vmul.f32 1.0, %v5193
          %v5195 = vrcp.pop %v5183
          %v5196 = vmul.f32 1.0, %v5195
          %v5197 = vrcp.pop %v5184
          %v5198 = vmul.f32 1.0, %v5197
          %v5199 = vrcp.pop %v5185
          %v5200 = vmul.f32 1.0, %v5199
          %v5201 = vrcp.pop %v5186
          %v5202 = vmul.f32 1.0, %v5201
          %v5204 = vrot.slane %v5032, 2
          %v5205 = vrot.slane %v5032, 3
          %v5206 = vrot.slane %v5032, 4
          %v5207 = vrot.slane %v5032, 5
          %v5208 = vrot.slane %v5032, 6
          %v5209 = vrot.slane %v5032, 7
          %v5210 = vrot.slane %v5032, 1
          %v5219 = vmul.f32 %v5116, %v5204
          %v5220 = vmul.f32 %v5118, %v5205
          %v5221 = vmul.f32 %v5120, %v5206
          %v5222 = vmul.f32 %v5122, %v5207
          %v5223 = vmul.f32 %v5124, %v5208
          %v5224 = vmul.f32 %v5126, %v5209
          %v5225 = vmul.f32 %v5128, %v5032
          %v5226 = vmul.f32 %v5130, %v5210
          %v5227 = vadd.f32 %v1622, %v5219
          %v5228 = vadd.f32 %v1625, %v5220
          %v5229 = vadd.f32 %v1628, %v5221
          %v5230 = vadd.f32 %v1631, %v5222
          %v5231 = vadd.f32 %v1634, %v5223
          %v5232 = vadd.f32 %v1637, %v5224
          %v5233 = vadd.f32 %v1640, %v5225
          %v5234 = vadd.f32 %v1643, %v5226
          %v5235 = vtanh.pop %v5227
          %v5236 = vtanh.pop %v5228
          %v5237 = vtanh.pop %v5229
          %v5238 = vtanh.pop %v5230
          %v5239 = vtanh.pop %v5231
          %v5240 = vtanh.pop %v5232
          %v5241 = vtanh.pop %v5233
          %v5242 = vtanh.pop %v5234
          %v5243 = vsub.f32 1.0, %v5188
          %v5244 = vsub.f32 1.0, %v5190
          %v5245 = vsub.f32 1.0, %v5192
          %v5246 = vsub.f32 1.0, %v5194
          %v5247 = vsub.f32 1.0, %v5196
          %v5248 = vsub.f32 1.0, %v5198
          %v5249 = vsub.f32 1.0, %v5200
          %v5250 = vsub.f32 1.0, %v5202
          %v5251 = vmul.f32 %v5243, %v5235
          %v5252 = vmul.f32 %v5244, %v5236
          %v5253 = vmul.f32 %v5245, %v5237
          %v5254 = vmul.f32 %v5246, %v5238
          %v5255 = vmul.f32 %v5247, %v5239
          %v5256 = vmul.f32 %v5248, %v5240
          %v5257 = vmul.f32 %v5249, %v5241
          %v5258 = vmul.f32 %v5250, %v5242
          %v5267 = vrot.slane %v4783, 7
          %v5268 = vrot.slane %v4784, 7
          %v5269 = vrot.slane %v4785, 7
          %v5270 = vrot.slane %v4786, 7
          %v5271 = vrot.slane %v4787, 7
          %v5272 = vrot.slane %v4788, 7
          %v5273 = vrot.slane %v4789, 7
          %v5274 = vrot.slane %v4790, 7
          %v5283 = vmul.f32 %v5188, %v5267
          %v5284 = vmul.f32 %v5190, %v5268
          %v5285 = vmul.f32 %v5192, %v5269
          %v5286 = vmul.f32 %v5194, %v5270
          %v5287 = vmul.f32 %v5196, %v5271
          %v5288 = vmul.f32 %v5198, %v5272
          %v5289 = vmul.f32 %v5200, %v5273
          %v5290 = vmul.f32 %v5202, %v5274
          %v5291 = vadd.f32 %v5251, %v5283
          %v5292 = vadd.f32 %v5252, %v5284
          %v5293 = vadd.f32 %v5253, %v5285
          %v5294 = vadd.f32 %v5254, %v5286
          %v5295 = vadd.f32 %v5255, %v5287
          %v5296 = vadd.f32 %v5256, %v5288
          %v5297 = vadd.f32 %v5257, %v5289
          %v5298 = vadd.f32 %v5258, %v5290
          %v5299 = vpack.c.bf16 %v5057, %v5057
          %5300 = vmatprep.subr.bf16.mxu0 %v1958
          %5301 = vmatpush1.bf16.msra.mxu0 %v1957
          %5302 = vmatprep.subr.bf16.mxu0 %v1961
          %5303 = vmatpush1.bf16.msra.mxu0 %v1960
          %5304 = vmatprep.subr.bf16.mxu0 %v1964
          %5305 = vmatpush1.bf16.msra.mxu0 %v1963
          %5306 = vmatprep.subr.bf16.mxu0 %v1967
          %5307 = vmatpush1.bf16.msra.mxu0 %v1966
          %5308 = vmatprep.subr.bf16.mxu0 %v1970
          %5309 = vmatpush1.bf16.msra.mxu0 %v1969
          %5310 = vmatprep.subr.bf16.mxu0 %v1973
          %5311 = vmatpush1.bf16.msra.mxu0 %v1972
          %5312 = vmatprep.subr.bf16.mxu0 %v1976
          %5313 = vmatpush1.bf16.msra.mxu0 %v1975
          %5314 = vmatprep.subr.bf16.mxu0 %v1979
          %5315 = vmatpush1.bf16.msra.mxu0 %v1978
          %5316 = vmatprep.subr.bf16.mxu0 0
          %5317 = vmatpush1.bf16.msra.mxu0 0
          %5318 = vmatprep.subr.bf16.mxu0 0
          %5319 = vmatpush1.bf16.msra.mxu0 0
          %5320 = vmatprep.subr.bf16.mxu0 0
          %5321 = vmatpush1.bf16.msra.mxu0 0
          %5322 = vmatprep.subr.bf16.mxu0 0
          %5323 = vmatpush1.bf16.msra.mxu0 0
          %5324 = vmatprep.subr.bf16.mxu0 0
          %5325 = vmatpush1.bf16.msra.mxu0 0
          %5326 = vmatprep.subr.bf16.mxu0 0
          %5327 = vmatpush1.bf16.msra.mxu0 0
          %5328 = vmatprep.subr.bf16.mxu0 0
          %5329 = vmatpush1.bf16.msra.mxu0 0
          %5330 = vmatprep.subr.bf16.mxu0 0
          %5331 = vmatpush1.bf16.msra.mxu0 0
          %5332 = vmatprep.mubr.bf16.mxu0 0
          %5333 = vmatmul.mubr.bf16.gmra.mrb[0].mxu0 %v5299
          %v5334 = vpop.f32.mrb[0].mxu0
          %v5335 = vadd.f32 0.0, %v5334
          %v5336 = vpop.f32.mrb[0].mxu0
          %v5337 = vadd.f32 0.0, %v5336
          %v5338 = vpop.f32.mrb[0].mxu0
          %v5339 = vpop.f32.mrb[0].mxu0
          %5340 = vdwg.mxu0
          %5341 = vmatprep.subr.bf16.mxu0 0
          %5342 = vmatpush1.bf16.msra.mxu0 %v1959
          %5343 = vmatprep.subr.bf16.mxu0 0
          %5344 = vmatpush1.bf16.msra.mxu0 %v1962
          %5345 = vmatprep.subr.bf16.mxu0 0
          %5346 = vmatpush1.bf16.msra.mxu0 %v1965
          %5347 = vmatprep.subr.bf16.mxu0 0
          %5348 = vmatpush1.bf16.msra.mxu0 %v1968
          %5349 = vmatprep.subr.bf16.mxu0 0
          %5350 = vmatpush1.bf16.msra.mxu0 %v1971
          %5351 = vmatprep.subr.bf16.mxu0 0
          %5352 = vmatpush1.bf16.msra.mxu0 %v1974
          %5353 = vmatprep.subr.bf16.mxu0 0
          %5354 = vmatpush1.bf16.msra.mxu0 %v1977
          %5355 = vmatprep.subr.bf16.mxu0 0
          %5356 = vmatpush1.bf16.msra.mxu0 %v1980
          %5357 = vmatprep.subr.bf16.mxu0 0
          %5358 = vmatpush1.bf16.msra.mxu0 0
          %5359 = vmatprep.subr.bf16.mxu0 0
          %5360 = vmatpush1.bf16.msra.mxu0 0
          %5361 = vmatprep.subr.bf16.mxu0 0
          %5362 = vmatpush1.bf16.msra.mxu0 0
          %5363 = vmatprep.subr.bf16.mxu0 0
          %5364 = vmatpush1.bf16.msra.mxu0 0
          %5365 = vmatprep.subr.bf16.mxu0 0
          %5366 = vmatpush1.bf16.msra.mxu0 0
          %5367 = vmatprep.subr.bf16.mxu0 0
          %5368 = vmatpush1.bf16.msra.mxu0 0
          %5369 = vmatprep.subr.bf16.mxu0 0
          %5370 = vmatpush1.bf16.msra.mxu0 0
          %5371 = vmatprep.subr.bf16.mxu0 0
          %5372 = vmatpush1.bf16.msra.mxu0 0
          %5373 = vmatprep.mubr.bf16.mxu0 0
          %5374 = vmatmul.mubr.bf16.gmra.mrb[0].mxu0 %v5299
          %v5375 = vpop.f32.mrb[0].mxu0
          %v5376 = vadd.f32 0.0, %v5375
          %v5377 = vpop.f32.mrb[0].mxu0
          %v5378 = vpop.f32.mrb[0].mxu0
          %v5379 = vpop.f32.mrb[0].mxu0
          %5380 = vdwg.mxu0
          %v5381 = vpack.c.bf16 %v5291, %v5291
          %v5382 = vpack.c.bf16 %v5292, %v5292
          %v5383 = vpack.c.bf16 %v5293, %v5293
          %v5384 = vpack.c.bf16 %v5294, %v5294
          %v5385 = vpack.c.bf16 %v5295, %v5295
          %v5386 = vpack.c.bf16 %v5296, %v5296
          %v5387 = vpack.c.bf16 %v5297, %v5297
          %v5388 = vpack.c.bf16 %v5298, %v5298
          %v5397 = vunpack.c.l.b16 %v5381
          %v5398 = vunpack.c.l.b16 %v5382
          %v5399 = vunpack.c.l.b16 %v5383
          %v5400 = vunpack.c.l.b16 %v5384
          %v5401 = vunpack.c.l.b16 %v5385
          %v5402 = vunpack.c.l.b16 %v5386
          %v5403 = vunpack.c.l.b16 %v5387
          %v5404 = vunpack.c.l.b16 %v5388
          %v5405 = vrot.slane %v5397, 6
          %v5406 = vrot.slane %v5398, 5
          %v5407 = vsel %vm2111, %v5406, %v5405
          %v5408 = vrot.slane %v5399, 4
          %v5409 = vsel %vm2114, %v5408, %v5407
          %v5410 = vrot.slane %v5400, 3
          %v5411 = vsel %vm2117, %v5410, %v5409
          %v5412 = vrot.slane %v5401, 2
          %v5413 = vsel %vm2120, %v5412, %v5411
          %v5414 = vrot.slane %v5402, 1
          %v5415 = vsel %vm2123, %v5414, %v5413
          %v5416 = vsel %vm2126, %v5403, %v5415
          %v5417 = vrot.slane %v5404, 7
          %v5418 = vsel %vm2129, %v5417, %v5416
          %v5419 = vpack.c.b16 %v5418, %v5418
          %5421 = vmatprep.subr.bf16.mxu0 %v2278
          %5422 = vmatpush1.bf16.msra.mxu0 %v2277
          %5423 = vmatprep.subr.bf16.mxu0 %v2284
          %5424 = vmatpush1.bf16.msra.mxu0 %v2283
          %5425 = vmatprep.subr.bf16.mxu0 %v2290
          %5426 = vmatpush1.bf16.msra.mxu0 %v2289
          %5427 = vmatprep.subr.bf16.mxu0 %v2296
          %5428 = vmatpush1.bf16.msra.mxu0 %v2295
          %5429 = vmatprep.subr.bf16.mxu0 %v2302
          %5430 = vmatpush1.bf16.msra.mxu0 %v2301
          %5431 = vmatprep.subr.bf16.mxu0 %v2308
          %5432 = vmatpush1.bf16.msra.mxu0 %v2307
          %5433 = vmatprep.subr.bf16.mxu0 %v2314
          %5434 = vmatpush1.bf16.msra.mxu0 %v2313
          %5435 = vmatprep.subr.bf16.mxu0 %v2320
          %5436 = vmatpush1.bf16.msra.mxu0 %v2319
          %5437 = vmatprep.subr.bf16.mxu0 0
          %5438 = vmatpush1.bf16.msra.mxu0 0
          %5439 = vmatprep.subr.bf16.mxu0 0
          %5440 = vmatpush1.bf16.msra.mxu0 0
          %5441 = vmatprep.subr.bf16.mxu0 0
          %5442 = vmatpush1.bf16.msra.mxu0 0
          %5443 = vmatprep.subr.bf16.mxu0 0
          %5444 = vmatpush1.bf16.msra.mxu0 0
          %5445 = vmatprep.subr.bf16.mxu0 0
          %5446 = vmatpush1.bf16.msra.mxu0 0
          %5447 = vmatprep.subr.bf16.mxu0 0
          %5448 = vmatpush1.bf16.msra.mxu0 0
          %5449 = vmatprep.subr.bf16.mxu0 0
          %5450 = vmatpush1.bf16.msra.mxu0 0
          %5451 = vmatprep.subr.bf16.mxu0 0
          %5452 = vmatpush1.bf16.msra.mxu0 0
          %5453 = vmatprep.mubr.bf16.mxu0 0
          %5454 = vmatmul.mubr.bf16.gmra.mrb[0].mxu0 %v5419
          %v5455 = vpop.f32.mrb[0].mxu0
          %v5456 = vadd.f32 %v1565, %v5455
          %v5457 = vpop.f32.mrb[0].mxu0
          %v5458 = vadd.f32 %v1569, %v5457
          %v5459 = vpop.f32.mrb[0].mxu0
          %v5460 = vpop.f32.mrb[0].mxu0
          %5461 = vdwg.mxu0
          %5462 = vmatprep.subr.bf16.mxu0 %v2280
          %5463 = vmatpush1.bf16.msra.mxu0 %v2279
          %5464 = vmatprep.subr.bf16.mxu0 %v2286
          %5465 = vmatpush1.bf16.msra.mxu0 %v2285
          %5466 = vmatprep.subr.bf16.mxu0 %v2292
          %5467 = vmatpush1.bf16.msra.mxu0 %v2291
          %5468 = vmatprep.subr.bf16.mxu0 %v2298
          %5469 = vmatpush1.bf16.msra.mxu0 %v2297
          %5470 = vmatprep.subr.bf16.mxu0 %v2304
          %5471 = vmatpush1.bf16.msra.mxu0 %v2303
          %5472 = vmatprep.subr.bf16.mxu0 %v2310
          %5473 = vmatpush1.bf16.msra.mxu0 %v2309
          %5474 = vmatprep.subr.bf16.mxu0 %v2316
          %5475 = vmatpush1.bf16.msra.mxu0 %v2315
          %5476 = vmatprep.subr.bf16.mxu0 %v2322
          %5477 = vmatpush1.bf16.msra.mxu0 %v2321
          %5478 = vmatprep.subr.bf16.mxu0 0
          %5479 = vmatpush1.bf16.msra.mxu0 0
          %5480 = vmatprep.subr.bf16.mxu0 0
          %5481 = vmatpush1.bf16.msra.mxu0 0
          %5482 = vmatprep.subr.bf16.mxu0 0
          %5483 = vmatpush1.bf16.msra.mxu0 0
          %5484 = vmatprep.subr.bf16.mxu0 0
          %5485 = vmatpush1.bf16.msra.mxu0 0
          %5486 = vmatprep.subr.bf16.mxu0 0
          %5487 = vmatpush1.bf16.msra.mxu0 0
          %5488 = vmatprep.subr.bf16.mxu0 0
          %5489 = vmatpush1.bf16.msra.mxu0 0
          %5490 = vmatprep.subr.bf16.mxu0 0
          %5491 = vmatpush1.bf16.msra.mxu0 0
          %5492 = vmatprep.subr.bf16.mxu0 0
          %5493 = vmatpush1.bf16.msra.mxu0 0
          %5494 = vmatprep.mubr.bf16.mxu0 0
          %5495 = vmatmul.mubr.bf16.gmra.mrb[0].mxu0 %v5419
          %v5496 = vpop.f32.mrb[0].mxu0
          %v5497 = vadd.f32 %v1573, %v5496
          %v5498 = vpop.f32.mrb[0].mxu0
          %v5499 = vadd.f32 %v1577, %v5498
          %v5500 = vpop.f32.mrb[0].mxu0
          %v5501 = vpop.f32.mrb[0].mxu0
          %5502 = vdwg.mxu0
          %5503 = vmatprep.subr.bf16.mxu0 %v2282
          %5504 = vmatpush1.bf16.msra.mxu0 %v2281
          %5505 = vmatprep.subr.bf16.mxu0 %v2288
          %5506 = vmatpush1.bf16.msra.mxu0 %v2287
          %5507 = vmatprep.subr.bf16.mxu0 %v2294
          %5508 = vmatpush1.bf16.msra.mxu0 %v2293
          %5509 = vmatprep.subr.bf16.mxu0 %v2300
          %5510 = vmatpush1.bf16.msra.mxu0 %v2299
          %5511 = vmatprep.subr.bf16.mxu0 %v2306
          %5512 = vmatpush1.bf16.msra.mxu0 %v2305
          %5513 = vmatprep.subr.bf16.mxu0 %v2312
          %5514 = vmatpush1.bf16.msra.mxu0 %v2311
          %5515 = vmatprep.subr.bf16.mxu0 %v2318
          %5516 = vmatpush1.bf16.msra.mxu0 %v2317
          %5517 = vmatprep.subr.bf16.mxu0 %v2324
          %5518 = vmatpush1.bf16.msra.mxu0 %v2323
          %5519 = vmatprep.subr.bf16.mxu0 0
          %5520 = vmatpush1.bf16.msra.mxu0 0
          %5521 = vmatprep.subr.bf16.mxu0 0
          %5522 = vmatpush1.bf16.msra.mxu0 0
          %5523 = vmatprep.subr.bf16.mxu0 0
          %5524 = vmatpush1.bf16.msra.mxu0 0
          %5525 = vmatprep.subr.bf16.mxu0 0
          %5526 = vmatpush1.bf16.msra.mxu0 0
          %5527 = vmatprep.subr.bf16.mxu0 0
          %5528 = vmatpush1.bf16.msra.mxu0 0
          %5529 = vmatprep.subr.bf16.mxu0 0
          %5530 = vmatpush1.bf16.msra.mxu0 0
          %5531 = vmatprep.subr.bf16.mxu0 0
          %5532 = vmatpush1.bf16.msra.mxu0 0
          %5533 = vmatprep.subr.bf16.mxu0 0
          %5534 = vmatpush1.bf16.msra.mxu0 0
          %5535 = vmatprep.mubr.bf16.mxu0 0
          %5536 = vmatmul.mubr.bf16.gmra.mrb[0].mxu0 %v5419
          %v5537 = vpop.f32.mrb[0].mxu0
          %v5538 = vadd.f32 %v1581, %v5537
          %v5539 = vpop.f32.mrb[0].mxu0
          %v5540 = vadd.f32 %v1585, %v5539
          %v5541 = vpop.f32.mrb[0].mxu0
          %v5542 = vpop.f32.mrb[0].mxu0
          %5543 = vdwg.mxu0
          %v5544 = vadd.f32 %v5456, %v5335
          %v5545 = vxor.u32 %v5544, 2147483648
          %v5546 = vmul.f32 %v5545, 1.442695
          %v5547 = vpow.pop %v5546
          %v5548 = vadd.f32 %v5547, 1.0
          %v5549 = vrcp.pop %v5548
          %v5550 = vmul.f32 1.0, %v5549
          %v5551 = vadd.f32 %v5458, %v5337
          %v5552 = vxor.u32 %v5551, 2147483648
          %v5553 = vmul.f32 %v5552, 1.442695
          %v5554 = vpow.pop %v5553
          %v5555 = vadd.f32 %v5554, 1.0
          %v5556 = vrcp.pop %v5555
          %v5557 = vmul.f32 1.0, %v5556
          %v5558 = vadd.f32 %v5376, %v1597
          %v5559 = vmul.f32 %v5550, %v5558
          %v5560 = vadd.f32 %v5497, %v5559
          %v5561 = vtanh.pop %v5560
          %v5562 = vsub.f32 1.0, %v5557
          %v5563 = vmul.f32 %v5562, %v5561
          %v5564 = vmul.f32 %v5557, %v5057
          %v5565 = vadd.f32 %v5563, %v5564
          %v5566 = vadd.f32 %v5058, %v5565
          %v5568 = vrot.slane %v5499, 1
          %v5569 = vrot.slane %v5499, 2
          %v5570 = vrot.slane %v5499, 3
          %v5571 = vrot.slane %v5499, 4
          %v5572 = vrot.slane %v5499, 5
          %v5573 = vrot.slane %v5499, 6
          %v5574 = vrot.slane %v5499, 7
          %v5583 = vadd.f32 %v1620, %v5568
          %v5584 = vadd.f32 %v1623, %v5569
          %v5585 = vadd.f32 %v1626, %v5570
          %v5586 = vadd.f32 %v1629, %v5571
          %v5587 = vadd.f32 %v1632, %v5572
          %v5588 = vadd.f32 %v1635, %v5573
          %v5589 = vadd.f32 %v1638, %v5574
          %v5590 = vadd.f32 %v1641, %v5499
          %v5591 = vxor.u32 %v5583, 2147483648
          %v5592 = vxor.u32 %v5584, 2147483648
          %v5593 = vxor.u32 %v5585, 2147483648
          %v5594 = vxor.u32 %v5586, 2147483648
          %v5595 = vxor.u32 %v5587, 2147483648
          %v5596 = vxor.u32 %v5588, 2147483648
          %v5597 = vxor.u32 %v5589, 2147483648
          %v5598 = vxor.u32 %v5590, 2147483648
          %v5599 = vmul.f32 %v5591, 1.442695
          %v5600 = vpow.pop %v5599
          %v5601 = vmul.f32 %v5592, 1.442695
          %v5602 = vpow.pop %v5601
          %v5603 = vmul.f32 %v5593, 1.442695
          %v5604 = vpow.pop %v5603
          %v5605 = vmul.f32 %v5594, 1.442695
          %v5606 = vpow.pop %v5605
          %v5607 = vmul.f32 %v5595, 1.442695
          %v5608 = vpow.pop %v5607
          %v5609 = vmul.f32 %v5596, 1.442695
          %v5610 = vpow.pop %v5609
          %v5611 = vmul.f32 %v5597, 1.442695
          %v5612 = vpow.pop %v5611
          %v5613 = vmul.f32 %v5598, 1.442695
          %v5614 = vpow.pop %v5613
          %v5615 = vadd.f32 %v5600, 1.0
          %v5616 = vadd.f32 %v5602, 1.0
          %v5617 = vadd.f32 %v5604, 1.0
          %v5618 = vadd.f32 %v5606, 1.0
          %v5619 = vadd.f32 %v5608, 1.0
          %v5620 = vadd.f32 %v5610, 1.0
          %v5621 = vadd.f32 %v5612, 1.0
          %v5622 = vadd.f32 %v5614, 1.0
          %v5623 = vrcp.pop %v5615
          %v5624 = vmul.f32 1.0, %v5623
          %v5625 = vrcp.pop %v5616
          %v5626 = vmul.f32 1.0, %v5625
          %v5627 = vrcp.pop %v5617
          %v5628 = vmul.f32 1.0, %v5627
          %v5629 = vrcp.pop %v5618
          %v5630 = vmul.f32 1.0, %v5629
          %v5631 = vrcp.pop %v5619
          %v5632 = vmul.f32 1.0, %v5631
          %v5633 = vrcp.pop %v5620
          %v5634 = vmul.f32 1.0, %v5633
          %v5635 = vrcp.pop %v5621
          %v5636 = vmul.f32 1.0, %v5635
          %v5637 = vrcp.pop %v5622
          %v5638 = vmul.f32 1.0, %v5637
          %v5640 = vrot.slane %v5538, 1
          %v5641 = vrot.slane %v5538, 2
          %v5642 = vrot.slane %v5538, 3
          %v5643 = vrot.slane %v5538, 4
          %v5644 = vrot.slane %v5538, 5
          %v5645 = vrot.slane %v5538, 6
          %v5646 = vrot.slane %v5538, 7
          %v5655 = vadd.f32 %v1621, %v5640
          %v5656 = vadd.f32 %v1624, %v5641
          %v5657 = vadd.f32 %v1627, %v5642
          %v5658 = vadd.f32 %v1630, %v5643
          %v5659 = vadd.f32 %v1633, %v5644
          %v5660 = vadd.f32 %v1636, %v5645
          %v5661 = vadd.f32 %v1639, %v5646
          %v5662 = vadd.f32 %v1642, %v5538
          %v5663 = vxor.u32 %v5655, 2147483648
          %v5664 = vxor.u32 %v5656, 2147483648
          %v5665 = vxor.u32 %v5657, 2147483648
          %v5666 = vxor.u32 %v5658, 2147483648
          %v5667 = vxor.u32 %v5659, 2147483648
          %v5668 = vxor.u32 %v5660, 2147483648
          %v5669 = vxor.u32 %v5661, 2147483648
          %v5670 = vxor.u32 %v5662, 2147483648
          %v5671 = vmul.f32 %v5663, 1.442695
          %v5672 = vpow.pop %v5671
          %v5673 = vmul.f32 %v5664, 1.442695
          %v5674 = vpow.pop %v5673
          %v5675 = vmul.f32 %v5665, 1.442695
          %v5676 = vpow.pop %v5675
          %v5677 = vmul.f32 %v5666, 1.442695
          %v5678 = vpow.pop %v5677
          %v5679 = vmul.f32 %v5667, 1.442695
          %v5680 = vpow.pop %v5679
          %v5681 = vmul.f32 %v5668, 1.442695
          %v5682 = vpow.pop %v5681
          %v5683 = vmul.f32 %v5669, 1.442695
          %v5684 = vpow.pop %v5683
          %v5685 = vmul.f32 %v5670, 1.442695
          %v5686 = vpow.pop %v5685
          %v5687 = vadd.f32 %v5672, 1.0
          %v5688 = vadd.f32 %v5674, 1.0
          %v5689 = vadd.f32 %v5676, 1.0
          %v5690 = vadd.f32 %v5678, 1.0
          %v5691 = vadd.f32 %v5680, 1.0
          %v5692 = vadd.f32 %v5682, 1.0
          %v5693 = vadd.f32 %v5684, 1.0
          %v5694 = vadd.f32 %v5686, 1.0
          %v5695 = vrcp.pop %v5687
          %v5696 = vmul.f32 1.0, %v5695
          %v5697 = vrcp.pop %v5688
          %v5698 = vmul.f32 1.0, %v5697
          %v5699 = vrcp.pop %v5689
          %v5700 = vmul.f32 1.0, %v5699
          %v5701 = vrcp.pop %v5690
          %v5702 = vmul.f32 1.0, %v5701
          %v5703 = vrcp.pop %v5691
          %v5704 = vmul.f32 1.0, %v5703
          %v5705 = vrcp.pop %v5692
          %v5706 = vmul.f32 1.0, %v5705
          %v5707 = vrcp.pop %v5693
          %v5708 = vmul.f32 1.0, %v5707
          %v5709 = vrcp.pop %v5694
          %v5710 = vmul.f32 1.0, %v5709
          %v5712 = vrot.slane %v5540, 1
          %v5713 = vrot.slane %v5540, 2
          %v5714 = vrot.slane %v5540, 3
          %v5715 = vrot.slane %v5540, 4
          %v5716 = vrot.slane %v5540, 5
          %v5717 = vrot.slane %v5540, 6
          %v5718 = vrot.slane %v5540, 7
          %v5727 = vmul.f32 %v5624, %v5712
          %v5728 = vmul.f32 %v5626, %v5713
          %v5729 = vmul.f32 %v5628, %v5714
          %v5730 = vmul.f32 %v5630, %v5715
          %v5731 = vmul.f32 %v5632, %v5716
          %v5732 = vmul.f32 %v5634, %v5717
          %v5733 = vmul.f32 %v5636, %v5718
          %v5734 = vmul.f32 %v5638, %v5540
          %v5735 = vadd.f32 %v1622, %v5727
          %v5736 = vadd.f32 %v1625, %v5728
          %v5737 = vadd.f32 %v1628, %v5729
          %v5738 = vadd.f32 %v1631, %v5730
          %v5739 = vadd.f32 %v1634, %v5731
          %v5740 = vadd.f32 %v1637, %v5732
          %v5741 = vadd.f32 %v1640, %v5733
          %v5742 = vadd.f32 %v1643, %v5734
          %v5743 = vtanh.pop %v5735
          %v5744 = vtanh.pop %v5736
          %v5745 = vtanh.pop %v5737
          %v5746 = vtanh.pop %v5738
          %v5747 = vtanh.pop %v5739
          %v5748 = vtanh.pop %v5740
          %v5749 = vtanh.pop %v5741
          %v5750 = vtanh.pop %v5742
          %v5751 = vsub.f32 1.0, %v5696
          %v5752 = vsub.f32 1.0, %v5698
          %v5753 = vsub.f32 1.0, %v5700
          %v5754 = vsub.f32 1.0, %v5702
          %v5755 = vsub.f32 1.0, %v5704
          %v5756 = vsub.f32 1.0, %v5706
          %v5757 = vsub.f32 1.0, %v5708
          %v5758 = vsub.f32 1.0, %v5710
          %v5759 = vmul.f32 %v5751, %v5743
          %v5760 = vmul.f32 %v5752, %v5744
          %v5761 = vmul.f32 %v5753, %v5745
          %v5762 = vmul.f32 %v5754, %v5746
          %v5763 = vmul.f32 %v5755, %v5747
          %v5764 = vmul.f32 %v5756, %v5748
          %v5765 = vmul.f32 %v5757, %v5749
          %v5766 = vmul.f32 %v5758, %v5750
          %v5775 = vrot.slane %v5291, 7
          %v5776 = vrot.slane %v5292, 7
          %v5777 = vrot.slane %v5293, 7
          %v5778 = vrot.slane %v5294, 7
          %v5779 = vrot.slane %v5295, 7
          %v5780 = vrot.slane %v5296, 7
          %v5781 = vrot.slane %v5297, 7
          %v5782 = vrot.slane %v5298, 7
          %v5791 = vmul.f32 %v5696, %v5775
          %v5792 = vmul.f32 %v5698, %v5776
          %v5793 = vmul.f32 %v5700, %v5777
          %v5794 = vmul.f32 %v5702, %v5778
          %v5795 = vmul.f32 %v5704, %v5779
          %v5796 = vmul.f32 %v5706, %v5780
          %v5797 = vmul.f32 %v5708, %v5781
          %v5798 = vmul.f32 %v5710, %v5782
          %v5799 = vadd.f32 %v5759, %v5791
          %v5800 = vadd.f32 %v5760, %v5792
          %v5801 = vadd.f32 %v5761, %v5793
          %v5802 = vadd.f32 %v5762, %v5794
          %v5803 = vadd.f32 %v5763, %v5795
          %v5804 = vadd.f32 %v5764, %v5796
          %v5805 = vadd.f32 %v5765, %v5797
          %v5806 = vadd.f32 %v5766, %v5798
          %v5807 = vpack.c.bf16 %v5565, %v5565
          %5808 = vmatprep.subr.bf16.mxu0 %v1958
          %5809 = vmatpush1.bf16.msra.mxu0 %v1957
          %5810 = vmatprep.subr.bf16.mxu0 %v1961
          %5811 = vmatpush1.bf16.msra.mxu0 %v1960
          %5812 = vmatprep.subr.bf16.mxu0 %v1964
          %5813 = vmatpush1.bf16.msra.mxu0 %v1963
          %5814 = vmatprep.subr.bf16.mxu0 %v1967
          %5815 = vmatpush1.bf16.msra.mxu0 %v1966
          %5816 = vmatprep.subr.bf16.mxu0 %v1970
          %5817 = vmatpush1.bf16.msra.mxu0 %v1969
          %5818 = vmatprep.subr.bf16.mxu0 %v1973
          %5819 = vmatpush1.bf16.msra.mxu0 %v1972
          %5820 = vmatprep.subr.bf16.mxu0 %v1976
          %5821 = vmatpush1.bf16.msra.mxu0 %v1975
          %5822 = vmatprep.subr.bf16.mxu0 %v1979
          %5823 = vmatpush1.bf16.msra.mxu0 %v1978
          %5824 = vmatprep.subr.bf16.mxu0 0
          %5825 = vmatpush1.bf16.msra.mxu0 0
          %5826 = vmatprep.subr.bf16.mxu0 0
          %5827 = vmatpush1.bf16.msra.mxu0 0
          %5828 = vmatprep.subr.bf16.mxu0 0
          %5829 = vmatpush1.bf16.msra.mxu0 0
          %5830 = vmatprep.subr.bf16.mxu0 0
          %5831 = vmatpush1.bf16.msra.mxu0 0
          %5832 = vmatprep.subr.bf16.mxu0 0
          %5833 = vmatpush1.bf16.msra.mxu0 0
          %5834 = vmatprep.subr.bf16.mxu0 0
          %5835 = vmatpush1.bf16.msra.mxu0 0
          %5836 = vmatprep.subr.bf16.mxu0 0
          %5837 = vmatpush1.bf16.msra.mxu0 0
          %5838 = vmatprep.subr.bf16.mxu0 0
          %5839 = vmatpush1.bf16.msra.mxu0 0
          %5840 = vmatprep.mubr.bf16.mxu0 0
          %5841 = vmatmul.mubr.bf16.gmra.mrb[0].mxu0 %v5807
          %v5842 = vpop.f32.mrb[0].mxu0
          %v5843 = vadd.f32 0.0, %v5842
          %v5844 = vpop.f32.mrb[0].mxu0
          %v5845 = vadd.f32 0.0, %v5844
          %v5846 = vpop.f32.mrb[0].mxu0
          %v5847 = vpop.f32.mrb[0].mxu0
          %5848 = vdwg.mxu0
          %5849 = vmatprep.subr.bf16.mxu0 0
          %5850 = vmatpush1.bf16.msra.mxu0 %v1959
          %5851 = vmatprep.subr.bf16.mxu0 0
          %5852 = vmatpush1.bf16.msra.mxu0 %v1962
          %5853 = vmatprep.subr.bf16.mxu0 0
          %5854 = vmatpush1.bf16.msra.mxu0 %v1965
          %5855 = vmatprep.subr.bf16.mxu0 0
          %5856 = vmatpush1.bf16.msra.mxu0 %v1968
          %5857 = vmatprep.subr.bf16.mxu0 0
          %5858 = vmatpush1.bf16.msra.mxu0 %v1971
          %5859 = vmatprep.subr.bf16.mxu0 0
          %5860 = vmatpush1.bf16.msra.mxu0 %v1974
          %5861 = vmatprep.subr.bf16.mxu0 0
          %5862 = vmatpush1.bf16.msra.mxu0 %v1977
          %5863 = vmatprep.subr.bf16.mxu0 0
          %5864 = vmatpush1.bf16.msra.mxu0 %v1980
          %5865 = vmatprep.subr.bf16.mxu0 0
          %5866 = vmatpush1.bf16.msra.mxu0 0
          %5867 = vmatprep.subr.bf16.mxu0 0
          %5868 = vmatpush1.bf16.msra.mxu0 0
          %5869 = vmatprep.subr.bf16.mxu0 0
          %5870 = vmatpush1.bf16.msra.mxu0 0
          %5871 = vmatprep.subr.bf16.mxu0 0
          %5872 = vmatpush1.bf16.msra.mxu0 0
          %5873 = vmatprep.subr.bf16.mxu0 0
          %5874 = vmatpush1.bf16.msra.mxu0 0
          %5875 = vmatprep.subr.bf16.mxu0 0
          %5876 = vmatpush1.bf16.msra.mxu0 0
          %5877 = vmatprep.subr.bf16.mxu0 0
          %5878 = vmatpush1.bf16.msra.mxu0 0
          %5879 = vmatprep.subr.bf16.mxu0 0
          %5880 = vmatpush1.bf16.msra.mxu0 0
          %5881 = vmatprep.mubr.bf16.mxu0 0
          %5882 = vmatmul.mubr.bf16.gmra.mrb[0].mxu0 %v5807
          %v5883 = vpop.f32.mrb[0].mxu0
          %v5884 = vadd.f32 0.0, %v5883
          %v5885 = vpop.f32.mrb[0].mxu0
          %v5886 = vpop.f32.mrb[0].mxu0
          %v5887 = vpop.f32.mrb[0].mxu0
          %5888 = vdwg.mxu0
          %v5889 = vpack.c.bf16 %v5799, %v5799
          %v5890 = vpack.c.bf16 %v5800, %v5800
          %v5891 = vpack.c.bf16 %v5801, %v5801
          %v5892 = vpack.c.bf16 %v5802, %v5802
          %v5893 = vpack.c.bf16 %v5803, %v5803
          %v5894 = vpack.c.bf16 %v5804, %v5804
          %v5895 = vpack.c.bf16 %v5805, %v5805
          %v5896 = vpack.c.bf16 %v5806, %v5806
          %v5905 = vunpack.c.l.b16 %v5889
          %v5906 = vunpack.c.l.b16 %v5890
          %v5907 = vunpack.c.l.b16 %v5891
          %v5908 = vunpack.c.l.b16 %v5892
          %v5909 = vunpack.c.l.b16 %v5893
          %v5910 = vunpack.c.l.b16 %v5894
          %v5911 = vunpack.c.l.b16 %v5895
          %v5912 = vunpack.c.l.b16 %v5896
          %v5913 = vrot.slane %v5905, 7
          %v5914 = vrot.slane %v5906, 6
          %v5915 = vsel %vm2111, %v5914, %v5913
          %v5916 = vrot.slane %v5907, 5
          %v5917 = vsel %vm2114, %v5916, %v5915
          %v5918 = vrot.slane %v5908, 4
          %v5919 = vsel %vm2117, %v5918, %v5917
          %v5920 = vrot.slane %v5909, 3
          %v5921 = vsel %vm2120, %v5920, %v5919
          %v5922 = vrot.slane %v5910, 2
          %v5923 = vsel %vm2123, %v5922, %v5921
          %v5924 = vrot.slane %v5911, 1
          %v5925 = vsel %vm2126, %v5924, %v5923
          %v5926 = vsel %vm2129, %v5912, %v5925
          %v5927 = vpack.c.b16 %v5926, %v5926
          %5929 = vmatprep.subr.bf16.mxu0 %v2278
          %5930 = vmatpush1.bf16.msra.mxu0 %v2277
          %5931 = vmatprep.subr.bf16.mxu0 %v2284
          %5932 = vmatpush1.bf16.msra.mxu0 %v2283
          %5933 = vmatprep.subr.bf16.mxu0 %v2290
          %5934 = vmatpush1.bf16.msra.mxu0 %v2289
          %5935 = vmatprep.subr.bf16.mxu0 %v2296
          %5936 = vmatpush1.bf16.msra.mxu0 %v2295
          %5937 = vmatprep.subr.bf16.mxu0 %v2302
          %5938 = vmatpush1.bf16.msra.mxu0 %v2301
          %5939 = vmatprep.subr.bf16.mxu0 %v2308
          %5940 = vmatpush1.bf16.msra.mxu0 %v2307
          %5941 = vmatprep.subr.bf16.mxu0 %v2314
          %5942 = vmatpush1.bf16.msra.mxu0 %v2313
          %5943 = vmatprep.subr.bf16.mxu0 %v2320
          %5944 = vmatpush1.bf16.msra.mxu0 %v2319
          %5945 = vmatprep.subr.bf16.mxu0 0
          %5946 = vmatpush1.bf16.msra.mxu0 0
          %5947 = vmatprep.subr.bf16.mxu0 0
          %5948 = vmatpush1.bf16.msra.mxu0 0
          %5949 = vmatprep.subr.bf16.mxu0 0
          %5950 = vmatpush1.bf16.msra.mxu0 0
          %5951 = vmatprep.subr.bf16.mxu0 0
          %5952 = vmatpush1.bf16.msra.mxu0 0
          %5953 = vmatprep.subr.bf16.mxu0 0
          %5954 = vmatpush1.bf16.msra.mxu0 0
          %5955 = vmatprep.subr.bf16.mxu0 0
          %5956 = vmatpush1.bf16.msra.mxu0 0
          %5957 = vmatprep.subr.bf16.mxu0 0
          %5958 = vmatpush1.bf16.msra.mxu0 0
          %5959 = vmatprep.subr.bf16.mxu0 0
          %5960 = vmatpush1.bf16.msra.mxu0 0
          %5961 = vmatprep.mubr.bf16.mxu0 0
          %5962 = vmatmul.mubr.bf16.gmra.mrb[0].mxu0 %v5927
          %v5963 = vpop.f32.mrb[0].mxu0
          %v5964 = vadd.f32 %v1565, %v5963
          %v5965 = vpop.f32.mrb[0].mxu0
          %v5966 = vadd.f32 %v1569, %v5965
          %v5967 = vpop.f32.mrb[0].mxu0
          %v5968 = vpop.f32.mrb[0].mxu0
          %5969 = vdwg.mxu0
          %5970 = vmatprep.subr.bf16.mxu0 %v2280
          %5971 = vmatpush1.bf16.msra.mxu0 %v2279
          %5972 = vmatprep.subr.bf16.mxu0 %v2286
          %5973 = vmatpush1.bf16.msra.mxu0 %v2285
          %5974 = vmatprep.subr.bf16.mxu0 %v2292
          %5975 = vmatpush1.bf16.msra.mxu0 %v2291
          %5976 = vmatprep.subr.bf16.mxu0 %v2298
          %5977 = vmatpush1.bf16.msra.mxu0 %v2297
          %5978 = vmatprep.subr.bf16.mxu0 %v2304
          %5979 = vmatpush1.bf16.msra.mxu0 %v2303
          %5980 = vmatprep.subr.bf16.mxu0 %v2310
          %5981 = vmatpush1.bf16.msra.mxu0 %v2309
          %5982 = vmatprep.subr.bf16.mxu0 %v2316
          %5983 = vmatpush1.bf16.msra.mxu0 %v2315
          %5984 = vmatprep.subr.bf16.mxu0 %v2322
          %5985 = vmatpush1.bf16.msra.mxu0 %v2321
          %5986 = vmatprep.subr.bf16.mxu0 0
          %5987 = vmatpush1.bf16.msra.mxu0 0
          %5988 = vmatprep.subr.bf16.mxu0 0
          %5989 = vmatpush1.bf16.msra.mxu0 0
          %5990 = vmatprep.subr.bf16.mxu0 0
          %5991 = vmatpush1.bf16.msra.mxu0 0
          %5992 = vmatprep.subr.bf16.mxu0 0
          %5993 = vmatpush1.bf16.msra.mxu0 0
          %5994 = vmatprep.subr.bf16.mxu0 0
          %5995 = vmatpush1.bf16.msra.mxu0 0
          %5996 = vmatprep.subr.bf16.mxu0 0
          %5997 = vmatpush1.bf16.msra.mxu0 0
          %5998 = vmatprep.subr.bf16.mxu0 0
          %5999 = vmatpush1.bf16.msra.mxu0 0
          %6000 = vmatprep.subr.bf16.mxu0 0
          %6001 = vmatpush1.bf16.msra.mxu0 0
          %6002 = vmatprep.mubr.bf16.mxu0 0
          %6003 = vmatmul.mubr.bf16.gmra.mrb[0].mxu0 %v5927
          %v6004 = vpop.f32.mrb[0].mxu0
          %v6005 = vadd.f32 %v1573, %v6004
          %v6006 = vpop.f32.mrb[0].mxu0
          %v6007 = vadd.f32 %v1577, %v6006
          %v6008 = vpop.f32.mrb[0].mxu0
          %v6009 = vpop.f32.mrb[0].mxu0
          %6010 = vdwg.mxu0
          %6011 = vmatprep.subr.bf16.mxu0 %v2282
          %6012 = vmatpush1.bf16.msra.mxu0 %v2281
          %6013 = vmatprep.subr.bf16.mxu0 %v2288
          %6014 = vmatpush1.bf16.msra.mxu0 %v2287
          %6015 = vmatprep.subr.bf16.mxu0 %v2294
          %6016 = vmatpush1.bf16.msra.mxu0 %v2293
          %6017 = vmatprep.subr.bf16.mxu0 %v2300
          %6018 = vmatpush1.bf16.msra.mxu0 %v2299
          %6019 = vmatprep.subr.bf16.mxu0 %v2306
          %6020 = vmatpush1.bf16.msra.mxu0 %v2305
          %6021 = vmatprep.subr.bf16.mxu0 %v2312
          %6022 = vmatpush1.bf16.msra.mxu0 %v2311
          %6023 = vmatprep.subr.bf16.mxu0 %v2318
          %6024 = vmatpush1.bf16.msra.mxu0 %v2317
          %6025 = vmatprep.subr.bf16.mxu0 %v2324
          %6026 = vmatpush1.bf16.msra.mxu0 %v2323
          %6027 = vmatprep.subr.bf16.mxu0 0
          %6028 = vmatpush1.bf16.msra.mxu0 0
          %6029 = vmatprep.subr.bf16.mxu0 0
          %6030 = vmatpush1.bf16.msra.mxu0 0
          %6031 = vmatprep.subr.bf16.mxu0 0
          %6032 = vmatpush1.bf16.msra.mxu0 0
          %6033 = vmatprep.subr.bf16.mxu0 0
          %6034 = vmatpush1.bf16.msra.mxu0 0
          %6035 = vmatprep.subr.bf16.mxu0 0
          %6036 = vmatpush1.bf16.msra.mxu0 0
          %6037 = vmatprep.subr.bf16.mxu0 0
          %6038 = vmatpush1.bf16.msra.mxu0 0
          %6039 = vmatprep.subr.bf16.mxu0 0
          %6040 = vmatpush1.bf16.msra.mxu0 0
          %6041 = vmatprep.subr.bf16.mxu0 0
          %6042 = vmatpush1.bf16.msra.mxu0 0
          %6043 = vmatprep.mubr.bf16.mxu0 0
          %6044 = vmatmul.mubr.bf16.gmra.mrb[0].mxu0 %v5927
          %v6045 = vpop.f32.mrb[0].mxu0
          %v6046 = vadd.f32 %v1581, %v6045
          %v6047 = vpop.f32.mrb[0].mxu0
          %v6048 = vadd.f32 %v1585, %v6047
          %v6049 = vpop.f32.mrb[0].mxu0
          %v6050 = vpop.f32.mrb[0].mxu0
          %6051 = vdwg.mxu0
          %v6052 = vadd.f32 %v5964, %v5843
          %v6053 = vxor.u32 %v6052, 2147483648
          %v6054 = vmul.f32 %v6053, 1.442695
          %v6055 = vpow.pop %v6054
          %v6056 = vadd.f32 %v6055, 1.0
          %v6057 = vrcp.pop %v6056
          %v6058 = vmul.f32 1.0, %v6057
          %v6059 = vadd.f32 %v5966, %v5845
          %v6060 = vxor.u32 %v6059, 2147483648
          %v6061 = vmul.f32 %v6060, 1.442695
          %v6062 = vpow.pop %v6061
          %v6063 = vadd.f32 %v6062, 1.0
          %v6064 = vrcp.pop %v6063
          %v6065 = vmul.f32 1.0, %v6064
          %v6066 = vadd.f32 %v5884, %v1597
          %v6067 = vmul.f32 %v6058, %v6066
          %v6068 = vadd.f32 %v6005, %v6067
          %v6069 = vtanh.pop %v6068
          %v6070 = vsub.f32 1.0, %v6065
          %v6071 = vmul.f32 %v6070, %v6069
          %v6072 = vmul.f32 %v6065, %v5565
          %v6073 = vadd.f32 %v6071, %v6072
          %v6074 = vadd.f32 %v5566, %v6073
          %v6083 = vrot.slane %v5799, 7
          %v6084 = vrot.slane %v5800, 6
          %v6085 = vsel %vm2111, %v6084, %v6083
          %v6086 = vrot.slane %v5801, 5
          %v6087 = vsel %vm2114, %v6086, %v6085
          %v6088 = vrot.slane %v5802, 4
          %v6089 = vsel %vm2117, %v6088, %v6087
          %v6090 = vrot.slane %v5803, 3
          %v6091 = vsel %vm2120, %v6090, %v6089
          %v6092 = vrot.slane %v5804, 2
          %v6093 = vsel %vm2123, %v6092, %v6091
          %v6094 = vrot.slane %v5805, 1
          %v6095 = vsel %vm2126, %v6094, %v6093
          %v6096 = vsel %vm2129, %v5806, %v6095
        $region141: #{audio_bilstm_net_forward.1} parent=75 // loop_footer
          %s1610 = sadd.s32 1, %s1606
        $region142: #{audio_bilstm_net_forward.1} parent=75 // loop_footer_branch
          %1605 = sbr.rel target = $region138
        $region143: #{audio_bilstm_net_forward.1} parent=75 // loop_exit
          _
        %6098 = vst [vmem:[#allocation3] sm:$0xff] %v1611
        %6099 = vst [vmem:[#allocation4] sm:$0xff] %v1612
        %6100 = vst [vmem:[#allocation5] sm:$0xff] %v1613
        %6101 = vst [vmem:[#allocation5 + $0x8] sm:$0xff] %v1614
        %6102 = vst [vmem:[#allocation5 + $0x10] sm:$0xff] %v1615
        %6103 = vst [vmem:[#allocation6] sm:$0xff] %v1616
        %p6104 = scmp.eq.s32.totalorder %s43, 1
        // Predicated region
        $region144: #{audio_bilstm_net_forward.1} parent=75 // pred_check
          %p6105 = pneg %p6104
        $region145: #{audio_bilstm_net_forward.1} parent=75 // pred_check_branch
          %6107 = sbr.rel (%p6105) target = $region147
        $region146: #{audio_bilstm_net_forward.1} parent=75 // pred_region
          %v6108 = vmul.f32 %v1616, 0.03125
          %v6109 = vpack.c.bf16 %v6108, %v6108
          %v6110 = vld [vmem:[#allocation24] sm:$0xf]
          %v6111 = vld [vmem:[#allocation24 + $0x4] sm:$0xf]
          %v6112 = vld [vmem:[#allocation24 + $0x8] sm:$0xf]
          %v6113 = vld [vmem:[#allocation24 + $0xc] sm:$0xf]
          %v6114 = vld [vmem:[#allocation24 + $0x10] sm:$0xf]
          %v6115 = vld [vmem:[#allocation24 + $0x14] sm:$0xf]
          %v6116 = vld [vmem:[#allocation24 + $0x18] sm:$0xf]
          %v6117 = vld [vmem:[#allocation24 + $0x1c] sm:$0xf]
          %v6118 = vld [vmem:[#allocation24 + $0x20] sm:$0xf]
          %v6119 = vld [vmem:[#allocation24 + $0x24] sm:$0xf]
          %v6120 = vld [vmem:[#allocation24 + $0x28] sm:$0xf]
          %v6121 = vld [vmem:[#allocation24 + $0x2c] sm:$0xf]
          %v6122 = vld [vmem:[#allocation24 + $0x30] sm:$0xf]
          %v6123 = vld [vmem:[#allocation24 + $0x34] sm:$0xf]
          %v6124 = vld [vmem:[#allocation24 + $0x38] sm:$0xf]
          %v6125 = vld [vmem:[#allocation24 + $0x3c] sm:$0xf]
          %v6126 = vld [vmem:[#allocation25] sm:$0x1]
          %v6128 = vlaneseq
          %v6129 = vshrl.u32 %v6128, 7
          %v6130 = vsub.s32 0, %v6129
          %v6131 = vrot.slane %v6126, %v6130
          %v6149 = vunpack.c.l.b16 %v6110
          %v6150 = vunpack.c.l.b16 %v6111
          %v6151 = vunpack.c.l.b16 %v6112
          %v6152 = vunpack.c.l.b16 %v6113
          %v6153 = vunpack.c.l.b16 %v6114
          %v6154 = vunpack.c.l.b16 %v6115
          %v6155 = vunpack.c.l.b16 %v6116
          %v6156 = vunpack.c.l.b16 %v6117
          %v6157 = vunpack.c.l.b16 %v6118
          %v6158 = vunpack.c.l.b16 %v6119
          %v6159 = vunpack.c.l.b16 %v6120
          %v6160 = vunpack.c.l.b16 %v6121
          %v6161 = vunpack.c.l.b16 %v6122
          %v6162 = vunpack.c.l.b16 %v6123
          %v6163 = vunpack.c.l.b16 %v6124
          %v6164 = vunpack.c.l.b16 %v6125
          %v6165 = vpack.c.b16 %v6150, %v6149
          %v6166 = vpack.c.b16 %v6152, %v6151
          %v6167 = vpack.c.b16 %v6154, %v6153
          %v6168 = vpack.c.b16 %v6156, %v6155
          %v6169 = vpack.c.b16 %v6158, %v6157
          %v6170 = vpack.c.b16 %v6160, %v6159
          %v6171 = vpack.c.b16 %v6162, %v6161
          %v6172 = vpack.c.b16 %v6164, %v6163
          %6181 = vmatprep.subr.bf16.mxu0 0
          %6182 = vmatpush1.bf16.msra.mxu0 %v6165
          %6183 = vmatprep.subr.bf16.mxu0 0
          %6184 = vmatpush1.bf16.msra.mxu0 %v6166
          %6185 = vmatprep.subr.bf16.mxu0 0
          %6186 = vmatpush1.bf16.msra.mxu0 %v6167
          %6187 = vmatprep.subr.bf16.mxu0 0
          %6188 = vmatpush1.bf16.msra.mxu0 %v6168
          %6189 = vmatprep.subr.bf16.mxu0 0
          %6190 = vmatpush1.bf16.msra.mxu0 %v6169
          %6191 = vmatprep.subr.bf16.mxu0 0
          %6192 = vmatpush1.bf16.msra.mxu0 %v6170
          %6193 = vmatprep.subr.bf16.mxu0 0
          %6194 = vmatpush1.bf16.msra.mxu0 %v6171
          %6195 = vmatprep.subr.bf16.mxu0 0
          %6196 = vmatpush1.bf16.msra.mxu0 %v6172
          %6197 = vmatprep.subr.bf16.mxu0 0
          %6198 = vmatpush1.bf16.msra.mxu0 0
          %6199 = vmatprep.subr.bf16.mxu0 0
          %6200 = vmatpush1.bf16.msra.mxu0 0
          %6201 = vmatprep.subr.bf16.mxu0 0
          %6202 = vmatpush1.bf16.msra.mxu0 0
          %6203 = vmatprep.subr.bf16.mxu0 0
          %6204 = vmatpush1.bf16.msra.mxu0 0
          %6205 = vmatprep.subr.bf16.mxu0 0
          %6206 = vmatpush1.bf16.msra.mxu0 0
          %6207 = vmatprep.subr.bf16.mxu0 0
          %6208 = vmatpush1.bf16.msra.mxu0 0
          %6209 = vmatprep.subr.bf16.mxu0 0
          %6210 = vmatpush1.bf16.msra.mxu0 0
          %6211 = vmatprep.subr.bf16.mxu0 0
          %6212 = vmatpush1.bf16.msra.mxu0 0
          %6213 = vmatprep.mubr.bf16.mxu0 0
          %6214 = vmatmul.mubr.bf16.gmra.mrb[0].mxu0 %v6109
          %v6215 = vpop.f32.mrb[0].mxu0
          %v6216 = vadd.f32 %v6131, %v6215
          %v6217 = vpop.f32.mrb[0].mxu0
          %v6218 = vpop.f32.mrb[0].mxu0
          %v6219 = vpop.f32.mrb[0].mxu0
          %6220 = vdwg.mxu0
          %v6221 = vmax.f32 %v6216, 0.0
          %v6222 = vpack.c.bf16 %v6221, %v6221
          %v6223 = vld [vmem:[#allocation27] sm:$0xf]
          %v6224 = vld [vmem:[#allocation27 + $0x4] sm:$0xf]
          %v6225 = vld [vmem:[#allocation27 + $0x8] sm:$0xf]
          %v6226 = vld [vmem:[#allocation27 + $0xc] sm:$0xf]
          %v6227 = vld [vmem:[#allocation27 + $0x10] sm:$0xf]
          %v6228 = vld [vmem:[#allocation27 + $0x14] sm:$0xf]
          %v6229 = vld [vmem:[#allocation27 + $0x18] sm:$0xf]
          %v6230 = vld [vmem:[#allocation27 + $0x1c] sm:$0xf]
          %v6231 = vld [vmem:[#allocation27 + $0x20] sm:$0xf]
          %v6232 = vld [vmem:[#allocation27 + $0x24] sm:$0xf]
          %v6233 = vld [vmem:[#allocation27 + $0x28] sm:$0xf]
          %v6234 = vld [vmem:[#allocation27 + $0x2c] sm:$0xf]
          %v6235 = vld [vmem:[#allocation27 + $0x30] sm:$0xf]
          %v6236 = vld [vmem:[#allocation27 + $0x34] sm:$0xf]
          %v6237 = vld [vmem:[#allocation27 + $0x38] sm:$0xf]
          %v6238 = vld [vmem:[#allocation27 + $0x3c] sm:$0xf]
          %v6239 = vld [vmem:[#allocation28] sm:$0x1]
          %v6241 = vlaneseq
          %v6242 = vshrl.u32 %v6241, 7
          %v6243 = vsub.s32 0, %v6242
          %v6244 = vrot.slane %v6239, %v6243
          %v6262 = vunpack.c.l.b16 %v6223
          %v6263 = vunpack.c.l.b16 %v6224
          %v6264 = vunpack.c.l.b16 %v6225
          %v6265 = vunpack.c.l.b16 %v6226
          %v6266 = vunpack.c.l.b16 %v6227
          %v6267 = vunpack.c.l.b16 %v6228
          %v6268 = vunpack.c.l.b16 %v6229
          %v6269 = vunpack.c.l.b16 %v6230
          %v6270 = vunpack.c.l.b16 %v6231
          %v6271 = vunpack.c.l.b16 %v6232
          %v6272 = vunpack.c.l.b16 %v6233
          %v6273 = vunpack.c.l.b16 %v6234
          %v6274 = vunpack.c.l.b16 %v6235
          %v6275 = vunpack.c.l.b16 %v6236
          %v6276 = vunpack.c.l.b16 %v6237
          %v6277 = vunpack.c.l.b16 %v6238
          %v6278 = vpack.c.b16 %v6263, %v6262
          %v6279 = vpack.c.b16 %v6265, %v6264
          %v6280 = vpack.c.b16 %v6267, %v6266
          %v6281 = vpack.c.b16 %v6269, %v6268
          %v6282 = vpack.c.b16 %v6271, %v6270
          %v6283 = vpack.c.b16 %v6273, %v6272
          %v6284 = vpack.c.b16 %v6275, %v6274
          %v6285 = vpack.c.b16 %v6277, %v6276
          %6294 = vmatprep.subr.bf16.mxu0 0
          %6295 = vmatpush1.bf16.msra.mxu0 %v6278
          %6296 = vmatprep.subr.bf16.mxu0 0
          %6297 = vmatpush1.bf16.msra.mxu0 %v6279
          %6298 = vmatprep.subr.bf16.mxu0 0
          %6299 = vmatpush1.bf16.msra.mxu0 %v6280
          %6300 = vmatprep.subr.bf16.mxu0 0
          %6301 = vmatpush1.bf16.msra.mxu0 %v6281
          %6302 = vmatprep.subr.bf16.mxu0 0
          %6303 = vmatpush1.bf16.msra.mxu0 %v6282
          %6304 = vmatprep.subr.bf16.mxu0 0
          %6305 = vmatpush1.bf16.msra.mxu0 %v6283
          %6306 = vmatprep.subr.bf16.mxu0 0
          %6307 = vmatpush1.bf16.msra.mxu0 %v6284
          %6308 = vmatprep.subr.bf16.mxu0 0
          %6309 = vmatpush1.bf16.msra.mxu0 %v6285
          %6310 = vmatprep.subr.bf16.mxu0 0
          %6311 = vmatpush1.bf16.msra.mxu0 0
          %6312 = vmatprep.subr.bf16.mxu0 0
          %6313 = vmatpush1.bf16.msra.mxu0 0
          %6314 = vmatprep.subr.bf16.mxu0 0
          %6315 = vmatpush1.bf16.msra.mxu0 0
          %6316 = vmatprep.subr.bf16.mxu0 0
          %6317 = vmatpush1.bf16.msra.mxu0 0
          %6318 = vmatprep.subr.bf16.mxu0 0
          %6319 = vmatpush1.bf16.msra.mxu0 0
          %6320 = vmatprep.subr.bf16.mxu0 0
          %6321 = vmatpush1.bf16.msra.mxu0 0
          %6322 = vmatprep.subr.bf16.mxu0 0
          %6323 = vmatpush1.bf16.msra.mxu0 0
          %6324 = vmatprep.subr.bf16.mxu0 0
          %6325 = vmatpush1.bf16.msra.mxu0 0
          %6326 = vmatprep.mubr.bf16.mxu0 0
          %6327 = vmatmul.mubr.bf16.gmra.mrb[0].mxu0 %v6222
          %v6328 = vpop.f32.mrb[0].mxu0
          %v6329 = vadd.f32 %v6244, %v6328
          %v6330 = vpop.f32.mrb[0].mxu0
          %v6331 = vpop.f32.mrb[0].mxu0
          %v6332 = vpop.f32.mrb[0].mxu0
          %6333 = vdwg.mxu0
          %vm6334 = vcmask 15360
          %v6335 = vsel %vm6334, %v6329, -inf
          %6336 = vmax.xlane.f32.xlu0 %v6335
          %v6337 = vpop.xlane.xlu0 %6336
          %v6338 = vsub.f32 %v6329, %v6337
          %v6339 = vmul.f32 %v6338, 1.442695
          %v6340 = vpow.pop %v6339
          %v6341 = vsel %vm6334, %v6340, 0.0
          %6342 = vadd.xlane.f32.xlu0 %v6341
          %v6343 = vpop.xlane.xlu0 %6342
          %v6344 = vrcp.pop %v6343
          %v6345 = vmul.f32 %v6340, %v6344
          %6346 = vst.msk [vmem:[%s700] sm:$0xff] %vm6334, %v6345
        $region147: #{audio_bilstm_net_forward.1} parent=75 // pred_fallthru
          _
        %s6347 = sand.u32 %s359, 1
        %s6348 = scalar_lea.sflag [#allocation9], %s6347
        %s6349 = sand.u32 %s359, 1
        %s6350 = smul.addr %s6349, 8
        %s6351 = scalar_lea.vmem [#allocation30], %s6350
        // Predicated region
        $region148: #{audio_bilstm_net_forward.1} parent=75 // pred_check
          %p6352 = pneg %p369
        $region149: #{audio_bilstm_net_forward.1} parent=75 // pred_check_branch
          %6354 = sbr.rel (%p6352) target = $region151
        $region150: #{audio_bilstm_net_forward.1} parent=75 // pred_region
          %s6356 = ssub.s32 128, 128
          %6357 = vsyncadd %s6348, %s6356
          %s6358 = smul.addr %s42, 128
          %s6359 = scalar_lea.hbm %s14, %s6358
          %s6361 = sshll.u32 %s6351, 4
          %s6362 = int_to_ptr.vmem [resolvable:$true] %s6361
          %6364 = dma.vmem_to_hbm [thread:$0]  %s6362, 128, %s6359, %s6348
        $region151: #{audio_bilstm_net_forward.1} parent=75 // pred_fallthru
          _
      $region76: #{audio_bilstm_net_forward.1} parent=5 // pred_fallthru
        _
      %p6365 = scmp.le.s32.totalorder 2, %s33
      // Predicated region
      $region152: #{audio_bilstm_net_forward.1} parent=5 // pred_check
        %p6366 = pneg %p6365
      $region153: #{audio_bilstm_net_forward.1} parent=5 // pred_check_branch
        %6368 = sbr.rel (%p6366) target = $region155
      $region154: #{audio_bilstm_net_forward.1} parent=5 // pred_region
        %s6369 = ssub.s32 %s33, 2
        // Predicated region
        $region156: #{audio_bilstm_net_forward.1} parent=154 // pred_check
          %p6370 = pneg %p375
        $region157: #{audio_bilstm_net_forward.1} parent=154 // pred_check_branch
          %6372 = sbr.rel (%p6370) target = $region159
        $region158: #{audio_bilstm_net_forward.1} parent=154 // pred_region
          %s6373 = sand.u32 %s360, 1
          %s6374 = scalar_lea.sflag [#allocation9], %s6373
          %s6375 = sand.u32 %s360, 1
          %s6376 = smul.addr %s6375, 8
          %s6377 = scalar_lea.vmem [#allocation30], %s6376
          %6378 = dma.done %s6374, 128
        $region159: #{audio_bilstm_net_forward.1} parent=154 // pred_fallthru
          _
      $region155: #{audio_bilstm_net_forward.1} parent=5 // pred_fallthru
        _
    $region6: #{audio_bilstm_net_forward.1} parent=1 // loop_footer
      %s37 = sadd.s32 1, %s33
    $region7: #{audio_bilstm_net_forward.1} parent=1 // loop_footer_branch
      %32 = sbr.rel target = $region3
    $region8: #{audio_bilstm_net_forward.1} parent=1 // loop_exit
      _
    %6379 = vsyncpa [#allocation8], 1
    %s6380 = scalar_lea.sflag [#allocation8], 1
    %6381 = vsyncpa %s6380, 1
    %6382 = vsyncpa [#allocation11], 1
    %6383 = vsyncpa [#allocation14], 1
    %6384 = vsyncpa [#allocation17], 1
    %6385 = vsyncpa [#allocation20], 1
    %6386 = vsyncpa [#allocation23], 1
    %6387 = vsyncpa [#allocation26], 1
    %6388 = vsyncpa [#allocation29], 1
    %6389 = vsyncpa [#allocation9], 1
    %s6390 = scalar_lea.sflag [#allocation9], 1
    %6391 = vsyncpa %s6390, 1

</llo_original>
